<compile_context>
chip_gen: v7x
topology: tpu7x:2x2x1
jax: 0.10.0
libtpu: 0.0.40
codegen_flags: <defaults>
</compile_context>

<pallas_src>
import functools

import jax
import jax.numpy as jnp
from jax.experimental import pallas as pl
from jax.experimental.pallas import tpu as pltpu

CUBE_SIZE = 4            # -> Cin = CUBE_SIZE * 2 = 8
PRIM_VEC_SIZE = 8        # K capsules
OUT_CHANNELS = 1024      # Conv3d out channels per capsule
BN_EPS = 1e-5


def _primary_caps_kernel(x_ref, w_ref, xmean_ref, gram_ref, gamma_ref, beta_ref,
                         o_ref, *, batch, spatial, sub):
    """Pointwise conv + train-mode BN + global spatial max-pool, column-tiled.

    x_ref     : (B*S, Cin)  f32  channels-last flattened input (resident)
    w_ref     : (Cin, CB)   f32  fused conv weights, this grid step's columns
    xmean_ref : (Cin, 1)    f32  per-channel mean of x over all B*S rows
    gram_ref  : (Cin, Cin)  f32  E[x x^T] over all B*S rows
    gamma_ref : (1, CB)     f32  BN gamma for these columns
    beta_ref  : (1, CB)     f32  BN beta  for these columns
    o_ref     : (B, CB)     f32  pooled + BN-affine output (pre-squash)
    """
    cols = w_ref.shape[1]
    n_sub = cols // sub

    # Static unroll: each 256-column sub-tile is independent; its (N, sub)
    # activation tile stays in vregs and is traversed exactly once.
    for t in range(n_sub):
        c0, c1 = t * sub, (t + 1) * sub
        w_sub = w_ref[:, c0:c1]                                        # (Cin, sub)

        # Conv3d(1x1x1): the only op that touches an (N, sub) activation tile.
        h = jnp.dot(x_ref[...], w_sub,
                    preferred_element_type=jnp.float32)                # (N, sub)

        # BatchNorm3d training statistics WITHOUT traversing h:
        #   E[h]   = E[x] @ W                     (matmul linearity; bias cancels)
        #   E[h^2] = sum_i W * (E[x x^T] @ W)     (Gram identity)
        mean = jnp.sum(xmean_ref[...] * w_sub, axis=0, keepdims=True)  # (1, sub)
        gw = jnp.dot(gram_ref[...], w_sub,
                     preferred_element_type=jnp.float32)               # (Cin, sub)
        ex2 = jnp.sum(w_sub * gw, axis=0, keepdims=True)               # (1, sub)
        var = jnp.maximum(ex2 - mean * mean, 0.0)                      # guard cancellation
        scale = gamma_ref[:, c0:c1] * jax.lax.rsqrt(var + BN_EPS)      # (1, sub)
        shift = beta_ref[:, c0:c1] - mean * scale                      # (1, sub)

        # Global spatial max-pool of BN(h), as an affine of per-batch max/min of
        # the raw h (single read of h; spatial is a multiple of 8, so the
        # reshape splits the sublane dim on a tile boundary).
        h3 = h.reshape(batch, spatial, sub)
        hmax = jnp.max(h3, axis=1)                                     # (B, sub)
        hmin = jnp.min(h3, axis=1)                                     # (B, sub)
        o_ref[:, c0:c1] = jnp.where(scale >= 0.0, hmax * scale, hmin * scale) + shift


def primary_point_caps_forward(x_ncdhw, w, b, gamma, beta):
    """x_ncdhw: (B, Cin, D, H, W); w: (K, Cin, Cout); b/gamma/beta: (K, 1, Cout).

    Returns (B, Cout, K), matching torch.stack(u, dim=2).squeeze() -> squash(...)."""
    B, Cin, D, H, W = x_ncdhw.shape
    S = D * H * W
    N = B * S
    K, _, Cout = w.shape
    cols = K * Cout
    # Conv3d bias cancels exactly under training-mode BatchNorm (mean-subtracted),
    # so it is neither DMA'd nor added.
    del b

    # Glue (tiny, plain XLA): NCDHW -> channels-last rows; fuse the K weight
    # matrices column-wise (capsule-major columns). f32 operands throughout.
    x2d = jnp.transpose(x_ncdhw, (0, 2, 3, 4, 1)).reshape(N, Cin).astype(jnp.float32)
    w_fused = jnp.transpose(w, (1, 0, 2)).reshape(Cin, cols).astype(jnp.float32)
    gamma_f = gamma.reshape(1, cols).astype(jnp.float32)
    beta_f = beta.reshape(1, cols).astype(jnp.float32)

    # First/second moments of the (N, Cin=8) input. These O(Cin^2) values let the
    # kernel reconstruct the BN batch statistics of the conv output without ever
    # summing over the (N, K*Cout) activation. Grid-invariant, so hoisted here
    # (one pass over a few-KiB x) instead of recomputed per grid step.
    xmean = (jnp.sum(x2d, axis=0) / N).reshape(Cin, 1)                      # (Cin, 1)
    gram = jnp.dot(x2d.T, x2d, precision=jax.lax.Precision.HIGHEST) / N     # (Cin, Cin)

    # Column tiling: 2 grid blocks marked "parallel" (the two v7x TensorCores
    # split them; on 1-TC v5e/v6e the extra step costs ~0.35us), with 256-column
    # register-resident sub-tiles inside each block.
    n_blocks = 2 if (cols % 2 == 0 and (cols // 2) % 128 == 0) else 1
    cb = cols // n_blocks
    sub = 256 if cb % 256 == 0 else (128 if cb % 128 == 0 else cb)

    kernel = functools.partial(_primary_caps_kernel, batch=B, spatial=S, sub=sub)
    pooled = pl.pallas_call(
        kernel,
        out_shape=jax.ShapeDtypeStruct((B, cols), jnp.float32),
        grid_spec=pltpu.PrefetchScalarGridSpec(
            num_scalar_prefetch=0,
            grid=(n_blocks,),
            in_specs=[
                pl.BlockSpec((N, Cin), lambda j: (0, 0)),   # resident across steps
                pl.BlockSpec((Cin, cb), lambda j: (0, j)),
                pl.BlockSpec((Cin, 1), lambda j: (0, 0)),
                pl.BlockSpec((Cin, Cin), lambda j: (0, 0)),
                pl.BlockSpec((1, cb), lambda j: (0, j)),
                pl.BlockSpec((1, cb), lambda j: (0, j)),
            ],
            out_specs=pl.BlockSpec((B, cb), lambda j: (0, j)),
        ),
        compiler_params=pltpu.CompilerParams(
            dimension_semantics=("parallel",),
        ),
    )(x2d, w_fused, xmean, gram, gamma_f, beta_f)

    # TODO(synk): for large B*S add a row-tile grid axis (per-batch pooling needs
    # no cross-tile accumulation and xmean/gram already cover all rows) so the
    # (N, sub) tile stays register-resident within v7x's 64 MiB VMEM as well.

    # Squash along the capsule axis + PyTorch output layout (B, Cout, K). The
    # pooled tensor is only B*K*Cout*4 bytes, so plain XLA is fine here and
    # keeps the column grid axis fully parallel.
    u = pooled.reshape(B, K, Cout)
    sn = jnp.sum(u * u, axis=1, keepdims=True)              # (B, 1, Cout): norm over K
    # Matches the PyTorch formula exactly (no epsilon): NaN iff the norm is 0.
    coef = sn / ((1.0 + sn) * jnp.sqrt(sn))
    return jnp.transpose(u * coef, (0, 2, 1))               # (B, Cout, K)


if __name__ == "__main__":
    key = jax.random.PRNGKey(0)
    B, D, H, W = 2, 4, 4, 4
    Cin = CUBE_SIZE * 2
    num_points = 4   # MaxPool3d(num_points) with D=H=W=num_points -> global pool
    assert D == H == W == num_points

    kx, kw, kb, kg, kbt = jax.random.split(key, 5)
    x = jax.random.normal(kx, (B, Cin, D, H, W), jnp.float32)
    # Conv3d(Cin, Cout, kernel=1) weights per capsule, squeezed to (Cin, Cout).
    w = 0.1 * jax.random.normal(kw, (PRIM_VEC_SIZE, Cin, OUT_CHANNELS), jnp.float32)
    b = 0.1 * jax.random.normal(kb, (PRIM_VEC_SIZE, 1, OUT_CHANNELS), jnp.float32)
    # BatchNorm affine params (default init = ones/zeros, perturbed deterministically).
    gamma = 1.0 + 0.1 * jax.random.normal(kg, (PRIM_VEC_SIZE, 1, OUT_CHANNELS), jnp.float32)
    beta = 0.1 * jax.random.normal(kbt, (PRIM_VEC_SIZE, 1, OUT_CHANNELS), jnp.float32)

    out = primary_point_caps_forward(x, w, b, gamma, beta)
    out = jax.block_until_ready(out)
    assert out.shape == (B, OUT_CHANNELS, PRIM_VEC_SIZE), out.shape
    assert bool(jnp.all(jnp.isfinite(out)))
    print("KERNEL_OK")
</pallas_src>

<mosaic_0001>
module attributes {stable_mosaic.version = 11 : i64} {
  func.func @_primary_caps_kernel(%arg0: i32, %arg1: memref<128x8xf32, #tpu.memory_space<vmem>>, %arg2: memref<8x4096xf32, #tpu.memory_space<vmem>>, %arg3: memref<8x1xf32, #tpu.memory_space<vmem>>, %arg4: memref<8x8xf32, #tpu.memory_space<vmem>>, %arg5: memref<1x4096xf32, #tpu.memory_space<vmem>>, %arg6: memref<1x4096xf32, #tpu.memory_space<vmem>>, %arg7: memref<2x4096xf32, #tpu.memory_space<vmem>>) attributes {dimension_semantics = [#tpu.dimension_semantics<parallel>], iteration_bounds = array<i64: 2>, scalar_prefetch = 0 : i64, scratch_operands = 0 : i64, tpu.core_type = #tpu.core_type<tc>, window_params = [{pipeline_mode = #tpu.pipeline_mode<synchronous>, transform_indices = @transform_0, window_bounds = array<i64: 128, 8>}, {transform_indices = @transform_1, window_bounds = array<i64: 8, 4096>}, {pipeline_mode = #tpu.pipeline_mode<synchronous>, transform_indices = @transform_2, window_bounds = array<i64: 8, 1>}, {pipeline_mode = #tpu.pipeline_mode<synchronous>, transform_indices = @transform_3, window_bounds = array<i64: 8, 8>}, {transform_indices = @transform_4, window_bounds = array<i64: 1, 4096>}, {transform_indices = @transform_5, window_bounds = array<i64: 1, 4096>}, {transform_indices = @transform_6, window_bounds = array<i64: 2, 4096>}]} {
    %c0 = arith.constant 0 : index
    %c0_0 = arith.constant 0 : index
    %0 = vector.load %arg2[%c0, %c0_0] : memref<8x4096xf32, #tpu.memory_space<vmem>>, vector<8x256xf32>
    %c0_1 = arith.constant 0 : index
    %c0_2 = arith.constant 0 : index
    %1 = vector.load %arg1[%c0_1, %c0_2] : memref<128x8xf32, #tpu.memory_space<vmem>>, vector<128x8xf32>
    %cst = arith.constant dense<0.000000e+00> : vector<128x256xf32>
    %2 = tpu.matmul %1, %0, %cst {dimension_numbers = #tpu.dot_dimension_numbers<[1], [0], [0], [1], [0, 0, 1, 1], [], []>} : vector<128x8xf32>, vector<8x256xf32>, vector<128x256xf32> -> vector<128x256xf32>
    %c0_3 = arith.constant 0 : index
    %c0_4 = arith.constant 0 : index
    %3 = vector.load %arg3[%c0_3, %c0_4] : memref<8x1xf32, #tpu.memory_space<vmem>>, vector<8x1xf32>
    %4 = vector.broadcast %3 : vector<8x1xf32> to vector<8x256xf32>
    %5 = arith.mulf %4, %0 : vector<8x256xf32>
    %cst_5 = arith.constant dense<0.000000e+00> : vector<256xf32>
    %6 = vector.multi_reduction <add>, %5, %cst_5 [0] : vector<8x256xf32> to vector<256xf32>
    %7 = vector.shape_cast %6 : vector<256xf32> to vector<1x256xf32>
    %c0_6 = arith.constant 0 : index
    %c0_7 = arith.constant 0 : index
    %8 = vector.load %arg4[%c0_6, %c0_7] : memref<8x8xf32, #tpu.memory_space<vmem>>, vector<8x8xf32>
    %cst_8 = arith.constant dense<0.000000e+00> : vector<8x256xf32>
    %9 = tpu.matmul %8, %0, %cst_8 {dimension_numbers = #tpu.dot_dimension_numbers<[1], [0], [0], [1], [0, 0, 1, 1], [], []>} : vector<8x8xf32>, vector<8x256xf32>, vector<8x256xf32> -> vector<8x256xf32>
    %10 = arith.mulf %0, %9 : vector<8x256xf32>
    %cst_9 = arith.constant dense<0.000000e+00> : vector<256xf32>
    %11 = vector.multi_reduction <add>, %10, %cst_9 [0] : vector<8x256xf32> to vector<256xf32>
    %12 = vector.shape_cast %11 : vector<256xf32> to vector<1x256xf32>
    %13 = arith.mulf %7, %7 : vector<1x256xf32>
    %14 = arith.subf %12, %13 : vector<1x256xf32>
    %cst_10 = arith.constant 0.000000e+00 : f32
    %15 = vector.broadcast %cst_10 : f32 to vector<1x256xf32>
    %16 = arith.maximumf %14, %15 : vector<1x256xf32>
    %c0_11 = arith.constant 0 : index
    %c0_12 = arith.constant 0 : index
    %17 = vector.load %arg5[%c0_11, %c0_12] : memref<1x4096xf32, #tpu.memory_space<vmem>>, vector<1x256xf32>
    %cst_13 = arith.constant 9.99999974E-6 : f32
    %18 = vector.broadcast %cst_13 : f32 to vector<1x256xf32>
    %19 = arith.addf %16, %18 : vector<1x256xf32>
    %20 = math.rsqrt %19 : vector<1x256xf32>
    %21 = arith.mulf %17, %20 : vector<1x256xf32>
    %c0_14 = arith.constant 0 : index
    %c0_15 = arith.constant 0 : index
    %22 = vector.load %arg6[%c0_14, %c0_15] : memref<1x4096xf32, #tpu.memory_space<vmem>>, vector<1x256xf32>
    %23 = arith.mulf %7, %21 : vector<1x256xf32>
    %24 = arith.subf %22, %23 : vector<1x256xf32>
    %25 = vector.shape_cast %2 : vector<128x256xf32> to vector<2x64x256xf32>
    %cst_16 = arith.constant dense<0xFF800000> : vector<2x256xf32>
    %26 = vector.multi_reduction <maximumf>, %25, %cst_16 [1] : vector<2x64x256xf32> to vector<2x256xf32>
    %cst_17 = arith.constant dense<0x7F800000> : vector<2x256xf32>
    %27 = vector.multi_reduction <minimumf>, %25, %cst_17 [1] : vector<2x64x256xf32> to vector<2x256xf32>
    %cst_18 = arith.constant 0.000000e+00 : f32
    %28 = vector.broadcast %cst_18 : f32 to vector<1x256xf32>
    %29 = arith.cmpf oge, %21, %28 : vector<1x256xf32>
    %30 = vector.broadcast %21 : vector<1x256xf32> to vector<2x256xf32>
    %31 = arith.mulf %26, %30 : vector<2x256xf32>
    %32 = vector.broadcast %21 : vector<1x256xf32> to vector<2x256xf32>
    %33 = arith.mulf %27, %32 : vector<2x256xf32>
    %34 = vector.shape_cast %29 : vector<1x256xi1> to vector<1x256xi1>
    %35 = vector.broadcast %34 : vector<1x256xi1> to vector<2x256xi1>
    %36 = arith.select %35, %31, %33 : vector<2x256xi1>, vector<2x256xf32>
    %37 = vector.broadcast %24 : vector<1x256xf32> to vector<2x256xf32>
    %38 = arith.addf %36, %37 : vector<2x256xf32>
    %c0_19 = arith.constant 0 : index
    %c0_20 = arith.constant 0 : index
    %39 = vector.load %arg7[%c0_19, %c0_20] : memref<2x4096xf32, #tpu.memory_space<vmem>>, vector<2x256xf32>
    tpu.vector_store %arg7[%c0_19, %c0_20], %38 {strides = array<i32>} : memref<2x4096xf32, #tpu.memory_space<vmem>>, vector<2x256xf32>,
    %c0_21 = arith.constant 0 : index
    %c256 = arith.constant 256 : index
    %40 = vector.load %arg2[%c0_21, %c256] : memref<8x4096xf32, #tpu.memory_space<vmem>>, vector<8x256xf32>
    %c0_22 = arith.constant 0 : index
    %c0_23 = arith.constant 0 : index
    %41 = vector.load %arg1[%c0_22, %c0_23] : memref<128x8xf32, #tpu.memory_space<vmem>>, vector<128x8xf32>
    %cst_24 = arith.constant dense<0.000000e+00> : vector<128x256xf32>
    %42 = tpu.matmul %41, %40, %cst_24 {dimension_numbers = #tpu.dot_dimension_numbers<[1], [0], [0], [1], [0, 0, 1, 1], [], []>} : vector<128x8xf32>, vector<8x256xf32>, vector<128x256xf32> -> vector<128x256xf32>
    %c0_25 = arith.constant 0 : index
    %c0_26 = arith.constant 0 : index
    %43 = vector.load %arg3[%c0_25, %c0_26] : memref<8x1xf32, #tpu.memory_space<vmem>>, vector<8x1xf32>
    %44 = vector.broadcast %43 : vector<8x1xf32> to vector<8x256xf32>
    %45 = arith.mulf %44, %40 : vector<8x256xf32>
    %cst_27 = arith.constant dense<0.000000e+00> : vector<256xf32>
    %46 = vector.multi_reduction <add>, %45, %cst_27 [0] : vector<8x256xf32> to vector<256xf32>
    %47 = vector.shape_cast %46 : vector<256xf32> to vector<1x256xf32>
    %c0_28 = arith.constant 0 : index
    %c0_29 = arith.constant 0 : index
    %48 = vector.load %arg4[%c0_28, %c0_29] : memref<8x8xf32, #tpu.memory_space<vmem>>, vector<8x8xf32>
    %cst_30 = arith.constant dense<0.000000e+00> : vector<8x256xf32>
    %49 = tpu.matmul %48, %40, %cst_30 {dimension_numbers = #tpu.dot_dimension_numbers<[1], [0], [0], [1], [0, 0, 1, 1], [], []>} : vector<8x8xf32>, vector<8x256xf32>, vector<8x256xf32> -> vector<8x256xf32>
    %50 = arith.mulf %40, %49 : vector<8x256xf32>
    %cst_31 = arith.constant dense<0.000000e+00> : vector<256xf32>
    %51 = vector.multi_reduction <add>, %50, %cst_31 [0] : vector<8x256xf32> to vector<256xf32>
    %52 = vector.shape_cast %51 : vector<256xf32> to vector<1x256xf32>
    %53 = arith.mulf %47, %47 : vector<1x256xf32>
    %54 = arith.subf %52, %53 : vector<1x256xf32>
    %cst_32 = arith.constant 0.000000e+00 : f32
    %55 = vector.broadcast %cst_32 : f32 to vector<1x256xf32>
    %56 = arith.maximumf %54, %55 : vector<1x256xf32>
    %c0_33 = arith.constant 0 : index
    %c256_34 = arith.constant 256 : index
    %57 = vector.load %arg5[%c0_33, %c256_34] : memref<1x4096xf32, #tpu.memory_space<vmem>>, vector<1x256xf32>
    %cst_35 = arith.constant 9.99999974E-6 : f32
    %58 = vector.broadcast %cst_35 : f32 to vector<1x256xf32>
    %59 = arith.addf %56, %58 : vector<1x256xf32>
    %60 = math.rsqrt %59 : vector<1x256xf32>
    %61 = arith.mulf %57, %60 : vector<1x256xf32>
    %c0_36 = arith.constant 0 : index
    %c256_37 = arith.constant 256 : index
    %62 = vector.load %arg6[%c0_36, %c256_37] : memref<1x4096xf32, #tpu.memory_space<vmem>>, vector<1x256xf32>
    %63 = arith.mulf %47, %61 : vector<1x256xf32>
    %64 = arith.subf %62, %63 : vector<1x256xf32>
    %65 = vector.shape_cast %42 : vector<128x256xf32> to vector<2x64x256xf32>
    %cst_38 = arith.constant dense<0xFF800000> : vector<2x256xf32>
    %66 = vector.multi_reduction <maximumf>, %65, %cst_38 [1] : vector<2x64x256xf32> to vector<2x256xf32>
    %cst_39 = arith.constant dense<0x7F800000> : vector<2x256xf32>
    %67 = vector.multi_reduction <minimumf>, %65, %cst_39 [1] : vector<2x64x256xf32> to vector<2x256xf32>
    %cst_40 = arith.constant 0.000000e+00 : f32
    %68 = vector.broadcast %cst_40 : f32 to vector<1x256xf32>
    %69 = arith.cmpf oge, %61, %68 : vector<1x256xf32>
    %70 = vector.broadcast %61 : vector<1x256xf32> to vector<2x256xf32>
    %71 = arith.mulf %66, %70 : vector<2x256xf32>
    %72 = vector.broadcast %61 : vector<1x256xf32> to vector<2x256xf32>
    %73 = arith.mulf %67, %72 : vector<2x256xf32>
    %74 = vector.shape_cast %69 : vector<1x256xi1> to vector<1x256xi1>
    %75 = vector.broadcast %74 : vector<1x256xi1> to vector<2x256xi1>
    %76 = arith.select %75, %71, %73 : vector<2x256xi1>, vector<2x256xf32>
    %77 = vector.broadcast %64 : vector<1x256xf32> to vector<2x256xf32>
    %78 = arith.addf %76, %77 : vector<2x256xf32>
    %c0_41 = arith.constant 0 : index
    %c256_42 = arith.constant 256 : index
    %79 = vector.load %arg7[%c0_41, %c256_42] : memref<2x4096xf32, #tpu.memory_space<vmem>>, vector<2x256xf32>
    tpu.vector_store %arg7[%c0_41, %c256_42], %78 {strides = array<i32>} : memref<2x4096xf32, #tpu.memory_space<vmem>>, vector<2x256xf32>,
    %c0_43 = arith.constant 0 : index
    %c512 = arith.constant 512 : index
    %80 = vector.load %arg2[%c0_43, %c512] : memref<8x4096xf32, #tpu.memory_space<vmem>>, vector<8x256xf32>
    %c0_44 = arith.constant 0 : index
    %c0_45 = arith.constant 0 : index
    %81 = vector.load %arg1[%c0_44, %c0_45] : memref<128x8xf32, #tpu.memory_space<vmem>>, vector<128x8xf32>
    %cst_46 = arith.constant dense<0.000000e+00> : vector<128x256xf32>
    %82 = tpu.matmul %81, %80, %cst_46 {dimension_numbers = #tpu.dot_dimension_numbers<[1], [0], [0], [1], [0, 0, 1, 1], [], []>} : vector<128x8xf32>, vector<8x256xf32>, vector<128x256xf32> -> vector<128x256xf32>
    %c0_47 = arith.constant 0 : index
    %c0_48 = arith.constant 0 : index
    %83 = vector.load %arg3[%c0_47, %c0_48] : memref<8x1xf32, #tpu.memory_space<vmem>>, vector<8x1xf32>
    %84 = vector.broadcast %83 : vector<8x1xf32> to vector<8x256xf32>
    %85 = arith.mulf %84, %80 : vector<8x256xf32>
    %cst_49 = arith.constant dense<0.000000e+00> : vector<256xf32>
    %86 = vector.multi_reduction <add>, %85, %cst_49 [0] : vector<8x256xf32> to vector<256xf32>
    %87 = vector.shape_cast %86 : vector<256xf32> to vector<1x256xf32>
    %c0_50 = arith.constant 0 : index
    %c0_51 = arith.constant 0 : index
    %88 = vector.load %arg4[%c0_50, %c0_51] : memref<8x8xf32, #tpu.memory_space<vmem>>, vector<8x8xf32>
    %cst_52 = arith.constant dense<0.000000e+00> : vector<8x256xf32>
    %89 = tpu.matmul %88, %80, %cst_52 {dimension_numbers = #tpu.dot_dimension_numbers<[1], [0], [0], [1], [0, 0, 1, 1], [], []>} : vector<8x8xf32>, vector<8x256xf32>, vector<8x256xf32> -> vector<8x256xf32>
    %90 = arith.mulf %80, %89 : vector<8x256xf32>
    %cst_53 = arith.constant dense<0.000000e+00> : vector<256xf32>
    %91 = vector.multi_reduction <add>, %90, %cst_53 [0] : vector<8x256xf32> to vector<256xf32>
    %92 = vector.shape_cast %91 : vector<256xf32> to vector<1x256xf32>
    %93 = arith.mulf %87, %87 : vector<1x256xf32>
    %94 = arith.subf %92, %93 : vector<1x256xf32>
    %cst_54 = arith.constant 0.000000e+00 : f32
    %95 = vector.broadcast %cst_54 : f32 to vector<1x256xf32>
    %96 = arith.maximumf %94, %95 : vector<1x256xf32>
    %c0_55 = arith.constant 0 : index
    %c512_56 = arith.constant 512 : index
    %97 = vector.load %arg5[%c0_55, %c512_56] : memref<1x4096xf32, #tpu.memory_space<vmem>>, vector<1x256xf32>
    %cst_57 = arith.constant 9.99999974E-6 : f32
    %98 = vector.broadcast %cst_57 : f32 to vector<1x256xf32>
    %99 = arith.addf %96, %98 : vector<1x256xf32>
    %100 = math.rsqrt %99 : vector<1x256xf32>
    %101 = arith.mulf %97, %100 : vector<1x256xf32>
    %c0_58 = arith.constant 0 : index
    %c512_59 = arith.constant 512 : index
    %102 = vector.load %arg6[%c0_58, %c512_59] : memref<1x4096xf32, #tpu.memory_space<vmem>>, vector<1x256xf32>
    %103 = arith.mulf %87, %101 : vector<1x256xf32>
    %104 = arith.subf %102, %103 : vector<1x256xf32>
    %105 = vector.shape_cast %82 : vector<128x256xf32> to vector<2x64x256xf32>
    %cst_60 = arith.constant dense<0xFF800000> : vector<2x256xf32>
    %106 = vector.multi_reduction <maximumf>, %105, %cst_60 [1] : vector<2x64x256xf32> to vector<2x256xf32>
    %cst_61 = arith.constant dense<0x7F800000> : vector<2x256xf32>
    %107 = vector.multi_reduction <minimumf>, %105, %cst_61 [1] : vector<2x64x256xf32> to vector<2x256xf32>
    %cst_62 = arith.constant 0.000000e+00 : f32
    %108 = vector.broadcast %cst_62 : f32 to vector<1x256xf32>
    %109 = arith.cmpf oge, %101, %108 : vector<1x256xf32>
    %110 = vector.broadcast %101 : vector<1x256xf32> to vector<2x256xf32>
    %111 = arith.mulf %106, %110 : vector<2x256xf32>
    %112 = vector.broadcast %101 : vector<1x256xf32> to vector<2x256xf32>
    %113 = arith.mulf %107, %112 : vector<2x256xf32>
    %114 = vector.shape_cast %109 : vector<1x256xi1> to vector<1x256xi1>
    %115 = vector.broadcast %114 : vector<1x256xi1> to vector<2x256xi1>
    %116 = arith.select %115, %111, %113 : vector<2x256xi1>, vector<2x256xf32>
    %117 = vector.broadcast %104 : vector<1x256xf32> to vector<2x256xf32>
    %118 = arith.addf %116, %117 : vector<2x256xf32>
    %c0_63 = arith.constant 0 : index
    %c512_64 = arith.constant 512 : index
    %119 = vector.load %arg7[%c0_63, %c512_64] : memref<2x4096xf32, #tpu.memory_space<vmem>>, vector<2x256xf32>
    tpu.vector_store %arg7[%c0_63, %c512_64], %118 {strides = array<i32>} : memref<2x4096xf32, #tpu.memory_space<vmem>>, vector<2x256xf32>,
    %c0_65 = arith.constant 0 : index
    %c768 = arith.constant 768 : index
    %120 = vector.load %arg2[%c0_65, %c768] : memref<8x4096xf32, #tpu.memory_space<vmem>>, vector<8x256xf32>
    %c0_66 = arith.constant 0 : index
    %c0_67 = arith.constant 0 : index
    %121 = vector.load %arg1[%c0_66, %c0_67] : memref<128x8xf32, #tpu.memory_space<vmem>>, vector<128x8xf32>
    %cst_68 = arith.constant dense<0.000000e+00> : vector<128x256xf32>
    %122 = tpu.matmul %121, %120, %cst_68 {dimension_numbers = #tpu.dot_dimension_numbers<[1], [0], [0], [1], [0, 0, 1, 1], [], []>} : vector<128x8xf32>, vector<8x256xf32>, vector<128x256xf32> -> vector<128x256xf32>
    %c0_69 = arith.constant 0 : index
    %c0_70 = arith.constant 0 : index
    %123 = vector.load %arg3[%c0_69, %c0_70] : memref<8x1xf32, #tpu.memory_space<vmem>>, vector<8x1xf32>
    %124 = vector.broadcast %123 : vector<8x1xf32> to vector<8x256xf32>
    %125 = arith.mulf %124, %120 : vector<8x256xf32>
    %cst_71 = arith.constant dense<0.000000e+00> : vector<256xf32>
    %126 = vector.multi_reduction <add>, %125, %cst_71 [0] : vector<8x256xf32> to vector<256xf32>
    %127 = vector.shape_cast %126 : vector<256xf32> to vector<1x256xf32>
    %c0_72 = arith.constant 0 : index
    %c0_73 = arith.constant 0 : index
    %128 = vector.load %arg4[%c0_72, %c0_73] : memref<8x8xf32, #tpu.memory_space<vmem>>, vector<8x8xf32>
    %cst_74 = arith.constant dense<0.000000e+00> : vector<8x256xf32>
    %129 = tpu.matmul %128, %120, %cst_74 {dimension_numbers = #tpu.dot_dimension_numbers<[1], [0], [0], [1], [0, 0, 1, 1], [], []>} : vector<8x8xf32>, vector<8x256xf32>, vector<8x256xf32> -> vector<8x256xf32>
    %130 = arith.mulf %120, %129 : vector<8x256xf32>
    %cst_75 = arith.constant dense<0.000000e+00> : vector<256xf32>
    %131 = vector.multi_reduction <add>, %130, %cst_75 [0] : vector<8x256xf32> to vector<256xf32>
    %132 = vector.shape_cast %131 : vector<256xf32> to vector<1x256xf32>
    %133 = arith.mulf %127, %127 : vector<1x256xf32>
    %134 = arith.subf %132, %133 : vector<1x256xf32>
    %cst_76 = arith.constant 0.000000e+00 : f32
    %135 = vector.broadcast %cst_76 : f32 to vector<1x256xf32>
    %136 = arith.maximumf %134, %135 : vector<1x256xf32>
    %c0_77 = arith.constant 0 : index
    %c768_78 = arith.constant 768 : index
    %137 = vector.load %arg5[%c0_77, %c768_78] : memref<1x4096xf32, #tpu.memory_space<vmem>>, vector<1x256xf32>
    %cst_79 = arith.constant 9.99999974E-6 : f32
    %138 = vector.broadcast %cst_79 : f32 to vector<1x256xf32>
    %139 = arith.addf %136, %138 : vector<1x256xf32>
    %140 = math.rsqrt %139 : vector<1x256xf32>
    %141 = arith.mulf %137, %140 : vector<1x256xf32>
    %c0_80 = arith.constant 0 : index
    %c768_81 = arith.constant 768 : index
    %142 = vector.load %arg6[%c0_80, %c768_81] : memref<1x4096xf32, #tpu.memory_space<vmem>>, vector<1x256xf32>
    %143 = arith.mulf %127, %141 : vector<1x256xf32>
    %144 = arith.subf %142, %143 : vector<1x256xf32>
    %145 = vector.shape_cast %122 : vector<128x256xf32> to vector<2x64x256xf32>
    %cst_82 = arith.constant dense<0xFF800000> : vector<2x256xf32>
    %146 = vector.multi_reduction <maximumf>, %145, %cst_82 [1] : vector<2x64x256xf32> to vector<2x256xf32>
    %cst_83 = arith.constant dense<0x7F800000> : vector<2x256xf32>
    %147 = vector.multi_reduction <minimumf>, %145, %cst_83 [1] : vector<2x64x256xf32> to vector<2x256xf32>
    %cst_84 = arith.constant 0.000000e+00 : f32
    %148 = vector.broadcast %cst_84 : f32 to vector<1x256xf32>
    %149 = arith.cmpf oge, %141, %148 : vector<1x256xf32>
    %150 = vector.broadcast %141 : vector<1x256xf32> to vector<2x256xf32>
    %151 = arith.mulf %146, %150 : vector<2x256xf32>
    %152 = vector.broadcast %141 : vector<1x256xf32> to vector<2x256xf32>
    %153 = arith.mulf %147, %152 : vector<2x256xf32>
    %154 = vector.shape_cast %149 : vector<1x256xi1> to vector<1x256xi1>
    %155 = vector.broadcast %154 : vector<1x256xi1> to vector<2x256xi1>
    %156 = arith.select %155, %151, %153 : vector<2x256xi1>, vector<2x256xf32>
    %157 = vector.broadcast %144 : vector<1x256xf32> to vector<2x256xf32>
    %158 = arith.addf %156, %157 : vector<2x256xf32>
    %c0_85 = arith.constant 0 : index
    %c768_86 = arith.constant 768 : index
    %159 = vector.load %arg7[%c0_85, %c768_86] : memref<2x4096xf32, #tpu.memory_space<vmem>>, vector<2x256xf32>
    tpu.vector_store %arg7[%c0_85, %c768_86], %158 {strides = array<i32>} : memref<2x4096xf32, #tpu.memory_space<vmem>>, vector<2x256xf32>,
    %c0_87 = arith.constant 0 : index
    %c1024 = arith.constant 1024 : index
    %160 = vector.load %arg2[%c0_87, %c1024] : memref<8x4096xf32, #tpu.memory_space<vmem>>, vector<8x256xf32>
    %c0_88 = arith.constant 0 : index
    %c0_89 = arith.constant 0 : index
    %161 = vector.load %arg1[%c0_88, %c0_89] : memref<128x8xf32, #tpu.memory_space<vmem>>, vector<128x8xf32>
    %cst_90 = arith.constant dense<0.000000e+00> : vector<128x256xf32>
    %162 = tpu.matmul %161, %160, %cst_90 {dimension_numbers = #tpu.dot_dimension_numbers<[1], [0], [0], [1], [0, 0, 1, 1], [], []>} : vector<128x8xf32>, vector<8x256xf32>, vector<128x256xf32> -> vector<128x256xf32>
    %c0_91 = arith.constant 0 : index
    %c0_92 = arith.constant 0 : index
    %163 = vector.load %arg3[%c0_91, %c0_92] : memref<8x1xf32, #tpu.memory_space<vmem>>, vector<8x1xf32>
    %164 = vector.broadcast %163 : vector<8x1xf32> to vector<8x256xf32>
    %165 = arith.mulf %164, %160 : vector<8x256xf32>
    %cst_93 = arith.constant dense<0.000000e+00> : vector<256xf32>
    %166 = vector.multi_reduction <add>, %165, %cst_93 [0] : vector<8x256xf32> to vector<256xf32>
    %167 = vector.shape_cast %166 : vector<256xf32> to vector<1x256xf32>
    %c0_94 = arith.constant 0 : index
    %c0_95 = arith.constant 0 : index
    %168 = vector.load %arg4[%c0_94, %c0_95] : memref<8x8xf32, #tpu.memory_space<vmem>>, vector<8x8xf32>
    %cst_96 = arith.constant dense<0.000000e+00> : vector<8x256xf32>
    %169 = tpu.matmul %168, %160, %cst_96 {dimension_numbers = #tpu.dot_dimension_numbers<[1], [0], [0], [1], [0, 0, 1, 1], [], []>} : vector<8x8xf32>, vector<8x256xf32>, vector<8x256xf32> -> vector<8x256xf32>
    %170 = arith.mulf %160, %169 : vector<8x256xf32>
    %cst_97 = arith.constant dense<0.000000e+00> : vector<256xf32>
    %171 = vector.multi_reduction <add>, %170, %cst_97 [0] : vector<8x256xf32> to vector<256xf32>
    %172 = vector.shape_cast %171 : vector<256xf32> to vector<1x256xf32>
    %173 = arith.mulf %167, %167 : vector<1x256xf32>
    %174 = arith.subf %172, %173 : vector<1x256xf32>
    %cst_98 = arith.constant 0.000000e+00 : f32
    %175 = vector.broadcast %cst_98 : f32 to vector<1x256xf32>
    %176 = arith.maximumf %174, %175 : vector<1x256xf32>
    %c0_99 = arith.constant 0 : index
    %c1024_100 = arith.constant 1024 : index
    %177 = vector.load %arg5[%c0_99, %c1024_100] : memref<1x4096xf32, #tpu.memory_space<vmem>>, vector<1x256xf32>
    %cst_101 = arith.constant 9.99999974E-6 : f32
    %178 = vector.broadcast %cst_101 : f32 to vector<1x256xf32>
    %179 = arith.addf %176, %178 : vector<1x256xf32>
    %180 = math.rsqrt %179 : vector<1x256xf32>
    %181 = arith.mulf %177, %180 : vector<1x256xf32>
    %c0_102 = arith.constant 0 : index
    %c1024_103 = arith.constant 1024 : index
    %182 = vector.load %arg6[%c0_102, %c1024_103] : memref<1x4096xf32, #tpu.memory_space<vmem>>, vector<1x256xf32>
    %183 = arith.mulf %167, %181 : vector<1x256xf32>
    %184 = arith.subf %182, %183 : vector<1x256xf32>
    %185 = vector.shape_cast %162 : vector<128x256xf32> to vector<2x64x256xf32>
    %cst_104 = arith.constant dense<0xFF800000> : vector<2x256xf32>
    %186 = vector.multi_reduction <maximumf>, %185, %cst_104 [1] : vector<2x64x256xf32> to vector<2x256xf32>
    %cst_105 = arith.constant dense<0x7F800000> : vector<2x256xf32>
    %187 = vector.multi_reduction <minimumf>, %185, %cst_105 [1] : vector<2x64x256xf32> to vector<2x256xf32>
    %cst_106 = arith.constant 0.000000e+00 : f32
    %188 = vector.broadcast %cst_106 : f32 to vector<1x256xf32>
    %189 = arith.cmpf oge, %181, %188 : vector<1x256xf32>
    %190 = vector.broadcast %181 : vector<1x256xf32> to vector<2x256xf32>
    %191 = arith.mulf %186, %190 : vector<2x256xf32>
    %192 = vector.broadcast %181 : vector<1x256xf32> to vector<2x256xf32>
    %193 = arith.mulf %187, %192 : vector<2x256xf32>
    %194 = vector.shape_cast %189 : vector<1x256xi1> to vector<1x256xi1>
    %195 = vector.broadcast %194 : vector<1x256xi1> to vector<2x256xi1>
    %196 = arith.select %195, %191, %193 : vector<2x256xi1>, vector<2x256xf32>
    %197 = vector.broadcast %184 : vector<1x256xf32> to vector<2x256xf32>
    %198 = arith.addf %196, %197 : vector<2x256xf32>
    %c0_107 = arith.constant 0 : index
    %c1024_108 = arith.constant 1024 : index
    %199 = vector.load %arg7[%c0_107, %c1024_108] : memref<2x4096xf32, #tpu.memory_space<vmem>>, vector<2x256xf32>
    tpu.vector_store %arg7[%c0_107, %c1024_108], %198 {strides = array<i32>} : memref<2x4096xf32, #tpu.memory_space<vmem>>, vector<2x256xf32>,
    %c0_109 = arith.constant 0 : index
    %c1280 = arith.constant 1280 : index
    %200 = vector.load %arg2[%c0_109, %c1280] : memref<8x4096xf32, #tpu.memory_space<vmem>>, vector<8x256xf32>
    %c0_110 = arith.constant 0 : index
    %c0_111 = arith.constant 0 : index
    %201 = vector.load %arg1[%c0_110, %c0_111] : memref<128x8xf32, #tpu.memory_space<vmem>>, vector<128x8xf32>
    %cst_112 = arith.constant dense<0.000000e+00> : vector<128x256xf32>
    %202 = tpu.matmul %201, %200, %cst_112 {dimension_numbers = #tpu.dot_dimension_numbers<[1], [0], [0], [1], [0, 0, 1, 1], [], []>} : vector<128x8xf32>, vector<8x256xf32>, vector<128x256xf32> -> vector<128x256xf32>
    %c0_113 = arith.constant 0 : index
    %c0_114 = arith.constant 0 : index
    %203 = vector.load %arg3[%c0_113, %c0_114] : memref<8x1xf32, #tpu.memory_space<vmem>>, vector<8x1xf32>
    %204 = vector.broadcast %203 : vector<8x1xf32> to vector<8x256xf32>
    %205 = arith.mulf %204, %200 : vector<8x256xf32>
    %cst_115 = arith.constant dense<0.000000e+00> : vector<256xf32>
    %206 = vector.multi_reduction <add>, %205, %cst_115 [0] : vector<8x256xf32> to vector<256xf32>
    %207 = vector.shape_cast %206 : vector<256xf32> to vector<1x256xf32>
    %c0_116 = arith.constant 0 : index
    %c0_117 = arith.constant 0 : index
    %208 = vector.load %arg4[%c0_116, %c0_117] : memref<8x8xf32, #tpu.memory_space<vmem>>, vector<8x8xf32>
    %cst_118 = arith.constant dense<0.000000e+00> : vector<8x256xf32>
    %209 = tpu.matmul %208, %200, %cst_118 {dimension_numbers = #tpu.dot_dimension_numbers<[1], [0], [0], [1], [0, 0, 1, 1], [], []>} : vector<8x8xf32>, vector<8x256xf32>, vector<8x256xf32> -> vector<8x256xf32>
    %210 = arith.mulf %200, %209 : vector<8x256xf32>
    %cst_119 = arith.constant dense<0.000000e+00> : vector<256xf32>
    %211 = vector.multi_reduction <add>, %210, %cst_119 [0] : vector<8x256xf32> to vector<256xf32>
    %212 = vector.shape_cast %211 : vector<256xf32> to vector<1x256xf32>
    %213 = arith.mulf %207, %207 : vector<1x256xf32>
    %214 = arith.subf %212, %213 : vector<1x256xf32>
    %cst_120 = arith.constant 0.000000e+00 : f32
    %215 = vector.broadcast %cst_120 : f32 to vector<1x256xf32>
    %216 = arith.maximumf %214, %215 : vector<1x256xf32>
    %c0_121 = arith.constant 0 : index
    %c1280_122 = arith.constant 1280 : index
    %217 = vector.load %arg5[%c0_121, %c1280_122] : memref<1x4096xf32, #tpu.memory_space<vmem>>, vector<1x256xf32>
    %cst_123 = arith.constant 9.99999974E-6 : f32
    %218 = vector.broadcast %cst_123 : f32 to vector<1x256xf32>
    %219 = arith.addf %216, %218 : vector<1x256xf32>
    %220 = math.rsqrt %219 : vector<1x256xf32>
    %221 = arith.mulf %217, %220 : vector<1x256xf32>
    %c0_124 = arith.constant 0 : index
    %c1280_125 = arith.constant 1280 : index
    %222 = vector.load %arg6[%c0_124, %c1280_125] : memref<1x4096xf32, #tpu.memory_space<vmem>>, vector<1x256xf32>
    %223 = arith.mulf %207, %221 : vector<1x256xf32>
    %224 = arith.subf %222, %223 : vector<1x256xf32>
    %225 = vector.shape_cast %202 : vector<128x256xf32> to vector<2x64x256xf32>
    %cst_126 = arith.constant dense<0xFF800000> : vector<2x256xf32>
    %226 = vector.multi_reduction <maximumf>, %225, %cst_126 [1] : vector<2x64x256xf32> to vector<2x256xf32>
    %cst_127 = arith.constant dense<0x7F800000> : vector<2x256xf32>
    %227 = vector.multi_reduction <minimumf>, %225, %cst_127 [1] : vector<2x64x256xf32> to vector<2x256xf32>
    %cst_128 = arith.constant 0.000000e+00 : f32
    %228 = vector.broadcast %cst_128 : f32 to vector<1x256xf32>
    %229 = arith.cmpf oge, %221, %228 : vector<1x256xf32>
    %230 = vector.broadcast %221 : vector<1x256xf32> to vector<2x256xf32>
    %231 = arith.mulf %226, %230 : vector<2x256xf32>
    %232 = vector.broadcast %221 : vector<1x256xf32> to vector<2x256xf32>
    %233 = arith.mulf %227, %232 : vector<2x256xf32>
    %234 = vector.shape_cast %229 : vector<1x256xi1> to vector<1x256xi1>
    %235 = vector.broadcast %234 : vector<1x256xi1> to vector<2x256xi1>
    %236 = arith.select %235, %231, %233 : vector<2x256xi1>, vector<2x256xf32>
    %237 = vector.broadcast %224 : vector<1x256xf32> to vector<2x256xf32>
    %238 = arith.addf %236, %237 : vector<2x256xf32>
    %c0_129 = arith.constant 0 : index
    %c1280_130 = arith.constant 1280 : index
    %239 = vector.load %arg7[%c0_129, %c1280_130] : memref<2x4096xf32, #tpu.memory_space<vmem>>, vector<2x256xf32>
    tpu.vector_store %arg7[%c0_129, %c1280_130], %238 {strides = array<i32>} : memref<2x4096xf32, #tpu.memory_space<vmem>>, vector<2x256xf32>,
    %c0_131 = arith.constant 0 : index
    %c1536 = arith.constant 1536 : index
    %240 = vector.load %arg2[%c0_131, %c1536] : memref<8x4096xf32, #tpu.memory_space<vmem>>, vector<8x256xf32>
    %c0_132 = arith.constant 0 : index
    %c0_133 = arith.constant 0 : index
    %241 = vector.load %arg1[%c0_132, %c0_133] : memref<128x8xf32, #tpu.memory_space<vmem>>, vector<128x8xf32>
    %cst_134 = arith.constant dense<0.000000e+00> : vector<128x256xf32>
    %242 = tpu.matmul %241, %240, %cst_134 {dimension_numbers = #tpu.dot_dimension_numbers<[1], [0], [0], [1], [0, 0, 1, 1], [], []>} : vector<128x8xf32>, vector<8x256xf32>, vector<128x256xf32> -> vector<128x256xf32>
    %c0_135 = arith.constant 0 : index
    %c0_136 = arith.constant 0 : index
    %243 = vector.load %arg3[%c0_135, %c0_136] : memref<8x1xf32, #tpu.memory_space<vmem>>, vector<8x1xf32>
    %244 = vector.broadcast %243 : vector<8x1xf32> to vector<8x256xf32>
    %245 = arith.mulf %244, %240 : vector<8x256xf32>
    %cst_137 = arith.constant dense<0.000000e+00> : vector<256xf32>
    %246 = vector.multi_reduction <add>, %245, %cst_137 [0] : vector<8x256xf32> to vector<256xf32>
    %247 = vector.shape_cast %246 : vector<256xf32> to vector<1x256xf32>
    %c0_138 = arith.constant 0 : index
    %c0_139 = arith.constant 0 : index
    %248 = vector.load %arg4[%c0_138, %c0_139] : memref<8x8xf32, #tpu.memory_space<vmem>>, vector<8x8xf32>
    %cst_140 = arith.constant dense<0.000000e+00> : vector<8x256xf32>
    %249 = tpu.matmul %248, %240, %cst_140 {dimension_numbers = #tpu.dot_dimension_numbers<[1], [0], [0], [1], [0, 0, 1, 1], [], []>} : vector<8x8xf32>, vector<8x256xf32>, vector<8x256xf32> -> vector<8x256xf32>
    %250 = arith.mulf %240, %249 : vector<8x256xf32>
    %cst_141 = arith.constant dense<0.000000e+00> : vector<256xf32>
    %251 = vector.multi_reduction <add>, %250, %cst_141 [0] : vector<8x256xf32> to vector<256xf32>
    %252 = vector.shape_cast %251 : vector<256xf32> to vector<1x256xf32>
    %253 = arith.mulf %247, %247 : vector<1x256xf32>
    %254 = arith.subf %252, %253 : vector<1x256xf32>
    %cst_142 = arith.constant 0.000000e+00 : f32
    %255 = vector.broadcast %cst_142 : f32 to vector<1x256xf32>
    %256 = arith.maximumf %254, %255 : vector<1x256xf32>
    %c0_143 = arith.constant 0 : index
    %c1536_144 = arith.constant 1536 : index
    %257 = vector.load %arg5[%c0_143, %c1536_144] : memref<1x4096xf32, #tpu.memory_space<vmem>>, vector<1x256xf32>
    %cst_145 = arith.constant 9.99999974E-6 : f32
    %258 = vector.broadcast %cst_145 : f32 to vector<1x256xf32>
    %259 = arith.addf %256, %258 : vector<1x256xf32>
    %260 = math.rsqrt %259 : vector<1x256xf32>
    %261 = arith.mulf %257, %260 : vector<1x256xf32>
    %c0_146 = arith.constant 0 : index
    %c1536_147 = arith.constant 1536 : index
    %262 = vector.load %arg6[%c0_146, %c1536_147] : memref<1x4096xf32, #tpu.memory_space<vmem>>, vector<1x256xf32>
    %263 = arith.mulf %247, %261 : vector<1x256xf32>
    %264 = arith.subf %262, %263 : vector<1x256xf32>
    %265 = vector.shape_cast %242 : vector<128x256xf32> to vector<2x64x256xf32>
    %cst_148 = arith.constant dense<0xFF800000> : vector<2x256xf32>
    %266 = vector.multi_reduction <maximumf>, %265, %cst_148 [1] : vector<2x64x256xf32> to vector<2x256xf32>
    %cst_149 = arith.constant dense<0x7F800000> : vector<2x256xf32>
    %267 = vector.multi_reduction <minimumf>, %265, %cst_149 [1] : vector<2x64x256xf32> to vector<2x256xf32>
    %cst_150 = arith.constant 0.000000e+00 : f32
    %268 = vector.broadcast %cst_150 : f32 to vector<1x256xf32>
    %269 = arith.cmpf oge, %261, %268 : vector<1x256xf32>
    %270 = vector.broadcast %261 : vector<1x256xf32> to vector<2x256xf32>
    %271 = arith.mulf %266, %270 : vector<2x256xf32>
    %272 = vector.broadcast %261 : vector<1x256xf32> to vector<2x256xf32>
    %273 = arith.mulf %267, %272 : vector<2x256xf32>
    %274 = vector.shape_cast %269 : vector<1x256xi1> to vector<1x256xi1>
    %275 = vector.broadcast %274 : vector<1x256xi1> to vector<2x256xi1>
    %276 = arith.select %275, %271, %273 : vector<2x256xi1>, vector<2x256xf32>
    %277 = vector.broadcast %264 : vector<1x256xf32> to vector<2x256xf32>
    %278 = arith.addf %276, %277 : vector<2x256xf32>
    %c0_151 = arith.constant 0 : index
    %c1536_152 = arith.constant 1536 : index
    %279 = vector.load %arg7[%c0_151, %c1536_152] : memref<2x4096xf32, #tpu.memory_space<vmem>>, vector<2x256xf32>
    tpu.vector_store %arg7[%c0_151, %c1536_152], %278 {strides = array<i32>} : memref<2x4096xf32, #tpu.memory_space<vmem>>, vector<2x256xf32>,
    %c0_153 = arith.constant 0 : index
    %c1792 = arith.constant 1792 : index
    %280 = vector.load %arg2[%c0_153, %c1792] : memref<8x4096xf32, #tpu.memory_space<vmem>>, vector<8x256xf32>
    %c0_154 = arith.constant 0 : index
    %c0_155 = arith.constant 0 : index
    %281 = vector.load %arg1[%c0_154, %c0_155] : memref<128x8xf32, #tpu.memory_space<vmem>>, vector<128x8xf32>
    %cst_156 = arith.constant dense<0.000000e+00> : vector<128x256xf32>
    %282 = tpu.matmul %281, %280, %cst_156 {dimension_numbers = #tpu.dot_dimension_numbers<[1], [0], [0], [1], [0, 0, 1, 1], [], []>} : vector<128x8xf32>, vector<8x256xf32>, vector<128x256xf32> -> vector<128x256xf32>
    %c0_157 = arith.constant 0 : index
    %c0_158 = arith.constant 0 : index
    %283 = vector.load %arg3[%c0_157, %c0_158] : memref<8x1xf32, #tpu.memory_space<vmem>>, vector<8x1xf32>
    %284 = vector.broadcast %283 : vector<8x1xf32> to vector<8x256xf32>
    %285 = arith.mulf %284, %280 : vector<8x256xf32>
    %cst_159 = arith.constant dense<0.000000e+00> : vector<256xf32>
    %286 = vector.multi_reduction <add>, %285, %cst_159 [0] : vector<8x256xf32> to vector<256xf32>
    %287 = vector.shape_cast %286 : vector<256xf32> to vector<1x256xf32>
    %c0_160 = arith.constant 0 : index
    %c0_161 = arith.constant 0 : index
    %288 = vector.load %arg4[%c0_160, %c0_161] : memref<8x8xf32, #tpu.memory_space<vmem>>, vector<8x8xf32>
    %cst_162 = arith.constant dense<0.000000e+00> : vector<8x256xf32>
    %289 = tpu.matmul %288, %280, %cst_162 {dimension_numbers = #tpu.dot_dimension_numbers<[1], [0], [0], [1], [0, 0, 1, 1], [], []>} : vector<8x8xf32>, vector<8x256xf32>, vector<8x256xf32> -> vector<8x256xf32>
    %290 = arith.mulf %280, %289 : vector<8x256xf32>
    %cst_163 = arith.constant dense<0.000000e+00> : vector<256xf32>
    %291 = vector.multi_reduction <add>, %290, %cst_163 [0] : vector<8x256xf32> to vector<256xf32>
    %292 = vector.shape_cast %291 : vector<256xf32> to vector<1x256xf32>
    %293 = arith.mulf %287, %287 : vector<1x256xf32>
    %294 = arith.subf %292, %293 : vector<1x256xf32>
    %cst_164 = arith.constant 0.000000e+00 : f32
    %295 = vector.broadcast %cst_164 : f32 to vector<1x256xf32>
    %296 = arith.maximumf %294, %295 : vector<1x256xf32>
    %c0_165 = arith.constant 0 : index
    %c1792_166 = arith.constant 1792 : index
    %297 = vector.load %arg5[%c0_165, %c1792_166] : memref<1x4096xf32, #tpu.memory_space<vmem>>, vector<1x256xf32>
    %cst_167 = arith.constant 9.99999974E-6 : f32
    %298 = vector.broadcast %cst_167 : f32 to vector<1x256xf32>
    %299 = arith.addf %296, %298 : vector<1x256xf32>
    %300 = math.rsqrt %299 : vector<1x256xf32>
    %301 = arith.mulf %297, %300 : vector<1x256xf32>
    %c0_168 = arith.constant 0 : index
    %c1792_169 = arith.constant 1792 : index
    %302 = vector.load %arg6[%c0_168, %c1792_169] : memref<1x4096xf32, #tpu.memory_space<vmem>>, vector<1x256xf32>
    %303 = arith.mulf %287, %301 : vector<1x256xf32>
    %304 = arith.subf %302, %303 : vector<1x256xf32>
    %305 = vector.shape_cast %282 : vector<128x256xf32> to vector<2x64x256xf32>
    %cst_170 = arith.constant dense<0xFF800000> : vector<2x256xf32>
    %306 = vector.multi_reduction <maximumf>, %305, %cst_170 [1] : vector<2x64x256xf32> to vector<2x256xf32>
    %cst_171 = arith.constant dense<0x7F800000> : vector<2x256xf32>
    %307 = vector.multi_reduction <minimumf>, %305, %cst_171 [1] : vector<2x64x256xf32> to vector<2x256xf32>
    %cst_172 = arith.constant 0.000000e+00 : f32
    %308 = vector.broadcast %cst_172 : f32 to vector<1x256xf32>
    %309 = arith.cmpf oge, %301, %308 : vector<1x256xf32>
    %310 = vector.broadcast %301 : vector<1x256xf32> to vector<2x256xf32>
    %311 = arith.mulf %306, %310 : vector<2x256xf32>
    %312 = vector.broadcast %301 : vector<1x256xf32> to vector<2x256xf32>
    %313 = arith.mulf %307, %312 : vector<2x256xf32>
    %314 = vector.shape_cast %309 : vector<1x256xi1> to vector<1x256xi1>
    %315 = vector.broadcast %314 : vector<1x256xi1> to vector<2x256xi1>
    %316 = arith.select %315, %311, %313 : vector<2x256xi1>, vector<2x256xf32>
    %317 = vector.broadcast %304 : vector<1x256xf32> to vector<2x256xf32>
    %318 = arith.addf %316, %317 : vector<2x256xf32>
    %c0_173 = arith.constant 0 : index
    %c1792_174 = arith.constant 1792 : index
    %319 = vector.load %arg7[%c0_173, %c1792_174] : memref<2x4096xf32, #tpu.memory_space<vmem>>, vector<2x256xf32>
    tpu.vector_store %arg7[%c0_173, %c1792_174], %318 {strides = array<i32>} : memref<2x4096xf32, #tpu.memory_space<vmem>>, vector<2x256xf32>,
    %c0_175 = arith.constant 0 : index
    %c2048 = arith.constant 2048 : index
    %320 = vector.load %arg2[%c0_175, %c2048] : memref<8x4096xf32, #tpu.memory_space<vmem>>, vector<8x256xf32>
    %c0_176 = arith.constant 0 : index
    %c0_177 = arith.constant 0 : index
    %321 = vector.load %arg1[%c0_176, %c0_177] : memref<128x8xf32, #tpu.memory_space<vmem>>, vector<128x8xf32>
    %cst_178 = arith.constant dense<0.000000e+00> : vector<128x256xf32>
    %322 = tpu.matmul %321, %320, %cst_178 {dimension_numbers = #tpu.dot_dimension_numbers<[1], [0], [0], [1], [0, 0, 1, 1], [], []>} : vector<128x8xf32>, vector<8x256xf32>, vector<128x256xf32> -> vector<128x256xf32>
    %c0_179 = arith.constant 0 : index
    %c0_180 = arith.constant 0 : index
    %323 = vector.load %arg3[%c0_179, %c0_180] : memref<8x1xf32, #tpu.memory_space<vmem>>, vector<8x1xf32>
    %324 = vector.broadcast %323 : vector<8x1xf32> to vector<8x256xf32>
    %325 = arith.mulf %324, %320 : vector<8x256xf32>
    %cst_181 = arith.constant dense<0.000000e+00> : vector<256xf32>
    %326 = vector.multi_reduction <add>, %325, %cst_181 [0] : vector<8x256xf32> to vector<256xf32>
    %327 = vector.shape_cast %326 : vector<256xf32> to vector<1x256xf32>
    %c0_182 = arith.constant 0 : index
    %c0_183 = arith.constant 0 : index
    %328 = vector.load %arg4[%c0_182, %c0_183] : memref<8x8xf32, #tpu.memory_space<vmem>>, vector<8x8xf32>
    %cst_184 = arith.constant dense<0.000000e+00> : vector<8x256xf32>
    %329 = tpu.matmul %328, %320, %cst_184 {dimension_numbers = #tpu.dot_dimension_numbers<[1], [0], [0], [1], [0, 0, 1, 1], [], []>} : vector<8x8xf32>, vector<8x256xf32>, vector<8x256xf32> -> vector<8x256xf32>
    %330 = arith.mulf %320, %329 : vector<8x256xf32>
    %cst_185 = arith.constant dense<0.000000e+00> : vector<256xf32>
    %331 = vector.multi_reduction <add>, %330, %cst_185 [0] : vector<8x256xf32> to vector<256xf32>
    %332 = vector.shape_cast %331 : vector<256xf32> to vector<1x256xf32>
    %333 = arith.mulf %327, %327 : vector<1x256xf32>
    %334 = arith.subf %332, %333 : vector<1x256xf32>
    %cst_186 = arith.constant 0.000000e+00 : f32
    %335 = vector.broadcast %cst_186 : f32 to vector<1x256xf32>
    %336 = arith.maximumf %334, %335 : vector<1x256xf32>
    %c0_187 = arith.constant 0 : index
    %c2048_188 = arith.constant 2048 : index
    %337 = vector.load %arg5[%c0_187, %c2048_188] : memref<1x4096xf32, #tpu.memory_space<vmem>>, vector<1x256xf32>
    %cst_189 = arith.constant 9.99999974E-6 : f32
    %338 = vector.broadcast %cst_189 : f32 to vector<1x256xf32>
    %339 = arith.addf %336, %338 : vector<1x256xf32>
    %340 = math.rsqrt %339 : vector<1x256xf32>
    %341 = arith.mulf %337, %340 : vector<1x256xf32>
    %c0_190 = arith.constant 0 : index
    %c2048_191 = arith.constant 2048 : index
    %342 = vector.load %arg6[%c0_190, %c2048_191] : memref<1x4096xf32, #tpu.memory_space<vmem>>, vector<1x256xf32>
    %343 = arith.mulf %327, %341 : vector<1x256xf32>
    %344 = arith.subf %342, %343 : vector<1x256xf32>
    %345 = vector.shape_cast %322 : vector<128x256xf32> to vector<2x64x256xf32>
    %cst_192 = arith.constant dense<0xFF800000> : vector<2x256xf32>
    %346 = vector.multi_reduction <maximumf>, %345, %cst_192 [1] : vector<2x64x256xf32> to vector<2x256xf32>
    %cst_193 = arith.constant dense<0x7F800000> : vector<2x256xf32>
    %347 = vector.multi_reduction <minimumf>, %345, %cst_193 [1] : vector<2x64x256xf32> to vector<2x256xf32>
    %cst_194 = arith.constant 0.000000e+00 : f32
    %348 = vector.broadcast %cst_194 : f32 to vector<1x256xf32>
    %349 = arith.cmpf oge, %341, %348 : vector<1x256xf32>
    %350 = vector.broadcast %341 : vector<1x256xf32> to vector<2x256xf32>
    %351 = arith.mulf %346, %350 : vector<2x256xf32>
    %352 = vector.broadcast %341 : vector<1x256xf32> to vector<2x256xf32>
    %353 = arith.mulf %347, %352 : vector<2x256xf32>
    %354 = vector.shape_cast %349 : vector<1x256xi1> to vector<1x256xi1>
    %355 = vector.broadcast %354 : vector<1x256xi1> to vector<2x256xi1>
    %356 = arith.select %355, %351, %353 : vector<2x256xi1>, vector<2x256xf32>
    %357 = vector.broadcast %344 : vector<1x256xf32> to vector<2x256xf32>
    %358 = arith.addf %356, %357 : vector<2x256xf32>
    %c0_195 = arith.constant 0 : index
    %c2048_196 = arith.constant 2048 : index
    %359 = vector.load %arg7[%c0_195, %c2048_196] : memref<2x4096xf32, #tpu.memory_space<vmem>>, vector<2x256xf32>
    tpu.vector_store %arg7[%c0_195, %c2048_196], %358 {strides = array<i32>} : memref<2x4096xf32, #tpu.memory_space<vmem>>, vector<2x256xf32>,
    %c0_197 = arith.constant 0 : index
    %c2304 = arith.constant 2304 : index
    %360 = vector.load %arg2[%c0_197, %c2304] : memref<8x4096xf32, #tpu.memory_space<vmem>>, vector<8x256xf32>
    %c0_198 = arith.constant 0 : index
    %c0_199 = arith.constant 0 : index
    %361 = vector.load %arg1[%c0_198, %c0_199] : memref<128x8xf32, #tpu.memory_space<vmem>>, vector<128x8xf32>
    %cst_200 = arith.constant dense<0.000000e+00> : vector<128x256xf32>
    %362 = tpu.matmul %361, %360, %cst_200 {dimension_numbers = #tpu.dot_dimension_numbers<[1], [0], [0], [1], [0, 0, 1, 1], [], []>} : vector<128x8xf32>, vector<8x256xf32>, vector<128x256xf32> -> vector<128x256xf32>
    %c0_201 = arith.constant 0 : index
    %c0_202 = arith.constant 0 : index
    %363 = vector.load %arg3[%c0_201, %c0_202] : memref<8x1xf32, #tpu.memory_space<vmem>>, vector<8x1xf32>
    %364 = vector.broadcast %363 : vector<8x1xf32> to vector<8x256xf32>
    %365 = arith.mulf %364, %360 : vector<8x256xf32>
    %cst_203 = arith.constant dense<0.000000e+00> : vector<256xf32>
    %366 = vector.multi_reduction <add>, %365, %cst_203 [0] : vector<8x256xf32> to vector<256xf32>
    %367 = vector.shape_cast %366 : vector<256xf32> to vector<1x256xf32>
    %c0_204 = arith.constant 0 : index
    %c0_205 = arith.constant 0 : index
    %368 = vector.load %arg4[%c0_204, %c0_205] : memref<8x8xf32, #tpu.memory_space<vmem>>, vector<8x8xf32>
    %cst_206 = arith.constant dense<0.000000e+00> : vector<8x256xf32>
    %369 = tpu.matmul %368, %360, %cst_206 {dimension_numbers = #tpu.dot_dimension_numbers<[1], [0], [0], [1], [0, 0, 1, 1], [], []>} : vector<8x8xf32>, vector<8x256xf32>, vector<8x256xf32> -> vector<8x256xf32>
    %370 = arith.mulf %360, %369 : vector<8x256xf32>
    %cst_207 = arith.constant dense<0.000000e+00> : vector<256xf32>
    %371 = vector.multi_reduction <add>, %370, %cst_207 [0] : vector<8x256xf32> to vector<256xf32>
    %372 = vector.shape_cast %371 : vector<256xf32> to vector<1x256xf32>
    %373 = arith.mulf %367, %367 : vector<1x256xf32>
    %374 = arith.subf %372, %373 : vector<1x256xf32>
    %cst_208 = arith.constant 0.000000e+00 : f32
    %375 = vector.broadcast %cst_208 : f32 to vector<1x256xf32>
    %376 = arith.maximumf %374, %375 : vector<1x256xf32>
    %c0_209 = arith.constant 0 : index
    %c2304_210 = arith.constant 2304 : index
    %377 = vector.load %arg5[%c0_209, %c2304_210] : memref<1x4096xf32, #tpu.memory_space<vmem>>, vector<1x256xf32>
    %cst_211 = arith.constant 9.99999974E-6 : f32
    %378 = vector.broadcast %cst_211 : f32 to vector<1x256xf32>
    %379 = arith.addf %376, %378 : vector<1x256xf32>
    %380 = math.rsqrt %379 : vector<1x256xf32>
    %381 = arith.mulf %377, %380 : vector<1x256xf32>
    %c0_212 = arith.constant 0 : index
    %c2304_213 = arith.constant 2304 : index
    %382 = vector.load %arg6[%c0_212, %c2304_213] : memref<1x4096xf32, #tpu.memory_space<vmem>>, vector<1x256xf32>
    %383 = arith.mulf %367, %381 : vector<1x256xf32>
    %384 = arith.subf %382, %383 : vector<1x256xf32>
    %385 = vector.shape_cast %362 : vector<128x256xf32> to vector<2x64x256xf32>
    %cst_214 = arith.constant dense<0xFF800000> : vector<2x256xf32>
    %386 = vector.multi_reduction <maximumf>, %385, %cst_214 [1] : vector<2x64x256xf32> to vector<2x256xf32>
    %cst_215 = arith.constant dense<0x7F800000> : vector<2x256xf32>
    %387 = vector.multi_reduction <minimumf>, %385, %cst_215 [1] : vector<2x64x256xf32> to vector<2x256xf32>
    %cst_216 = arith.constant 0.000000e+00 : f32
    %388 = vector.broadcast %cst_216 : f32 to vector<1x256xf32>
    %389 = arith.cmpf oge, %381, %388 : vector<1x256xf32>
    %390 = vector.broadcast %381 : vector<1x256xf32> to vector<2x256xf32>
    %391 = arith.mulf %386, %390 : vector<2x256xf32>
    %392 = vector.broadcast %381 : vector<1x256xf32> to vector<2x256xf32>
    %393 = arith.mulf %387, %392 : vector<2x256xf32>
    %394 = vector.shape_cast %389 : vector<1x256xi1> to vector<1x256xi1>
    %395 = vector.broadcast %394 : vector<1x256xi1> to vector<2x256xi1>
    %396 = arith.select %395, %391, %393 : vector<2x256xi1>, vector<2x256xf32>
    %397 = vector.broadcast %384 : vector<1x256xf32> to vector<2x256xf32>
    %398 = arith.addf %396, %397 : vector<2x256xf32>
    %c0_217 = arith.constant 0 : index
    %c2304_218 = arith.constant 2304 : index
    %399 = vector.load %arg7[%c0_217, %c2304_218] : memref<2x4096xf32, #tpu.memory_space<vmem>>, vector<2x256xf32>
    tpu.vector_store %arg7[%c0_217, %c2304_218], %398 {strides = array<i32>} : memref<2x4096xf32, #tpu.memory_space<vmem>>, vector<2x256xf32>,
    %c0_219 = arith.constant 0 : index
    %c2560 = arith.constant 2560 : index
    %400 = vector.load %arg2[%c0_219, %c2560] : memref<8x4096xf32, #tpu.memory_space<vmem>>, vector<8x256xf32>
    %c0_220 = arith.constant 0 : index
    %c0_221 = arith.constant 0 : index
    %401 = vector.load %arg1[%c0_220, %c0_221] : memref<128x8xf32, #tpu.memory_space<vmem>>, vector<128x8xf32>
    %cst_222 = arith.constant dense<0.000000e+00> : vector<128x256xf32>
    %402 = tpu.matmul %401, %400, %cst_222 {dimension_numbers = #tpu.dot_dimension_numbers<[1], [0], [0], [1], [0, 0, 1, 1], [], []>} : vector<128x8xf32>, vector<8x256xf32>, vector<128x256xf32> -> vector<128x256xf32>
    %c0_223 = arith.constant 0 : index
    %c0_224 = arith.constant 0 : index
    %403 = vector.load %arg3[%c0_223, %c0_224] : memref<8x1xf32, #tpu.memory_space<vmem>>, vector<8x1xf32>
    %404 = vector.broadcast %403 : vector<8x1xf32> to vector<8x256xf32>
    %405 = arith.mulf %404, %400 : vector<8x256xf32>
    %cst_225 = arith.constant dense<0.000000e+00> : vector<256xf32>
    %406 = vector.multi_reduction <add>, %405, %cst_225 [0] : vector<8x256xf32> to vector<256xf32>
    %407 = vector.shape_cast %406 : vector<256xf32> to vector<1x256xf32>
    %c0_226 = arith.constant 0 : index
    %c0_227 = arith.constant 0 : index
    %408 = vector.load %arg4[%c0_226, %c0_227] : memref<8x8xf32, #tpu.memory_space<vmem>>, vector<8x8xf32>
    %cst_228 = arith.constant dense<0.000000e+00> : vector<8x256xf32>
    %409 = tpu.matmul %408, %400, %cst_228 {dimension_numbers = #tpu.dot_dimension_numbers<[1], [0], [0], [1], [0, 0, 1, 1], [], []>} : vector<8x8xf32>, vector<8x256xf32>, vector<8x256xf32> -> vector<8x256xf32>
    %410 = arith.mulf %400, %409 : vector<8x256xf32>
    %cst_229 = arith.constant dense<0.000000e+00> : vector<256xf32>
    %411 = vector.multi_reduction <add>, %410, %cst_229 [0] : vector<8x256xf32> to vector<256xf32>
    %412 = vector.shape_cast %411 : vector<256xf32> to vector<1x256xf32>
    %413 = arith.mulf %407, %407 : vector<1x256xf32>
    %414 = arith.subf %412, %413 : vector<1x256xf32>
    %cst_230 = arith.constant 0.000000e+00 : f32
    %415 = vector.broadcast %cst_230 : f32 to vector<1x256xf32>
    %416 = arith.maximumf %414, %415 : vector<1x256xf32>
    %c0_231 = arith.constant 0 : index
    %c2560_232 = arith.constant 2560 : index
    %417 = vector.load %arg5[%c0_231, %c2560_232] : memref<1x4096xf32, #tpu.memory_space<vmem>>, vector<1x256xf32>
    %cst_233 = arith.constant 9.99999974E-6 : f32
    %418 = vector.broadcast %cst_233 : f32 to vector<1x256xf32>
    %419 = arith.addf %416, %418 : vector<1x256xf32>
    %420 = math.rsqrt %419 : vector<1x256xf32>
    %421 = arith.mulf %417, %420 : vector<1x256xf32>
    %c0_234 = arith.constant 0 : index
    %c2560_235 = arith.constant 2560 : index
    %422 = vector.load %arg6[%c0_234, %c2560_235] : memref<1x4096xf32, #tpu.memory_space<vmem>>, vector<1x256xf32>
    %423 = arith.mulf %407, %421 : vector<1x256xf32>
    %424 = arith.subf %422, %423 : vector<1x256xf32>
    %425 = vector.shape_cast %402 : vector<128x256xf32> to vector<2x64x256xf32>
    %cst_236 = arith.constant dense<0xFF800000> : vector<2x256xf32>
    %426 = vector.multi_reduction <maximumf>, %425, %cst_236 [1] : vector<2x64x256xf32> to vector<2x256xf32>
    %cst_237 = arith.constant dense<0x7F800000> : vector<2x256xf32>
    %427 = vector.multi_reduction <minimumf>, %425, %cst_237 [1] : vector<2x64x256xf32> to vector<2x256xf32>
    %cst_238 = arith.constant 0.000000e+00 : f32
    %428 = vector.broadcast %cst_238 : f32 to vector<1x256xf32>
    %429 = arith.cmpf oge, %421, %428 : vector<1x256xf32>
    %430 = vector.broadcast %421 : vector<1x256xf32> to vector<2x256xf32>
    %431 = arith.mulf %426, %430 : vector<2x256xf32>
    %432 = vector.broadcast %421 : vector<1x256xf32> to vector<2x256xf32>
    %433 = arith.mulf %427, %432 : vector<2x256xf32>
    %434 = vector.shape_cast %429 : vector<1x256xi1> to vector<1x256xi1>
    %435 = vector.broadcast %434 : vector<1x256xi1> to vector<2x256xi1>
    %436 = arith.select %435, %431, %433 : vector<2x256xi1>, vector<2x256xf32>
    %437 = vector.broadcast %424 : vector<1x256xf32> to vector<2x256xf32>
    %438 = arith.addf %436, %437 : vector<2x256xf32>
    %c0_239 = arith.constant 0 : index
    %c2560_240 = arith.constant 2560 : index
    %439 = vector.load %arg7[%c0_239, %c2560_240] : memref<2x4096xf32, #tpu.memory_space<vmem>>, vector<2x256xf32>
    tpu.vector_store %arg7[%c0_239, %c2560_240], %438 {strides = array<i32>} : memref<2x4096xf32, #tpu.memory_space<vmem>>, vector<2x256xf32>,
    %c0_241 = arith.constant 0 : index
    %c2816 = arith.constant 2816 : index
    %440 = vector.load %arg2[%c0_241, %c2816] : memref<8x4096xf32, #tpu.memory_space<vmem>>, vector<8x256xf32>
    %c0_242 = arith.constant 0 : index
    %c0_243 = arith.constant 0 : index
    %441 = vector.load %arg1[%c0_242, %c0_243] : memref<128x8xf32, #tpu.memory_space<vmem>>, vector<128x8xf32>
    %cst_244 = arith.constant dense<0.000000e+00> : vector<128x256xf32>
    %442 = tpu.matmul %441, %440, %cst_244 {dimension_numbers = #tpu.dot_dimension_numbers<[1], [0], [0], [1], [0, 0, 1, 1], [], []>} : vector<128x8xf32>, vector<8x256xf32>, vector<128x256xf32> -> vector<128x256xf32>
    %c0_245 = arith.constant 0 : index
    %c0_246 = arith.constant 0 : index
    %443 = vector.load %arg3[%c0_245, %c0_246] : memref<8x1xf32, #tpu.memory_space<vmem>>, vector<8x1xf32>
    %444 = vector.broadcast %443 : vector<8x1xf32> to vector<8x256xf32>
    %445 = arith.mulf %444, %440 : vector<8x256xf32>
    %cst_247 = arith.constant dense<0.000000e+00> : vector<256xf32>
    %446 = vector.multi_reduction <add>, %445, %cst_247 [0] : vector<8x256xf32> to vector<256xf32>
    %447 = vector.shape_cast %446 : vector<256xf32> to vector<1x256xf32>
    %c0_248 = arith.constant 0 : index
    %c0_249 = arith.constant 0 : index
    %448 = vector.load %arg4[%c0_248, %c0_249] : memref<8x8xf32, #tpu.memory_space<vmem>>, vector<8x8xf32>
    %cst_250 = arith.constant dense<0.000000e+00> : vector<8x256xf32>
    %449 = tpu.matmul %448, %440, %cst_250 {dimension_numbers = #tpu.dot_dimension_numbers<[1], [0], [0], [1], [0, 0, 1, 1], [], []>} : vector<8x8xf32>, vector<8x256xf32>, vector<8x256xf32> -> vector<8x256xf32>
    %450 = arith.mulf %440, %449 : vector<8x256xf32>
    %cst_251 = arith.constant dense<0.000000e+00> : vector<256xf32>
    %451 = vector.multi_reduction <add>, %450, %cst_251 [0] : vector<8x256xf32> to vector<256xf32>
    %452 = vector.shape_cast %451 : vector<256xf32> to vector<1x256xf32>
    %453 = arith.mulf %447, %447 : vector<1x256xf32>
    %454 = arith.subf %452, %453 : vector<1x256xf32>
    %cst_252 = arith.constant 0.000000e+00 : f32
    %455 = vector.broadcast %cst_252 : f32 to vector<1x256xf32>
    %456 = arith.maximumf %454, %455 : vector<1x256xf32>
    %c0_253 = arith.constant 0 : index
    %c2816_254 = arith.constant 2816 : index
    %457 = vector.load %arg5[%c0_253, %c2816_254] : memref<1x4096xf32, #tpu.memory_space<vmem>>, vector<1x256xf32>
    %cst_255 = arith.constant 9.99999974E-6 : f32
    %458 = vector.broadcast %cst_255 : f32 to vector<1x256xf32>
    %459 = arith.addf %456, %458 : vector<1x256xf32>
    %460 = math.rsqrt %459 : vector<1x256xf32>
    %461 = arith.mulf %457, %460 : vector<1x256xf32>
    %c0_256 = arith.constant 0 : index
    %c2816_257 = arith.constant 2816 : index
    %462 = vector.load %arg6[%c0_256, %c2816_257] : memref<1x4096xf32, #tpu.memory_space<vmem>>, vector<1x256xf32>
    %463 = arith.mulf %447, %461 : vector<1x256xf32>
    %464 = arith.subf %462, %463 : vector<1x256xf32>
    %465 = vector.shape_cast %442 : vector<128x256xf32> to vector<2x64x256xf32>
    %cst_258 = arith.constant dense<0xFF800000> : vector<2x256xf32>
    %466 = vector.multi_reduction <maximumf>, %465, %cst_258 [1] : vector<2x64x256xf32> to vector<2x256xf32>
    %cst_259 = arith.constant dense<0x7F800000> : vector<2x256xf32>
    %467 = vector.multi_reduction <minimumf>, %465, %cst_259 [1] : vector<2x64x256xf32> to vector<2x256xf32>
    %cst_260 = arith.constant 0.000000e+00 : f32
    %468 = vector.broadcast %cst_260 : f32 to vector<1x256xf32>
    %469 = arith.cmpf oge, %461, %468 : vector<1x256xf32>
    %470 = vector.broadcast %461 : vector<1x256xf32> to vector<2x256xf32>
    %471 = arith.mulf %466, %470 : vector<2x256xf32>
    %472 = vector.broadcast %461 : vector<1x256xf32> to vector<2x256xf32>
    %473 = arith.mulf %467, %472 : vector<2x256xf32>
    %474 = vector.shape_cast %469 : vector<1x256xi1> to vector<1x256xi1>
    %475 = vector.broadcast %474 : vector<1x256xi1> to vector<2x256xi1>
    %476 = arith.select %475, %471, %473 : vector<2x256xi1>, vector<2x256xf32>
    %477 = vector.broadcast %464 : vector<1x256xf32> to vector<2x256xf32>
    %478 = arith.addf %476, %477 : vector<2x256xf32>
    %c0_261 = arith.constant 0 : index
    %c2816_262 = arith.constant 2816 : index
    %479 = vector.load %arg7[%c0_261, %c2816_262] : memref<2x4096xf32, #tpu.memory_space<vmem>>, vector<2x256xf32>
    tpu.vector_store %arg7[%c0_261, %c2816_262], %478 {strides = array<i32>} : memref<2x4096xf32, #tpu.memory_space<vmem>>, vector<2x256xf32>,
    %c0_263 = arith.constant 0 : index
    %c3072 = arith.constant 3072 : index
    %480 = vector.load %arg2[%c0_263, %c3072] : memref<8x4096xf32, #tpu.memory_space<vmem>>, vector<8x256xf32>
    %c0_264 = arith.constant 0 : index
    %c0_265 = arith.constant 0 : index
    %481 = vector.load %arg1[%c0_264, %c0_265] : memref<128x8xf32, #tpu.memory_space<vmem>>, vector<128x8xf32>
    %cst_266 = arith.constant dense<0.000000e+00> : vector<128x256xf32>
    %482 = tpu.matmul %481, %480, %cst_266 {dimension_numbers = #tpu.dot_dimension_numbers<[1], [0], [0], [1], [0, 0, 1, 1], [], []>} : vector<128x8xf32>, vector<8x256xf32>, vector<128x256xf32> -> vector<128x256xf32>
    %c0_267 = arith.constant 0 : index
    %c0_268 = arith.constant 0 : index
    %483 = vector.load %arg3[%c0_267, %c0_268] : memref<8x1xf32, #tpu.memory_space<vmem>>, vector<8x1xf32>
    %484 = vector.broadcast %483 : vector<8x1xf32> to vector<8x256xf32>
    %485 = arith.mulf %484, %480 : vector<8x256xf32>
    %cst_269 = arith.constant dense<0.000000e+00> : vector<256xf32>
    %486 = vector.multi_reduction <add>, %485, %cst_269 [0] : vector<8x256xf32> to vector<256xf32>
    %487 = vector.shape_cast %486 : vector<256xf32> to vector<1x256xf32>
    %c0_270 = arith.constant 0 : index
    %c0_271 = arith.constant 0 : index
    %488 = vector.load %arg4[%c0_270, %c0_271] : memref<8x8xf32, #tpu.memory_space<vmem>>, vector<8x8xf32>
    %cst_272 = arith.constant dense<0.000000e+00> : vector<8x256xf32>
    %489 = tpu.matmul %488, %480, %cst_272 {dimension_numbers = #tpu.dot_dimension_numbers<[1], [0], [0], [1], [0, 0, 1, 1], [], []>} : vector<8x8xf32>, vector<8x256xf32>, vector<8x256xf32> -> vector<8x256xf32>
    %490 = arith.mulf %480, %489 : vector<8x256xf32>
    %cst_273 = arith.constant dense<0.000000e+00> : vector<256xf32>
    %491 = vector.multi_reduction <add>, %490, %cst_273 [0] : vector<8x256xf32> to vector<256xf32>
    %492 = vector.shape_cast %491 : vector<256xf32> to vector<1x256xf32>
    %493 = arith.mulf %487, %487 : vector<1x256xf32>
    %494 = arith.subf %492, %493 : vector<1x256xf32>
    %cst_274 = arith.constant 0.000000e+00 : f32
    %495 = vector.broadcast %cst_274 : f32 to vector<1x256xf32>
    %496 = arith.maximumf %494, %495 : vector<1x256xf32>
    %c0_275 = arith.constant 0 : index
    %c3072_276 = arith.constant 3072 : index
    %497 = vector.load %arg5[%c0_275, %c3072_276] : memref<1x4096xf32, #tpu.memory_space<vmem>>, vector<1x256xf32>
    %cst_277 = arith.constant 9.99999974E-6 : f32
    %498 = vector.broadcast %cst_277 : f32 to vector<1x256xf32>
    %499 = arith.addf %496, %498 : vector<1x256xf32>
    %500 = math.rsqrt %499 : vector<1x256xf32>
    %501 = arith.mulf %497, %500 : vector<1x256xf32>
    %c0_278 = arith.constant 0 : index
    %c3072_279 = arith.constant 3072 : index
    %502 = vector.load %arg6[%c0_278, %c3072_279] : memref<1x4096xf32, #tpu.memory_space<vmem>>, vector<1x256xf32>
    %503 = arith.mulf %487, %501 : vector<1x256xf32>
    %504 = arith.subf %502, %503 : vector<1x256xf32>
    %505 = vector.shape_cast %482 : vector<128x256xf32> to vector<2x64x256xf32>
    %cst_280 = arith.constant dense<0xFF800000> : vector<2x256xf32>
    %506 = vector.multi_reduction <maximumf>, %505, %cst_280 [1] : vector<2x64x256xf32> to vector<2x256xf32>
    %cst_281 = arith.constant dense<0x7F800000> : vector<2x256xf32>
    %507 = vector.multi_reduction <minimumf>, %505, %cst_281 [1] : vector<2x64x256xf32> to vector<2x256xf32>
    %cst_282 = arith.constant 0.000000e+00 : f32
    %508 = vector.broadcast %cst_282 : f32 to vector<1x256xf32>
    %509 = arith.cmpf oge, %501, %508 : vector<1x256xf32>
    %510 = vector.broadcast %501 : vector<1x256xf32> to vector<2x256xf32>
    %511 = arith.mulf %506, %510 : vector<2x256xf32>
    %512 = vector.broadcast %501 : vector<1x256xf32> to vector<2x256xf32>
    %513 = arith.mulf %507, %512 : vector<2x256xf32>
    %514 = vector.shape_cast %509 : vector<1x256xi1> to vector<1x256xi1>
    %515 = vector.broadcast %514 : vector<1x256xi1> to vector<2x256xi1>
    %516 = arith.select %515, %511, %513 : vector<2x256xi1>, vector<2x256xf32>
    %517 = vector.broadcast %504 : vector<1x256xf32> to vector<2x256xf32>
    %518 = arith.addf %516, %517 : vector<2x256xf32>
    %c0_283 = arith.constant 0 : index
    %c3072_284 = arith.constant 3072 : index
    %519 = vector.load %arg7[%c0_283, %c3072_284] : memref<2x4096xf32, #tpu.memory_space<vmem>>, vector<2x256xf32>
    tpu.vector_store %arg7[%c0_283, %c3072_284], %518 {strides = array<i32>} : memref<2x4096xf32, #tpu.memory_space<vmem>>, vector<2x256xf32>,
    %c0_285 = arith.constant 0 : index
    %c3328 = arith.constant 3328 : index
    %520 = vector.load %arg2[%c0_285, %c3328] : memref<8x4096xf32, #tpu.memory_space<vmem>>, vector<8x256xf32>
    %c0_286 = arith.constant 0 : index
    %c0_287 = arith.constant 0 : index
    %521 = vector.load %arg1[%c0_286, %c0_287] : memref<128x8xf32, #tpu.memory_space<vmem>>, vector<128x8xf32>
    %cst_288 = arith.constant dense<0.000000e+00> : vector<128x256xf32>
    %522 = tpu.matmul %521, %520, %cst_288 {dimension_numbers = #tpu.dot_dimension_numbers<[1], [0], [0], [1], [0, 0, 1, 1], [], []>} : vector<128x8xf32>, vector<8x256xf32>, vector<128x256xf32> -> vector<128x256xf32>
    %c0_289 = arith.constant 0 : index
    %c0_290 = arith.constant 0 : index
    %523 = vector.load %arg3[%c0_289, %c0_290] : memref<8x1xf32, #tpu.memory_space<vmem>>, vector<8x1xf32>
    %524 = vector.broadcast %523 : vector<8x1xf32> to vector<8x256xf32>
    %525 = arith.mulf %524, %520 : vector<8x256xf32>
    %cst_291 = arith.constant dense<0.000000e+00> : vector<256xf32>
    %526 = vector.multi_reduction <add>, %525, %cst_291 [0] : vector<8x256xf32> to vector<256xf32>
    %527 = vector.shape_cast %526 : vector<256xf32> to vector<1x256xf32>
    %c0_292 = arith.constant 0 : index
    %c0_293 = arith.constant 0 : index
    %528 = vector.load %arg4[%c0_292, %c0_293] : memref<8x8xf32, #tpu.memory_space<vmem>>, vector<8x8xf32>
    %cst_294 = arith.constant dense<0.000000e+00> : vector<8x256xf32>
    %529 = tpu.matmul %528, %520, %cst_294 {dimension_numbers = #tpu.dot_dimension_numbers<[1], [0], [0], [1], [0, 0, 1, 1], [], []>} : vector<8x8xf32>, vector<8x256xf32>, vector<8x256xf32> -> vector<8x256xf32>
    %530 = arith.mulf %520, %529 : vector<8x256xf32>
    %cst_295 = arith.constant dense<0.000000e+00> : vector<256xf32>
    %531 = vector.multi_reduction <add>, %530, %cst_295 [0] : vector<8x256xf32> to vector<256xf32>
    %532 = vector.shape_cast %531 : vector<256xf32> to vector<1x256xf32>
    %533 = arith.mulf %527, %527 : vector<1x256xf32>
    %534 = arith.subf %532, %533 : vector<1x256xf32>
    %cst_296 = arith.constant 0.000000e+00 : f32
    %535 = vector.broadcast %cst_296 : f32 to vector<1x256xf32>
    %536 = arith.maximumf %534, %535 : vector<1x256xf32>
    %c0_297 = arith.constant 0 : index
    %c3328_298 = arith.constant 3328 : index
    %537 = vector.load %arg5[%c0_297, %c3328_298] : memref<1x4096xf32, #tpu.memory_space<vmem>>, vector<1x256xf32>
    %cst_299 = arith.constant 9.99999974E-6 : f32
    %538 = vector.broadcast %cst_299 : f32 to vector<1x256xf32>
    %539 = arith.addf %536, %538 : vector<1x256xf32>
    %540 = math.rsqrt %539 : vector<1x256xf32>
    %541 = arith.mulf %537, %540 : vector<1x256xf32>
    %c0_300 = arith.constant 0 : index
    %c3328_301 = arith.constant 3328 : index
    %542 = vector.load %arg6[%c0_300, %c3328_301] : memref<1x4096xf32, #tpu.memory_space<vmem>>, vector<1x256xf32>
    %543 = arith.mulf %527, %541 : vector<1x256xf32>
    %544 = arith.subf %542, %543 : vector<1x256xf32>
    %545 = vector.shape_cast %522 : vector<128x256xf32> to vector<2x64x256xf32>
    %cst_302 = arith.constant dense<0xFF800000> : vector<2x256xf32>
    %546 = vector.multi_reduction <maximumf>, %545, %cst_302 [1] : vector<2x64x256xf32> to vector<2x256xf32>
    %cst_303 = arith.constant dense<0x7F800000> : vector<2x256xf32>
    %547 = vector.multi_reduction <minimumf>, %545, %cst_303 [1] : vector<2x64x256xf32> to vector<2x256xf32>
    %cst_304 = arith.constant 0.000000e+00 : f32
    %548 = vector.broadcast %cst_304 : f32 to vector<1x256xf32>
    %549 = arith.cmpf oge, %541, %548 : vector<1x256xf32>
    %550 = vector.broadcast %541 : vector<1x256xf32> to vector<2x256xf32>
    %551 = arith.mulf %546, %550 : vector<2x256xf32>
    %552 = vector.broadcast %541 : vector<1x256xf32> to vector<2x256xf32>
    %553 = arith.mulf %547, %552 : vector<2x256xf32>
    %554 = vector.shape_cast %549 : vector<1x256xi1> to vector<1x256xi1>
    %555 = vector.broadcast %554 : vector<1x256xi1> to vector<2x256xi1>
    %556 = arith.select %555, %551, %553 : vector<2x256xi1>, vector<2x256xf32>
    %557 = vector.broadcast %544 : vector<1x256xf32> to vector<2x256xf32>
    %558 = arith.addf %556, %557 : vector<2x256xf32>
    %c0_305 = arith.constant 0 : index
    %c3328_306 = arith.constant 3328 : index
    %559 = vector.load %arg7[%c0_305, %c3328_306] : memref<2x4096xf32, #tpu.memory_space<vmem>>, vector<2x256xf32>
    tpu.vector_store %arg7[%c0_305, %c3328_306], %558 {strides = array<i32>} : memref<2x4096xf32, #tpu.memory_space<vmem>>, vector<2x256xf32>,
    %c0_307 = arith.constant 0 : index
    %c3584 = arith.constant 3584 : index
    %560 = vector.load %arg2[%c0_307, %c3584] : memref<8x4096xf32, #tpu.memory_space<vmem>>, vector<8x256xf32>
    %c0_308 = arith.constant 0 : index
    %c0_309 = arith.constant 0 : index
    %561 = vector.load %arg1[%c0_308, %c0_309] : memref<128x8xf32, #tpu.memory_space<vmem>>, vector<128x8xf32>
    %cst_310 = arith.constant dense<0.000000e+00> : vector<128x256xf32>
    %562 = tpu.matmul %561, %560, %cst_310 {dimension_numbers = #tpu.dot_dimension_numbers<[1], [0], [0], [1], [0, 0, 1, 1], [], []>} : vector<128x8xf32>, vector<8x256xf32>, vector<128x256xf32> -> vector<128x256xf32>
    %c0_311 = arith.constant 0 : index
    %c0_312 = arith.constant 0 : index
    %563 = vector.load %arg3[%c0_311, %c0_312] : memref<8x1xf32, #tpu.memory_space<vmem>>, vector<8x1xf32>
    %564 = vector.broadcast %563 : vector<8x1xf32> to vector<8x256xf32>
    %565 = arith.mulf %564, %560 : vector<8x256xf32>
    %cst_313 = arith.constant dense<0.000000e+00> : vector<256xf32>
    %566 = vector.multi_reduction <add>, %565, %cst_313 [0] : vector<8x256xf32> to vector<256xf32>
    %567 = vector.shape_cast %566 : vector<256xf32> to vector<1x256xf32>
    %c0_314 = arith.constant 0 : index
    %c0_315 = arith.constant 0 : index
    %568 = vector.load %arg4[%c0_314, %c0_315] : memref<8x8xf32, #tpu.memory_space<vmem>>, vector<8x8xf32>
    %cst_316 = arith.constant dense<0.000000e+00> : vector<8x256xf32>
    %569 = tpu.matmul %568, %560, %cst_316 {dimension_numbers = #tpu.dot_dimension_numbers<[1], [0], [0], [1], [0, 0, 1, 1], [], []>} : vector<8x8xf32>, vector<8x256xf32>, vector<8x256xf32> -> vector<8x256xf32>
    %570 = arith.mulf %560, %569 : vector<8x256xf32>
    %cst_317 = arith.constant dense<0.000000e+00> : vector<256xf32>
    %571 = vector.multi_reduction <add>, %570, %cst_317 [0] : vector<8x256xf32> to vector<256xf32>
    %572 = vector.shape_cast %571 : vector<256xf32> to vector<1x256xf32>
    %573 = arith.mulf %567, %567 : vector<1x256xf32>
    %574 = arith.subf %572, %573 : vector<1x256xf32>
    %cst_318 = arith.constant 0.000000e+00 : f32
    %575 = vector.broadcast %cst_318 : f32 to vector<1x256xf32>
    %576 = arith.maximumf %574, %575 : vector<1x256xf32>
    %c0_319 = arith.constant 0 : index
    %c3584_320 = arith.constant 3584 : index
    %577 = vector.load %arg5[%c0_319, %c3584_320] : memref<1x4096xf32, #tpu.memory_space<vmem>>, vector<1x256xf32>
    %cst_321 = arith.constant 9.99999974E-6 : f32
    %578 = vector.broadcast %cst_321 : f32 to vector<1x256xf32>
    %579 = arith.addf %576, %578 : vector<1x256xf32>
    %580 = math.rsqrt %579 : vector<1x256xf32>
    %581 = arith.mulf %577, %580 : vector<1x256xf32>
    %c0_322 = arith.constant 0 : index
    %c3584_323 = arith.constant 3584 : index
    %582 = vector.load %arg6[%c0_322, %c3584_323] : memref<1x4096xf32, #tpu.memory_space<vmem>>, vector<1x256xf32>
    %583 = arith.mulf %567, %581 : vector<1x256xf32>
    %584 = arith.subf %582, %583 : vector<1x256xf32>
    %585 = vector.shape_cast %562 : vector<128x256xf32> to vector<2x64x256xf32>
    %cst_324 = arith.constant dense<0xFF800000> : vector<2x256xf32>
    %586 = vector.multi_reduction <maximumf>, %585, %cst_324 [1] : vector<2x64x256xf32> to vector<2x256xf32>
    %cst_325 = arith.constant dense<0x7F800000> : vector<2x256xf32>
    %587 = vector.multi_reduction <minimumf>, %585, %cst_325 [1] : vector<2x64x256xf32> to vector<2x256xf32>
    %cst_326 = arith.constant 0.000000e+00 : f32
    %588 = vector.broadcast %cst_326 : f32 to vector<1x256xf32>
    %589 = arith.cmpf oge, %581, %588 : vector<1x256xf32>
    %590 = vector.broadcast %581 : vector<1x256xf32> to vector<2x256xf32>
    %591 = arith.mulf %586, %590 : vector<2x256xf32>
    %592 = vector.broadcast %581 : vector<1x256xf32> to vector<2x256xf32>
    %593 = arith.mulf %587, %592 : vector<2x256xf32>
    %594 = vector.shape_cast %589 : vector<1x256xi1> to vector<1x256xi1>
    %595 = vector.broadcast %594 : vector<1x256xi1> to vector<2x256xi1>
    %596 = arith.select %595, %591, %593 : vector<2x256xi1>, vector<2x256xf32>
    %597 = vector.broadcast %584 : vector<1x256xf32> to vector<2x256xf32>
    %598 = arith.addf %596, %597 : vector<2x256xf32>
    %c0_327 = arith.constant 0 : index
    %c3584_328 = arith.constant 3584 : index
    %599 = vector.load %arg7[%c0_327, %c3584_328] : memref<2x4096xf32, #tpu.memory_space<vmem>>, vector<2x256xf32>
    tpu.vector_store %arg7[%c0_327, %c3584_328], %598 {strides = array<i32>} : memref<2x4096xf32, #tpu.memory_space<vmem>>, vector<2x256xf32>,
    %c0_329 = arith.constant 0 : index
    %c3840 = arith.constant 3840 : index
    %600 = vector.load %arg2[%c0_329, %c3840] : memref<8x4096xf32, #tpu.memory_space<vmem>>, vector<8x256xf32>
    %c0_330 = arith.constant 0 : index
    %c0_331 = arith.constant 0 : index
    %601 = vector.load %arg1[%c0_330, %c0_331] : memref<128x8xf32, #tpu.memory_space<vmem>>, vector<128x8xf32>
    %cst_332 = arith.constant dense<0.000000e+00> : vector<128x256xf32>
    %602 = tpu.matmul %601, %600, %cst_332 {dimension_numbers = #tpu.dot_dimension_numbers<[1], [0], [0], [1], [0, 0, 1, 1], [], []>} : vector<128x8xf32>, vector<8x256xf32>, vector<128x256xf32> -> vector<128x256xf32>
    %c0_333 = arith.constant 0 : index
    %c0_334 = arith.constant 0 : index
    %603 = vector.load %arg3[%c0_333, %c0_334] : memref<8x1xf32, #tpu.memory_space<vmem>>, vector<8x1xf32>
    %604 = vector.broadcast %603 : vector<8x1xf32> to vector<8x256xf32>
    %605 = arith.mulf %604, %600 : vector<8x256xf32>
    %cst_335 = arith.constant dense<0.000000e+00> : vector<256xf32>
    %606 = vector.multi_reduction <add>, %605, %cst_335 [0] : vector<8x256xf32> to vector<256xf32>
    %607 = vector.shape_cast %606 : vector<256xf32> to vector<1x256xf32>
    %c0_336 = arith.constant 0 : index
    %c0_337 = arith.constant 0 : index
    %608 = vector.load %arg4[%c0_336, %c0_337] : memref<8x8xf32, #tpu.memory_space<vmem>>, vector<8x8xf32>
    %cst_338 = arith.constant dense<0.000000e+00> : vector<8x256xf32>
    %609 = tpu.matmul %608, %600, %cst_338 {dimension_numbers = #tpu.dot_dimension_numbers<[1], [0], [0], [1], [0, 0, 1, 1], [], []>} : vector<8x8xf32>, vector<8x256xf32>, vector<8x256xf32> -> vector<8x256xf32>
    %610 = arith.mulf %600, %609 : vector<8x256xf32>
    %cst_339 = arith.constant dense<0.000000e+00> : vector<256xf32>
    %611 = vector.multi_reduction <add>, %610, %cst_339 [0] : vector<8x256xf32> to vector<256xf32>
    %612 = vector.shape_cast %611 : vector<256xf32> to vector<1x256xf32>
    %613 = arith.mulf %607, %607 : vector<1x256xf32>
    %614 = arith.subf %612, %613 : vector<1x256xf32>
    %cst_340 = arith.constant 0.000000e+00 : f32
    %615 = vector.broadcast %cst_340 : f32 to vector<1x256xf32>
    %616 = arith.maximumf %614, %615 : vector<1x256xf32>
    %c0_341 = arith.constant 0 : index
    %c3840_342 = arith.constant 3840 : index
    %617 = vector.load %arg5[%c0_341, %c3840_342] : memref<1x4096xf32, #tpu.memory_space<vmem>>, vector<1x256xf32>
    %cst_343 = arith.constant 9.99999974E-6 : f32
    %618 = vector.broadcast %cst_343 : f32 to vector<1x256xf32>
    %619 = arith.addf %616, %618 : vector<1x256xf32>
    %620 = math.rsqrt %619 : vector<1x256xf32>
    %621 = arith.mulf %617, %620 : vector<1x256xf32>
    %c0_344 = arith.constant 0 : index
    %c3840_345 = arith.constant 3840 : index
    %622 = vector.load %arg6[%c0_344, %c3840_345] : memref<1x4096xf32, #tpu.memory_space<vmem>>, vector<1x256xf32>
    %623 = arith.mulf %607, %621 : vector<1x256xf32>
    %624 = arith.subf %622, %623 : vector<1x256xf32>
    %625 = vector.shape_cast %602 : vector<128x256xf32> to vector<2x64x256xf32>
    %cst_346 = arith.constant dense<0xFF800000> : vector<2x256xf32>
    %626 = vector.multi_reduction <maximumf>, %625, %cst_346 [1] : vector<2x64x256xf32> to vector<2x256xf32>
    %cst_347 = arith.constant dense<0x7F800000> : vector<2x256xf32>
    %627 = vector.multi_reduction <minimumf>, %625, %cst_347 [1] : vector<2x64x256xf32> to vector<2x256xf32>
    %cst_348 = arith.constant 0.000000e+00 : f32
    %628 = vector.broadcast %cst_348 : f32 to vector<1x256xf32>
    %629 = arith.cmpf oge, %621, %628 : vector<1x256xf32>
    %630 = vector.broadcast %621 : vector<1x256xf32> to vector<2x256xf32>
    %631 = arith.mulf %626, %630 : vector<2x256xf32>
    %632 = vector.broadcast %621 : vector<1x256xf32> to vector<2x256xf32>
    %633 = arith.mulf %627, %632 : vector<2x256xf32>
    %634 = vector.shape_cast %629 : vector<1x256xi1> to vector<1x256xi1>
    %635 = vector.broadcast %634 : vector<1x256xi1> to vector<2x256xi1>
    %636 = arith.select %635, %631, %633 : vector<2x256xi1>, vector<2x256xf32>
    %637 = vector.broadcast %624 : vector<1x256xf32> to vector<2x256xf32>
    %638 = arith.addf %636, %637 : vector<2x256xf32>
    %c0_349 = arith.constant 0 : index
    %c3840_350 = arith.constant 3840 : index
    %639 = vector.load %arg7[%c0_349, %c3840_350] : memref<2x4096xf32, #tpu.memory_space<vmem>>, vector<2x256xf32>
    tpu.vector_store %arg7[%c0_349, %c3840_350], %638 {strides = array<i32>} : memref<2x4096xf32, #tpu.memory_space<vmem>>, vector<2x256xf32>,
    return
  }
  func.func @transform_0(%arg0: i32) -> (i32, i32) {
    %c0_i32 = arith.constant 0 : i32
    %c0_i32_0 = arith.constant 0 : i32
    %c0_i32_1 = arith.constant 0 : i32
    return %c0_i32, %c0_i32_0 : i32, i32
  }
  func.func @transform_1(%arg0: i32) -> (i32, i32) {
    %c0_i32 = arith.constant 0 : i32
    %c0_i32_0 = arith.constant 0 : i32
    return %c0_i32, %arg0 : i32, i32
  }
  func.func @transform_2(%arg0: i32) -> (i32, i32) {
    %c0_i32 = arith.constant 0 : i32
    %c0_i32_0 = arith.constant 0 : i32
    %c0_i32_1 = arith.constant 0 : i32
    return %c0_i32, %c0_i32_0 : i32, i32
  }
  func.func @transform_3(%arg0: i32) -> (i32, i32) {
    %c0_i32 = arith.constant 0 : i32
    %c0_i32_0 = arith.constant 0 : i32
    %c0_i32_1 = arith.constant 0 : i32
    return %c0_i32, %c0_i32_0 : i32, i32
  }
  func.func @transform_4(%arg0: i32) -> (i32, i32) {
    %c0_i32 = arith.constant 0 : i32
    %c0_i32_0 = arith.constant 0 : i32
    return %c0_i32, %arg0 : i32, i32
  }
  func.func @transform_5(%arg0: i32) -> (i32, i32) {
    %c0_i32 = arith.constant 0 : i32
    %c0_i32_0 = arith.constant 0 : i32
    return %c0_i32, %arg0 : i32, i32
  }
  func.func @transform_6(%arg0: i32) -> (i32, i32) {
    %c0_i32 = arith.constant 0 : i32
    %c0_i32_0 = arith.constant 0 : i32
    return %c0_i32, %arg0 : i32, i32
  }
}

</mosaic_0001>

<llo_original>
// kernel: tpu_custom_call.1
$region0: #{tpu_custom_call.1}
  #allocation0 [shape = 'u32[]', space=smem, size = 0x4, offset = 0x4, fixed_abs, tag = 'smem constant byte address 0x4 - core index']
  #allocation1 [shape = 'u32[144,128]{1,0:T(1,128)}', space=vmem, size = 0x12000, scoped, tag = 'internal scratch']
  %s0 = inlined_call_operand.vmem [shape: f32[128,8], index: 0, kind: input, shape index: {}]
  %s1 = inlined_call_operand.hbm [shape: f32[8,8192], index: 1, kind: input, shape index: {}]
  %s2 = inlined_call_operand.vmem [shape: f32[8,1], index: 2, kind: input, shape index: {}]
  %s3 = inlined_call_operand.vmem [shape: f32[8,8], index: 3, kind: input, shape index: {}]
  %s4 = inlined_call_operand.vmem [shape: f32[1,8192], index: 4, kind: input, shape index: {}]
  %s5 = inlined_call_operand.vmem [shape: f32[1,8192], index: 5, kind: input, shape index: {}]
  %s6 = inlined_call_operand.hbm [shape: f32[2,8192], index: 6, kind: output, shape index: {}]
  %s7 = sld [smem:[#allocation0]]
  $region61: #{tpu_custom_call.1} parent=0
    _
  %s9 = ssub.s32 1, %s7
  %s10 = scalar_select 0, %s9, %s7
  $region1: #{tpu_custom_call.1} parent=0
    #allocation2 [shape = 'u8[262144]{0}', space=vmem, size = 0x40000, scoped, tag = 'input window, operand 1']
    #allocation3 [shape = 's32[2]{0}', space=sflag, size = 0x8, scoped, tag = 'scoped memory for tpu_custom_call.1']
    #allocation4 [shape = 's32[2]{0}', space=sflag, size = 0x8, scoped, tag = 'scoped memory for tpu_custom_call.1']
    #allocation5 [shape = 'u8[65536]{0}', space=vmem, size = 0x10000, scoped, tag = 'output window, operand 0']
    %11 = vsyncpa [#allocation3], 0
    %s12 = scalar_lea.sflag [#allocation3], 1
    %13 = vsyncpa %s12, 0
    %14 = vsyncpa [#allocation4], 0
    %s15 = scalar_lea.sflag [#allocation4], 1
    %16 = vsyncpa %s15, 0
    loop: start=0, step=1, limit=4
    $region2: #{tpu_custom_call.1} parent=1 // loop_pre_header
      _
    $region3: #{tpu_custom_call.1} parent=1 // loop_header
      %s18 = sphi 0, %s22
      %p19 = scmp.ge.s32.totalorder %s18, 4
      %s26 = sphi 0, %s26
      %s28 = sphi 0, %s26
      %s29 = sphi 0, %s28
      %s43 = sphi 0, %s29
      %s49 = sphi 0, %s51
      %s52 = sphi 0, %s49
      %s53 = sphi 0, %s52
      %s69 = sphi 0, %s53
      %s73 = sphi 0, %s73
      %s75 = sphi 0, %s73
      %s76 = sphi 0, %s75
      %s90 = sphi 0, %s76
      %s94 = sphi 0, %s94
      %s96 = sphi 0, %s94
      %s97 = sphi 0, %s96
      %s111 = sphi 0, %s97
      %s117 = sphi 0, %s119
      %s120 = sphi 0, %s117
      %s121 = sphi 0, %s120
      %s137 = sphi 0, %s121
      %s143 = sphi 0, %s145
      %s146 = sphi 0, %s143
      %s147 = sphi 0, %s146
      %s163 = sphi 0, %s147
      %s169 = sphi 0, %s171
      %s172 = sphi 0, %s169
      %s173 = sphi 0, %s172
      %s189 = sphi 0, %s173
    $region4: #{tpu_custom_call.1} parent=1 // loop_header_branch
      %21 = sbr.rel (%p19) target = $region8
    $region5: #{tpu_custom_call.1} parent=1 // loop_body
      %s23 = ssub.s32 %s18, 1
      %s24 = ssub.s32 %s18, 2
      %s25 = sadd.s32 %s18, 1
      %s27 = sadd.s32 %s26, 1
      %p30 = scmp.eq.s32.totalorder %s18, 1
      %p31 = scmp.ne.s32.totalorder %s26, %s28
      %p32 = scmp.eq.s32.totalorder %s18, 0
      %p33 = por %p31, %p32
      %p34 = scmp.ne.s32.totalorder %s26, %s28
      %p35 = scmp.eq.s32.totalorder %s23, 1
      %p36 = por %p34, %p35
      %p37 = scmp.ne.s32.totalorder %s28, %s29
      %p38 = scmp.eq.s32.totalorder %s23, 0
      %p39 = por %p37, %p38
      %p40 = scmp.ne.s32.totalorder %s28, %s29
      %p41 = scmp.eq.s32.totalorder %s24, 1
      %p42 = por %p40, %p41
      %p44 = scmp.ne.s32.totalorder %s29, %s43
      %p45 = scmp.eq.s32.totalorder %s24, 0
      %p46 = por %p44, %p45
      %s47 = ssub.s32 %s18, %s25
      %p48 = scmp.eq.s32.totalorder %s47, 0
      %s50 = sadd.s32 %s49, 1
      %s51 = scalar_select %p48, %s49, %s50
      %p54 = pneg %p48
      %p55 = scmp.eq.s32.totalorder %s18, 1
      %p56 = por %p54, %p55
      %p57 = scmp.ne.s32.totalorder %s49, %s52
      %p58 = scmp.eq.s32.totalorder %s18, 0
      %p59 = por %p57, %p58
      %p60 = scmp.ne.s32.totalorder %s49, %s52
      %p61 = scmp.eq.s32.totalorder %s23, 1
      %p62 = por %p60, %p61
      %p63 = scmp.ne.s32.totalorder %s52, %s53
      %p64 = scmp.eq.s32.totalorder %s23, 0
      %p65 = por %p63, %p64
      %p66 = scmp.ne.s32.totalorder %s52, %s53
      %p67 = scmp.eq.s32.totalorder %s24, 1
      %p68 = por %p66, %p67
      %p70 = scmp.ne.s32.totalorder %s53, %s69
      %p71 = scmp.eq.s32.totalorder %s24, 0
      %p72 = por %p70, %p71
      %s74 = sadd.s32 %s73, 1
      %p77 = scmp.eq.s32.totalorder %s18, 1
      %p78 = scmp.ne.s32.totalorder %s73, %s75
      %p79 = scmp.eq.s32.totalorder %s18, 0
      %p80 = por %p78, %p79
      %p81 = scmp.ne.s32.totalorder %s73, %s75
      %p82 = scmp.eq.s32.totalorder %s23, 1
      %p83 = por %p81, %p82
      %p84 = scmp.ne.s32.totalorder %s75, %s76
      %p85 = scmp.eq.s32.totalorder %s23, 0
      %p86 = por %p84, %p85
      %p87 = scmp.ne.s32.totalorder %s75, %s76
      %p88 = scmp.eq.s32.totalorder %s24, 1
      %p89 = por %p87, %p88
      %p91 = scmp.ne.s32.totalorder %s76, %s90
      %p92 = scmp.eq.s32.totalorder %s24, 0
      %p93 = por %p91, %p92
      %s95 = sadd.s32 %s94, 1
      %p98 = scmp.eq.s32.totalorder %s18, 1
      %p99 = scmp.ne.s32.totalorder %s94, %s96
      %p100 = scmp.eq.s32.totalorder %s18, 0
      %p101 = por %p99, %p100
      %p102 = scmp.ne.s32.totalorder %s94, %s96
      %p103 = scmp.eq.s32.totalorder %s23, 1
      %p104 = por %p102, %p103
      %p105 = scmp.ne.s32.totalorder %s96, %s97
      %p106 = scmp.eq.s32.totalorder %s23, 0
      %p107 = por %p105, %p106
      %p108 = scmp.ne.s32.totalorder %s96, %s97
      %p109 = scmp.eq.s32.totalorder %s24, 1
      %p110 = por %p108, %p109
      %p112 = scmp.ne.s32.totalorder %s97, %s111
      %p113 = scmp.eq.s32.totalorder %s24, 0
      %p114 = por %p112, %p113
      %s115 = ssub.s32 %s18, %s25
      %p116 = scmp.eq.s32.totalorder %s115, 0
      %s118 = sadd.s32 %s117, 1
      %s119 = scalar_select %p116, %s117, %s118
      %p122 = pneg %p116
      %p123 = scmp.eq.s32.totalorder %s18, 1
      %p124 = por %p122, %p123
      %p125 = scmp.ne.s32.totalorder %s117, %s120
      %p126 = scmp.eq.s32.totalorder %s18, 0
      %p127 = por %p125, %p126
      %p128 = scmp.ne.s32.totalorder %s117, %s120
      %p129 = scmp.eq.s32.totalorder %s23, 1
      %p130 = por %p128, %p129
      %p131 = scmp.ne.s32.totalorder %s120, %s121
      %p132 = scmp.eq.s32.totalorder %s23, 0
      %p133 = por %p131, %p132
      %p134 = scmp.ne.s32.totalorder %s120, %s121
      %p135 = scmp.eq.s32.totalorder %s24, 1
      %p136 = por %p134, %p135
      %p138 = scmp.ne.s32.totalorder %s121, %s137
      %p139 = scmp.eq.s32.totalorder %s24, 0
      %p140 = por %p138, %p139
      %s141 = ssub.s32 %s18, %s25
      %p142 = scmp.eq.s32.totalorder %s141, 0
      %s144 = sadd.s32 %s143, 1
      %s145 = scalar_select %p142, %s143, %s144
      %p148 = pneg %p142
      %p149 = scmp.eq.s32.totalorder %s18, 1
      %p150 = por %p148, %p149
      %p151 = scmp.ne.s32.totalorder %s143, %s146
      %p152 = scmp.eq.s32.totalorder %s18, 0
      %p153 = por %p151, %p152
      %p154 = scmp.ne.s32.totalorder %s143, %s146
      %p155 = scmp.eq.s32.totalorder %s23, 1
      %p156 = por %p154, %p155
      %p157 = scmp.ne.s32.totalorder %s146, %s147
      %p158 = scmp.eq.s32.totalorder %s23, 0
      %p159 = por %p157, %p158
      %p160 = scmp.ne.s32.totalorder %s146, %s147
      %p161 = scmp.eq.s32.totalorder %s24, 1
      %p162 = por %p160, %p161
      %p164 = scmp.ne.s32.totalorder %s147, %s163
      %p165 = scmp.eq.s32.totalorder %s24, 0
      %p166 = por %p164, %p165
      %s167 = ssub.s32 %s18, %s25
      %p168 = scmp.eq.s32.totalorder %s167, 0
      %s170 = sadd.s32 %s169, 1
      %s171 = scalar_select %p168, %s169, %s170
      %p174 = pneg %p168
      %p175 = scmp.eq.s32.totalorder %s18, 1
      %p176 = por %p174, %p175
      %p177 = scmp.ne.s32.totalorder %s169, %s172
      %p178 = scmp.eq.s32.totalorder %s18, 0
      %p179 = por %p177, %p178
      %p180 = scmp.ne.s32.totalorder %s169, %s172
      %p181 = scmp.eq.s32.totalorder %s23, 1
      %p182 = por %p180, %p181
      %p183 = scmp.ne.s32.totalorder %s172, %s173
      %p184 = scmp.eq.s32.totalorder %s23, 0
      %p185 = por %p183, %p184
      %p186 = scmp.ne.s32.totalorder %s172, %s173
      %p187 = scmp.eq.s32.totalorder %s24, 1
      %p188 = por %p186, %p187
      %p190 = scmp.ne.s32.totalorder %s173, %s189
      %p191 = scmp.eq.s32.totalorder %s24, 0
      %p192 = por %p190, %p191
      %p193 = scmp.le.s32.totalorder 1, %s18
      %p194 = scmp.lt.s32.totalorder %s18, 3
      %p195 = pnand %p193, %p194
      %p196 = pneg %p195
      // Predicated region
      $region9: #{tpu_custom_call.1} parent=5 // pred_check
        _
      $region10: #{tpu_custom_call.1} parent=5 // pred_check_branch
        %198 = sbr.rel (%p195) target = $region12
      $region11: #{tpu_custom_call.1} parent=5 // pred_region
        %s199 = ssub.s32 %s18, 1
        // Predicated region
        $region13: #{tpu_custom_call.1} parent=11 // pred_check
          %p200 = pneg %p39
        $region14: #{tpu_custom_call.1} parent=11 // pred_check_branch
          %202 = sbr.rel (%p200) target = $region16
        $region15: #{tpu_custom_call.1} parent=11 // pred_region
          _
        $region16: #{tpu_custom_call.1} parent=11 // pred_fallthru
          _
        // Predicated region
        $region17: #{tpu_custom_call.1} parent=11 // pred_check
          %p203 = pneg %p86
        $region18: #{tpu_custom_call.1} parent=11 // pred_check_branch
          %205 = sbr.rel (%p203) target = $region20
        $region19: #{tpu_custom_call.1} parent=11 // pred_region
          _
        $region20: #{tpu_custom_call.1} parent=11 // pred_fallthru
          _
        // Predicated region
        $region21: #{tpu_custom_call.1} parent=11 // pred_check
          %p206 = pneg %p107
        $region22: #{tpu_custom_call.1} parent=11 // pred_check_branch
          %208 = sbr.rel (%p206) target = $region24
        $region23: #{tpu_custom_call.1} parent=11 // pred_region
          _
        $region24: #{tpu_custom_call.1} parent=11 // pred_fallthru
          _
      $region12: #{tpu_custom_call.1} parent=5 // pred_fallthru
        _
      %p209 = scmp.lt.s32.totalorder %s18, 2
      // Predicated region
      $region25: #{tpu_custom_call.1} parent=5 // pred_check
        %p210 = pneg %p209
      $region26: #{tpu_custom_call.1} parent=5 // pred_check_branch
        %212 = sbr.rel (%p210) target = $region28
      $region27: #{tpu_custom_call.1} parent=5 // pred_region
        // Predicated region
        $region29: #{tpu_custom_call.1} parent=27 // pred_check
          %p213 = pneg %p59
        $region30: #{tpu_custom_call.1} parent=27 // pred_check_branch
          %215 = sbr.rel (%p213) target = $region32
        $region31: #{tpu_custom_call.1} parent=27 // pred_region
          %s216 = sand.u32 %s49, 1
          %s217 = scalar_lea.sflag [#allocation3], %s216
          %s218 = sand.u32 %s49, 1
          %s219 = smul.addr %s218, 256
          %s220 = scalar_lea.vmem [#allocation2], %s219
          %s221 = smul.u32 32, %s18
          %s223 = ssub.s32 4096, 4096
          %224 = vsyncadd %s217, %s223
          %s225 = smul.addr %s221, 128
          %s226 = scalar_lea.hbm %s1, %s225
          %s228 = sshll.u32 %s220, 4
          %s229 = int_to_ptr.vmem [resolvable:$true] %s228
          %231 = dma.hbm_to_vmem [thread:$0]  %s226, 4096, %s229, %s217
        $region32: #{tpu_custom_call.1} parent=27 // pred_fallthru
          _
        // Predicated region
        $region33: #{tpu_custom_call.1} parent=27 // pred_check
          %p232 = pneg %p127
        $region34: #{tpu_custom_call.1} parent=27 // pred_check_branch
          %234 = sbr.rel (%p232) target = $region36
        $region35: #{tpu_custom_call.1} parent=27 // pred_region
          %s235 = smul.u32 32, %s18
          %p236 = scmp.lt.s32.totalorder %s235, 63
          %s237 = scalar_select %p236, %s235, 63
          %s238 = scalar_lea.vmem %s4, %s237
          %s239 = smul.u32 32, %s18
        $region36: #{tpu_custom_call.1} parent=27 // pred_fallthru
          _
        // Predicated region
        $region37: #{tpu_custom_call.1} parent=27 // pred_check
          %p240 = pneg %p153
        $region38: #{tpu_custom_call.1} parent=27 // pred_check_branch
          %242 = sbr.rel (%p240) target = $region40
        $region39: #{tpu_custom_call.1} parent=27 // pred_region
          %s243 = smul.u32 32, %s18
          %p244 = scmp.lt.s32.totalorder %s243, 63
          %s245 = scalar_select %p244, %s243, 63
          %s246 = scalar_lea.vmem %s5, %s245
          %s247 = smul.u32 32, %s18
        $region40: #{tpu_custom_call.1} parent=27 // pred_fallthru
          _
      $region28: #{tpu_custom_call.1} parent=5 // pred_fallthru
        _
      %p248 = scmp.le.s32.totalorder 1, %s18
      %p249 = scmp.lt.s32.totalorder %s18, 3
      %p250 = pnand %p248, %p249
      %p251 = pneg %p250
      // Predicated region
      $region41: #{tpu_custom_call.1} parent=5 // pred_check
        _
      $region42: #{tpu_custom_call.1} parent=5 // pred_check_branch
        %253 = sbr.rel (%p250) target = $region44
      $region43: #{tpu_custom_call.1} parent=5 // pred_region
        %s254 = ssub.s32 %s18, 1
        %s255 = sand.u32 %s52, 1
        %s256 = scalar_lea.sflag [#allocation3], %s255
        %s257 = sand.u32 %s52, 1
        %s258 = smul.addr %s257, 256
        %s259 = scalar_lea.vmem [#allocation2], %s258
        // Predicated region
        $region45: #{tpu_custom_call.1} parent=43 // pred_check
          %p260 = pneg %p65
        $region46: #{tpu_custom_call.1} parent=43 // pred_check_branch
          %262 = sbr.rel (%p260) target = $region48
        $region47: #{tpu_custom_call.1} parent=43 // pred_region
          %263 = dma.done %s256, 4096
        $region48: #{tpu_custom_call.1} parent=43 // pred_fallthru
          _
        %p264 = pneg %p39
        %p265 = pneg %p36
        %s266 = sand.u32 %s52, 1
        %s267 = scalar_lea.sflag [#allocation3], %s266
        %s268 = sand.u32 %s52, 1
        %s269 = smul.addr %s268, 256
        %s270 = scalar_lea.vmem [#allocation2], %s269
        %p271 = pneg %p65
        %p272 = pneg %p62
        %p273 = pneg %p86
        %p274 = pneg %p83
        %p275 = pneg %p107
        %p276 = pneg %p104
        %s277 = smul.u32 32, %s23
        %p278 = scmp.lt.s32.totalorder %s277, 63
        %s279 = scalar_select %p278, %s277, 63
        %s280 = scalar_lea.vmem %s4, %s279
        %p281 = pneg %p133
        %p282 = pneg %p130
        %s283 = smul.u32 32, %s23
        %p284 = scmp.lt.s32.totalorder %s283, 63
        %s285 = scalar_select %p284, %s283, 63
        %s286 = scalar_lea.vmem %s5, %s285
        %p287 = pneg %p159
        %p288 = pneg %p156
        %p289 = pneg %p185
        %p290 = pneg %p182
        %s291 = sand.u32 %s172, 1
        %s292 = scalar_lea.sflag [#allocation4], %s291
        %s293 = sand.u32 %s172, 1
        %s294 = smul.addr %s293, 64
        %s295 = scalar_lea.vmem [#allocation5], %s294
        %s296 = smul.u32 32, %s23
        %s297 = smul.u32 32, %s23
        %p298 = scmp.lt.s32.totalorder %s297, 63
        %s299 = scalar_select %p298, %s297, 63
        %s300 = scalar_lea.vmem %s4, %s299
        %s301 = smul.u32 32, %s23
        %s302 = smul.u32 32, %s23
        %p303 = scmp.lt.s32.totalorder %s302, 63
        %s304 = scalar_select %p303, %s302, 63
        %s305 = scalar_lea.vmem %s5, %s304
        %s306 = smul.u32 32, %s23
        %s307 = smul.u32 32, %s23
        %v308 = vld [vmem:[%s259] sm:$0xff]
        %v309 = vld [vmem:[%s259 + $0x8] sm:$0xff]
        %v310 = vld [vmem:[%s0] sm:$0xff]
        %v311 = vld [vmem:[%s0 + $0x8] sm:$0xff]
        %v312 = vld [vmem:[%s0 + $0x10] sm:$0xff]
        %v313 = vld [vmem:[%s0 + $0x18] sm:$0xff]
        %v314 = vld [vmem:[%s0 + $0x20] sm:$0xff]
        %v315 = vld [vmem:[%s0 + $0x28] sm:$0xff]
        %v316 = vld [vmem:[%s0 + $0x30] sm:$0xff]
        %v317 = vld [vmem:[%s0 + $0x38] sm:$0xff]
        %v318 = vld [vmem:[%s0 + $0x40] sm:$0xff]
        %v319 = vld [vmem:[%s0 + $0x48] sm:$0xff]
        %v320 = vld [vmem:[%s0 + $0x50] sm:$0xff]
        %v321 = vld [vmem:[%s0 + $0x58] sm:$0xff]
        %v322 = vld [vmem:[%s0 + $0x60] sm:$0xff]
        %v323 = vld [vmem:[%s0 + $0x68] sm:$0xff]
        %v324 = vld [vmem:[%s0 + $0x70] sm:$0xff]
        %v325 = vld [vmem:[%s0 + $0x78] sm:$0xff]
        %vm326 = vcmask 64512
        %v328 = vsel %vm326, %v310, 0
        %v331 = vsel %vm326, %v311, 0
        %v334 = vsel %vm326, %v312, 0
        %v337 = vsel %vm326, %v313, 0
        %v340 = vsel %vm326, %v314, 0
        %v343 = vsel %vm326, %v315, 0
        %v346 = vsel %vm326, %v316, 0
        %v349 = vsel %vm326, %v317, 0
        %v352 = vsel %vm326, %v318, 0
        %v355 = vsel %vm326, %v319, 0
        %v358 = vsel %vm326, %v320, 0
        %v361 = vsel %vm326, %v321, 0
        %v364 = vsel %vm326, %v322, 0
        %v367 = vsel %vm326, %v323, 0
        %v370 = vsel %vm326, %v324, 0
        %v373 = vsel %vm326, %v325, 0
        %375 = vmatprep.subr.mxu0 %v309
        %376 = vmatpush1.msra.mxu0 %v308
        %377 = vmatprep.subr.mxu0 0.0
        %378 = vmatpush1.msra.mxu0 0.0
        %379 = vmatprep.subr.mxu0 0.0
        %380 = vmatpush1.msra.mxu0 0.0
        %381 = vmatprep.subr.mxu0 0.0
        %382 = vmatpush1.msra.mxu0 0.0
        %383 = vmatprep.subr.mxu0 0.0
        %384 = vmatpush1.msra.mxu0 0.0
        %385 = vmatprep.subr.mxu0 0.0
        %386 = vmatpush1.msra.mxu0 0.0
        %387 = vmatprep.subr.mxu0 0.0
        %388 = vmatpush1.msra.mxu0 0.0
        %389 = vmatprep.subr.mxu0 0.0
        %390 = vmatpush1.msra.mxu0 0.0
        %391 = vmatprep.subr.mxu0 0.0
        %392 = vmatpush1.msra.mxu0 0.0
        %393 = vmatprep.subr.mxu0 0.0
        %394 = vmatpush1.msra.mxu0 0.0
        %395 = vmatprep.subr.mxu0 0.0
        %396 = vmatpush1.msra.mxu0 0.0
        %397 = vmatprep.subr.mxu0 0.0
        %398 = vmatpush1.msra.mxu0 0.0
        %399 = vmatprep.subr.mxu0 0.0
        %400 = vmatpush1.msra.mxu0 0.0
        %401 = vmatprep.subr.mxu0 0.0
        %402 = vmatpush1.msra.mxu0 0.0
        %403 = vmatprep.subr.mxu0 0.0
        %404 = vmatpush1.msra.mxu0 0.0
        %405 = vmatprep.subr.mxu0 0.0
        %406 = vmatpush1.msra.mxu0 0.0
        %407 = vmatprep.subr.mxu0 0.0
        %408 = vmatpush1.msra.mxu0 0.0
        %409 = vmatprep.subr.mxu0 0.0
        %410 = vmatpush1.msra.mxu0 0.0
        %411 = vmatprep.subr.mxu0 0.0
        %412 = vmatpush1.msra.mxu0 0.0
        %413 = vmatprep.subr.mxu0 0.0
        %414 = vmatpush1.msra.mxu0 0.0
        %415 = vmatprep.subr.mxu0 0.0
        %416 = vmatpush1.msra.mxu0 0.0
        %417 = vmatprep.subr.mxu0 0.0
        %418 = vmatpush1.msra.mxu0 0.0
        %419 = vmatprep.subr.mxu0 0.0
        %420 = vmatpush1.msra.mxu0 0.0
        %421 = vmatprep.subr.mxu0 0.0
        %422 = vmatpush1.msra.mxu0 0.0
        %423 = vmatprep.subr.mxu0 0.0
        %424 = vmatpush1.msra.mxu0 0.0
        %425 = vmatprep.subr.mxu0 0.0
        %426 = vmatpush1.msra.mxu0 0.0
        %427 = vmatprep.subr.mxu0 0.0
        %428 = vmatpush1.msra.mxu0 0.0
        %429 = vmatprep.subr.mxu0 0.0
        %430 = vmatpush1.msra.mxu0 0.0
        %431 = vmatprep.subr.mxu0 0.0
        %432 = vmatpush1.msra.mxu0 0.0
        %433 = vmatprep.subr.mxu0 0.0
        %434 = vmatpush1.msra.mxu0 0.0
        %435 = vmatprep.subr.mxu0 0.0
        %436 = vmatpush1.msra.mxu0 0.0
        %437 = vmatprep.subr.mxu0 0.0
        %438 = vmatpush1.msra.mxu0 0.0
        %439 = vmatprep.mubr.f32.mxu0 0.0
        %440 = vmatmul.mubr.f32.gmra.mrb[0].mxu0 %v328
        %v441 = vpop.f32.mrb[0].mxu0
        %v442 = vadd.f32 0.0, %v441
        %v443 = vpop.f32.mrb[0].mxu0
        %v444 = vadd.f32 0.0, %v443
        %445 = vmatprep.mubr.f32.mxu0 0.0
        %446 = vmatmul.mubr.f32.gmra.mrb[0].mxu0 %v331
        %v447 = vpop.f32.mrb[0].mxu0
        %v448 = vadd.f32 0.0, %v447
        %v449 = vpop.f32.mrb[0].mxu0
        %v450 = vadd.f32 0.0, %v449
        %451 = vmatprep.mubr.f32.mxu0 0.0
        %452 = vmatmul.mubr.f32.gmra.mrb[0].mxu0 %v334
        %v453 = vpop.f32.mrb[0].mxu0
        %v454 = vadd.f32 0.0, %v453
        %v455 = vpop.f32.mrb[0].mxu0
        %v456 = vadd.f32 0.0, %v455
        %457 = vmatprep.mubr.f32.mxu0 0.0
        %458 = vmatmul.mubr.f32.gmra.mrb[0].mxu0 %v337
        %v459 = vpop.f32.mrb[0].mxu0
        %v460 = vadd.f32 0.0, %v459
        %v461 = vpop.f32.mrb[0].mxu0
        %v462 = vadd.f32 0.0, %v461
        %463 = vmatprep.mubr.f32.mxu0 0.0
        %464 = vmatmul.mubr.f32.gmra.mrb[0].mxu0 %v340
        %v465 = vpop.f32.mrb[0].mxu0
        %v466 = vadd.f32 0.0, %v465
        %v467 = vpop.f32.mrb[0].mxu0
        %v468 = vadd.f32 0.0, %v467
        %469 = vmatprep.mubr.f32.mxu0 0.0
        %470 = vmatmul.mubr.f32.gmra.mrb[0].mxu0 %v343
        %v471 = vpop.f32.mrb[0].mxu0
        %v472 = vadd.f32 0.0, %v471
        %v473 = vpop.f32.mrb[0].mxu0
        %v474 = vadd.f32 0.0, %v473
        %475 = vmatprep.mubr.f32.mxu0 0.0
        %476 = vmatmul.mubr.f32.gmra.mrb[0].mxu0 %v346
        %v477 = vpop.f32.mrb[0].mxu0
        %v478 = vadd.f32 0.0, %v477
        %v479 = vpop.f32.mrb[0].mxu0
        %v480 = vadd.f32 0.0, %v479
        %481 = vmatprep.mubr.f32.mxu0 0.0
        %482 = vmatmul.mubr.f32.gmra.mrb[0].mxu0 %v349
        %v483 = vpop.f32.mrb[0].mxu0
        %v484 = vadd.f32 0.0, %v483
        %v485 = vpop.f32.mrb[0].mxu0
        %v486 = vadd.f32 0.0, %v485
        %487 = vmatprep.mubr.f32.mxu0 0.0
        %488 = vmatmul.mubr.f32.gmra.mrb[0].mxu0 %v352
        %v489 = vpop.f32.mrb[0].mxu0
        %v490 = vadd.f32 0.0, %v489
        %v491 = vpop.f32.mrb[0].mxu0
        %v492 = vadd.f32 0.0, %v491
        %493 = vmatprep.mubr.f32.mxu0 0.0
        %494 = vmatmul.mubr.f32.gmra.mrb[0].mxu0 %v355
        %v495 = vpop.f32.mrb[0].mxu0
        %v496 = vadd.f32 0.0, %v495
        %v497 = vpop.f32.mrb[0].mxu0
        %v498 = vadd.f32 0.0, %v497
        %499 = vmatprep.mubr.f32.mxu0 0.0
        %500 = vmatmul.mubr.f32.gmra.mrb[0].mxu0 %v358
        %v501 = vpop.f32.mrb[0].mxu0
        %v502 = vadd.f32 0.0, %v501
        %v503 = vpop.f32.mrb[0].mxu0
        %v504 = vadd.f32 0.0, %v503
        %505 = vmatprep.mubr.f32.mxu0 0.0
        %506 = vmatmul.mubr.f32.gmra.mrb[0].mxu0 %v361
        %v507 = vpop.f32.mrb[0].mxu0
        %v508 = vadd.f32 0.0, %v507
        %v509 = vpop.f32.mrb[0].mxu0
        %v510 = vadd.f32 0.0, %v509
        %511 = vmatprep.mubr.f32.mxu0 0.0
        %512 = vmatmul.mubr.f32.gmra.mrb[0].mxu0 %v364
        %v513 = vpop.f32.mrb[0].mxu0
        %v514 = vadd.f32 0.0, %v513
        %v515 = vpop.f32.mrb[0].mxu0
        %v516 = vadd.f32 0.0, %v515
        %517 = vmatprep.mubr.f32.mxu0 0.0
        %518 = vmatmul.mubr.f32.gmra.mrb[0].mxu0 %v367
        %v519 = vpop.f32.mrb[0].mxu0
        %v520 = vadd.f32 0.0, %v519
        %v521 = vpop.f32.mrb[0].mxu0
        %v522 = vadd.f32 0.0, %v521
        %523 = vmatprep.mubr.f32.mxu0 0.0
        %524 = vmatmul.mubr.f32.gmra.mrb[0].mxu0 %v370
        %v525 = vpop.f32.mrb[0].mxu0
        %v526 = vadd.f32 0.0, %v525
        %v527 = vpop.f32.mrb[0].mxu0
        %v528 = vadd.f32 0.0, %v527
        %529 = vmatprep.mubr.f32.mxu0 0.0
        %530 = vmatmul.mubr.f32.gmra.mrb[0].mxu0 %v373
        %v531 = vpop.f32.mrb[0].mxu0
        %v532 = vadd.f32 0.0, %v531
        %v533 = vpop.f32.mrb[0].mxu0
        %v534 = vadd.f32 0.0, %v533
        %535 = vdwg.mxu0
        %v536 = vld [vmem:[%s2] sm:$0xff]
        %538 = vset.pattern.permute.xlu0 0
        %539 = vperm.xlu0 %538, %v536
        %v540 = vpop.permute.xlu0 %539
        %v542 = vmul.f32 %v540, %v308
        %v543 = vmul.f32 %v540, %v309
        %v544 = vrot.slane %v542, 4
        %v545 = vadd.f32 %v542, %v544
        %v546 = vrot.slane %v545, 2
        %v547 = vadd.f32 %v545, %v546
        %v548 = vrot.slane %v547, 1
        %v549 = vadd.f32 %v547, %v548
        %v550 = vrot.slane %v543, 4
        %v551 = vadd.f32 %v543, %v550
        %v552 = vrot.slane %v551, 2
        %v553 = vadd.f32 %v551, %v552
        %v554 = vrot.slane %v553, 1
        %v555 = vadd.f32 %v553, %v554
        %v556 = vld [vmem:[%s3] sm:$0xff]
        %v558 = vsel %vm326, %v556, 0
        %560 = vmatprep.subr.mxu0 %v309
        %561 = vmatpush1.msra.mxu0 %v308
        %562 = vmatprep.subr.mxu0 0.0
        %563 = vmatpush1.msra.mxu0 0.0
        %564 = vmatprep.subr.mxu0 0.0
        %565 = vmatpush1.msra.mxu0 0.0
        %566 = vmatprep.subr.mxu0 0.0
        %567 = vmatpush1.msra.mxu0 0.0
        %568 = vmatprep.subr.mxu0 0.0
        %569 = vmatpush1.msra.mxu0 0.0
        %570 = vmatprep.subr.mxu0 0.0
        %571 = vmatpush1.msra.mxu0 0.0
        %572 = vmatprep.subr.mxu0 0.0
        %573 = vmatpush1.msra.mxu0 0.0
        %574 = vmatprep.subr.mxu0 0.0
        %575 = vmatpush1.msra.mxu0 0.0
        %576 = vmatprep.subr.mxu0 0.0
        %577 = vmatpush1.msra.mxu0 0.0
        %578 = vmatprep.subr.mxu0 0.0
        %579 = vmatpush1.msra.mxu0 0.0
        %580 = vmatprep.subr.mxu0 0.0
        %581 = vmatpush1.msra.mxu0 0.0
        %582 = vmatprep.subr.mxu0 0.0
        %583 = vmatpush1.msra.mxu0 0.0
        %584 = vmatprep.subr.mxu0 0.0
        %585 = vmatpush1.msra.mxu0 0.0
        %586 = vmatprep.subr.mxu0 0.0
        %587 = vmatpush1.msra.mxu0 0.0
        %588 = vmatprep.subr.mxu0 0.0
        %589 = vmatpush1.msra.mxu0 0.0
        %590 = vmatprep.subr.mxu0 0.0
        %591 = vmatpush1.msra.mxu0 0.0
        %592 = vmatprep.subr.mxu0 0.0
        %593 = vmatpush1.msra.mxu0 0.0
        %594 = vmatprep.subr.mxu0 0.0
        %595 = vmatpush1.msra.mxu0 0.0
        %596 = vmatprep.subr.mxu0 0.0
        %597 = vmatpush1.msra.mxu0 0.0
        %598 = vmatprep.subr.mxu0 0.0
        %599 = vmatpush1.msra.mxu0 0.0
        %600 = vmatprep.subr.mxu0 0.0
        %601 = vmatpush1.msra.mxu0 0.0
        %602 = vmatprep.subr.mxu0 0.0
        %603 = vmatpush1.msra.mxu0 0.0
        %604 = vmatprep.subr.mxu0 0.0
        %605 = vmatpush1.msra.mxu0 0.0
        %606 = vmatprep.subr.mxu0 0.0
        %607 = vmatpush1.msra.mxu0 0.0
        %608 = vmatprep.subr.mxu0 0.0
        %609 = vmatpush1.msra.mxu0 0.0
        %610 = vmatprep.subr.mxu0 0.0
        %611 = vmatpush1.msra.mxu0 0.0
        %612 = vmatprep.subr.mxu0 0.0
        %613 = vmatpush1.msra.mxu0 0.0
        %614 = vmatprep.subr.mxu0 0.0
        %615 = vmatpush1.msra.mxu0 0.0
        %616 = vmatprep.subr.mxu0 0.0
        %617 = vmatpush1.msra.mxu0 0.0
        %618 = vmatprep.subr.mxu0 0.0
        %619 = vmatpush1.msra.mxu0 0.0
        %620 = vmatprep.subr.mxu0 0.0
        %621 = vmatpush1.msra.mxu0 0.0
        %622 = vmatprep.subr.mxu0 0.0
        %623 = vmatpush1.msra.mxu0 0.0
        %624 = vmatprep.mubr.f32.mxu0 0.0
        %625 = vmatmul.mubr.f32.gmra.mrb[0].mxu0 %v558
        %v626 = vpop.f32.mrb[0].mxu0
        %v627 = vadd.f32 0.0, %v626
        %v628 = vpop.f32.mrb[0].mxu0
        %v629 = vadd.f32 0.0, %v628
        %630 = vdwg.mxu0
        %v631 = vmul.f32 %v308, %v627
        %v632 = vmul.f32 %v309, %v629
        %v633 = vrot.slane %v631, 4
        %v634 = vadd.f32 %v631, %v633
        %v635 = vrot.slane %v634, 2
        %v636 = vadd.f32 %v634, %v635
        %v637 = vrot.slane %v636, 1
        %v638 = vadd.f32 %v636, %v637
        %v639 = vrot.slane %v632, 4
        %v640 = vadd.f32 %v632, %v639
        %v641 = vrot.slane %v640, 2
        %v642 = vadd.f32 %v640, %v641
        %v643 = vrot.slane %v642, 1
        %v644 = vadd.f32 %v642, %v643
        %v645 = vmul.f32 %v549, %v549
        %v646 = vmul.f32 %v555, %v555
        %v647 = vsub.f32 %v638, %v645
        %v648 = vsub.f32 %v644, %v646
        %v649 = vmax.f32 %v647, 0.0
        %v650 = vmax.f32 %v648, 0.0
        %v651 = vld [vmem:[%s300] sm:$0x3]
        %v652 = vadd.f32 %v649, 1e-05
        %v653 = vadd.f32 %v650, 1e-05
        %v654 = vrsqrt.pop %v652
        %v655 = vrsqrt.pop %v653
        %v658 = vcombine.low %v654, %v655
        %v660 = vunpack.c.l.s4 1966171168
        %v661 = vunpack.c.0.s8 %v660
        %v662 = vlaneseq
        %v663 = vshrl.u32 %v662, 7
        %v664 = vsub.s32 %v661, %v663
        %v665 = vrot.slane %v658, %v664
        %v667 = vunpack.c.l.s4 1966171168
        %v668 = vunpack.c.0.s8 %v667
        %v669 = vlaneseq
        %v670 = vshrl.u32 %v669, 7
        %v671 = vsub.s32 %v668, %v670
        %v672 = vrot.slane %v665, %v671
        %v674 = vmul.f32 %v651, %v672
        %v675 = vld [vmem:[%s305] sm:$0x3]
        %v677 = vlaneseq
        %v678 = vshrl.u32 %v677, 7
        %v679 = vsub.s32 0, %v678
        %v680 = vrot.slane %v674, %v679
        %v681 = vlaneseq
        %v682 = vshrl.u32 %v681, 7
        %v683 = vsub.s32 1, %v682
        %v684 = vrot.slane %v674, %v683
        %v687 = vmul.f32 %v549, %v680
        %v688 = vmul.f32 %v555, %v684
        %v691 = vcombine.low %v687, %v688
        %v693 = vunpack.c.l.s4 1966171168
        %v694 = vunpack.c.0.s8 %v693
        %v695 = vlaneseq
        %v696 = vshrl.u32 %v695, 7
        %v697 = vsub.s32 %v694, %v696
        %v698 = vrot.slane %v691, %v697
        %v700 = vunpack.c.l.s4 1966171168
        %v701 = vunpack.c.0.s8 %v700
        %v702 = vlaneseq
        %v703 = vshrl.u32 %v702, 7
        %v704 = vsub.s32 %v701, %v703
        %v705 = vrot.slane %v698, %v704
        %v707 = vsub.f32 %v675, %v705
        %v708 = vmax.f32 %v442, %v448
        %v709 = vmax.f32 %v708, %v454
        %v710 = vmax.f32 %v709, %v460
        %v711 = vmax.f32 %v710, %v466
        %v712 = vmax.f32 %v711, %v472
        %v713 = vmax.f32 %v712, %v478
        %v714 = vmax.f32 %v713, %v484
        %v715 = vrot.slane %v714, 4
        %v716 = vmax.f32 %v714, %v715
        %v717 = vrot.slane %v716, 2
        %v718 = vmax.f32 %v716, %v717
        %v719 = vrot.slane %v718, 1
        %v720 = vmax.f32 %v718, %v719
        %v721 = vmax.f32 %v444, %v450
        %v722 = vmax.f32 %v721, %v456
        %v723 = vmax.f32 %v722, %v462
        %v724 = vmax.f32 %v723, %v468
        %v725 = vmax.f32 %v724, %v474
        %v726 = vmax.f32 %v725, %v480
        %v727 = vmax.f32 %v726, %v486
        %v728 = vrot.slane %v727, 4
        %v729 = vmax.f32 %v727, %v728
        %v730 = vrot.slane %v729, 2
        %v731 = vmax.f32 %v729, %v730
        %v732 = vrot.slane %v731, 1
        %v733 = vmax.f32 %v731, %v732
        %v734 = vmax.f32 %v490, %v496
        %v735 = vmax.f32 %v734, %v502
        %v736 = vmax.f32 %v735, %v508
        %v737 = vmax.f32 %v736, %v514
        %v738 = vmax.f32 %v737, %v520
        %v739 = vmax.f32 %v738, %v526
        %v740 = vmax.f32 %v739, %v532
        %v741 = vrot.slane %v740, 4
        %v742 = vmax.f32 %v740, %v741
        %v743 = vrot.slane %v742, 2
        %v744 = vmax.f32 %v742, %v743
        %v745 = vrot.slane %v744, 1
        %v746 = vmax.f32 %v744, %v745
        %v747 = vmax.f32 %v492, %v498
        %v748 = vmax.f32 %v747, %v504
        %v749 = vmax.f32 %v748, %v510
        %v750 = vmax.f32 %v749, %v516
        %v751 = vmax.f32 %v750, %v522
        %v752 = vmax.f32 %v751, %v528
        %v753 = vmax.f32 %v752, %v534
        %v754 = vrot.slane %v753, 4
        %v755 = vmax.f32 %v753, %v754
        %v756 = vrot.slane %v755, 2
        %v757 = vmax.f32 %v755, %v756
        %v758 = vrot.slane %v757, 1
        %v759 = vmax.f32 %v757, %v758
        %v760 = vmin.f32 %v442, %v448
        %v761 = vmin.f32 %v760, %v454
        %v762 = vmin.f32 %v761, %v460
        %v763 = vmin.f32 %v762, %v466
        %v764 = vmin.f32 %v763, %v472
        %v765 = vmin.f32 %v764, %v478
        %v766 = vmin.f32 %v765, %v484
        %v767 = vrot.slane %v766, 4
        %v768 = vmin.f32 %v766, %v767
        %v769 = vrot.slane %v768, 2
        %v770 = vmin.f32 %v768, %v769
        %v771 = vrot.slane %v770, 1
        %v772 = vmin.f32 %v770, %v771
        %v773 = vmin.f32 %v444, %v450
        %v774 = vmin.f32 %v773, %v456
        %v775 = vmin.f32 %v774, %v462
        %v776 = vmin.f32 %v775, %v468
        %v777 = vmin.f32 %v776, %v474
        %v778 = vmin.f32 %v777, %v480
        %v779 = vmin.f32 %v778, %v486
        %v780 = vrot.slane %v779, 4
        %v781 = vmin.f32 %v779, %v780
        %v782 = vrot.slane %v781, 2
        %v783 = vmin.f32 %v781, %v782
        %v784 = vrot.slane %v783, 1
        %v785 = vmin.f32 %v783, %v784
        %v786 = vmin.f32 %v490, %v496
        %v787 = vmin.f32 %v786, %v502
        %v788 = vmin.f32 %v787, %v508
        %v789 = vmin.f32 %v788, %v514
        %v790 = vmin.f32 %v789, %v520
        %v791 = vmin.f32 %v790, %v526
        %v792 = vmin.f32 %v791, %v532
        %v793 = vrot.slane %v792, 4
        %v794 = vmin.f32 %v792, %v793
        %v795 = vrot.slane %v794, 2
        %v796 = vmin.f32 %v794, %v795
        %v797 = vrot.slane %v796, 1
        %v798 = vmin.f32 %v796, %v797
        %v799 = vmin.f32 %v492, %v498
        %v800 = vmin.f32 %v799, %v504
        %v801 = vmin.f32 %v800, %v510
        %v802 = vmin.f32 %v801, %v516
        %v803 = vmin.f32 %v802, %v522
        %v804 = vmin.f32 %v803, %v528
        %v805 = vmin.f32 %v804, %v534
        %v806 = vrot.slane %v805, 4
        %v807 = vmin.f32 %v805, %v806
        %v808 = vrot.slane %v807, 2
        %v809 = vmin.f32 %v807, %v808
        %v810 = vrot.slane %v809, 1
        %v811 = vmin.f32 %v809, %v810
        %vm812 = vcmp.ge.f32.partialorder %v674, 0.0
        %v813 = vmul.f32 %v720, %v680
        %v814 = vmul.f32 %v733, %v684
        %v815 = vmul.f32 %v746, %v680
        %v816 = vmul.f32 %v759, %v684
        %v817 = vmul.f32 %v772, %v680
        %v818 = vmul.f32 %v785, %v684
        %v819 = vmul.f32 %v798, %v680
        %v820 = vmul.f32 %v811, %v684
        %v821 = vsel %vm812, 1, 0
        %v822 = vlaneseq
        %v823 = vshrl.u32 %v822, 7
        %v824 = vsub.s32 0, %v823
        %v825 = vrot.slane %v821, %v824
        %v826 = vlaneseq
        %v827 = vshrl.u32 %v826, 7
        %v828 = vsub.s32 1, %v827
        %v829 = vrot.slane %v821, %v828
        %vm830 = vcmp.eq.s32.totalorder %v825, 1
        %vm831 = vcmp.eq.s32.totalorder %v829, 1
        %v836 = vrot.slane %v815, 7
        %vm837 = vcmask 1041409
        %v838 = vsel %vm837, %v836, %v813
        %v839 = vrot.slane %v816, 7
        %v840 = vsel %vm837, %v839, %v814
        %v847 = vrot.slane %v819, 7
        %v848 = vsel %vm837, %v847, %v817
        %v849 = vrot.slane %v820, 7
        %v850 = vsel %vm837, %v849, %v818
        %v853 = vsel %vm830, %v838, %v848
        %v854 = vsel %vm831, %v840, %v850
        %v856 = vlaneseq
        %v857 = vshrl.u32 %v856, 7
        %v858 = vsub.s32 0, %v857
        %v859 = vrot.slane %v707, %v858
        %v860 = vlaneseq
        %v861 = vshrl.u32 %v860, 7
        %v862 = vsub.s32 1, %v861
        %v863 = vrot.slane %v707, %v862
        %v866 = vadd.f32 %v853, %v859
        %v867 = vadd.f32 %v854, %v863
        %v870 = vcombine.low %v866, %v867
        %v872 = vunpack.c.l.s4 1983009808
        %v873 = vunpack.c.0.s8 %v872
        %v874 = vlaneseq
        %v875 = vshrl.u32 %v874, 7
        %v876 = vsub.s32 %v873, %v875
        %v877 = vrot.slane %v870, %v876
        %879 = vst [vmem:[%s295] sm:$0xf] %v877
        %v880 = vld [vmem:[%s259 + $0x10] sm:$0xff]
        %v881 = vld [vmem:[%s259 + $0x18] sm:$0xff]
        %v882 = vld [vmem:[%s0] sm:$0xff]
        %v883 = vld [vmem:[%s0 + $0x8] sm:$0xff]
        %v884 = vld [vmem:[%s0 + $0x10] sm:$0xff]
        %v885 = vld [vmem:[%s0 + $0x18] sm:$0xff]
        %v886 = vld [vmem:[%s0 + $0x20] sm:$0xff]
        %v887 = vld [vmem:[%s0 + $0x28] sm:$0xff]
        %v888 = vld [vmem:[%s0 + $0x30] sm:$0xff]
        %v889 = vld [vmem:[%s0 + $0x38] sm:$0xff]
        %v890 = vld [vmem:[%s0 + $0x40] sm:$0xff]
        %v891 = vld [vmem:[%s0 + $0x48] sm:$0xff]
        %v892 = vld [vmem:[%s0 + $0x50] sm:$0xff]
        %v893 = vld [vmem:[%s0 + $0x58] sm:$0xff]
        %v894 = vld [vmem:[%s0 + $0x60] sm:$0xff]
        %v895 = vld [vmem:[%s0 + $0x68] sm:$0xff]
        %v896 = vld [vmem:[%s0 + $0x70] sm:$0xff]
        %v897 = vld [vmem:[%s0 + $0x78] sm:$0xff]
        %v899 = vsel %vm326, %v882, 0
        %v902 = vsel %vm326, %v883, 0
        %v905 = vsel %vm326, %v884, 0
        %v908 = vsel %vm326, %v885, 0
        %v911 = vsel %vm326, %v886, 0
        %v914 = vsel %vm326, %v887, 0
        %v917 = vsel %vm326, %v888, 0
        %v920 = vsel %vm326, %v889, 0
        %v923 = vsel %vm326, %v890, 0
        %v926 = vsel %vm326, %v891, 0
        %v929 = vsel %vm326, %v892, 0
        %v932 = vsel %vm326, %v893, 0
        %v935 = vsel %vm326, %v894, 0
        %v938 = vsel %vm326, %v895, 0
        %v941 = vsel %vm326, %v896, 0
        %v944 = vsel %vm326, %v897, 0
        %946 = vmatprep.subr.mxu0 %v881
        %947 = vmatpush1.msra.mxu0 %v880
        %948 = vmatprep.subr.mxu0 0.0
        %949 = vmatpush1.msra.mxu0 0.0
        %950 = vmatprep.subr.mxu0 0.0
        %951 = vmatpush1.msra.mxu0 0.0
        %952 = vmatprep.subr.mxu0 0.0
        %953 = vmatpush1.msra.mxu0 0.0
        %954 = vmatprep.subr.mxu0 0.0
        %955 = vmatpush1.msra.mxu0 0.0
        %956 = vmatprep.subr.mxu0 0.0
        %957 = vmatpush1.msra.mxu0 0.0
        %958 = vmatprep.subr.mxu0 0.0
        %959 = vmatpush1.msra.mxu0 0.0
        %960 = vmatprep.subr.mxu0 0.0
        %961 = vmatpush1.msra.mxu0 0.0
        %962 = vmatprep.subr.mxu0 0.0
        %963 = vmatpush1.msra.mxu0 0.0
        %964 = vmatprep.subr.mxu0 0.0
        %965 = vmatpush1.msra.mxu0 0.0
        %966 = vmatprep.subr.mxu0 0.0
        %967 = vmatpush1.msra.mxu0 0.0
        %968 = vmatprep.subr.mxu0 0.0
        %969 = vmatpush1.msra.mxu0 0.0
        %970 = vmatprep.subr.mxu0 0.0
        %971 = vmatpush1.msra.mxu0 0.0
        %972 = vmatprep.subr.mxu0 0.0
        %973 = vmatpush1.msra.mxu0 0.0
        %974 = vmatprep.subr.mxu0 0.0
        %975 = vmatpush1.msra.mxu0 0.0
        %976 = vmatprep.subr.mxu0 0.0
        %977 = vmatpush1.msra.mxu0 0.0
        %978 = vmatprep.subr.mxu0 0.0
        %979 = vmatpush1.msra.mxu0 0.0
        %980 = vmatprep.subr.mxu0 0.0
        %981 = vmatpush1.msra.mxu0 0.0
        %982 = vmatprep.subr.mxu0 0.0
        %983 = vmatpush1.msra.mxu0 0.0
        %984 = vmatprep.subr.mxu0 0.0
        %985 = vmatpush1.msra.mxu0 0.0
        %986 = vmatprep.subr.mxu0 0.0
        %987 = vmatpush1.msra.mxu0 0.0
        %988 = vmatprep.subr.mxu0 0.0
        %989 = vmatpush1.msra.mxu0 0.0
        %990 = vmatprep.subr.mxu0 0.0
        %991 = vmatpush1.msra.mxu0 0.0
        %992 = vmatprep.subr.mxu0 0.0
        %993 = vmatpush1.msra.mxu0 0.0
        %994 = vmatprep.subr.mxu0 0.0
        %995 = vmatpush1.msra.mxu0 0.0
        %996 = vmatprep.subr.mxu0 0.0
        %997 = vmatpush1.msra.mxu0 0.0
        %998 = vmatprep.subr.mxu0 0.0
        %999 = vmatpush1.msra.mxu0 0.0
        %1000 = vmatprep.subr.mxu0 0.0
        %1001 = vmatpush1.msra.mxu0 0.0
        %1002 = vmatprep.subr.mxu0 0.0
        %1003 = vmatpush1.msra.mxu0 0.0
        %1004 = vmatprep.subr.mxu0 0.0
        %1005 = vmatpush1.msra.mxu0 0.0
        %1006 = vmatprep.subr.mxu0 0.0
        %1007 = vmatpush1.msra.mxu0 0.0
        %1008 = vmatprep.subr.mxu0 0.0
        %1009 = vmatpush1.msra.mxu0 0.0
        %1010 = vmatprep.mubr.f32.mxu0 0.0
        %1011 = vmatmul.mubr.f32.gmra.mrb[0].mxu0 %v899
        %v1012 = vpop.f32.mrb[0].mxu0
        %v1013 = vadd.f32 0.0, %v1012
        %v1014 = vpop.f32.mrb[0].mxu0
        %v1015 = vadd.f32 0.0, %v1014
        %1016 = vmatprep.mubr.f32.mxu0 0.0
        %1017 = vmatmul.mubr.f32.gmra.mrb[0].mxu0 %v902
        %v1018 = vpop.f32.mrb[0].mxu0
        %v1019 = vadd.f32 0.0, %v1018
        %v1020 = vpop.f32.mrb[0].mxu0
        %v1021 = vadd.f32 0.0, %v1020
        %1022 = vmatprep.mubr.f32.mxu0 0.0
        %1023 = vmatmul.mubr.f32.gmra.mrb[0].mxu0 %v905
        %v1024 = vpop.f32.mrb[0].mxu0
        %v1025 = vadd.f32 0.0, %v1024
        %v1026 = vpop.f32.mrb[0].mxu0
        %v1027 = vadd.f32 0.0, %v1026
        %1028 = vmatprep.mubr.f32.mxu0 0.0
        %1029 = vmatmul.mubr.f32.gmra.mrb[0].mxu0 %v908
        %v1030 = vpop.f32.mrb[0].mxu0
        %v1031 = vadd.f32 0.0, %v1030
        %v1032 = vpop.f32.mrb[0].mxu0
        %v1033 = vadd.f32 0.0, %v1032
        %1034 = vmatprep.mubr.f32.mxu0 0.0
        %1035 = vmatmul.mubr.f32.gmra.mrb[0].mxu0 %v911
        %v1036 = vpop.f32.mrb[0].mxu0
        %v1037 = vadd.f32 0.0, %v1036
        %v1038 = vpop.f32.mrb[0].mxu0
        %v1039 = vadd.f32 0.0, %v1038
        %1040 = vmatprep.mubr.f32.mxu0 0.0
        %1041 = vmatmul.mubr.f32.gmra.mrb[0].mxu0 %v914
        %v1042 = vpop.f32.mrb[0].mxu0
        %v1043 = vadd.f32 0.0, %v1042
        %v1044 = vpop.f32.mrb[0].mxu0
        %v1045 = vadd.f32 0.0, %v1044
        %1046 = vmatprep.mubr.f32.mxu0 0.0
        %1047 = vmatmul.mubr.f32.gmra.mrb[0].mxu0 %v917
        %v1048 = vpop.f32.mrb[0].mxu0
        %v1049 = vadd.f32 0.0, %v1048
        %v1050 = vpop.f32.mrb[0].mxu0
        %v1051 = vadd.f32 0.0, %v1050
        %1052 = vmatprep.mubr.f32.mxu0 0.0
        %1053 = vmatmul.mubr.f32.gmra.mrb[0].mxu0 %v920
        %v1054 = vpop.f32.mrb[0].mxu0
        %v1055 = vadd.f32 0.0, %v1054
        %v1056 = vpop.f32.mrb[0].mxu0
        %v1057 = vadd.f32 0.0, %v1056
        %1058 = vmatprep.mubr.f32.mxu0 0.0
        %1059 = vmatmul.mubr.f32.gmra.mrb[0].mxu0 %v923
        %v1060 = vpop.f32.mrb[0].mxu0
        %v1061 = vadd.f32 0.0, %v1060
        %v1062 = vpop.f32.mrb[0].mxu0
        %v1063 = vadd.f32 0.0, %v1062
        %1064 = vmatprep.mubr.f32.mxu0 0.0
        %1065 = vmatmul.mubr.f32.gmra.mrb[0].mxu0 %v926
        %v1066 = vpop.f32.mrb[0].mxu0
        %v1067 = vadd.f32 0.0, %v1066
        %v1068 = vpop.f32.mrb[0].mxu0
        %v1069 = vadd.f32 0.0, %v1068
        %1070 = vmatprep.mubr.f32.mxu0 0.0
        %1071 = vmatmul.mubr.f32.gmra.mrb[0].mxu0 %v929
        %v1072 = vpop.f32.mrb[0].mxu0
        %v1073 = vadd.f32 0.0, %v1072
        %v1074 = vpop.f32.mrb[0].mxu0
        %v1075 = vadd.f32 0.0, %v1074
        %1076 = vmatprep.mubr.f32.mxu0 0.0
        %1077 = vmatmul.mubr.f32.gmra.mrb[0].mxu0 %v932
        %v1078 = vpop.f32.mrb[0].mxu0
        %v1079 = vadd.f32 0.0, %v1078
        %v1080 = vpop.f32.mrb[0].mxu0
        %v1081 = vadd.f32 0.0, %v1080
        %1082 = vmatprep.mubr.f32.mxu0 0.0
        %1083 = vmatmul.mubr.f32.gmra.mrb[0].mxu0 %v935
        %v1084 = vpop.f32.mrb[0].mxu0
        %v1085 = vadd.f32 0.0, %v1084
        %v1086 = vpop.f32.mrb[0].mxu0
        %v1087 = vadd.f32 0.0, %v1086
        %1088 = vmatprep.mubr.f32.mxu0 0.0
        %1089 = vmatmul.mubr.f32.gmra.mrb[0].mxu0 %v938
        %v1090 = vpop.f32.mrb[0].mxu0
        %v1091 = vadd.f32 0.0, %v1090
        %v1092 = vpop.f32.mrb[0].mxu0
        %v1093 = vadd.f32 0.0, %v1092
        %1094 = vmatprep.mubr.f32.mxu0 0.0
        %1095 = vmatmul.mubr.f32.gmra.mrb[0].mxu0 %v941
        %v1096 = vpop.f32.mrb[0].mxu0
        %v1097 = vadd.f32 0.0, %v1096
        %v1098 = vpop.f32.mrb[0].mxu0
        %v1099 = vadd.f32 0.0, %v1098
        %1100 = vmatprep.mubr.f32.mxu0 0.0
        %1101 = vmatmul.mubr.f32.gmra.mrb[0].mxu0 %v944
        %v1102 = vpop.f32.mrb[0].mxu0
        %v1103 = vadd.f32 0.0, %v1102
        %v1104 = vpop.f32.mrb[0].mxu0
        %v1105 = vadd.f32 0.0, %v1104
        %1106 = vdwg.mxu0
        %v1107 = vld [vmem:[%s2] sm:$0xff]
        %1109 = vset.pattern.permute.xlu0 0
        %1110 = vperm.xlu0 %1109, %v1107
        %v1111 = vpop.permute.xlu0 %1110
        %v1113 = vmul.f32 %v1111, %v880
        %v1114 = vmul.f32 %v1111, %v881
        %v1115 = vrot.slane %v1113, 4
        %v1116 = vadd.f32 %v1113, %v1115
        %v1117 = vrot.slane %v1116, 2
        %v1118 = vadd.f32 %v1116, %v1117
        %v1119 = vrot.slane %v1118, 1
        %v1120 = vadd.f32 %v1118, %v1119
        %v1121 = vrot.slane %v1114, 4
        %v1122 = vadd.f32 %v1114, %v1121
        %v1123 = vrot.slane %v1122, 2
        %v1124 = vadd.f32 %v1122, %v1123
        %v1125 = vrot.slane %v1124, 1
        %v1126 = vadd.f32 %v1124, %v1125
        %v1127 = vld [vmem:[%s3] sm:$0xff]
        %v1129 = vsel %vm326, %v1127, 0
        %1131 = vmatprep.subr.mxu0 %v881
        %1132 = vmatpush1.msra.mxu0 %v880
        %1133 = vmatprep.subr.mxu0 0.0
        %1134 = vmatpush1.msra.mxu0 0.0
        %1135 = vmatprep.subr.mxu0 0.0
        %1136 = vmatpush1.msra.mxu0 0.0
        %1137 = vmatprep.subr.mxu0 0.0
        %1138 = vmatpush1.msra.mxu0 0.0
        %1139 = vmatprep.subr.mxu0 0.0
        %1140 = vmatpush1.msra.mxu0 0.0
        %1141 = vmatprep.subr.mxu0 0.0
        %1142 = vmatpush1.msra.mxu0 0.0
        %1143 = vmatprep.subr.mxu0 0.0
        %1144 = vmatpush1.msra.mxu0 0.0
        %1145 = vmatprep.subr.mxu0 0.0
        %1146 = vmatpush1.msra.mxu0 0.0
        %1147 = vmatprep.subr.mxu0 0.0
        %1148 = vmatpush1.msra.mxu0 0.0
        %1149 = vmatprep.subr.mxu0 0.0
        %1150 = vmatpush1.msra.mxu0 0.0
        %1151 = vmatprep.subr.mxu0 0.0
        %1152 = vmatpush1.msra.mxu0 0.0
        %1153 = vmatprep.subr.mxu0 0.0
        %1154 = vmatpush1.msra.mxu0 0.0
        %1155 = vmatprep.subr.mxu0 0.0
        %1156 = vmatpush1.msra.mxu0 0.0
        %1157 = vmatprep.subr.mxu0 0.0
        %1158 = vmatpush1.msra.mxu0 0.0
        %1159 = vmatprep.subr.mxu0 0.0
        %1160 = vmatpush1.msra.mxu0 0.0
        %1161 = vmatprep.subr.mxu0 0.0
        %1162 = vmatpush1.msra.mxu0 0.0
        %1163 = vmatprep.subr.mxu0 0.0
        %1164 = vmatpush1.msra.mxu0 0.0
        %1165 = vmatprep.subr.mxu0 0.0
        %1166 = vmatpush1.msra.mxu0 0.0
        %1167 = vmatprep.subr.mxu0 0.0
        %1168 = vmatpush1.msra.mxu0 0.0
        %1169 = vmatprep.subr.mxu0 0.0
        %1170 = vmatpush1.msra.mxu0 0.0
        %1171 = vmatprep.subr.mxu0 0.0
        %1172 = vmatpush1.msra.mxu0 0.0
        %1173 = vmatprep.subr.mxu0 0.0
        %1174 = vmatpush1.msra.mxu0 0.0
        %1175 = vmatprep.subr.mxu0 0.0
        %1176 = vmatpush1.msra.mxu0 0.0
        %1177 = vmatprep.subr.mxu0 0.0
        %1178 = vmatpush1.msra.mxu0 0.0
        %1179 = vmatprep.subr.mxu0 0.0
        %1180 = vmatpush1.msra.mxu0 0.0
        %1181 = vmatprep.subr.mxu0 0.0
        %1182 = vmatpush1.msra.mxu0 0.0
        %1183 = vmatprep.subr.mxu0 0.0
        %1184 = vmatpush1.msra.mxu0 0.0
        %1185 = vmatprep.subr.mxu0 0.0
        %1186 = vmatpush1.msra.mxu0 0.0
        %1187 = vmatprep.subr.mxu0 0.0
        %1188 = vmatpush1.msra.mxu0 0.0
        %1189 = vmatprep.subr.mxu0 0.0
        %1190 = vmatpush1.msra.mxu0 0.0
        %1191 = vmatprep.subr.mxu0 0.0
        %1192 = vmatpush1.msra.mxu0 0.0
        %1193 = vmatprep.subr.mxu0 0.0
        %1194 = vmatpush1.msra.mxu0 0.0
        %1195 = vmatprep.mubr.f32.mxu0 0.0
        %1196 = vmatmul.mubr.f32.gmra.mrb[0].mxu0 %v1129
        %v1197 = vpop.f32.mrb[0].mxu0
        %v1198 = vadd.f32 0.0, %v1197
        %v1199 = vpop.f32.mrb[0].mxu0
        %v1200 = vadd.f32 0.0, %v1199
        %1201 = vdwg.mxu0
        %v1202 = vmul.f32 %v880, %v1198
        %v1203 = vmul.f32 %v881, %v1200
        %v1204 = vrot.slane %v1202, 4
        %v1205 = vadd.f32 %v1202, %v1204
        %v1206 = vrot.slane %v1205, 2
        %v1207 = vadd.f32 %v1205, %v1206
        %v1208 = vrot.slane %v1207, 1
        %v1209 = vadd.f32 %v1207, %v1208
        %v1210 = vrot.slane %v1203, 4
        %v1211 = vadd.f32 %v1203, %v1210
        %v1212 = vrot.slane %v1211, 2
        %v1213 = vadd.f32 %v1211, %v1212
        %v1214 = vrot.slane %v1213, 1
        %v1215 = vadd.f32 %v1213, %v1214
        %v1216 = vmul.f32 %v1120, %v1120
        %v1217 = vmul.f32 %v1126, %v1126
        %v1218 = vsub.f32 %v1209, %v1216
        %v1219 = vsub.f32 %v1215, %v1217
        %v1220 = vmax.f32 %v1218, 0.0
        %v1221 = vmax.f32 %v1219, 0.0
        %v1222 = vld [vmem:[%s300 + $0x2] sm:$0x3]
        %v1223 = vadd.f32 %v1220, 1e-05
        %v1224 = vadd.f32 %v1221, 1e-05
        %v1225 = vrsqrt.pop %v1223
        %v1226 = vrsqrt.pop %v1224
        %v1229 = vcombine.low %v1225, %v1226
        %v1231 = vunpack.c.l.s4 1966171168
        %v1232 = vunpack.c.0.s8 %v1231
        %v1233 = vlaneseq
        %v1234 = vshrl.u32 %v1233, 7
        %v1235 = vsub.s32 %v1232, %v1234
        %v1236 = vrot.slane %v1229, %v1235
        %v1238 = vunpack.c.l.s4 1966171168
        %v1239 = vunpack.c.0.s8 %v1238
        %v1240 = vlaneseq
        %v1241 = vshrl.u32 %v1240, 7
        %v1242 = vsub.s32 %v1239, %v1241
        %v1243 = vrot.slane %v1236, %v1242
        %v1245 = vmul.f32 %v1222, %v1243
        %v1246 = vld [vmem:[%s305 + $0x2] sm:$0x3]
        %v1248 = vlaneseq
        %v1249 = vshrl.u32 %v1248, 7
        %v1250 = vsub.s32 0, %v1249
        %v1251 = vrot.slane %v1245, %v1250
        %v1252 = vlaneseq
        %v1253 = vshrl.u32 %v1252, 7
        %v1254 = vsub.s32 1, %v1253
        %v1255 = vrot.slane %v1245, %v1254
        %v1258 = vmul.f32 %v1120, %v1251
        %v1259 = vmul.f32 %v1126, %v1255
        %v1262 = vcombine.low %v1258, %v1259
        %v1264 = vunpack.c.l.s4 1966171168
        %v1265 = vunpack.c.0.s8 %v1264
        %v1266 = vlaneseq
        %v1267 = vshrl.u32 %v1266, 7
        %v1268 = vsub.s32 %v1265, %v1267
        %v1269 = vrot.slane %v1262, %v1268
        %v1271 = vunpack.c.l.s4 1966171168
        %v1272 = vunpack.c.0.s8 %v1271
        %v1273 = vlaneseq
        %v1274 = vshrl.u32 %v1273, 7
        %v1275 = vsub.s32 %v1272, %v1274
        %v1276 = vrot.slane %v1269, %v1275
        %v1278 = vsub.f32 %v1246, %v1276
        %v1279 = vmax.f32 %v1013, %v1019
        %v1280 = vmax.f32 %v1279, %v1025
        %v1281 = vmax.f32 %v1280, %v1031
        %v1282 = vmax.f32 %v1281, %v1037
        %v1283 = vmax.f32 %v1282, %v1043
        %v1284 = vmax.f32 %v1283, %v1049
        %v1285 = vmax.f32 %v1284, %v1055
        %v1286 = vrot.slane %v1285, 4
        %v1287 = vmax.f32 %v1285, %v1286
        %v1288 = vrot.slane %v1287, 2
        %v1289 = vmax.f32 %v1287, %v1288
        %v1290 = vrot.slane %v1289, 1
        %v1291 = vmax.f32 %v1289, %v1290
        %v1292 = vmax.f32 %v1015, %v1021
        %v1293 = vmax.f32 %v1292, %v1027
        %v1294 = vmax.f32 %v1293, %v1033
        %v1295 = vmax.f32 %v1294, %v1039
        %v1296 = vmax.f32 %v1295, %v1045
        %v1297 = vmax.f32 %v1296, %v1051
        %v1298 = vmax.f32 %v1297, %v1057
        %v1299 = vrot.slane %v1298, 4
        %v1300 = vmax.f32 %v1298, %v1299
        %v1301 = vrot.slane %v1300, 2
        %v1302 = vmax.f32 %v1300, %v1301
        %v1303 = vrot.slane %v1302, 1
        %v1304 = vmax.f32 %v1302, %v1303
        %v1305 = vmax.f32 %v1061, %v1067
        %v1306 = vmax.f32 %v1305, %v1073
        %v1307 = vmax.f32 %v1306, %v1079
        %v1308 = vmax.f32 %v1307, %v1085
        %v1309 = vmax.f32 %v1308, %v1091
        %v1310 = vmax.f32 %v1309, %v1097
        %v1311 = vmax.f32 %v1310, %v1103
        %v1312 = vrot.slane %v1311, 4
        %v1313 = vmax.f32 %v1311, %v1312
        %v1314 = vrot.slane %v1313, 2
        %v1315 = vmax.f32 %v1313, %v1314
        %v1316 = vrot.slane %v1315, 1
        %v1317 = vmax.f32 %v1315, %v1316
        %v1318 = vmax.f32 %v1063, %v1069
        %v1319 = vmax.f32 %v1318, %v1075
        %v1320 = vmax.f32 %v1319, %v1081
        %v1321 = vmax.f32 %v1320, %v1087
        %v1322 = vmax.f32 %v1321, %v1093
        %v1323 = vmax.f32 %v1322, %v1099
        %v1324 = vmax.f32 %v1323, %v1105
        %v1325 = vrot.slane %v1324, 4
        %v1326 = vmax.f32 %v1324, %v1325
        %v1327 = vrot.slane %v1326, 2
        %v1328 = vmax.f32 %v1326, %v1327
        %v1329 = vrot.slane %v1328, 1
        %v1330 = vmax.f32 %v1328, %v1329
        %v1331 = vmin.f32 %v1013, %v1019
        %v1332 = vmin.f32 %v1331, %v1025
        %v1333 = vmin.f32 %v1332, %v1031
        %v1334 = vmin.f32 %v1333, %v1037
        %v1335 = vmin.f32 %v1334, %v1043
        %v1336 = vmin.f32 %v1335, %v1049
        %v1337 = vmin.f32 %v1336, %v1055
        %v1338 = vrot.slane %v1337, 4
        %v1339 = vmin.f32 %v1337, %v1338
        %v1340 = vrot.slane %v1339, 2
        %v1341 = vmin.f32 %v1339, %v1340
        %v1342 = vrot.slane %v1341, 1
        %v1343 = vmin.f32 %v1341, %v1342
        %v1344 = vmin.f32 %v1015, %v1021
        %v1345 = vmin.f32 %v1344, %v1027
        %v1346 = vmin.f32 %v1345, %v1033
        %v1347 = vmin.f32 %v1346, %v1039
        %v1348 = vmin.f32 %v1347, %v1045
        %v1349 = vmin.f32 %v1348, %v1051
        %v1350 = vmin.f32 %v1349, %v1057
        %v1351 = vrot.slane %v1350, 4
        %v1352 = vmin.f32 %v1350, %v1351
        %v1353 = vrot.slane %v1352, 2
        %v1354 = vmin.f32 %v1352, %v1353
        %v1355 = vrot.slane %v1354, 1
        %v1356 = vmin.f32 %v1354, %v1355
        %v1357 = vmin.f32 %v1061, %v1067
        %v1358 = vmin.f32 %v1357, %v1073
        %v1359 = vmin.f32 %v1358, %v1079
        %v1360 = vmin.f32 %v1359, %v1085
        %v1361 = vmin.f32 %v1360, %v1091
        %v1362 = vmin.f32 %v1361, %v1097
        %v1363 = vmin.f32 %v1362, %v1103
        %v1364 = vrot.slane %v1363, 4
        %v1365 = vmin.f32 %v1363, %v1364
        %v1366 = vrot.slane %v1365, 2
        %v1367 = vmin.f32 %v1365, %v1366
        %v1368 = vrot.slane %v1367, 1
        %v1369 = vmin.f32 %v1367, %v1368
        %v1370 = vmin.f32 %v1063, %v1069
        %v1371 = vmin.f32 %v1370, %v1075
        %v1372 = vmin.f32 %v1371, %v1081
        %v1373 = vmin.f32 %v1372, %v1087
        %v1374 = vmin.f32 %v1373, %v1093
        %v1375 = vmin.f32 %v1374, %v1099
        %v1376 = vmin.f32 %v1375, %v1105
        %v1377 = vrot.slane %v1376, 4
        %v1378 = vmin.f32 %v1376, %v1377
        %v1379 = vrot.slane %v1378, 2
        %v1380 = vmin.f32 %v1378, %v1379
        %v1381 = vrot.slane %v1380, 1
        %v1382 = vmin.f32 %v1380, %v1381
        %vm1383 = vcmp.ge.f32.partialorder %v1245, 0.0
        %v1384 = vmul.f32 %v1291, %v1251
        %v1385 = vmul.f32 %v1304, %v1255
        %v1386 = vmul.f32 %v1317, %v1251
        %v1387 = vmul.f32 %v1330, %v1255
        %v1388 = vmul.f32 %v1343, %v1251
        %v1389 = vmul.f32 %v1356, %v1255
        %v1390 = vmul.f32 %v1369, %v1251
        %v1391 = vmul.f32 %v1382, %v1255
        %v1392 = vsel %vm1383, 1, 0
        %v1393 = vlaneseq
        %v1394 = vshrl.u32 %v1393, 7
        %v1395 = vsub.s32 0, %v1394
        %v1396 = vrot.slane %v1392, %v1395
        %v1397 = vlaneseq
        %v1398 = vshrl.u32 %v1397, 7
        %v1399 = vsub.s32 1, %v1398
        %v1400 = vrot.slane %v1392, %v1399
        %vm1401 = vcmp.eq.s32.totalorder %v1396, 1
        %vm1402 = vcmp.eq.s32.totalorder %v1400, 1
        %v1407 = vrot.slane %v1386, 7
        %v1408 = vsel %vm837, %v1407, %v1384
        %v1409 = vrot.slane %v1387, 7
        %v1410 = vsel %vm837, %v1409, %v1385
        %v1417 = vrot.slane %v1390, 7
        %v1418 = vsel %vm837, %v1417, %v1388
        %v1419 = vrot.slane %v1391, 7
        %v1420 = vsel %vm837, %v1419, %v1389
        %v1423 = vsel %vm1401, %v1408, %v1418
        %v1424 = vsel %vm1402, %v1410, %v1420
        %v1426 = vlaneseq
        %v1427 = vshrl.u32 %v1426, 7
        %v1428 = vsub.s32 0, %v1427
        %v1429 = vrot.slane %v1278, %v1428
        %v1430 = vlaneseq
        %v1431 = vshrl.u32 %v1430, 7
        %v1432 = vsub.s32 1, %v1431
        %v1433 = vrot.slane %v1278, %v1432
        %v1436 = vadd.f32 %v1423, %v1429
        %v1437 = vadd.f32 %v1424, %v1433
        %v1440 = vcombine.low %v1436, %v1437
        %v1442 = vunpack.c.l.s4 1983009808
        %v1443 = vunpack.c.0.s8 %v1442
        %v1444 = vlaneseq
        %v1445 = vshrl.u32 %v1444, 7
        %v1446 = vsub.s32 %v1443, %v1445
        %v1447 = vrot.slane %v1440, %v1446
        %1449 = vst [vmem:[%s295 + $0x4] sm:$0xf] %v1447
        %v1450 = vld [vmem:[%s259 + $0x20] sm:$0xff]
        %v1451 = vld [vmem:[%s259 + $0x28] sm:$0xff]
        %v1452 = vld [vmem:[%s0] sm:$0xff]
        %v1453 = vld [vmem:[%s0 + $0x8] sm:$0xff]
        %v1454 = vld [vmem:[%s0 + $0x10] sm:$0xff]
        %v1455 = vld [vmem:[%s0 + $0x18] sm:$0xff]
        %v1456 = vld [vmem:[%s0 + $0x20] sm:$0xff]
        %v1457 = vld [vmem:[%s0 + $0x28] sm:$0xff]
        %v1458 = vld [vmem:[%s0 + $0x30] sm:$0xff]
        %v1459 = vld [vmem:[%s0 + $0x38] sm:$0xff]
        %v1460 = vld [vmem:[%s0 + $0x40] sm:$0xff]
        %v1461 = vld [vmem:[%s0 + $0x48] sm:$0xff]
        %v1462 = vld [vmem:[%s0 + $0x50] sm:$0xff]
        %v1463 = vld [vmem:[%s0 + $0x58] sm:$0xff]
        %v1464 = vld [vmem:[%s0 + $0x60] sm:$0xff]
        %v1465 = vld [vmem:[%s0 + $0x68] sm:$0xff]
        %v1466 = vld [vmem:[%s0 + $0x70] sm:$0xff]
        %v1467 = vld [vmem:[%s0 + $0x78] sm:$0xff]
        %v1469 = vsel %vm326, %v1452, 0
        %v1472 = vsel %vm326, %v1453, 0
        %v1475 = vsel %vm326, %v1454, 0
        %v1478 = vsel %vm326, %v1455, 0
        %v1481 = vsel %vm326, %v1456, 0
        %v1484 = vsel %vm326, %v1457, 0
        %v1487 = vsel %vm326, %v1458, 0
        %v1490 = vsel %vm326, %v1459, 0
        %v1493 = vsel %vm326, %v1460, 0
        %v1496 = vsel %vm326, %v1461, 0
        %v1499 = vsel %vm326, %v1462, 0
        %v1502 = vsel %vm326, %v1463, 0
        %v1505 = vsel %vm326, %v1464, 0
        %v1508 = vsel %vm326, %v1465, 0
        %v1511 = vsel %vm326, %v1466, 0
        %v1514 = vsel %vm326, %v1467, 0
        %1516 = vmatprep.subr.mxu0 %v1451
        %1517 = vmatpush1.msra.mxu0 %v1450
        %1518 = vmatprep.subr.mxu0 0.0
        %1519 = vmatpush1.msra.mxu0 0.0
        %1520 = vmatprep.subr.mxu0 0.0
        %1521 = vmatpush1.msra.mxu0 0.0
        %1522 = vmatprep.subr.mxu0 0.0
        %1523 = vmatpush1.msra.mxu0 0.0
        %1524 = vmatprep.subr.mxu0 0.0
        %1525 = vmatpush1.msra.mxu0 0.0
        %1526 = vmatprep.subr.mxu0 0.0
        %1527 = vmatpush1.msra.mxu0 0.0
        %1528 = vmatprep.subr.mxu0 0.0
        %1529 = vmatpush1.msra.mxu0 0.0
        %1530 = vmatprep.subr.mxu0 0.0
        %1531 = vmatpush1.msra.mxu0 0.0
        %1532 = vmatprep.subr.mxu0 0.0
        %1533 = vmatpush1.msra.mxu0 0.0
        %1534 = vmatprep.subr.mxu0 0.0
        %1535 = vmatpush1.msra.mxu0 0.0
        %1536 = vmatprep.subr.mxu0 0.0
        %1537 = vmatpush1.msra.mxu0 0.0
        %1538 = vmatprep.subr.mxu0 0.0
        %1539 = vmatpush1.msra.mxu0 0.0
        %1540 = vmatprep.subr.mxu0 0.0
        %1541 = vmatpush1.msra.mxu0 0.0
        %1542 = vmatprep.subr.mxu0 0.0
        %1543 = vmatpush1.msra.mxu0 0.0
        %1544 = vmatprep.subr.mxu0 0.0
        %1545 = vmatpush1.msra.mxu0 0.0
        %1546 = vmatprep.subr.mxu0 0.0
        %1547 = vmatpush1.msra.mxu0 0.0
        %1548 = vmatprep.subr.mxu0 0.0
        %1549 = vmatpush1.msra.mxu0 0.0
        %1550 = vmatprep.subr.mxu0 0.0
        %1551 = vmatpush1.msra.mxu0 0.0
        %1552 = vmatprep.subr.mxu0 0.0
        %1553 = vmatpush1.msra.mxu0 0.0
        %1554 = vmatprep.subr.mxu0 0.0
        %1555 = vmatpush1.msra.mxu0 0.0
        %1556 = vmatprep.subr.mxu0 0.0
        %1557 = vmatpush1.msra.mxu0 0.0
        %1558 = vmatprep.subr.mxu0 0.0
        %1559 = vmatpush1.msra.mxu0 0.0
        %1560 = vmatprep.subr.mxu0 0.0
        %1561 = vmatpush1.msra.mxu0 0.0
        %1562 = vmatprep.subr.mxu0 0.0
        %1563 = vmatpush1.msra.mxu0 0.0
        %1564 = vmatprep.subr.mxu0 0.0
        %1565 = vmatpush1.msra.mxu0 0.0
        %1566 = vmatprep.subr.mxu0 0.0
        %1567 = vmatpush1.msra.mxu0 0.0
        %1568 = vmatprep.subr.mxu0 0.0
        %1569 = vmatpush1.msra.mxu0 0.0
        %1570 = vmatprep.subr.mxu0 0.0
        %1571 = vmatpush1.msra.mxu0 0.0
        %1572 = vmatprep.subr.mxu0 0.0
        %1573 = vmatpush1.msra.mxu0 0.0
        %1574 = vmatprep.subr.mxu0 0.0
        %1575 = vmatpush1.msra.mxu0 0.0
        %1576 = vmatprep.subr.mxu0 0.0
        %1577 = vmatpush1.msra.mxu0 0.0
        %1578 = vmatprep.subr.mxu0 0.0
        %1579 = vmatpush1.msra.mxu0 0.0
        %1580 = vmatprep.mubr.f32.mxu0 0.0
        %1581 = vmatmul.mubr.f32.gmra.mrb[0].mxu0 %v1469
        %v1582 = vpop.f32.mrb[0].mxu0
        %v1583 = vadd.f32 0.0, %v1582
        %v1584 = vpop.f32.mrb[0].mxu0
        %v1585 = vadd.f32 0.0, %v1584
        %1586 = vmatprep.mubr.f32.mxu0 0.0
        %1587 = vmatmul.mubr.f32.gmra.mrb[0].mxu0 %v1472
        %v1588 = vpop.f32.mrb[0].mxu0
        %v1589 = vadd.f32 0.0, %v1588
        %v1590 = vpop.f32.mrb[0].mxu0
        %v1591 = vadd.f32 0.0, %v1590
        %1592 = vmatprep.mubr.f32.mxu0 0.0
        %1593 = vmatmul.mubr.f32.gmra.mrb[0].mxu0 %v1475
        %v1594 = vpop.f32.mrb[0].mxu0
        %v1595 = vadd.f32 0.0, %v1594
        %v1596 = vpop.f32.mrb[0].mxu0
        %v1597 = vadd.f32 0.0, %v1596
        %1598 = vmatprep.mubr.f32.mxu0 0.0
        %1599 = vmatmul.mubr.f32.gmra.mrb[0].mxu0 %v1478
        %v1600 = vpop.f32.mrb[0].mxu0
        %v1601 = vadd.f32 0.0, %v1600
        %v1602 = vpop.f32.mrb[0].mxu0
        %v1603 = vadd.f32 0.0, %v1602
        %1604 = vmatprep.mubr.f32.mxu0 0.0
        %1605 = vmatmul.mubr.f32.gmra.mrb[0].mxu0 %v1481
        %v1606 = vpop.f32.mrb[0].mxu0
        %v1607 = vadd.f32 0.0, %v1606
        %v1608 = vpop.f32.mrb[0].mxu0
        %v1609 = vadd.f32 0.0, %v1608
        %1610 = vmatprep.mubr.f32.mxu0 0.0
        %1611 = vmatmul.mubr.f32.gmra.mrb[0].mxu0 %v1484
        %v1612 = vpop.f32.mrb[0].mxu0
        %v1613 = vadd.f32 0.0, %v1612
        %v1614 = vpop.f32.mrb[0].mxu0
        %v1615 = vadd.f32 0.0, %v1614
        %1616 = vmatprep.mubr.f32.mxu0 0.0
        %1617 = vmatmul.mubr.f32.gmra.mrb[0].mxu0 %v1487
        %v1618 = vpop.f32.mrb[0].mxu0
        %v1619 = vadd.f32 0.0, %v1618
        %v1620 = vpop.f32.mrb[0].mxu0
        %v1621 = vadd.f32 0.0, %v1620
        %1622 = vmatprep.mubr.f32.mxu0 0.0
        %1623 = vmatmul.mubr.f32.gmra.mrb[0].mxu0 %v1490
        %v1624 = vpop.f32.mrb[0].mxu0
        %v1625 = vadd.f32 0.0, %v1624
        %v1626 = vpop.f32.mrb[0].mxu0
        %v1627 = vadd.f32 0.0, %v1626
        %1628 = vmatprep.mubr.f32.mxu0 0.0
        %1629 = vmatmul.mubr.f32.gmra.mrb[0].mxu0 %v1493
        %v1630 = vpop.f32.mrb[0].mxu0
        %v1631 = vadd.f32 0.0, %v1630
        %v1632 = vpop.f32.mrb[0].mxu0
        %v1633 = vadd.f32 0.0, %v1632
        %1634 = vmatprep.mubr.f32.mxu0 0.0
        %1635 = vmatmul.mubr.f32.gmra.mrb[0].mxu0 %v1496
        %v1636 = vpop.f32.mrb[0].mxu0
        %v1637 = vadd.f32 0.0, %v1636
        %v1638 = vpop.f32.mrb[0].mxu0
        %v1639 = vadd.f32 0.0, %v1638
        %1640 = vmatprep.mubr.f32.mxu0 0.0
        %1641 = vmatmul.mubr.f32.gmra.mrb[0].mxu0 %v1499
        %v1642 = vpop.f32.mrb[0].mxu0
        %v1643 = vadd.f32 0.0, %v1642
        %v1644 = vpop.f32.mrb[0].mxu0
        %v1645 = vadd.f32 0.0, %v1644
        %1646 = vmatprep.mubr.f32.mxu0 0.0
        %1647 = vmatmul.mubr.f32.gmra.mrb[0].mxu0 %v1502
        %v1648 = vpop.f32.mrb[0].mxu0
        %v1649 = vadd.f32 0.0, %v1648
        %v1650 = vpop.f32.mrb[0].mxu0
        %v1651 = vadd.f32 0.0, %v1650
        %1652 = vmatprep.mubr.f32.mxu0 0.0
        %1653 = vmatmul.mubr.f32.gmra.mrb[0].mxu0 %v1505
        %v1654 = vpop.f32.mrb[0].mxu0
        %v1655 = vadd.f32 0.0, %v1654
        %v1656 = vpop.f32.mrb[0].mxu0
        %v1657 = vadd.f32 0.0, %v1656
        %1658 = vmatprep.mubr.f32.mxu0 0.0
        %1659 = vmatmul.mubr.f32.gmra.mrb[0].mxu0 %v1508
        %v1660 = vpop.f32.mrb[0].mxu0
        %v1661 = vadd.f32 0.0, %v1660
        %v1662 = vpop.f32.mrb[0].mxu0
        %v1663 = vadd.f32 0.0, %v1662
        %1664 = vmatprep.mubr.f32.mxu0 0.0
        %1665 = vmatmul.mubr.f32.gmra.mrb[0].mxu0 %v1511
        %v1666 = vpop.f32.mrb[0].mxu0
        %v1667 = vadd.f32 0.0, %v1666
        %v1668 = vpop.f32.mrb[0].mxu0
        %v1669 = vadd.f32 0.0, %v1668
        %1670 = vmatprep.mubr.f32.mxu0 0.0
        %1671 = vmatmul.mubr.f32.gmra.mrb[0].mxu0 %v1514
        %v1672 = vpop.f32.mrb[0].mxu0
        %v1673 = vadd.f32 0.0, %v1672
        %v1674 = vpop.f32.mrb[0].mxu0
        %v1675 = vadd.f32 0.0, %v1674
        %1676 = vdwg.mxu0
        %v1677 = vld [vmem:[%s2] sm:$0xff]
        %1679 = vset.pattern.permute.xlu0 0
        %1680 = vperm.xlu0 %1679, %v1677
        %v1681 = vpop.permute.xlu0 %1680
        %v1683 = vmul.f32 %v1681, %v1450
        %v1684 = vmul.f32 %v1681, %v1451
        %v1685 = vrot.slane %v1683, 4
        %v1686 = vadd.f32 %v1683, %v1685
        %v1687 = vrot.slane %v1686, 2
        %v1688 = vadd.f32 %v1686, %v1687
        %v1689 = vrot.slane %v1688, 1
        %v1690 = vadd.f32 %v1688, %v1689
        %v1691 = vrot.slane %v1684, 4
        %v1692 = vadd.f32 %v1684, %v1691
        %v1693 = vrot.slane %v1692, 2
        %v1694 = vadd.f32 %v1692, %v1693
        %v1695 = vrot.slane %v1694, 1
        %v1696 = vadd.f32 %v1694, %v1695
        %v1697 = vld [vmem:[%s3] sm:$0xff]
        %v1699 = vsel %vm326, %v1697, 0
        %1701 = vmatprep.subr.mxu0 %v1451
        %1702 = vmatpush1.msra.mxu0 %v1450
        %1703 = vmatprep.subr.mxu0 0.0
        %1704 = vmatpush1.msra.mxu0 0.0
        %1705 = vmatprep.subr.mxu0 0.0
        %1706 = vmatpush1.msra.mxu0 0.0
        %1707 = vmatprep.subr.mxu0 0.0
        %1708 = vmatpush1.msra.mxu0 0.0
        %1709 = vmatprep.subr.mxu0 0.0
        %1710 = vmatpush1.msra.mxu0 0.0
        %1711 = vmatprep.subr.mxu0 0.0
        %1712 = vmatpush1.msra.mxu0 0.0
        %1713 = vmatprep.subr.mxu0 0.0
        %1714 = vmatpush1.msra.mxu0 0.0
        %1715 = vmatprep.subr.mxu0 0.0
        %1716 = vmatpush1.msra.mxu0 0.0
        %1717 = vmatprep.subr.mxu0 0.0
        %1718 = vmatpush1.msra.mxu0 0.0
        %1719 = vmatprep.subr.mxu0 0.0
        %1720 = vmatpush1.msra.mxu0 0.0
        %1721 = vmatprep.subr.mxu0 0.0
        %1722 = vmatpush1.msra.mxu0 0.0
        %1723 = vmatprep.subr.mxu0 0.0
        %1724 = vmatpush1.msra.mxu0 0.0
        %1725 = vmatprep.subr.mxu0 0.0
        %1726 = vmatpush1.msra.mxu0 0.0
        %1727 = vmatprep.subr.mxu0 0.0
        %1728 = vmatpush1.msra.mxu0 0.0
        %1729 = vmatprep.subr.mxu0 0.0
        %1730 = vmatpush1.msra.mxu0 0.0
        %1731 = vmatprep.subr.mxu0 0.0
        %1732 = vmatpush1.msra.mxu0 0.0
        %1733 = vmatprep.subr.mxu0 0.0
        %1734 = vmatpush1.msra.mxu0 0.0
        %1735 = vmatprep.subr.mxu0 0.0
        %1736 = vmatpush1.msra.mxu0 0.0
        %1737 = vmatprep.subr.mxu0 0.0
        %1738 = vmatpush1.msra.mxu0 0.0
        %1739 = vmatprep.subr.mxu0 0.0
        %1740 = vmatpush1.msra.mxu0 0.0
        %1741 = vmatprep.subr.mxu0 0.0
        %1742 = vmatpush1.msra.mxu0 0.0
        %1743 = vmatprep.subr.mxu0 0.0
        %1744 = vmatpush1.msra.mxu0 0.0
        %1745 = vmatprep.subr.mxu0 0.0
        %1746 = vmatpush1.msra.mxu0 0.0
        %1747 = vmatprep.subr.mxu0 0.0
        %1748 = vmatpush1.msra.mxu0 0.0
        %1749 = vmatprep.subr.mxu0 0.0
        %1750 = vmatpush1.msra.mxu0 0.0
        %1751 = vmatprep.subr.mxu0 0.0
        %1752 = vmatpush1.msra.mxu0 0.0
        %1753 = vmatprep.subr.mxu0 0.0
        %1754 = vmatpush1.msra.mxu0 0.0
        %1755 = vmatprep.subr.mxu0 0.0
        %1756 = vmatpush1.msra.mxu0 0.0
        %1757 = vmatprep.subr.mxu0 0.0
        %1758 = vmatpush1.msra.mxu0 0.0
        %1759 = vmatprep.subr.mxu0 0.0
        %1760 = vmatpush1.msra.mxu0 0.0
        %1761 = vmatprep.subr.mxu0 0.0
        %1762 = vmatpush1.msra.mxu0 0.0
        %1763 = vmatprep.subr.mxu0 0.0
        %1764 = vmatpush1.msra.mxu0 0.0
        %1765 = vmatprep.mubr.f32.mxu0 0.0
        %1766 = vmatmul.mubr.f32.gmra.mrb[0].mxu0 %v1699
        %v1767 = vpop.f32.mrb[0].mxu0
        %v1768 = vadd.f32 0.0, %v1767
        %v1769 = vpop.f32.mrb[0].mxu0
        %v1770 = vadd.f32 0.0, %v1769
        %1771 = vdwg.mxu0
        %v1772 = vmul.f32 %v1450, %v1768
        %v1773 = vmul.f32 %v1451, %v1770
        %v1774 = vrot.slane %v1772, 4
        %v1775 = vadd.f32 %v1772, %v1774
        %v1776 = vrot.slane %v1775, 2
        %v1777 = vadd.f32 %v1775, %v1776
        %v1778 = vrot.slane %v1777, 1
        %v1779 = vadd.f32 %v1777, %v1778
        %v1780 = vrot.slane %v1773, 4
        %v1781 = vadd.f32 %v1773, %v1780
        %v1782 = vrot.slane %v1781, 2
        %v1783 = vadd.f32 %v1781, %v1782
        %v1784 = vrot.slane %v1783, 1
        %v1785 = vadd.f32 %v1783, %v1784
        %v1786 = vmul.f32 %v1690, %v1690
        %v1787 = vmul.f32 %v1696, %v1696
        %v1788 = vsub.f32 %v1779, %v1786
        %v1789 = vsub.f32 %v1785, %v1787
        %v1790 = vmax.f32 %v1788, 0.0
        %v1791 = vmax.f32 %v1789, 0.0
        %v1792 = vld [vmem:[%s300 + $0x4] sm:$0x3]
        %v1793 = vadd.f32 %v1790, 1e-05
        %v1794 = vadd.f32 %v1791, 1e-05
        %v1795 = vrsqrt.pop %v1793
        %v1796 = vrsqrt.pop %v1794
        %v1799 = vcombine.low %v1795, %v1796
        %v1801 = vunpack.c.l.s4 1966171168
        %v1802 = vunpack.c.0.s8 %v1801
        %v1803 = vlaneseq
        %v1804 = vshrl.u32 %v1803, 7
        %v1805 = vsub.s32 %v1802, %v1804
        %v1806 = vrot.slane %v1799, %v1805
        %v1808 = vunpack.c.l.s4 1966171168
        %v1809 = vunpack.c.0.s8 %v1808
        %v1810 = vlaneseq
        %v1811 = vshrl.u32 %v1810, 7
        %v1812 = vsub.s32 %v1809, %v1811
        %v1813 = vrot.slane %v1806, %v1812
        %v1815 = vmul.f32 %v1792, %v1813
        %v1816 = vld [vmem:[%s305 + $0x4] sm:$0x3]
        %v1818 = vlaneseq
        %v1819 = vshrl.u32 %v1818, 7
        %v1820 = vsub.s32 0, %v1819
        %v1821 = vrot.slane %v1815, %v1820
        %v1822 = vlaneseq
        %v1823 = vshrl.u32 %v1822, 7
        %v1824 = vsub.s32 1, %v1823
        %v1825 = vrot.slane %v1815, %v1824
        %v1828 = vmul.f32 %v1690, %v1821
        %v1829 = vmul.f32 %v1696, %v1825
        %v1832 = vcombine.low %v1828, %v1829
        %v1834 = vunpack.c.l.s4 1966171168
        %v1835 = vunpack.c.0.s8 %v1834
        %v1836 = vlaneseq
        %v1837 = vshrl.u32 %v1836, 7
        %v1838 = vsub.s32 %v1835, %v1837
        %v1839 = vrot.slane %v1832, %v1838
        %v1841 = vunpack.c.l.s4 1966171168
        %v1842 = vunpack.c.0.s8 %v1841
        %v1843 = vlaneseq
        %v1844 = vshrl.u32 %v1843, 7
        %v1845 = vsub.s32 %v1842, %v1844
        %v1846 = vrot.slane %v1839, %v1845
        %v1848 = vsub.f32 %v1816, %v1846
        %v1849 = vmax.f32 %v1583, %v1589
        %v1850 = vmax.f32 %v1849, %v1595
        %v1851 = vmax.f32 %v1850, %v1601
        %v1852 = vmax.f32 %v1851, %v1607
        %v1853 = vmax.f32 %v1852, %v1613
        %v1854 = vmax.f32 %v1853, %v1619
        %v1855 = vmax.f32 %v1854, %v1625
        %v1856 = vrot.slane %v1855, 4
        %v1857 = vmax.f32 %v1855, %v1856
        %v1858 = vrot.slane %v1857, 2
        %v1859 = vmax.f32 %v1857, %v1858
        %v1860 = vrot.slane %v1859, 1
        %v1861 = vmax.f32 %v1859, %v1860
        %v1862 = vmax.f32 %v1585, %v1591
        %v1863 = vmax.f32 %v1862, %v1597
        %v1864 = vmax.f32 %v1863, %v1603
        %v1865 = vmax.f32 %v1864, %v1609
        %v1866 = vmax.f32 %v1865, %v1615
        %v1867 = vmax.f32 %v1866, %v1621
        %v1868 = vmax.f32 %v1867, %v1627
        %v1869 = vrot.slane %v1868, 4
        %v1870 = vmax.f32 %v1868, %v1869
        %v1871 = vrot.slane %v1870, 2
        %v1872 = vmax.f32 %v1870, %v1871
        %v1873 = vrot.slane %v1872, 1
        %v1874 = vmax.f32 %v1872, %v1873
        %v1875 = vmax.f32 %v1631, %v1637
        %v1876 = vmax.f32 %v1875, %v1643
        %v1877 = vmax.f32 %v1876, %v1649
        %v1878 = vmax.f32 %v1877, %v1655
        %v1879 = vmax.f32 %v1878, %v1661
        %v1880 = vmax.f32 %v1879, %v1667
        %v1881 = vmax.f32 %v1880, %v1673
        %v1882 = vrot.slane %v1881, 4
        %v1883 = vmax.f32 %v1881, %v1882
        %v1884 = vrot.slane %v1883, 2
        %v1885 = vmax.f32 %v1883, %v1884
        %v1886 = vrot.slane %v1885, 1
        %v1887 = vmax.f32 %v1885, %v1886
        %v1888 = vmax.f32 %v1633, %v1639
        %v1889 = vmax.f32 %v1888, %v1645
        %v1890 = vmax.f32 %v1889, %v1651
        %v1891 = vmax.f32 %v1890, %v1657
        %v1892 = vmax.f32 %v1891, %v1663
        %v1893 = vmax.f32 %v1892, %v1669
        %v1894 = vmax.f32 %v1893, %v1675
        %v1895 = vrot.slane %v1894, 4
        %v1896 = vmax.f32 %v1894, %v1895
        %v1897 = vrot.slane %v1896, 2
        %v1898 = vmax.f32 %v1896, %v1897
        %v1899 = vrot.slane %v1898, 1
        %v1900 = vmax.f32 %v1898, %v1899
        %v1901 = vmin.f32 %v1583, %v1589
        %v1902 = vmin.f32 %v1901, %v1595
        %v1903 = vmin.f32 %v1902, %v1601
        %v1904 = vmin.f32 %v1903, %v1607
        %v1905 = vmin.f32 %v1904, %v1613
        %v1906 = vmin.f32 %v1905, %v1619
        %v1907 = vmin.f32 %v1906, %v1625
        %v1908 = vrot.slane %v1907, 4
        %v1909 = vmin.f32 %v1907, %v1908
        %v1910 = vrot.slane %v1909, 2
        %v1911 = vmin.f32 %v1909, %v1910
        %v1912 = vrot.slane %v1911, 1
        %v1913 = vmin.f32 %v1911, %v1912
        %v1914 = vmin.f32 %v1585, %v1591
        %v1915 = vmin.f32 %v1914, %v1597
        %v1916 = vmin.f32 %v1915, %v1603
        %v1917 = vmin.f32 %v1916, %v1609
        %v1918 = vmin.f32 %v1917, %v1615
        %v1919 = vmin.f32 %v1918, %v1621
        %v1920 = vmin.f32 %v1919, %v1627
        %v1921 = vrot.slane %v1920, 4
        %v1922 = vmin.f32 %v1920, %v1921
        %v1923 = vrot.slane %v1922, 2
        %v1924 = vmin.f32 %v1922, %v1923
        %v1925 = vrot.slane %v1924, 1
        %v1926 = vmin.f32 %v1924, %v1925
        %v1927 = vmin.f32 %v1631, %v1637
        %v1928 = vmin.f32 %v1927, %v1643
        %v1929 = vmin.f32 %v1928, %v1649
        %v1930 = vmin.f32 %v1929, %v1655
        %v1931 = vmin.f32 %v1930, %v1661
        %v1932 = vmin.f32 %v1931, %v1667
        %v1933 = vmin.f32 %v1932, %v1673
        %v1934 = vrot.slane %v1933, 4
        %v1935 = vmin.f32 %v1933, %v1934
        %v1936 = vrot.slane %v1935, 2
        %v1937 = vmin.f32 %v1935, %v1936
        %v1938 = vrot.slane %v1937, 1
        %v1939 = vmin.f32 %v1937, %v1938
        %v1940 = vmin.f32 %v1633, %v1639
        %v1941 = vmin.f32 %v1940, %v1645
        %v1942 = vmin.f32 %v1941, %v1651
        %v1943 = vmin.f32 %v1942, %v1657
        %v1944 = vmin.f32 %v1943, %v1663
        %v1945 = vmin.f32 %v1944, %v1669
        %v1946 = vmin.f32 %v1945, %v1675
        %v1947 = vrot.slane %v1946, 4
        %v1948 = vmin.f32 %v1946, %v1947
        %v1949 = vrot.slane %v1948, 2
        %v1950 = vmin.f32 %v1948, %v1949
        %v1951 = vrot.slane %v1950, 1
        %v1952 = vmin.f32 %v1950, %v1951
        %vm1953 = vcmp.ge.f32.partialorder %v1815, 0.0
        %v1954 = vmul.f32 %v1861, %v1821
        %v1955 = vmul.f32 %v1874, %v1825
        %v1956 = vmul.f32 %v1887, %v1821
        %v1957 = vmul.f32 %v1900, %v1825
        %v1958 = vmul.f32 %v1913, %v1821
        %v1959 = vmul.f32 %v1926, %v1825
        %v1960 = vmul.f32 %v1939, %v1821
        %v1961 = vmul.f32 %v1952, %v1825
        %v1962 = vsel %vm1953, 1, 0
        %v1963 = vlaneseq
        %v1964 = vshrl.u32 %v1963, 7
        %v1965 = vsub.s32 0, %v1964
        %v1966 = vrot.slane %v1962, %v1965
        %v1967 = vlaneseq
        %v1968 = vshrl.u32 %v1967, 7
        %v1969 = vsub.s32 1, %v1968
        %v1970 = vrot.slane %v1962, %v1969
        %vm1971 = vcmp.eq.s32.totalorder %v1966, 1
        %vm1972 = vcmp.eq.s32.totalorder %v1970, 1
        %v1977 = vrot.slane %v1956, 7
        %v1978 = vsel %vm837, %v1977, %v1954
        %v1979 = vrot.slane %v1957, 7
        %v1980 = vsel %vm837, %v1979, %v1955
        %v1987 = vrot.slane %v1960, 7
        %v1988 = vsel %vm837, %v1987, %v1958
        %v1989 = vrot.slane %v1961, 7
        %v1990 = vsel %vm837, %v1989, %v1959
        %v1993 = vsel %vm1971, %v1978, %v1988
        %v1994 = vsel %vm1972, %v1980, %v1990
        %v1996 = vlaneseq
        %v1997 = vshrl.u32 %v1996, 7
        %v1998 = vsub.s32 0, %v1997
        %v1999 = vrot.slane %v1848, %v1998
        %v2000 = vlaneseq
        %v2001 = vshrl.u32 %v2000, 7
        %v2002 = vsub.s32 1, %v2001
        %v2003 = vrot.slane %v1848, %v2002
        %v2006 = vadd.f32 %v1993, %v1999
        %v2007 = vadd.f32 %v1994, %v2003
        %v2010 = vcombine.low %v2006, %v2007
        %v2012 = vunpack.c.l.s4 1983009808
        %v2013 = vunpack.c.0.s8 %v2012
        %v2014 = vlaneseq
        %v2015 = vshrl.u32 %v2014, 7
        %v2016 = vsub.s32 %v2013, %v2015
        %v2017 = vrot.slane %v2010, %v2016
        %2019 = vst [vmem:[%s295 + $0x8] sm:$0xf] %v2017
        %v2020 = vld [vmem:[%s259 + $0x30] sm:$0xff]
        %v2021 = vld [vmem:[%s259 + $0x38] sm:$0xff]
        %v2022 = vld [vmem:[%s0] sm:$0xff]
        %v2023 = vld [vmem:[%s0 + $0x8] sm:$0xff]
        %v2024 = vld [vmem:[%s0 + $0x10] sm:$0xff]
        %v2025 = vld [vmem:[%s0 + $0x18] sm:$0xff]
        %v2026 = vld [vmem:[%s0 + $0x20] sm:$0xff]
        %v2027 = vld [vmem:[%s0 + $0x28] sm:$0xff]
        %v2028 = vld [vmem:[%s0 + $0x30] sm:$0xff]
        %v2029 = vld [vmem:[%s0 + $0x38] sm:$0xff]
        %v2030 = vld [vmem:[%s0 + $0x40] sm:$0xff]
        %v2031 = vld [vmem:[%s0 + $0x48] sm:$0xff]
        %v2032 = vld [vmem:[%s0 + $0x50] sm:$0xff]
        %v2033 = vld [vmem:[%s0 + $0x58] sm:$0xff]
        %v2034 = vld [vmem:[%s0 + $0x60] sm:$0xff]
        %v2035 = vld [vmem:[%s0 + $0x68] sm:$0xff]
        %v2036 = vld [vmem:[%s0 + $0x70] sm:$0xff]
        %v2037 = vld [vmem:[%s0 + $0x78] sm:$0xff]
        %v2039 = vsel %vm326, %v2022, 0
        %v2042 = vsel %vm326, %v2023, 0
        %v2045 = vsel %vm326, %v2024, 0
        %v2048 = vsel %vm326, %v2025, 0
        %v2051 = vsel %vm326, %v2026, 0
        %v2054 = vsel %vm326, %v2027, 0
        %v2057 = vsel %vm326, %v2028, 0
        %v2060 = vsel %vm326, %v2029, 0
        %v2063 = vsel %vm326, %v2030, 0
        %v2066 = vsel %vm326, %v2031, 0
        %v2069 = vsel %vm326, %v2032, 0
        %v2072 = vsel %vm326, %v2033, 0
        %v2075 = vsel %vm326, %v2034, 0
        %v2078 = vsel %vm326, %v2035, 0
        %v2081 = vsel %vm326, %v2036, 0
        %v2084 = vsel %vm326, %v2037, 0
        %2086 = vmatprep.subr.mxu0 %v2021
        %2087 = vmatpush1.msra.mxu0 %v2020
        %2088 = vmatprep.subr.mxu0 0.0
        %2089 = vmatpush1.msra.mxu0 0.0
        %2090 = vmatprep.subr.mxu0 0.0
        %2091 = vmatpush1.msra.mxu0 0.0
        %2092 = vmatprep.subr.mxu0 0.0
        %2093 = vmatpush1.msra.mxu0 0.0
        %2094 = vmatprep.subr.mxu0 0.0
        %2095 = vmatpush1.msra.mxu0 0.0
        %2096 = vmatprep.subr.mxu0 0.0
        %2097 = vmatpush1.msra.mxu0 0.0
        %2098 = vmatprep.subr.mxu0 0.0
        %2099 = vmatpush1.msra.mxu0 0.0
        %2100 = vmatprep.subr.mxu0 0.0
        %2101 = vmatpush1.msra.mxu0 0.0
        %2102 = vmatprep.subr.mxu0 0.0
        %2103 = vmatpush1.msra.mxu0 0.0
        %2104 = vmatprep.subr.mxu0 0.0
        %2105 = vmatpush1.msra.mxu0 0.0
        %2106 = vmatprep.subr.mxu0 0.0
        %2107 = vmatpush1.msra.mxu0 0.0
        %2108 = vmatprep.subr.mxu0 0.0
        %2109 = vmatpush1.msra.mxu0 0.0
        %2110 = vmatprep.subr.mxu0 0.0
        %2111 = vmatpush1.msra.mxu0 0.0
        %2112 = vmatprep.subr.mxu0 0.0
        %2113 = vmatpush1.msra.mxu0 0.0
        %2114 = vmatprep.subr.mxu0 0.0
        %2115 = vmatpush1.msra.mxu0 0.0
        %2116 = vmatprep.subr.mxu0 0.0
        %2117 = vmatpush1.msra.mxu0 0.0
        %2118 = vmatprep.subr.mxu0 0.0
        %2119 = vmatpush1.msra.mxu0 0.0
        %2120 = vmatprep.subr.mxu0 0.0
        %2121 = vmatpush1.msra.mxu0 0.0
        %2122 = vmatprep.subr.mxu0 0.0
        %2123 = vmatpush1.msra.mxu0 0.0
        %2124 = vmatprep.subr.mxu0 0.0
        %2125 = vmatpush1.msra.mxu0 0.0
        %2126 = vmatprep.subr.mxu0 0.0
        %2127 = vmatpush1.msra.mxu0 0.0
        %2128 = vmatprep.subr.mxu0 0.0
        %2129 = vmatpush1.msra.mxu0 0.0
        %2130 = vmatprep.subr.mxu0 0.0
        %2131 = vmatpush1.msra.mxu0 0.0
        %2132 = vmatprep.subr.mxu0 0.0
        %2133 = vmatpush1.msra.mxu0 0.0
        %2134 = vmatprep.subr.mxu0 0.0
        %2135 = vmatpush1.msra.mxu0 0.0
        %2136 = vmatprep.subr.mxu0 0.0
        %2137 = vmatpush1.msra.mxu0 0.0
        %2138 = vmatprep.subr.mxu0 0.0
        %2139 = vmatpush1.msra.mxu0 0.0
        %2140 = vmatprep.subr.mxu0 0.0
        %2141 = vmatpush1.msra.mxu0 0.0
        %2142 = vmatprep.subr.mxu0 0.0
        %2143 = vmatpush1.msra.mxu0 0.0
        %2144 = vmatprep.subr.mxu0 0.0
        %2145 = vmatpush1.msra.mxu0 0.0
        %2146 = vmatprep.subr.mxu0 0.0
        %2147 = vmatpush1.msra.mxu0 0.0
        %2148 = vmatprep.subr.mxu0 0.0
        %2149 = vmatpush1.msra.mxu0 0.0
        %2150 = vmatprep.mubr.f32.mxu0 0.0
        %2151 = vmatmul.mubr.f32.gmra.mrb[0].mxu0 %v2039
        %v2152 = vpop.f32.mrb[0].mxu0
        %v2153 = vadd.f32 0.0, %v2152
        %v2154 = vpop.f32.mrb[0].mxu0
        %v2155 = vadd.f32 0.0, %v2154
        %2156 = vmatprep.mubr.f32.mxu0 0.0
        %2157 = vmatmul.mubr.f32.gmra.mrb[0].mxu0 %v2042
        %v2158 = vpop.f32.mrb[0].mxu0
        %v2159 = vadd.f32 0.0, %v2158
        %v2160 = vpop.f32.mrb[0].mxu0
        %v2161 = vadd.f32 0.0, %v2160
        %2162 = vmatprep.mubr.f32.mxu0 0.0
        %2163 = vmatmul.mubr.f32.gmra.mrb[0].mxu0 %v2045
        %v2164 = vpop.f32.mrb[0].mxu0
        %v2165 = vadd.f32 0.0, %v2164
        %v2166 = vpop.f32.mrb[0].mxu0
        %v2167 = vadd.f32 0.0, %v2166
        %2168 = vmatprep.mubr.f32.mxu0 0.0
        %2169 = vmatmul.mubr.f32.gmra.mrb[0].mxu0 %v2048
        %v2170 = vpop.f32.mrb[0].mxu0
        %v2171 = vadd.f32 0.0, %v2170
        %v2172 = vpop.f32.mrb[0].mxu0
        %v2173 = vadd.f32 0.0, %v2172
        %2174 = vmatprep.mubr.f32.mxu0 0.0
        %2175 = vmatmul.mubr.f32.gmra.mrb[0].mxu0 %v2051
        %v2176 = vpop.f32.mrb[0].mxu0
        %v2177 = vadd.f32 0.0, %v2176
        %v2178 = vpop.f32.mrb[0].mxu0
        %v2179 = vadd.f32 0.0, %v2178
        %2180 = vmatprep.mubr.f32.mxu0 0.0
        %2181 = vmatmul.mubr.f32.gmra.mrb[0].mxu0 %v2054
        %v2182 = vpop.f32.mrb[0].mxu0
        %v2183 = vadd.f32 0.0, %v2182
        %v2184 = vpop.f32.mrb[0].mxu0
        %v2185 = vadd.f32 0.0, %v2184
        %2186 = vmatprep.mubr.f32.mxu0 0.0
        %2187 = vmatmul.mubr.f32.gmra.mrb[0].mxu0 %v2057
        %v2188 = vpop.f32.mrb[0].mxu0
        %v2189 = vadd.f32 0.0, %v2188
        %v2190 = vpop.f32.mrb[0].mxu0
        %v2191 = vadd.f32 0.0, %v2190
        %2192 = vmatprep.mubr.f32.mxu0 0.0
        %2193 = vmatmul.mubr.f32.gmra.mrb[0].mxu0 %v2060
        %v2194 = vpop.f32.mrb[0].mxu0
        %v2195 = vadd.f32 0.0, %v2194
        %v2196 = vpop.f32.mrb[0].mxu0
        %v2197 = vadd.f32 0.0, %v2196
        %2198 = vmatprep.mubr.f32.mxu0 0.0
        %2199 = vmatmul.mubr.f32.gmra.mrb[0].mxu0 %v2063
        %v2200 = vpop.f32.mrb[0].mxu0
        %v2201 = vadd.f32 0.0, %v2200
        %v2202 = vpop.f32.mrb[0].mxu0
        %v2203 = vadd.f32 0.0, %v2202
        %2204 = vmatprep.mubr.f32.mxu0 0.0
        %2205 = vmatmul.mubr.f32.gmra.mrb[0].mxu0 %v2066
        %v2206 = vpop.f32.mrb[0].mxu0
        %v2207 = vadd.f32 0.0, %v2206
        %v2208 = vpop.f32.mrb[0].mxu0
        %v2209 = vadd.f32 0.0, %v2208
        %2210 = vmatprep.mubr.f32.mxu0 0.0
        %2211 = vmatmul.mubr.f32.gmra.mrb[0].mxu0 %v2069
        %v2212 = vpop.f32.mrb[0].mxu0
        %v2213 = vadd.f32 0.0, %v2212
        %v2214 = vpop.f32.mrb[0].mxu0
        %v2215 = vadd.f32 0.0, %v2214
        %2216 = vmatprep.mubr.f32.mxu0 0.0
        %2217 = vmatmul.mubr.f32.gmra.mrb[0].mxu0 %v2072
        %v2218 = vpop.f32.mrb[0].mxu0
        %v2219 = vadd.f32 0.0, %v2218
        %v2220 = vpop.f32.mrb[0].mxu0
        %v2221 = vadd.f32 0.0, %v2220
        %2222 = vmatprep.mubr.f32.mxu0 0.0
        %2223 = vmatmul.mubr.f32.gmra.mrb[0].mxu0 %v2075
        %v2224 = vpop.f32.mrb[0].mxu0
        %v2225 = vadd.f32 0.0, %v2224
        %v2226 = vpop.f32.mrb[0].mxu0
        %v2227 = vadd.f32 0.0, %v2226
        %2228 = vmatprep.mubr.f32.mxu0 0.0
        %2229 = vmatmul.mubr.f32.gmra.mrb[0].mxu0 %v2078
        %v2230 = vpop.f32.mrb[0].mxu0
        %v2231 = vadd.f32 0.0, %v2230
        %v2232 = vpop.f32.mrb[0].mxu0
        %v2233 = vadd.f32 0.0, %v2232
        %2234 = vmatprep.mubr.f32.mxu0 0.0
        %2235 = vmatmul.mubr.f32.gmra.mrb[0].mxu0 %v2081
        %v2236 = vpop.f32.mrb[0].mxu0
        %v2237 = vadd.f32 0.0, %v2236
        %v2238 = vpop.f32.mrb[0].mxu0
        %v2239 = vadd.f32 0.0, %v2238
        %2240 = vmatprep.mubr.f32.mxu0 0.0
        %2241 = vmatmul.mubr.f32.gmra.mrb[0].mxu0 %v2084
        %v2242 = vpop.f32.mrb[0].mxu0
        %v2243 = vadd.f32 0.0, %v2242
        %v2244 = vpop.f32.mrb[0].mxu0
        %v2245 = vadd.f32 0.0, %v2244
        %2246 = vdwg.mxu0
        %v2247 = vld [vmem:[%s2] sm:$0xff]
        %2249 = vset.pattern.permute.xlu0 0
        %2250 = vperm.xlu0 %2249, %v2247
        %v2251 = vpop.permute.xlu0 %2250
        %v2253 = vmul.f32 %v2251, %v2020
        %v2254 = vmul.f32 %v2251, %v2021
        %v2255 = vrot.slane %v2253, 4
        %v2256 = vadd.f32 %v2253, %v2255
        %v2257 = vrot.slane %v2256, 2
        %v2258 = vadd.f32 %v2256, %v2257
        %v2259 = vrot.slane %v2258, 1
        %v2260 = vadd.f32 %v2258, %v2259
        %v2261 = vrot.slane %v2254, 4
        %v2262 = vadd.f32 %v2254, %v2261
        %v2263 = vrot.slane %v2262, 2
        %v2264 = vadd.f32 %v2262, %v2263
        %v2265 = vrot.slane %v2264, 1
        %v2266 = vadd.f32 %v2264, %v2265
        %v2267 = vld [vmem:[%s3] sm:$0xff]
        %v2269 = vsel %vm326, %v2267, 0
        %2271 = vmatprep.subr.mxu0 %v2021
        %2272 = vmatpush1.msra.mxu0 %v2020
        %2273 = vmatprep.subr.mxu0 0.0
        %2274 = vmatpush1.msra.mxu0 0.0
        %2275 = vmatprep.subr.mxu0 0.0
        %2276 = vmatpush1.msra.mxu0 0.0
        %2277 = vmatprep.subr.mxu0 0.0
        %2278 = vmatpush1.msra.mxu0 0.0
        %2279 = vmatprep.subr.mxu0 0.0
        %2280 = vmatpush1.msra.mxu0 0.0
        %2281 = vmatprep.subr.mxu0 0.0
        %2282 = vmatpush1.msra.mxu0 0.0
        %2283 = vmatprep.subr.mxu0 0.0
        %2284 = vmatpush1.msra.mxu0 0.0
        %2285 = vmatprep.subr.mxu0 0.0
        %2286 = vmatpush1.msra.mxu0 0.0
        %2287 = vmatprep.subr.mxu0 0.0
        %2288 = vmatpush1.msra.mxu0 0.0
        %2289 = vmatprep.subr.mxu0 0.0
        %2290 = vmatpush1.msra.mxu0 0.0
        %2291 = vmatprep.subr.mxu0 0.0
        %2292 = vmatpush1.msra.mxu0 0.0
        %2293 = vmatprep.subr.mxu0 0.0
        %2294 = vmatpush1.msra.mxu0 0.0
        %2295 = vmatprep.subr.mxu0 0.0
        %2296 = vmatpush1.msra.mxu0 0.0
        %2297 = vmatprep.subr.mxu0 0.0
        %2298 = vmatpush1.msra.mxu0 0.0
        %2299 = vmatprep.subr.mxu0 0.0
        %2300 = vmatpush1.msra.mxu0 0.0
        %2301 = vmatprep.subr.mxu0 0.0
        %2302 = vmatpush1.msra.mxu0 0.0
        %2303 = vmatprep.subr.mxu0 0.0
        %2304 = vmatpush1.msra.mxu0 0.0
        %2305 = vmatprep.subr.mxu0 0.0
        %2306 = vmatpush1.msra.mxu0 0.0
        %2307 = vmatprep.subr.mxu0 0.0
        %2308 = vmatpush1.msra.mxu0 0.0
        %2309 = vmatprep.subr.mxu0 0.0
        %2310 = vmatpush1.msra.mxu0 0.0
        %2311 = vmatprep.subr.mxu0 0.0
        %2312 = vmatpush1.msra.mxu0 0.0
        %2313 = vmatprep.subr.mxu0 0.0
        %2314 = vmatpush1.msra.mxu0 0.0
        %2315 = vmatprep.subr.mxu0 0.0
        %2316 = vmatpush1.msra.mxu0 0.0
        %2317 = vmatprep.subr.mxu0 0.0
        %2318 = vmatpush1.msra.mxu0 0.0
        %2319 = vmatprep.subr.mxu0 0.0
        %2320 = vmatpush1.msra.mxu0 0.0
        %2321 = vmatprep.subr.mxu0 0.0
        %2322 = vmatpush1.msra.mxu0 0.0
        %2323 = vmatprep.subr.mxu0 0.0
        %2324 = vmatpush1.msra.mxu0 0.0
        %2325 = vmatprep.subr.mxu0 0.0
        %2326 = vmatpush1.msra.mxu0 0.0
        %2327 = vmatprep.subr.mxu0 0.0
        %2328 = vmatpush1.msra.mxu0 0.0
        %2329 = vmatprep.subr.mxu0 0.0
        %2330 = vmatpush1.msra.mxu0 0.0
        %2331 = vmatprep.subr.mxu0 0.0
        %2332 = vmatpush1.msra.mxu0 0.0
        %2333 = vmatprep.subr.mxu0 0.0
        %2334 = vmatpush1.msra.mxu0 0.0
        %2335 = vmatprep.mubr.f32.mxu0 0.0
        %2336 = vmatmul.mubr.f32.gmra.mrb[0].mxu0 %v2269
        %v2337 = vpop.f32.mrb[0].mxu0
        %v2338 = vadd.f32 0.0, %v2337
        %v2339 = vpop.f32.mrb[0].mxu0
        %v2340 = vadd.f32 0.0, %v2339
        %2341 = vdwg.mxu0
        %v2342 = vmul.f32 %v2020, %v2338
        %v2343 = vmul.f32 %v2021, %v2340
        %v2344 = vrot.slane %v2342, 4
        %v2345 = vadd.f32 %v2342, %v2344
        %v2346 = vrot.slane %v2345, 2
        %v2347 = vadd.f32 %v2345, %v2346
        %v2348 = vrot.slane %v2347, 1
        %v2349 = vadd.f32 %v2347, %v2348
        %v2350 = vrot.slane %v2343, 4
        %v2351 = vadd.f32 %v2343, %v2350
        %v2352 = vrot.slane %v2351, 2
        %v2353 = vadd.f32 %v2351, %v2352
        %v2354 = vrot.slane %v2353, 1
        %v2355 = vadd.f32 %v2353, %v2354
        %v2356 = vmul.f32 %v2260, %v2260
        %v2357 = vmul.f32 %v2266, %v2266
        %v2358 = vsub.f32 %v2349, %v2356
        %v2359 = vsub.f32 %v2355, %v2357
        %v2360 = vmax.f32 %v2358, 0.0
        %v2361 = vmax.f32 %v2359, 0.0
        %v2362 = vld [vmem:[%s300 + $0x6] sm:$0x3]
        %v2363 = vadd.f32 %v2360, 1e-05
        %v2364 = vadd.f32 %v2361, 1e-05
        %v2365 = vrsqrt.pop %v2363
        %v2366 = vrsqrt.pop %v2364
        %v2369 = vcombine.low %v2365, %v2366
        %v2371 = vunpack.c.l.s4 1966171168
        %v2372 = vunpack.c.0.s8 %v2371
        %v2373 = vlaneseq
        %v2374 = vshrl.u32 %v2373, 7
        %v2375 = vsub.s32 %v2372, %v2374
        %v2376 = vrot.slane %v2369, %v2375
        %v2378 = vunpack.c.l.s4 1966171168
        %v2379 = vunpack.c.0.s8 %v2378
        %v2380 = vlaneseq
        %v2381 = vshrl.u32 %v2380, 7
        %v2382 = vsub.s32 %v2379, %v2381
        %v2383 = vrot.slane %v2376, %v2382
        %v2385 = vmul.f32 %v2362, %v2383
        %v2386 = vld [vmem:[%s305 + $0x6] sm:$0x3]
        %v2388 = vlaneseq
        %v2389 = vshrl.u32 %v2388, 7
        %v2390 = vsub.s32 0, %v2389
        %v2391 = vrot.slane %v2385, %v2390
        %v2392 = vlaneseq
        %v2393 = vshrl.u32 %v2392, 7
        %v2394 = vsub.s32 1, %v2393
        %v2395 = vrot.slane %v2385, %v2394
        %v2398 = vmul.f32 %v2260, %v2391
        %v2399 = vmul.f32 %v2266, %v2395
        %v2402 = vcombine.low %v2398, %v2399
        %v2404 = vunpack.c.l.s4 1966171168
        %v2405 = vunpack.c.0.s8 %v2404
        %v2406 = vlaneseq
        %v2407 = vshrl.u32 %v2406, 7
        %v2408 = vsub.s32 %v2405, %v2407
        %v2409 = vrot.slane %v2402, %v2408
        %v2411 = vunpack.c.l.s4 1966171168
        %v2412 = vunpack.c.0.s8 %v2411
        %v2413 = vlaneseq
        %v2414 = vshrl.u32 %v2413, 7
        %v2415 = vsub.s32 %v2412, %v2414
        %v2416 = vrot.slane %v2409, %v2415
        %v2418 = vsub.f32 %v2386, %v2416
        %v2419 = vmax.f32 %v2153, %v2159
        %v2420 = vmax.f32 %v2419, %v2165
        %v2421 = vmax.f32 %v2420, %v2171
        %v2422 = vmax.f32 %v2421, %v2177
        %v2423 = vmax.f32 %v2422, %v2183
        %v2424 = vmax.f32 %v2423, %v2189
        %v2425 = vmax.f32 %v2424, %v2195
        %v2426 = vrot.slane %v2425, 4
        %v2427 = vmax.f32 %v2425, %v2426
        %v2428 = vrot.slane %v2427, 2
        %v2429 = vmax.f32 %v2427, %v2428
        %v2430 = vrot.slane %v2429, 1
        %v2431 = vmax.f32 %v2429, %v2430
        %v2432 = vmax.f32 %v2155, %v2161
        %v2433 = vmax.f32 %v2432, %v2167
        %v2434 = vmax.f32 %v2433, %v2173
        %v2435 = vmax.f32 %v2434, %v2179
        %v2436 = vmax.f32 %v2435, %v2185
        %v2437 = vmax.f32 %v2436, %v2191
        %v2438 = vmax.f32 %v2437, %v2197
        %v2439 = vrot.slane %v2438, 4
        %v2440 = vmax.f32 %v2438, %v2439
        %v2441 = vrot.slane %v2440, 2
        %v2442 = vmax.f32 %v2440, %v2441
        %v2443 = vrot.slane %v2442, 1
        %v2444 = vmax.f32 %v2442, %v2443
        %v2445 = vmax.f32 %v2201, %v2207
        %v2446 = vmax.f32 %v2445, %v2213
        %v2447 = vmax.f32 %v2446, %v2219
        %v2448 = vmax.f32 %v2447, %v2225
        %v2449 = vmax.f32 %v2448, %v2231
        %v2450 = vmax.f32 %v2449, %v2237
        %v2451 = vmax.f32 %v2450, %v2243
        %v2452 = vrot.slane %v2451, 4
        %v2453 = vmax.f32 %v2451, %v2452
        %v2454 = vrot.slane %v2453, 2
        %v2455 = vmax.f32 %v2453, %v2454
        %v2456 = vrot.slane %v2455, 1
        %v2457 = vmax.f32 %v2455, %v2456
        %v2458 = vmax.f32 %v2203, %v2209
        %v2459 = vmax.f32 %v2458, %v2215
        %v2460 = vmax.f32 %v2459, %v2221
        %v2461 = vmax.f32 %v2460, %v2227
        %v2462 = vmax.f32 %v2461, %v2233
        %v2463 = vmax.f32 %v2462, %v2239
        %v2464 = vmax.f32 %v2463, %v2245
        %v2465 = vrot.slane %v2464, 4
        %v2466 = vmax.f32 %v2464, %v2465
        %v2467 = vrot.slane %v2466, 2
        %v2468 = vmax.f32 %v2466, %v2467
        %v2469 = vrot.slane %v2468, 1
        %v2470 = vmax.f32 %v2468, %v2469
        %v2471 = vmin.f32 %v2153, %v2159
        %v2472 = vmin.f32 %v2471, %v2165
        %v2473 = vmin.f32 %v2472, %v2171
        %v2474 = vmin.f32 %v2473, %v2177
        %v2475 = vmin.f32 %v2474, %v2183
        %v2476 = vmin.f32 %v2475, %v2189
        %v2477 = vmin.f32 %v2476, %v2195
        %v2478 = vrot.slane %v2477, 4
        %v2479 = vmin.f32 %v2477, %v2478
        %v2480 = vrot.slane %v2479, 2
        %v2481 = vmin.f32 %v2479, %v2480
        %v2482 = vrot.slane %v2481, 1
        %v2483 = vmin.f32 %v2481, %v2482
        %v2484 = vmin.f32 %v2155, %v2161
        %v2485 = vmin.f32 %v2484, %v2167
        %v2486 = vmin.f32 %v2485, %v2173
        %v2487 = vmin.f32 %v2486, %v2179
        %v2488 = vmin.f32 %v2487, %v2185
        %v2489 = vmin.f32 %v2488, %v2191
        %v2490 = vmin.f32 %v2489, %v2197
        %v2491 = vrot.slane %v2490, 4
        %v2492 = vmin.f32 %v2490, %v2491
        %v2493 = vrot.slane %v2492, 2
        %v2494 = vmin.f32 %v2492, %v2493
        %v2495 = vrot.slane %v2494, 1
        %v2496 = vmin.f32 %v2494, %v2495
        %v2497 = vmin.f32 %v2201, %v2207
        %v2498 = vmin.f32 %v2497, %v2213
        %v2499 = vmin.f32 %v2498, %v2219
        %v2500 = vmin.f32 %v2499, %v2225
        %v2501 = vmin.f32 %v2500, %v2231
        %v2502 = vmin.f32 %v2501, %v2237
        %v2503 = vmin.f32 %v2502, %v2243
        %v2504 = vrot.slane %v2503, 4
        %v2505 = vmin.f32 %v2503, %v2504
        %v2506 = vrot.slane %v2505, 2
        %v2507 = vmin.f32 %v2505, %v2506
        %v2508 = vrot.slane %v2507, 1
        %v2509 = vmin.f32 %v2507, %v2508
        %v2510 = vmin.f32 %v2203, %v2209
        %v2511 = vmin.f32 %v2510, %v2215
        %v2512 = vmin.f32 %v2511, %v2221
        %v2513 = vmin.f32 %v2512, %v2227
        %v2514 = vmin.f32 %v2513, %v2233
        %v2515 = vmin.f32 %v2514, %v2239
        %v2516 = vmin.f32 %v2515, %v2245
        %v2517 = vrot.slane %v2516, 4
        %v2518 = vmin.f32 %v2516, %v2517
        %v2519 = vrot.slane %v2518, 2
        %v2520 = vmin.f32 %v2518, %v2519
        %v2521 = vrot.slane %v2520, 1
        %v2522 = vmin.f32 %v2520, %v2521
        %vm2523 = vcmp.ge.f32.partialorder %v2385, 0.0
        %v2524 = vmul.f32 %v2431, %v2391
        %v2525 = vmul.f32 %v2444, %v2395
        %v2526 = vmul.f32 %v2457, %v2391
        %v2527 = vmul.f32 %v2470, %v2395
        %v2528 = vmul.f32 %v2483, %v2391
        %v2529 = vmul.f32 %v2496, %v2395
        %v2530 = vmul.f32 %v2509, %v2391
        %v2531 = vmul.f32 %v2522, %v2395
        %v2532 = vsel %vm2523, 1, 0
        %v2533 = vlaneseq
        %v2534 = vshrl.u32 %v2533, 7
        %v2535 = vsub.s32 0, %v2534
        %v2536 = vrot.slane %v2532, %v2535
        %v2537 = vlaneseq
        %v2538 = vshrl.u32 %v2537, 7
        %v2539 = vsub.s32 1, %v2538
        %v2540 = vrot.slane %v2532, %v2539
        %vm2541 = vcmp.eq.s32.totalorder %v2536, 1
        %vm2542 = vcmp.eq.s32.totalorder %v2540, 1
        %v2547 = vrot.slane %v2526, 7
        %v2548 = vsel %vm837, %v2547, %v2524
        %v2549 = vrot.slane %v2527, 7
        %v2550 = vsel %vm837, %v2549, %v2525
        %v2557 = vrot.slane %v2530, 7
        %v2558 = vsel %vm837, %v2557, %v2528
        %v2559 = vrot.slane %v2531, 7
        %v2560 = vsel %vm837, %v2559, %v2529
        %v2563 = vsel %vm2541, %v2548, %v2558
        %v2564 = vsel %vm2542, %v2550, %v2560
        %v2566 = vlaneseq
        %v2567 = vshrl.u32 %v2566, 7
        %v2568 = vsub.s32 0, %v2567
        %v2569 = vrot.slane %v2418, %v2568
        %v2570 = vlaneseq
        %v2571 = vshrl.u32 %v2570, 7
        %v2572 = vsub.s32 1, %v2571
        %v2573 = vrot.slane %v2418, %v2572
        %v2576 = vadd.f32 %v2563, %v2569
        %v2577 = vadd.f32 %v2564, %v2573
        %v2580 = vcombine.low %v2576, %v2577
        %v2582 = vunpack.c.l.s4 1983009808
        %v2583 = vunpack.c.0.s8 %v2582
        %v2584 = vlaneseq
        %v2585 = vshrl.u32 %v2584, 7
        %v2586 = vsub.s32 %v2583, %v2585
        %v2587 = vrot.slane %v2580, %v2586
        %2589 = vst [vmem:[%s295 + $0xc] sm:$0xf] %v2587
        %v2590 = vld [vmem:[%s259 + $0x40] sm:$0xff]
        %v2591 = vld [vmem:[%s259 + $0x48] sm:$0xff]
        %v2592 = vld [vmem:[%s0] sm:$0xff]
        %v2593 = vld [vmem:[%s0 + $0x8] sm:$0xff]
        %v2594 = vld [vmem:[%s0 + $0x10] sm:$0xff]
        %v2595 = vld [vmem:[%s0 + $0x18] sm:$0xff]
        %v2596 = vld [vmem:[%s0 + $0x20] sm:$0xff]
        %v2597 = vld [vmem:[%s0 + $0x28] sm:$0xff]
        %v2598 = vld [vmem:[%s0 + $0x30] sm:$0xff]
        %v2599 = vld [vmem:[%s0 + $0x38] sm:$0xff]
        %v2600 = vld [vmem:[%s0 + $0x40] sm:$0xff]
        %v2601 = vld [vmem:[%s0 + $0x48] sm:$0xff]
        %v2602 = vld [vmem:[%s0 + $0x50] sm:$0xff]
        %v2603 = vld [vmem:[%s0 + $0x58] sm:$0xff]
        %v2604 = vld [vmem:[%s0 + $0x60] sm:$0xff]
        %v2605 = vld [vmem:[%s0 + $0x68] sm:$0xff]
        %v2606 = vld [vmem:[%s0 + $0x70] sm:$0xff]
        %v2607 = vld [vmem:[%s0 + $0x78] sm:$0xff]
        %v2609 = vsel %vm326, %v2592, 0
        %v2612 = vsel %vm326, %v2593, 0
        %v2615 = vsel %vm326, %v2594, 0
        %v2618 = vsel %vm326, %v2595, 0
        %v2621 = vsel %vm326, %v2596, 0
        %v2624 = vsel %vm326, %v2597, 0
        %v2627 = vsel %vm326, %v2598, 0
        %v2630 = vsel %vm326, %v2599, 0
        %v2633 = vsel %vm326, %v2600, 0
        %v2636 = vsel %vm326, %v2601, 0
        %v2639 = vsel %vm326, %v2602, 0
        %v2642 = vsel %vm326, %v2603, 0
        %v2645 = vsel %vm326, %v2604, 0
        %v2648 = vsel %vm326, %v2605, 0
        %v2651 = vsel %vm326, %v2606, 0
        %v2654 = vsel %vm326, %v2607, 0
        %2656 = vmatprep.subr.mxu0 %v2591
        %2657 = vmatpush1.msra.mxu0 %v2590
        %2658 = vmatprep.subr.mxu0 0.0
        %2659 = vmatpush1.msra.mxu0 0.0
        %2660 = vmatprep.subr.mxu0 0.0
        %2661 = vmatpush1.msra.mxu0 0.0
        %2662 = vmatprep.subr.mxu0 0.0
        %2663 = vmatpush1.msra.mxu0 0.0
        %2664 = vmatprep.subr.mxu0 0.0
        %2665 = vmatpush1.msra.mxu0 0.0
        %2666 = vmatprep.subr.mxu0 0.0
        %2667 = vmatpush1.msra.mxu0 0.0
        %2668 = vmatprep.subr.mxu0 0.0
        %2669 = vmatpush1.msra.mxu0 0.0
        %2670 = vmatprep.subr.mxu0 0.0
        %2671 = vmatpush1.msra.mxu0 0.0
        %2672 = vmatprep.subr.mxu0 0.0
        %2673 = vmatpush1.msra.mxu0 0.0
        %2674 = vmatprep.subr.mxu0 0.0
        %2675 = vmatpush1.msra.mxu0 0.0
        %2676 = vmatprep.subr.mxu0 0.0
        %2677 = vmatpush1.msra.mxu0 0.0
        %2678 = vmatprep.subr.mxu0 0.0
        %2679 = vmatpush1.msra.mxu0 0.0
        %2680 = vmatprep.subr.mxu0 0.0
        %2681 = vmatpush1.msra.mxu0 0.0
        %2682 = vmatprep.subr.mxu0 0.0
        %2683 = vmatpush1.msra.mxu0 0.0
        %2684 = vmatprep.subr.mxu0 0.0
        %2685 = vmatpush1.msra.mxu0 0.0
        %2686 = vmatprep.subr.mxu0 0.0
        %2687 = vmatpush1.msra.mxu0 0.0
        %2688 = vmatprep.subr.mxu0 0.0
        %2689 = vmatpush1.msra.mxu0 0.0
        %2690 = vmatprep.subr.mxu0 0.0
        %2691 = vmatpush1.msra.mxu0 0.0
        %2692 = vmatprep.subr.mxu0 0.0
        %2693 = vmatpush1.msra.mxu0 0.0
        %2694 = vmatprep.subr.mxu0 0.0
        %2695 = vmatpush1.msra.mxu0 0.0
        %2696 = vmatprep.subr.mxu0 0.0
        %2697 = vmatpush1.msra.mxu0 0.0
        %2698 = vmatprep.subr.mxu0 0.0
        %2699 = vmatpush1.msra.mxu0 0.0
        %2700 = vmatprep.subr.mxu0 0.0
        %2701 = vmatpush1.msra.mxu0 0.0
        %2702 = vmatprep.subr.mxu0 0.0
        %2703 = vmatpush1.msra.mxu0 0.0
        %2704 = vmatprep.subr.mxu0 0.0
        %2705 = vmatpush1.msra.mxu0 0.0
        %2706 = vmatprep.subr.mxu0 0.0
        %2707 = vmatpush1.msra.mxu0 0.0
        %2708 = vmatprep.subr.mxu0 0.0
        %2709 = vmatpush1.msra.mxu0 0.0
        %2710 = vmatprep.subr.mxu0 0.0
        %2711 = vmatpush1.msra.mxu0 0.0
        %2712 = vmatprep.subr.mxu0 0.0
        %2713 = vmatpush1.msra.mxu0 0.0
        %2714 = vmatprep.subr.mxu0 0.0
        %2715 = vmatpush1.msra.mxu0 0.0
        %2716 = vmatprep.subr.mxu0 0.0
        %2717 = vmatpush1.msra.mxu0 0.0
        %2718 = vmatprep.subr.mxu0 0.0
        %2719 = vmatpush1.msra.mxu0 0.0
        %2720 = vmatprep.mubr.f32.mxu0 0.0
        %2721 = vmatmul.mubr.f32.gmra.mrb[0].mxu0 %v2609
        %v2722 = vpop.f32.mrb[0].mxu0
        %v2723 = vadd.f32 0.0, %v2722
        %v2724 = vpop.f32.mrb[0].mxu0
        %v2725 = vadd.f32 0.0, %v2724
        %2726 = vmatprep.mubr.f32.mxu0 0.0
        %2727 = vmatmul.mubr.f32.gmra.mrb[0].mxu0 %v2612
        %v2728 = vpop.f32.mrb[0].mxu0
        %v2729 = vadd.f32 0.0, %v2728
        %v2730 = vpop.f32.mrb[0].mxu0
        %v2731 = vadd.f32 0.0, %v2730
        %2732 = vmatprep.mubr.f32.mxu0 0.0
        %2733 = vmatmul.mubr.f32.gmra.mrb[0].mxu0 %v2615
        %v2734 = vpop.f32.mrb[0].mxu0
        %v2735 = vadd.f32 0.0, %v2734
        %v2736 = vpop.f32.mrb[0].mxu0
        %v2737 = vadd.f32 0.0, %v2736
        %2738 = vmatprep.mubr.f32.mxu0 0.0
        %2739 = vmatmul.mubr.f32.gmra.mrb[0].mxu0 %v2618
        %v2740 = vpop.f32.mrb[0].mxu0
        %v2741 = vadd.f32 0.0, %v2740
        %v2742 = vpop.f32.mrb[0].mxu0
        %v2743 = vadd.f32 0.0, %v2742
        %2744 = vmatprep.mubr.f32.mxu0 0.0
        %2745 = vmatmul.mubr.f32.gmra.mrb[0].mxu0 %v2621
        %v2746 = vpop.f32.mrb[0].mxu0
        %v2747 = vadd.f32 0.0, %v2746
        %v2748 = vpop.f32.mrb[0].mxu0
        %v2749 = vadd.f32 0.0, %v2748
        %2750 = vmatprep.mubr.f32.mxu0 0.0
        %2751 = vmatmul.mubr.f32.gmra.mrb[0].mxu0 %v2624
        %v2752 = vpop.f32.mrb[0].mxu0
        %v2753 = vadd.f32 0.0, %v2752
        %v2754 = vpop.f32.mrb[0].mxu0
        %v2755 = vadd.f32 0.0, %v2754
        %2756 = vmatprep.mubr.f32.mxu0 0.0
        %2757 = vmatmul.mubr.f32.gmra.mrb[0].mxu0 %v2627
        %v2758 = vpop.f32.mrb[0].mxu0
        %v2759 = vadd.f32 0.0, %v2758
        %v2760 = vpop.f32.mrb[0].mxu0
        %v2761 = vadd.f32 0.0, %v2760
        %2762 = vmatprep.mubr.f32.mxu0 0.0
        %2763 = vmatmul.mubr.f32.gmra.mrb[0].mxu0 %v2630
        %v2764 = vpop.f32.mrb[0].mxu0
        %v2765 = vadd.f32 0.0, %v2764
        %v2766 = vpop.f32.mrb[0].mxu0
        %v2767 = vadd.f32 0.0, %v2766
        %2768 = vmatprep.mubr.f32.mxu0 0.0
        %2769 = vmatmul.mubr.f32.gmra.mrb[0].mxu0 %v2633
        %v2770 = vpop.f32.mrb[0].mxu0
        %v2771 = vadd.f32 0.0, %v2770
        %v2772 = vpop.f32.mrb[0].mxu0
        %v2773 = vadd.f32 0.0, %v2772
        %2774 = vmatprep.mubr.f32.mxu0 0.0
        %2775 = vmatmul.mubr.f32.gmra.mrb[0].mxu0 %v2636
        %v2776 = vpop.f32.mrb[0].mxu0
        %v2777 = vadd.f32 0.0, %v2776
        %v2778 = vpop.f32.mrb[0].mxu0
        %v2779 = vadd.f32 0.0, %v2778
        %2780 = vmatprep.mubr.f32.mxu0 0.0
        %2781 = vmatmul.mubr.f32.gmra.mrb[0].mxu0 %v2639
        %v2782 = vpop.f32.mrb[0].mxu0
        %v2783 = vadd.f32 0.0, %v2782
        %v2784 = vpop.f32.mrb[0].mxu0
        %v2785 = vadd.f32 0.0, %v2784
        %2786 = vmatprep.mubr.f32.mxu0 0.0
        %2787 = vmatmul.mubr.f32.gmra.mrb[0].mxu0 %v2642
        %v2788 = vpop.f32.mrb[0].mxu0
        %v2789 = vadd.f32 0.0, %v2788
        %v2790 = vpop.f32.mrb[0].mxu0
        %v2791 = vadd.f32 0.0, %v2790
        %2792 = vmatprep.mubr.f32.mxu0 0.0
        %2793 = vmatmul.mubr.f32.gmra.mrb[0].mxu0 %v2645
        %v2794 = vpop.f32.mrb[0].mxu0
        %v2795 = vadd.f32 0.0, %v2794
        %v2796 = vpop.f32.mrb[0].mxu0
        %v2797 = vadd.f32 0.0, %v2796
        %2798 = vmatprep.mubr.f32.mxu0 0.0
        %2799 = vmatmul.mubr.f32.gmra.mrb[0].mxu0 %v2648
        %v2800 = vpop.f32.mrb[0].mxu0
        %v2801 = vadd.f32 0.0, %v2800
        %v2802 = vpop.f32.mrb[0].mxu0
        %v2803 = vadd.f32 0.0, %v2802
        %2804 = vmatprep.mubr.f32.mxu0 0.0
        %2805 = vmatmul.mubr.f32.gmra.mrb[0].mxu0 %v2651
        %v2806 = vpop.f32.mrb[0].mxu0
        %v2807 = vadd.f32 0.0, %v2806
        %v2808 = vpop.f32.mrb[0].mxu0
        %v2809 = vadd.f32 0.0, %v2808
        %2810 = vmatprep.mubr.f32.mxu0 0.0
        %2811 = vmatmul.mubr.f32.gmra.mrb[0].mxu0 %v2654
        %v2812 = vpop.f32.mrb[0].mxu0
        %v2813 = vadd.f32 0.0, %v2812
        %v2814 = vpop.f32.mrb[0].mxu0
        %v2815 = vadd.f32 0.0, %v2814
        %2816 = vdwg.mxu0
        %v2817 = vld [vmem:[%s2] sm:$0xff]
        %2819 = vset.pattern.permute.xlu0 0
        %2820 = vperm.xlu0 %2819, %v2817
        %v2821 = vpop.permute.xlu0 %2820
        %v2823 = vmul.f32 %v2821, %v2590
        %v2824 = vmul.f32 %v2821, %v2591
        %v2825 = vrot.slane %v2823, 4
        %v2826 = vadd.f32 %v2823, %v2825
        %v2827 = vrot.slane %v2826, 2
        %v2828 = vadd.f32 %v2826, %v2827
        %v2829 = vrot.slane %v2828, 1
        %v2830 = vadd.f32 %v2828, %v2829
        %v2831 = vrot.slane %v2824, 4
        %v2832 = vadd.f32 %v2824, %v2831
        %v2833 = vrot.slane %v2832, 2
        %v2834 = vadd.f32 %v2832, %v2833
        %v2835 = vrot.slane %v2834, 1
        %v2836 = vadd.f32 %v2834, %v2835
        %v2837 = vld [vmem:[%s3] sm:$0xff]
        %v2839 = vsel %vm326, %v2837, 0
        %2841 = vmatprep.subr.mxu0 %v2591
        %2842 = vmatpush1.msra.mxu0 %v2590
        %2843 = vmatprep.subr.mxu0 0.0
        %2844 = vmatpush1.msra.mxu0 0.0
        %2845 = vmatprep.subr.mxu0 0.0
        %2846 = vmatpush1.msra.mxu0 0.0
        %2847 = vmatprep.subr.mxu0 0.0
        %2848 = vmatpush1.msra.mxu0 0.0
        %2849 = vmatprep.subr.mxu0 0.0
        %2850 = vmatpush1.msra.mxu0 0.0
        %2851 = vmatprep.subr.mxu0 0.0
        %2852 = vmatpush1.msra.mxu0 0.0
        %2853 = vmatprep.subr.mxu0 0.0
        %2854 = vmatpush1.msra.mxu0 0.0
        %2855 = vmatprep.subr.mxu0 0.0
        %2856 = vmatpush1.msra.mxu0 0.0
        %2857 = vmatprep.subr.mxu0 0.0
        %2858 = vmatpush1.msra.mxu0 0.0
        %2859 = vmatprep.subr.mxu0 0.0
        %2860 = vmatpush1.msra.mxu0 0.0
        %2861 = vmatprep.subr.mxu0 0.0
        %2862 = vmatpush1.msra.mxu0 0.0
        %2863 = vmatprep.subr.mxu0 0.0
        %2864 = vmatpush1.msra.mxu0 0.0
        %2865 = vmatprep.subr.mxu0 0.0
        %2866 = vmatpush1.msra.mxu0 0.0
        %2867 = vmatprep.subr.mxu0 0.0
        %2868 = vmatpush1.msra.mxu0 0.0
        %2869 = vmatprep.subr.mxu0 0.0
        %2870 = vmatpush1.msra.mxu0 0.0
        %2871 = vmatprep.subr.mxu0 0.0
        %2872 = vmatpush1.msra.mxu0 0.0
        %2873 = vmatprep.subr.mxu0 0.0
        %2874 = vmatpush1.msra.mxu0 0.0
        %2875 = vmatprep.subr.mxu0 0.0
        %2876 = vmatpush1.msra.mxu0 0.0
        %2877 = vmatprep.subr.mxu0 0.0
        %2878 = vmatpush1.msra.mxu0 0.0
        %2879 = vmatprep.subr.mxu0 0.0
        %2880 = vmatpush1.msra.mxu0 0.0
        %2881 = vmatprep.subr.mxu0 0.0
        %2882 = vmatpush1.msra.mxu0 0.0
        %2883 = vmatprep.subr.mxu0 0.0
        %2884 = vmatpush1.msra.mxu0 0.0
        %2885 = vmatprep.subr.mxu0 0.0
        %2886 = vmatpush1.msra.mxu0 0.0
        %2887 = vmatprep.subr.mxu0 0.0
        %2888 = vmatpush1.msra.mxu0 0.0
        %2889 = vmatprep.subr.mxu0 0.0
        %2890 = vmatpush1.msra.mxu0 0.0
        %2891 = vmatprep.subr.mxu0 0.0
        %2892 = vmatpush1.msra.mxu0 0.0
        %2893 = vmatprep.subr.mxu0 0.0
        %2894 = vmatpush1.msra.mxu0 0.0
        %2895 = vmatprep.subr.mxu0 0.0
        %2896 = vmatpush1.msra.mxu0 0.0
        %2897 = vmatprep.subr.mxu0 0.0
        %2898 = vmatpush1.msra.mxu0 0.0
        %2899 = vmatprep.subr.mxu0 0.0
        %2900 = vmatpush1.msra.mxu0 0.0
        %2901 = vmatprep.subr.mxu0 0.0
        %2902 = vmatpush1.msra.mxu0 0.0
        %2903 = vmatprep.subr.mxu0 0.0
        %2904 = vmatpush1.msra.mxu0 0.0
        %2905 = vmatprep.mubr.f32.mxu0 0.0
        %2906 = vmatmul.mubr.f32.gmra.mrb[0].mxu0 %v2839
        %v2907 = vpop.f32.mrb[0].mxu0
        %v2908 = vadd.f32 0.0, %v2907
        %v2909 = vpop.f32.mrb[0].mxu0
        %v2910 = vadd.f32 0.0, %v2909
        %2911 = vdwg.mxu0
        %v2912 = vmul.f32 %v2590, %v2908
        %v2913 = vmul.f32 %v2591, %v2910
        %v2914 = vrot.slane %v2912, 4
        %v2915 = vadd.f32 %v2912, %v2914
        %v2916 = vrot.slane %v2915, 2
        %v2917 = vadd.f32 %v2915, %v2916
        %v2918 = vrot.slane %v2917, 1
        %v2919 = vadd.f32 %v2917, %v2918
        %v2920 = vrot.slane %v2913, 4
        %v2921 = vadd.f32 %v2913, %v2920
        %v2922 = vrot.slane %v2921, 2
        %v2923 = vadd.f32 %v2921, %v2922
        %v2924 = vrot.slane %v2923, 1
        %v2925 = vadd.f32 %v2923, %v2924
        %v2926 = vmul.f32 %v2830, %v2830
        %v2927 = vmul.f32 %v2836, %v2836
        %v2928 = vsub.f32 %v2919, %v2926
        %v2929 = vsub.f32 %v2925, %v2927
        %v2930 = vmax.f32 %v2928, 0.0
        %v2931 = vmax.f32 %v2929, 0.0
        %v2932 = vld [vmem:[%s300 + $0x8] sm:$0x3]
        %v2933 = vadd.f32 %v2930, 1e-05
        %v2934 = vadd.f32 %v2931, 1e-05
        %v2935 = vrsqrt.pop %v2933
        %v2936 = vrsqrt.pop %v2934
        %v2939 = vcombine.low %v2935, %v2936
        %v2941 = vunpack.c.l.s4 1966171168
        %v2942 = vunpack.c.0.s8 %v2941
        %v2943 = vlaneseq
        %v2944 = vshrl.u32 %v2943, 7
        %v2945 = vsub.s32 %v2942, %v2944
        %v2946 = vrot.slane %v2939, %v2945
        %v2948 = vunpack.c.l.s4 1966171168
        %v2949 = vunpack.c.0.s8 %v2948
        %v2950 = vlaneseq
        %v2951 = vshrl.u32 %v2950, 7
        %v2952 = vsub.s32 %v2949, %v2951
        %v2953 = vrot.slane %v2946, %v2952
        %v2955 = vmul.f32 %v2932, %v2953
        %v2956 = vld [vmem:[%s305 + $0x8] sm:$0x3]
        %v2958 = vlaneseq
        %v2959 = vshrl.u32 %v2958, 7
        %v2960 = vsub.s32 0, %v2959
        %v2961 = vrot.slane %v2955, %v2960
        %v2962 = vlaneseq
        %v2963 = vshrl.u32 %v2962, 7
        %v2964 = vsub.s32 1, %v2963
        %v2965 = vrot.slane %v2955, %v2964
        %v2968 = vmul.f32 %v2830, %v2961
        %v2969 = vmul.f32 %v2836, %v2965
        %v2972 = vcombine.low %v2968, %v2969
        %v2974 = vunpack.c.l.s4 1966171168
        %v2975 = vunpack.c.0.s8 %v2974
        %v2976 = vlaneseq
        %v2977 = vshrl.u32 %v2976, 7
        %v2978 = vsub.s32 %v2975, %v2977
        %v2979 = vrot.slane %v2972, %v2978
        %v2981 = vunpack.c.l.s4 1966171168
        %v2982 = vunpack.c.0.s8 %v2981
        %v2983 = vlaneseq
        %v2984 = vshrl.u32 %v2983, 7
        %v2985 = vsub.s32 %v2982, %v2984
        %v2986 = vrot.slane %v2979, %v2985
        %v2988 = vsub.f32 %v2956, %v2986
        %v2989 = vmax.f32 %v2723, %v2729
        %v2990 = vmax.f32 %v2989, %v2735
        %v2991 = vmax.f32 %v2990, %v2741
        %v2992 = vmax.f32 %v2991, %v2747
        %v2993 = vmax.f32 %v2992, %v2753
        %v2994 = vmax.f32 %v2993, %v2759
        %v2995 = vmax.f32 %v2994, %v2765
        %v2996 = vrot.slane %v2995, 4
        %v2997 = vmax.f32 %v2995, %v2996
        %v2998 = vrot.slane %v2997, 2
        %v2999 = vmax.f32 %v2997, %v2998
        %v3000 = vrot.slane %v2999, 1
        %v3001 = vmax.f32 %v2999, %v3000
        %v3002 = vmax.f32 %v2725, %v2731
        %v3003 = vmax.f32 %v3002, %v2737
        %v3004 = vmax.f32 %v3003, %v2743
        %v3005 = vmax.f32 %v3004, %v2749
        %v3006 = vmax.f32 %v3005, %v2755
        %v3007 = vmax.f32 %v3006, %v2761
        %v3008 = vmax.f32 %v3007, %v2767
        %v3009 = vrot.slane %v3008, 4
        %v3010 = vmax.f32 %v3008, %v3009
        %v3011 = vrot.slane %v3010, 2
        %v3012 = vmax.f32 %v3010, %v3011
        %v3013 = vrot.slane %v3012, 1
        %v3014 = vmax.f32 %v3012, %v3013
        %v3015 = vmax.f32 %v2771, %v2777
        %v3016 = vmax.f32 %v3015, %v2783
        %v3017 = vmax.f32 %v3016, %v2789
        %v3018 = vmax.f32 %v3017, %v2795
        %v3019 = vmax.f32 %v3018, %v2801
        %v3020 = vmax.f32 %v3019, %v2807
        %v3021 = vmax.f32 %v3020, %v2813
        %v3022 = vrot.slane %v3021, 4
        %v3023 = vmax.f32 %v3021, %v3022
        %v3024 = vrot.slane %v3023, 2
        %v3025 = vmax.f32 %v3023, %v3024
        %v3026 = vrot.slane %v3025, 1
        %v3027 = vmax.f32 %v3025, %v3026
        %v3028 = vmax.f32 %v2773, %v2779
        %v3029 = vmax.f32 %v3028, %v2785
        %v3030 = vmax.f32 %v3029, %v2791
        %v3031 = vmax.f32 %v3030, %v2797
        %v3032 = vmax.f32 %v3031, %v2803
        %v3033 = vmax.f32 %v3032, %v2809
        %v3034 = vmax.f32 %v3033, %v2815
        %v3035 = vrot.slane %v3034, 4
        %v3036 = vmax.f32 %v3034, %v3035
        %v3037 = vrot.slane %v3036, 2
        %v3038 = vmax.f32 %v3036, %v3037
        %v3039 = vrot.slane %v3038, 1
        %v3040 = vmax.f32 %v3038, %v3039
        %v3041 = vmin.f32 %v2723, %v2729
        %v3042 = vmin.f32 %v3041, %v2735
        %v3043 = vmin.f32 %v3042, %v2741
        %v3044 = vmin.f32 %v3043, %v2747
        %v3045 = vmin.f32 %v3044, %v2753
        %v3046 = vmin.f32 %v3045, %v2759
        %v3047 = vmin.f32 %v3046, %v2765
        %v3048 = vrot.slane %v3047, 4
        %v3049 = vmin.f32 %v3047, %v3048
        %v3050 = vrot.slane %v3049, 2
        %v3051 = vmin.f32 %v3049, %v3050
        %v3052 = vrot.slane %v3051, 1
        %v3053 = vmin.f32 %v3051, %v3052
        %v3054 = vmin.f32 %v2725, %v2731
        %v3055 = vmin.f32 %v3054, %v2737
        %v3056 = vmin.f32 %v3055, %v2743
        %v3057 = vmin.f32 %v3056, %v2749
        %v3058 = vmin.f32 %v3057, %v2755
        %v3059 = vmin.f32 %v3058, %v2761
        %v3060 = vmin.f32 %v3059, %v2767
        %v3061 = vrot.slane %v3060, 4
        %v3062 = vmin.f32 %v3060, %v3061
        %v3063 = vrot.slane %v3062, 2
        %v3064 = vmin.f32 %v3062, %v3063
        %v3065 = vrot.slane %v3064, 1
        %v3066 = vmin.f32 %v3064, %v3065
        %v3067 = vmin.f32 %v2771, %v2777
        %v3068 = vmin.f32 %v3067, %v2783
        %v3069 = vmin.f32 %v3068, %v2789
        %v3070 = vmin.f32 %v3069, %v2795
        %v3071 = vmin.f32 %v3070, %v2801
        %v3072 = vmin.f32 %v3071, %v2807
        %v3073 = vmin.f32 %v3072, %v2813
        %v3074 = vrot.slane %v3073, 4
        %v3075 = vmin.f32 %v3073, %v3074
        %v3076 = vrot.slane %v3075, 2
        %v3077 = vmin.f32 %v3075, %v3076
        %v3078 = vrot.slane %v3077, 1
        %v3079 = vmin.f32 %v3077, %v3078
        %v3080 = vmin.f32 %v2773, %v2779
        %v3081 = vmin.f32 %v3080, %v2785
        %v3082 = vmin.f32 %v3081, %v2791
        %v3083 = vmin.f32 %v3082, %v2797
        %v3084 = vmin.f32 %v3083, %v2803
        %v3085 = vmin.f32 %v3084, %v2809
        %v3086 = vmin.f32 %v3085, %v2815
        %v3087 = vrot.slane %v3086, 4
        %v3088 = vmin.f32 %v3086, %v3087
        %v3089 = vrot.slane %v3088, 2
        %v3090 = vmin.f32 %v3088, %v3089
        %v3091 = vrot.slane %v3090, 1
        %v3092 = vmin.f32 %v3090, %v3091
        %vm3093 = vcmp.ge.f32.partialorder %v2955, 0.0
        %v3094 = vmul.f32 %v3001, %v2961
        %v3095 = vmul.f32 %v3014, %v2965
        %v3096 = vmul.f32 %v3027, %v2961
        %v3097 = vmul.f32 %v3040, %v2965
        %v3098 = vmul.f32 %v3053, %v2961
        %v3099 = vmul.f32 %v3066, %v2965
        %v3100 = vmul.f32 %v3079, %v2961
        %v3101 = vmul.f32 %v3092, %v2965
        %v3102 = vsel %vm3093, 1, 0
        %v3103 = vlaneseq
        %v3104 = vshrl.u32 %v3103, 7
        %v3105 = vsub.s32 0, %v3104
        %v3106 = vrot.slane %v3102, %v3105
        %v3107 = vlaneseq
        %v3108 = vshrl.u32 %v3107, 7
        %v3109 = vsub.s32 1, %v3108
        %v3110 = vrot.slane %v3102, %v3109
        %vm3111 = vcmp.eq.s32.totalorder %v3106, 1
        %vm3112 = vcmp.eq.s32.totalorder %v3110, 1
        %v3117 = vrot.slane %v3096, 7
        %v3118 = vsel %vm837, %v3117, %v3094
        %v3119 = vrot.slane %v3097, 7
        %v3120 = vsel %vm837, %v3119, %v3095
        %v3127 = vrot.slane %v3100, 7
        %v3128 = vsel %vm837, %v3127, %v3098
        %v3129 = vrot.slane %v3101, 7
        %v3130 = vsel %vm837, %v3129, %v3099
        %v3133 = vsel %vm3111, %v3118, %v3128
        %v3134 = vsel %vm3112, %v3120, %v3130
        %v3136 = vlaneseq
        %v3137 = vshrl.u32 %v3136, 7
        %v3138 = vsub.s32 0, %v3137
        %v3139 = vrot.slane %v2988, %v3138
        %v3140 = vlaneseq
        %v3141 = vshrl.u32 %v3140, 7
        %v3142 = vsub.s32 1, %v3141
        %v3143 = vrot.slane %v2988, %v3142
        %v3146 = vadd.f32 %v3133, %v3139
        %v3147 = vadd.f32 %v3134, %v3143
        %v3150 = vcombine.low %v3146, %v3147
        %v3152 = vunpack.c.l.s4 1983009808
        %v3153 = vunpack.c.0.s8 %v3152
        %v3154 = vlaneseq
        %v3155 = vshrl.u32 %v3154, 7
        %v3156 = vsub.s32 %v3153, %v3155
        %v3157 = vrot.slane %v3150, %v3156
        %3159 = vst [vmem:[%s295 + $0x10] sm:$0xf] %v3157
        %v3160 = vld [vmem:[%s259 + $0x50] sm:$0xff]
        %v3161 = vld [vmem:[%s259 + $0x58] sm:$0xff]
        %v3162 = vld [vmem:[%s0] sm:$0xff]
        %v3163 = vld [vmem:[%s0 + $0x8] sm:$0xff]
        %v3164 = vld [vmem:[%s0 + $0x10] sm:$0xff]
        %v3165 = vld [vmem:[%s0 + $0x18] sm:$0xff]
        %v3166 = vld [vmem:[%s0 + $0x20] sm:$0xff]
        %v3167 = vld [vmem:[%s0 + $0x28] sm:$0xff]
        %v3168 = vld [vmem:[%s0 + $0x30] sm:$0xff]
        %v3169 = vld [vmem:[%s0 + $0x38] sm:$0xff]
        %v3170 = vld [vmem:[%s0 + $0x40] sm:$0xff]
        %v3171 = vld [vmem:[%s0 + $0x48] sm:$0xff]
        %v3172 = vld [vmem:[%s0 + $0x50] sm:$0xff]
        %v3173 = vld [vmem:[%s0 + $0x58] sm:$0xff]
        %v3174 = vld [vmem:[%s0 + $0x60] sm:$0xff]
        %v3175 = vld [vmem:[%s0 + $0x68] sm:$0xff]
        %v3176 = vld [vmem:[%s0 + $0x70] sm:$0xff]
        %v3177 = vld [vmem:[%s0 + $0x78] sm:$0xff]
        %v3179 = vsel %vm326, %v3162, 0
        %v3182 = vsel %vm326, %v3163, 0
        %v3185 = vsel %vm326, %v3164, 0
        %v3188 = vsel %vm326, %v3165, 0
        %v3191 = vsel %vm326, %v3166, 0
        %v3194 = vsel %vm326, %v3167, 0
        %v3197 = vsel %vm326, %v3168, 0
        %v3200 = vsel %vm326, %v3169, 0
        %v3203 = vsel %vm326, %v3170, 0
        %v3206 = vsel %vm326, %v3171, 0
        %v3209 = vsel %vm326, %v3172, 0
        %v3212 = vsel %vm326, %v3173, 0
        %v3215 = vsel %vm326, %v3174, 0
        %v3218 = vsel %vm326, %v3175, 0
        %v3221 = vsel %vm326, %v3176, 0
        %v3224 = vsel %vm326, %v3177, 0
        %3226 = vmatprep.subr.mxu0 %v3161
        %3227 = vmatpush1.msra.mxu0 %v3160
        %3228 = vmatprep.subr.mxu0 0.0
        %3229 = vmatpush1.msra.mxu0 0.0
        %3230 = vmatprep.subr.mxu0 0.0
        %3231 = vmatpush1.msra.mxu0 0.0
        %3232 = vmatprep.subr.mxu0 0.0
        %3233 = vmatpush1.msra.mxu0 0.0
        %3234 = vmatprep.subr.mxu0 0.0
        %3235 = vmatpush1.msra.mxu0 0.0
        %3236 = vmatprep.subr.mxu0 0.0
        %3237 = vmatpush1.msra.mxu0 0.0
        %3238 = vmatprep.subr.mxu0 0.0
        %3239 = vmatpush1.msra.mxu0 0.0
        %3240 = vmatprep.subr.mxu0 0.0
        %3241 = vmatpush1.msra.mxu0 0.0
        %3242 = vmatprep.subr.mxu0 0.0
        %3243 = vmatpush1.msra.mxu0 0.0
        %3244 = vmatprep.subr.mxu0 0.0
        %3245 = vmatpush1.msra.mxu0 0.0
        %3246 = vmatprep.subr.mxu0 0.0
        %3247 = vmatpush1.msra.mxu0 0.0
        %3248 = vmatprep.subr.mxu0 0.0
        %3249 = vmatpush1.msra.mxu0 0.0
        %3250 = vmatprep.subr.mxu0 0.0
        %3251 = vmatpush1.msra.mxu0 0.0
        %3252 = vmatprep.subr.mxu0 0.0
        %3253 = vmatpush1.msra.mxu0 0.0
        %3254 = vmatprep.subr.mxu0 0.0
        %3255 = vmatpush1.msra.mxu0 0.0
        %3256 = vmatprep.subr.mxu0 0.0
        %3257 = vmatpush1.msra.mxu0 0.0
        %3258 = vmatprep.subr.mxu0 0.0
        %3259 = vmatpush1.msra.mxu0 0.0
        %3260 = vmatprep.subr.mxu0 0.0
        %3261 = vmatpush1.msra.mxu0 0.0
        %3262 = vmatprep.subr.mxu0 0.0
        %3263 = vmatpush1.msra.mxu0 0.0
        %3264 = vmatprep.subr.mxu0 0.0
        %3265 = vmatpush1.msra.mxu0 0.0
        %3266 = vmatprep.subr.mxu0 0.0
        %3267 = vmatpush1.msra.mxu0 0.0
        %3268 = vmatprep.subr.mxu0 0.0
        %3269 = vmatpush1.msra.mxu0 0.0
        %3270 = vmatprep.subr.mxu0 0.0
        %3271 = vmatpush1.msra.mxu0 0.0
        %3272 = vmatprep.subr.mxu0 0.0
        %3273 = vmatpush1.msra.mxu0 0.0
        %3274 = vmatprep.subr.mxu0 0.0
        %3275 = vmatpush1.msra.mxu0 0.0
        %3276 = vmatprep.subr.mxu0 0.0
        %3277 = vmatpush1.msra.mxu0 0.0
        %3278 = vmatprep.subr.mxu0 0.0
        %3279 = vmatpush1.msra.mxu0 0.0
        %3280 = vmatprep.subr.mxu0 0.0
        %3281 = vmatpush1.msra.mxu0 0.0
        %3282 = vmatprep.subr.mxu0 0.0
        %3283 = vmatpush1.msra.mxu0 0.0
        %3284 = vmatprep.subr.mxu0 0.0
        %3285 = vmatpush1.msra.mxu0 0.0
        %3286 = vmatprep.subr.mxu0 0.0
        %3287 = vmatpush1.msra.mxu0 0.0
        %3288 = vmatprep.subr.mxu0 0.0
        %3289 = vmatpush1.msra.mxu0 0.0
        %3290 = vmatprep.mubr.f32.mxu0 0.0
        %3291 = vmatmul.mubr.f32.gmra.mrb[0].mxu0 %v3179
        %v3292 = vpop.f32.mrb[0].mxu0
        %v3293 = vadd.f32 0.0, %v3292
        %v3294 = vpop.f32.mrb[0].mxu0
        %v3295 = vadd.f32 0.0, %v3294
        %3296 = vmatprep.mubr.f32.mxu0 0.0
        %3297 = vmatmul.mubr.f32.gmra.mrb[0].mxu0 %v3182
        %v3298 = vpop.f32.mrb[0].mxu0
        %v3299 = vadd.f32 0.0, %v3298
        %v3300 = vpop.f32.mrb[0].mxu0
        %v3301 = vadd.f32 0.0, %v3300
        %3302 = vmatprep.mubr.f32.mxu0 0.0
        %3303 = vmatmul.mubr.f32.gmra.mrb[0].mxu0 %v3185
        %v3304 = vpop.f32.mrb[0].mxu0
        %v3305 = vadd.f32 0.0, %v3304
        %v3306 = vpop.f32.mrb[0].mxu0
        %v3307 = vadd.f32 0.0, %v3306
        %3308 = vmatprep.mubr.f32.mxu0 0.0
        %3309 = vmatmul.mubr.f32.gmra.mrb[0].mxu0 %v3188
        %v3310 = vpop.f32.mrb[0].mxu0
        %v3311 = vadd.f32 0.0, %v3310
        %v3312 = vpop.f32.mrb[0].mxu0
        %v3313 = vadd.f32 0.0, %v3312
        %3314 = vmatprep.mubr.f32.mxu0 0.0
        %3315 = vmatmul.mubr.f32.gmra.mrb[0].mxu0 %v3191
        %v3316 = vpop.f32.mrb[0].mxu0
        %v3317 = vadd.f32 0.0, %v3316
        %v3318 = vpop.f32.mrb[0].mxu0
        %v3319 = vadd.f32 0.0, %v3318
        %3320 = vmatprep.mubr.f32.mxu0 0.0
        %3321 = vmatmul.mubr.f32.gmra.mrb[0].mxu0 %v3194
        %v3322 = vpop.f32.mrb[0].mxu0
        %v3323 = vadd.f32 0.0, %v3322
        %v3324 = vpop.f32.mrb[0].mxu0
        %v3325 = vadd.f32 0.0, %v3324
        %3326 = vmatprep.mubr.f32.mxu0 0.0
        %3327 = vmatmul.mubr.f32.gmra.mrb[0].mxu0 %v3197
        %v3328 = vpop.f32.mrb[0].mxu0
        %v3329 = vadd.f32 0.0, %v3328
        %v3330 = vpop.f32.mrb[0].mxu0
        %v3331 = vadd.f32 0.0, %v3330
        %3332 = vmatprep.mubr.f32.mxu0 0.0
        %3333 = vmatmul.mubr.f32.gmra.mrb[0].mxu0 %v3200
        %v3334 = vpop.f32.mrb[0].mxu0
        %v3335 = vadd.f32 0.0, %v3334
        %v3336 = vpop.f32.mrb[0].mxu0
        %v3337 = vadd.f32 0.0, %v3336
        %3338 = vmatprep.mubr.f32.mxu0 0.0
        %3339 = vmatmul.mubr.f32.gmra.mrb[0].mxu0 %v3203
        %v3340 = vpop.f32.mrb[0].mxu0
        %v3341 = vadd.f32 0.0, %v3340
        %v3342 = vpop.f32.mrb[0].mxu0
        %v3343 = vadd.f32 0.0, %v3342
        %3344 = vmatprep.mubr.f32.mxu0 0.0
        %3345 = vmatmul.mubr.f32.gmra.mrb[0].mxu0 %v3206
        %v3346 = vpop.f32.mrb[0].mxu0
        %v3347 = vadd.f32 0.0, %v3346
        %v3348 = vpop.f32.mrb[0].mxu0
        %v3349 = vadd.f32 0.0, %v3348
        %3350 = vmatprep.mubr.f32.mxu0 0.0
        %3351 = vmatmul.mubr.f32.gmra.mrb[0].mxu0 %v3209
        %v3352 = vpop.f32.mrb[0].mxu0
        %v3353 = vadd.f32 0.0, %v3352
        %v3354 = vpop.f32.mrb[0].mxu0
        %v3355 = vadd.f32 0.0, %v3354
        %3356 = vmatprep.mubr.f32.mxu0 0.0
        %3357 = vmatmul.mubr.f32.gmra.mrb[0].mxu0 %v3212
        %v3358 = vpop.f32.mrb[0].mxu0
        %v3359 = vadd.f32 0.0, %v3358
        %v3360 = vpop.f32.mrb[0].mxu0
        %v3361 = vadd.f32 0.0, %v3360
        %3362 = vmatprep.mubr.f32.mxu0 0.0
        %3363 = vmatmul.mubr.f32.gmra.mrb[0].mxu0 %v3215
        %v3364 = vpop.f32.mrb[0].mxu0
        %v3365 = vadd.f32 0.0, %v3364
        %v3366 = vpop.f32.mrb[0].mxu0
        %v3367 = vadd.f32 0.0, %v3366
        %3368 = vmatprep.mubr.f32.mxu0 0.0
        %3369 = vmatmul.mubr.f32.gmra.mrb[0].mxu0 %v3218
        %v3370 = vpop.f32.mrb[0].mxu0
        %v3371 = vadd.f32 0.0, %v3370
        %v3372 = vpop.f32.mrb[0].mxu0
        %v3373 = vadd.f32 0.0, %v3372
        %3374 = vmatprep.mubr.f32.mxu0 0.0
        %3375 = vmatmul.mubr.f32.gmra.mrb[0].mxu0 %v3221
        %v3376 = vpop.f32.mrb[0].mxu0
        %v3377 = vadd.f32 0.0, %v3376
        %v3378 = vpop.f32.mrb[0].mxu0
        %v3379 = vadd.f32 0.0, %v3378
        %3380 = vmatprep.mubr.f32.mxu0 0.0
        %3381 = vmatmul.mubr.f32.gmra.mrb[0].mxu0 %v3224
        %v3382 = vpop.f32.mrb[0].mxu0
        %v3383 = vadd.f32 0.0, %v3382
        %v3384 = vpop.f32.mrb[0].mxu0
        %v3385 = vadd.f32 0.0, %v3384
        %3386 = vdwg.mxu0
        %v3387 = vld [vmem:[%s2] sm:$0xff]
        %3389 = vset.pattern.permute.xlu0 0
        %3390 = vperm.xlu0 %3389, %v3387
        %v3391 = vpop.permute.xlu0 %3390
        %v3393 = vmul.f32 %v3391, %v3160
        %v3394 = vmul.f32 %v3391, %v3161
        %v3395 = vrot.slane %v3393, 4
        %v3396 = vadd.f32 %v3393, %v3395
        %v3397 = vrot.slane %v3396, 2
        %v3398 = vadd.f32 %v3396, %v3397
        %v3399 = vrot.slane %v3398, 1
        %v3400 = vadd.f32 %v3398, %v3399
        %v3401 = vrot.slane %v3394, 4
        %v3402 = vadd.f32 %v3394, %v3401
        %v3403 = vrot.slane %v3402, 2
        %v3404 = vadd.f32 %v3402, %v3403
        %v3405 = vrot.slane %v3404, 1
        %v3406 = vadd.f32 %v3404, %v3405
        %v3407 = vld [vmem:[%s3] sm:$0xff]
        %v3409 = vsel %vm326, %v3407, 0
        %3411 = vmatprep.subr.mxu0 %v3161
        %3412 = vmatpush1.msra.mxu0 %v3160
        %3413 = vmatprep.subr.mxu0 0.0
        %3414 = vmatpush1.msra.mxu0 0.0
        %3415 = vmatprep.subr.mxu0 0.0
        %3416 = vmatpush1.msra.mxu0 0.0
        %3417 = vmatprep.subr.mxu0 0.0
        %3418 = vmatpush1.msra.mxu0 0.0
        %3419 = vmatprep.subr.mxu0 0.0
        %3420 = vmatpush1.msra.mxu0 0.0
        %3421 = vmatprep.subr.mxu0 0.0
        %3422 = vmatpush1.msra.mxu0 0.0
        %3423 = vmatprep.subr.mxu0 0.0
        %3424 = vmatpush1.msra.mxu0 0.0
        %3425 = vmatprep.subr.mxu0 0.0
        %3426 = vmatpush1.msra.mxu0 0.0
        %3427 = vmatprep.subr.mxu0 0.0
        %3428 = vmatpush1.msra.mxu0 0.0
        %3429 = vmatprep.subr.mxu0 0.0
        %3430 = vmatpush1.msra.mxu0 0.0
        %3431 = vmatprep.subr.mxu0 0.0
        %3432 = vmatpush1.msra.mxu0 0.0
        %3433 = vmatprep.subr.mxu0 0.0
        %3434 = vmatpush1.msra.mxu0 0.0
        %3435 = vmatprep.subr.mxu0 0.0
        %3436 = vmatpush1.msra.mxu0 0.0
        %3437 = vmatprep.subr.mxu0 0.0
        %3438 = vmatpush1.msra.mxu0 0.0
        %3439 = vmatprep.subr.mxu0 0.0
        %3440 = vmatpush1.msra.mxu0 0.0
        %3441 = vmatprep.subr.mxu0 0.0
        %3442 = vmatpush1.msra.mxu0 0.0
        %3443 = vmatprep.subr.mxu0 0.0
        %3444 = vmatpush1.msra.mxu0 0.0
        %3445 = vmatprep.subr.mxu0 0.0
        %3446 = vmatpush1.msra.mxu0 0.0
        %3447 = vmatprep.subr.mxu0 0.0
        %3448 = vmatpush1.msra.mxu0 0.0
        %3449 = vmatprep.subr.mxu0 0.0
        %3450 = vmatpush1.msra.mxu0 0.0
        %3451 = vmatprep.subr.mxu0 0.0
        %3452 = vmatpush1.msra.mxu0 0.0
        %3453 = vmatprep.subr.mxu0 0.0
        %3454 = vmatpush1.msra.mxu0 0.0
        %3455 = vmatprep.subr.mxu0 0.0
        %3456 = vmatpush1.msra.mxu0 0.0
        %3457 = vmatprep.subr.mxu0 0.0
        %3458 = vmatpush1.msra.mxu0 0.0
        %3459 = vmatprep.subr.mxu0 0.0
        %3460 = vmatpush1.msra.mxu0 0.0
        %3461 = vmatprep.subr.mxu0 0.0
        %3462 = vmatpush1.msra.mxu0 0.0
        %3463 = vmatprep.subr.mxu0 0.0
        %3464 = vmatpush1.msra.mxu0 0.0
        %3465 = vmatprep.subr.mxu0 0.0
        %3466 = vmatpush1.msra.mxu0 0.0
        %3467 = vmatprep.subr.mxu0 0.0
        %3468 = vmatpush1.msra.mxu0 0.0
        %3469 = vmatprep.subr.mxu0 0.0
        %3470 = vmatpush1.msra.mxu0 0.0
        %3471 = vmatprep.subr.mxu0 0.0
        %3472 = vmatpush1.msra.mxu0 0.0
        %3473 = vmatprep.subr.mxu0 0.0
        %3474 = vmatpush1.msra.mxu0 0.0
        %3475 = vmatprep.mubr.f32.mxu0 0.0
        %3476 = vmatmul.mubr.f32.gmra.mrb[0].mxu0 %v3409
        %v3477 = vpop.f32.mrb[0].mxu0
        %v3478 = vadd.f32 0.0, %v3477
        %v3479 = vpop.f32.mrb[0].mxu0
        %v3480 = vadd.f32 0.0, %v3479
        %3481 = vdwg.mxu0
        %v3482 = vmul.f32 %v3160, %v3478
        %v3483 = vmul.f32 %v3161, %v3480
        %v3484 = vrot.slane %v3482, 4
        %v3485 = vadd.f32 %v3482, %v3484
        %v3486 = vrot.slane %v3485, 2
        %v3487 = vadd.f32 %v3485, %v3486
        %v3488 = vrot.slane %v3487, 1
        %v3489 = vadd.f32 %v3487, %v3488
        %v3490 = vrot.slane %v3483, 4
        %v3491 = vadd.f32 %v3483, %v3490
        %v3492 = vrot.slane %v3491, 2
        %v3493 = vadd.f32 %v3491, %v3492
        %v3494 = vrot.slane %v3493, 1
        %v3495 = vadd.f32 %v3493, %v3494
        %v3496 = vmul.f32 %v3400, %v3400
        %v3497 = vmul.f32 %v3406, %v3406
        %v3498 = vsub.f32 %v3489, %v3496
        %v3499 = vsub.f32 %v3495, %v3497
        %v3500 = vmax.f32 %v3498, 0.0
        %v3501 = vmax.f32 %v3499, 0.0
        %v3502 = vld [vmem:[%s300 + $0xa] sm:$0x3]
        %v3503 = vadd.f32 %v3500, 1e-05
        %v3504 = vadd.f32 %v3501, 1e-05
        %v3505 = vrsqrt.pop %v3503
        %v3506 = vrsqrt.pop %v3504
        %v3509 = vcombine.low %v3505, %v3506
        %v3511 = vunpack.c.l.s4 1966171168
        %v3512 = vunpack.c.0.s8 %v3511
        %v3513 = vlaneseq
        %v3514 = vshrl.u32 %v3513, 7
        %v3515 = vsub.s32 %v3512, %v3514
        %v3516 = vrot.slane %v3509, %v3515
        %v3518 = vunpack.c.l.s4 1966171168
        %v3519 = vunpack.c.0.s8 %v3518
        %v3520 = vlaneseq
        %v3521 = vshrl.u32 %v3520, 7
        %v3522 = vsub.s32 %v3519, %v3521
        %v3523 = vrot.slane %v3516, %v3522
        %v3525 = vmul.f32 %v3502, %v3523
        %v3526 = vld [vmem:[%s305 + $0xa] sm:$0x3]
        %v3528 = vlaneseq
        %v3529 = vshrl.u32 %v3528, 7
        %v3530 = vsub.s32 0, %v3529
        %v3531 = vrot.slane %v3525, %v3530
        %v3532 = vlaneseq
        %v3533 = vshrl.u32 %v3532, 7
        %v3534 = vsub.s32 1, %v3533
        %v3535 = vrot.slane %v3525, %v3534
        %v3538 = vmul.f32 %v3400, %v3531
        %v3539 = vmul.f32 %v3406, %v3535
        %v3542 = vcombine.low %v3538, %v3539
        %v3544 = vunpack.c.l.s4 1966171168
        %v3545 = vunpack.c.0.s8 %v3544
        %v3546 = vlaneseq
        %v3547 = vshrl.u32 %v3546, 7
        %v3548 = vsub.s32 %v3545, %v3547
        %v3549 = vrot.slane %v3542, %v3548
        %v3551 = vunpack.c.l.s4 1966171168
        %v3552 = vunpack.c.0.s8 %v3551
        %v3553 = vlaneseq
        %v3554 = vshrl.u32 %v3553, 7
        %v3555 = vsub.s32 %v3552, %v3554
        %v3556 = vrot.slane %v3549, %v3555
        %v3558 = vsub.f32 %v3526, %v3556
        %v3559 = vmax.f32 %v3293, %v3299
        %v3560 = vmax.f32 %v3559, %v3305
        %v3561 = vmax.f32 %v3560, %v3311
        %v3562 = vmax.f32 %v3561, %v3317
        %v3563 = vmax.f32 %v3562, %v3323
        %v3564 = vmax.f32 %v3563, %v3329
        %v3565 = vmax.f32 %v3564, %v3335
        %v3566 = vrot.slane %v3565, 4
        %v3567 = vmax.f32 %v3565, %v3566
        %v3568 = vrot.slane %v3567, 2
        %v3569 = vmax.f32 %v3567, %v3568
        %v3570 = vrot.slane %v3569, 1
        %v3571 = vmax.f32 %v3569, %v3570
        %v3572 = vmax.f32 %v3295, %v3301
        %v3573 = vmax.f32 %v3572, %v3307
        %v3574 = vmax.f32 %v3573, %v3313
        %v3575 = vmax.f32 %v3574, %v3319
        %v3576 = vmax.f32 %v3575, %v3325
        %v3577 = vmax.f32 %v3576, %v3331
        %v3578 = vmax.f32 %v3577, %v3337
        %v3579 = vrot.slane %v3578, 4
        %v3580 = vmax.f32 %v3578, %v3579
        %v3581 = vrot.slane %v3580, 2
        %v3582 = vmax.f32 %v3580, %v3581
        %v3583 = vrot.slane %v3582, 1
        %v3584 = vmax.f32 %v3582, %v3583
        %v3585 = vmax.f32 %v3341, %v3347
        %v3586 = vmax.f32 %v3585, %v3353
        %v3587 = vmax.f32 %v3586, %v3359
        %v3588 = vmax.f32 %v3587, %v3365
        %v3589 = vmax.f32 %v3588, %v3371
        %v3590 = vmax.f32 %v3589, %v3377
        %v3591 = vmax.f32 %v3590, %v3383
        %v3592 = vrot.slane %v3591, 4
        %v3593 = vmax.f32 %v3591, %v3592
        %v3594 = vrot.slane %v3593, 2
        %v3595 = vmax.f32 %v3593, %v3594
        %v3596 = vrot.slane %v3595, 1
        %v3597 = vmax.f32 %v3595, %v3596
        %v3598 = vmax.f32 %v3343, %v3349
        %v3599 = vmax.f32 %v3598, %v3355
        %v3600 = vmax.f32 %v3599, %v3361
        %v3601 = vmax.f32 %v3600, %v3367
        %v3602 = vmax.f32 %v3601, %v3373
        %v3603 = vmax.f32 %v3602, %v3379
        %v3604 = vmax.f32 %v3603, %v3385
        %v3605 = vrot.slane %v3604, 4
        %v3606 = vmax.f32 %v3604, %v3605
        %v3607 = vrot.slane %v3606, 2
        %v3608 = vmax.f32 %v3606, %v3607
        %v3609 = vrot.slane %v3608, 1
        %v3610 = vmax.f32 %v3608, %v3609
        %v3611 = vmin.f32 %v3293, %v3299
        %v3612 = vmin.f32 %v3611, %v3305
        %v3613 = vmin.f32 %v3612, %v3311
        %v3614 = vmin.f32 %v3613, %v3317
        %v3615 = vmin.f32 %v3614, %v3323
        %v3616 = vmin.f32 %v3615, %v3329
        %v3617 = vmin.f32 %v3616, %v3335
        %v3618 = vrot.slane %v3617, 4
        %v3619 = vmin.f32 %v3617, %v3618
        %v3620 = vrot.slane %v3619, 2
        %v3621 = vmin.f32 %v3619, %v3620
        %v3622 = vrot.slane %v3621, 1
        %v3623 = vmin.f32 %v3621, %v3622
        %v3624 = vmin.f32 %v3295, %v3301
        %v3625 = vmin.f32 %v3624, %v3307
        %v3626 = vmin.f32 %v3625, %v3313
        %v3627 = vmin.f32 %v3626, %v3319
        %v3628 = vmin.f32 %v3627, %v3325
        %v3629 = vmin.f32 %v3628, %v3331
        %v3630 = vmin.f32 %v3629, %v3337
        %v3631 = vrot.slane %v3630, 4
        %v3632 = vmin.f32 %v3630, %v3631
        %v3633 = vrot.slane %v3632, 2
        %v3634 = vmin.f32 %v3632, %v3633
        %v3635 = vrot.slane %v3634, 1
        %v3636 = vmin.f32 %v3634, %v3635
        %v3637 = vmin.f32 %v3341, %v3347
        %v3638 = vmin.f32 %v3637, %v3353
        %v3639 = vmin.f32 %v3638, %v3359
        %v3640 = vmin.f32 %v3639, %v3365
        %v3641 = vmin.f32 %v3640, %v3371
        %v3642 = vmin.f32 %v3641, %v3377
        %v3643 = vmin.f32 %v3642, %v3383
        %v3644 = vrot.slane %v3643, 4
        %v3645 = vmin.f32 %v3643, %v3644
        %v3646 = vrot.slane %v3645, 2
        %v3647 = vmin.f32 %v3645, %v3646
        %v3648 = vrot.slane %v3647, 1
        %v3649 = vmin.f32 %v3647, %v3648
        %v3650 = vmin.f32 %v3343, %v3349
        %v3651 = vmin.f32 %v3650, %v3355
        %v3652 = vmin.f32 %v3651, %v3361
        %v3653 = vmin.f32 %v3652, %v3367
        %v3654 = vmin.f32 %v3653, %v3373
        %v3655 = vmin.f32 %v3654, %v3379
        %v3656 = vmin.f32 %v3655, %v3385
        %v3657 = vrot.slane %v3656, 4
        %v3658 = vmin.f32 %v3656, %v3657
        %v3659 = vrot.slane %v3658, 2
        %v3660 = vmin.f32 %v3658, %v3659
        %v3661 = vrot.slane %v3660, 1
        %v3662 = vmin.f32 %v3660, %v3661
        %vm3663 = vcmp.ge.f32.partialorder %v3525, 0.0
        %v3664 = vmul.f32 %v3571, %v3531
        %v3665 = vmul.f32 %v3584, %v3535
        %v3666 = vmul.f32 %v3597, %v3531
        %v3667 = vmul.f32 %v3610, %v3535
        %v3668 = vmul.f32 %v3623, %v3531
        %v3669 = vmul.f32 %v3636, %v3535
        %v3670 = vmul.f32 %v3649, %v3531
        %v3671 = vmul.f32 %v3662, %v3535
        %v3672 = vsel %vm3663, 1, 0
        %v3673 = vlaneseq
        %v3674 = vshrl.u32 %v3673, 7
        %v3675 = vsub.s32 0, %v3674
        %v3676 = vrot.slane %v3672, %v3675
        %v3677 = vlaneseq
        %v3678 = vshrl.u32 %v3677, 7
        %v3679 = vsub.s32 1, %v3678
        %v3680 = vrot.slane %v3672, %v3679
        %vm3681 = vcmp.eq.s32.totalorder %v3676, 1
        %vm3682 = vcmp.eq.s32.totalorder %v3680, 1
        %v3687 = vrot.slane %v3666, 7
        %v3688 = vsel %vm837, %v3687, %v3664
        %v3689 = vrot.slane %v3667, 7
        %v3690 = vsel %vm837, %v3689, %v3665
        %v3697 = vrot.slane %v3670, 7
        %v3698 = vsel %vm837, %v3697, %v3668
        %v3699 = vrot.slane %v3671, 7
        %v3700 = vsel %vm837, %v3699, %v3669
        %v3703 = vsel %vm3681, %v3688, %v3698
        %v3704 = vsel %vm3682, %v3690, %v3700
        %v3706 = vlaneseq
        %v3707 = vshrl.u32 %v3706, 7
        %v3708 = vsub.s32 0, %v3707
        %v3709 = vrot.slane %v3558, %v3708
        %v3710 = vlaneseq
        %v3711 = vshrl.u32 %v3710, 7
        %v3712 = vsub.s32 1, %v3711
        %v3713 = vrot.slane %v3558, %v3712
        %v3716 = vadd.f32 %v3703, %v3709
        %v3717 = vadd.f32 %v3704, %v3713
        %v3720 = vcombine.low %v3716, %v3717
        %v3722 = vunpack.c.l.s4 1983009808
        %v3723 = vunpack.c.0.s8 %v3722
        %v3724 = vlaneseq
        %v3725 = vshrl.u32 %v3724, 7
        %v3726 = vsub.s32 %v3723, %v3725
        %v3727 = vrot.slane %v3720, %v3726
        %3729 = vst [vmem:[%s295 + $0x14] sm:$0xf] %v3727
        %v3730 = vld [vmem:[%s259 + $0x60] sm:$0xff]
        %v3731 = vld [vmem:[%s259 + $0x68] sm:$0xff]
        %v3732 = vld [vmem:[%s0] sm:$0xff]
        %v3733 = vld [vmem:[%s0 + $0x8] sm:$0xff]
        %v3734 = vld [vmem:[%s0 + $0x10] sm:$0xff]
        %v3735 = vld [vmem:[%s0 + $0x18] sm:$0xff]
        %v3736 = vld [vmem:[%s0 + $0x20] sm:$0xff]
        %v3737 = vld [vmem:[%s0 + $0x28] sm:$0xff]
        %v3738 = vld [vmem:[%s0 + $0x30] sm:$0xff]
        %v3739 = vld [vmem:[%s0 + $0x38] sm:$0xff]
        %v3740 = vld [vmem:[%s0 + $0x40] sm:$0xff]
        %v3741 = vld [vmem:[%s0 + $0x48] sm:$0xff]
        %v3742 = vld [vmem:[%s0 + $0x50] sm:$0xff]
        %v3743 = vld [vmem:[%s0 + $0x58] sm:$0xff]
        %v3744 = vld [vmem:[%s0 + $0x60] sm:$0xff]
        %v3745 = vld [vmem:[%s0 + $0x68] sm:$0xff]
        %v3746 = vld [vmem:[%s0 + $0x70] sm:$0xff]
        %v3747 = vld [vmem:[%s0 + $0x78] sm:$0xff]
        %v3749 = vsel %vm326, %v3732, 0
        %v3752 = vsel %vm326, %v3733, 0
        %v3755 = vsel %vm326, %v3734, 0
        %v3758 = vsel %vm326, %v3735, 0
        %v3761 = vsel %vm326, %v3736, 0
        %v3764 = vsel %vm326, %v3737, 0
        %v3767 = vsel %vm326, %v3738, 0
        %v3770 = vsel %vm326, %v3739, 0
        %v3773 = vsel %vm326, %v3740, 0
        %v3776 = vsel %vm326, %v3741, 0
        %v3779 = vsel %vm326, %v3742, 0
        %v3782 = vsel %vm326, %v3743, 0
        %v3785 = vsel %vm326, %v3744, 0
        %v3788 = vsel %vm326, %v3745, 0
        %v3791 = vsel %vm326, %v3746, 0
        %v3794 = vsel %vm326, %v3747, 0
        %3796 = vmatprep.subr.mxu0 %v3731
        %3797 = vmatpush1.msra.mxu0 %v3730
        %3798 = vmatprep.subr.mxu0 0.0
        %3799 = vmatpush1.msra.mxu0 0.0
        %3800 = vmatprep.subr.mxu0 0.0
        %3801 = vmatpush1.msra.mxu0 0.0
        %3802 = vmatprep.subr.mxu0 0.0
        %3803 = vmatpush1.msra.mxu0 0.0
        %3804 = vmatprep.subr.mxu0 0.0
        %3805 = vmatpush1.msra.mxu0 0.0
        %3806 = vmatprep.subr.mxu0 0.0
        %3807 = vmatpush1.msra.mxu0 0.0
        %3808 = vmatprep.subr.mxu0 0.0
        %3809 = vmatpush1.msra.mxu0 0.0
        %3810 = vmatprep.subr.mxu0 0.0
        %3811 = vmatpush1.msra.mxu0 0.0
        %3812 = vmatprep.subr.mxu0 0.0
        %3813 = vmatpush1.msra.mxu0 0.0
        %3814 = vmatprep.subr.mxu0 0.0
        %3815 = vmatpush1.msra.mxu0 0.0
        %3816 = vmatprep.subr.mxu0 0.0
        %3817 = vmatpush1.msra.mxu0 0.0
        %3818 = vmatprep.subr.mxu0 0.0
        %3819 = vmatpush1.msra.mxu0 0.0
        %3820 = vmatprep.subr.mxu0 0.0
        %3821 = vmatpush1.msra.mxu0 0.0
        %3822 = vmatprep.subr.mxu0 0.0
        %3823 = vmatpush1.msra.mxu0 0.0
        %3824 = vmatprep.subr.mxu0 0.0
        %3825 = vmatpush1.msra.mxu0 0.0
        %3826 = vmatprep.subr.mxu0 0.0
        %3827 = vmatpush1.msra.mxu0 0.0
        %3828 = vmatprep.subr.mxu0 0.0
        %3829 = vmatpush1.msra.mxu0 0.0
        %3830 = vmatprep.subr.mxu0 0.0
        %3831 = vmatpush1.msra.mxu0 0.0
        %3832 = vmatprep.subr.mxu0 0.0
        %3833 = vmatpush1.msra.mxu0 0.0
        %3834 = vmatprep.subr.mxu0 0.0
        %3835 = vmatpush1.msra.mxu0 0.0
        %3836 = vmatprep.subr.mxu0 0.0
        %3837 = vmatpush1.msra.mxu0 0.0
        %3838 = vmatprep.subr.mxu0 0.0
        %3839 = vmatpush1.msra.mxu0 0.0
        %3840 = vmatprep.subr.mxu0 0.0
        %3841 = vmatpush1.msra.mxu0 0.0
        %3842 = vmatprep.subr.mxu0 0.0
        %3843 = vmatpush1.msra.mxu0 0.0
        %3844 = vmatprep.subr.mxu0 0.0
        %3845 = vmatpush1.msra.mxu0 0.0
        %3846 = vmatprep.subr.mxu0 0.0
        %3847 = vmatpush1.msra.mxu0 0.0
        %3848 = vmatprep.subr.mxu0 0.0
        %3849 = vmatpush1.msra.mxu0 0.0
        %3850 = vmatprep.subr.mxu0 0.0
        %3851 = vmatpush1.msra.mxu0 0.0
        %3852 = vmatprep.subr.mxu0 0.0
        %3853 = vmatpush1.msra.mxu0 0.0
        %3854 = vmatprep.subr.mxu0 0.0
        %3855 = vmatpush1.msra.mxu0 0.0
        %3856 = vmatprep.subr.mxu0 0.0
        %3857 = vmatpush1.msra.mxu0 0.0
        %3858 = vmatprep.subr.mxu0 0.0
        %3859 = vmatpush1.msra.mxu0 0.0
        %3860 = vmatprep.mubr.f32.mxu0 0.0
        %3861 = vmatmul.mubr.f32.gmra.mrb[0].mxu0 %v3749
        %v3862 = vpop.f32.mrb[0].mxu0
        %v3863 = vadd.f32 0.0, %v3862
        %v3864 = vpop.f32.mrb[0].mxu0
        %v3865 = vadd.f32 0.0, %v3864
        %3866 = vmatprep.mubr.f32.mxu0 0.0
        %3867 = vmatmul.mubr.f32.gmra.mrb[0].mxu0 %v3752
        %v3868 = vpop.f32.mrb[0].mxu0
        %v3869 = vadd.f32 0.0, %v3868
        %v3870 = vpop.f32.mrb[0].mxu0
        %v3871 = vadd.f32 0.0, %v3870
        %3872 = vmatprep.mubr.f32.mxu0 0.0
        %3873 = vmatmul.mubr.f32.gmra.mrb[0].mxu0 %v3755
        %v3874 = vpop.f32.mrb[0].mxu0
        %v3875 = vadd.f32 0.0, %v3874
        %v3876 = vpop.f32.mrb[0].mxu0
        %v3877 = vadd.f32 0.0, %v3876
        %3878 = vmatprep.mubr.f32.mxu0 0.0
        %3879 = vmatmul.mubr.f32.gmra.mrb[0].mxu0 %v3758
        %v3880 = vpop.f32.mrb[0].mxu0
        %v3881 = vadd.f32 0.0, %v3880
        %v3882 = vpop.f32.mrb[0].mxu0
        %v3883 = vadd.f32 0.0, %v3882
        %3884 = vmatprep.mubr.f32.mxu0 0.0
        %3885 = vmatmul.mubr.f32.gmra.mrb[0].mxu0 %v3761
        %v3886 = vpop.f32.mrb[0].mxu0
        %v3887 = vadd.f32 0.0, %v3886
        %v3888 = vpop.f32.mrb[0].mxu0
        %v3889 = vadd.f32 0.0, %v3888
        %3890 = vmatprep.mubr.f32.mxu0 0.0
        %3891 = vmatmul.mubr.f32.gmra.mrb[0].mxu0 %v3764
        %v3892 = vpop.f32.mrb[0].mxu0
        %v3893 = vadd.f32 0.0, %v3892
        %v3894 = vpop.f32.mrb[0].mxu0
        %v3895 = vadd.f32 0.0, %v3894
        %3896 = vmatprep.mubr.f32.mxu0 0.0
        %3897 = vmatmul.mubr.f32.gmra.mrb[0].mxu0 %v3767
        %v3898 = vpop.f32.mrb[0].mxu0
        %v3899 = vadd.f32 0.0, %v3898
        %v3900 = vpop.f32.mrb[0].mxu0
        %v3901 = vadd.f32 0.0, %v3900
        %3902 = vmatprep.mubr.f32.mxu0 0.0
        %3903 = vmatmul.mubr.f32.gmra.mrb[0].mxu0 %v3770
        %v3904 = vpop.f32.mrb[0].mxu0
        %v3905 = vadd.f32 0.0, %v3904
        %v3906 = vpop.f32.mrb[0].mxu0
        %v3907 = vadd.f32 0.0, %v3906
        %3908 = vmatprep.mubr.f32.mxu0 0.0
        %3909 = vmatmul.mubr.f32.gmra.mrb[0].mxu0 %v3773
        %v3910 = vpop.f32.mrb[0].mxu0
        %v3911 = vadd.f32 0.0, %v3910
        %v3912 = vpop.f32.mrb[0].mxu0
        %v3913 = vadd.f32 0.0, %v3912
        %3914 = vmatprep.mubr.f32.mxu0 0.0
        %3915 = vmatmul.mubr.f32.gmra.mrb[0].mxu0 %v3776
        %v3916 = vpop.f32.mrb[0].mxu0
        %v3917 = vadd.f32 0.0, %v3916
        %v3918 = vpop.f32.mrb[0].mxu0
        %v3919 = vadd.f32 0.0, %v3918
        %3920 = vmatprep.mubr.f32.mxu0 0.0
        %3921 = vmatmul.mubr.f32.gmra.mrb[0].mxu0 %v3779
        %v3922 = vpop.f32.mrb[0].mxu0
        %v3923 = vadd.f32 0.0, %v3922
        %v3924 = vpop.f32.mrb[0].mxu0
        %v3925 = vadd.f32 0.0, %v3924
        %3926 = vmatprep.mubr.f32.mxu0 0.0
        %3927 = vmatmul.mubr.f32.gmra.mrb[0].mxu0 %v3782
        %v3928 = vpop.f32.mrb[0].mxu0
        %v3929 = vadd.f32 0.0, %v3928
        %v3930 = vpop.f32.mrb[0].mxu0
        %v3931 = vadd.f32 0.0, %v3930
        %3932 = vmatprep.mubr.f32.mxu0 0.0
        %3933 = vmatmul.mubr.f32.gmra.mrb[0].mxu0 %v3785
        %v3934 = vpop.f32.mrb[0].mxu0
        %v3935 = vadd.f32 0.0, %v3934
        %v3936 = vpop.f32.mrb[0].mxu0
        %v3937 = vadd.f32 0.0, %v3936
        %3938 = vmatprep.mubr.f32.mxu0 0.0
        %3939 = vmatmul.mubr.f32.gmra.mrb[0].mxu0 %v3788
        %v3940 = vpop.f32.mrb[0].mxu0
        %v3941 = vadd.f32 0.0, %v3940
        %v3942 = vpop.f32.mrb[0].mxu0
        %v3943 = vadd.f32 0.0, %v3942
        %3944 = vmatprep.mubr.f32.mxu0 0.0
        %3945 = vmatmul.mubr.f32.gmra.mrb[0].mxu0 %v3791
        %v3946 = vpop.f32.mrb[0].mxu0
        %v3947 = vadd.f32 0.0, %v3946
        %v3948 = vpop.f32.mrb[0].mxu0
        %v3949 = vadd.f32 0.0, %v3948
        %3950 = vmatprep.mubr.f32.mxu0 0.0
        %3951 = vmatmul.mubr.f32.gmra.mrb[0].mxu0 %v3794
        %v3952 = vpop.f32.mrb[0].mxu0
        %v3953 = vadd.f32 0.0, %v3952
        %v3954 = vpop.f32.mrb[0].mxu0
        %v3955 = vadd.f32 0.0, %v3954
        %3956 = vdwg.mxu0
        %v3957 = vld [vmem:[%s2] sm:$0xff]
        %3959 = vset.pattern.permute.xlu0 0
        %3960 = vperm.xlu0 %3959, %v3957
        %v3961 = vpop.permute.xlu0 %3960
        %v3963 = vmul.f32 %v3961, %v3730
        %v3964 = vmul.f32 %v3961, %v3731
        %v3965 = vrot.slane %v3963, 4
        %v3966 = vadd.f32 %v3963, %v3965
        %v3967 = vrot.slane %v3966, 2
        %v3968 = vadd.f32 %v3966, %v3967
        %v3969 = vrot.slane %v3968, 1
        %v3970 = vadd.f32 %v3968, %v3969
        %v3971 = vrot.slane %v3964, 4
        %v3972 = vadd.f32 %v3964, %v3971
        %v3973 = vrot.slane %v3972, 2
        %v3974 = vadd.f32 %v3972, %v3973
        %v3975 = vrot.slane %v3974, 1
        %v3976 = vadd.f32 %v3974, %v3975
        %v3977 = vld [vmem:[%s3] sm:$0xff]
        %v3979 = vsel %vm326, %v3977, 0
        %3981 = vmatprep.subr.mxu0 %v3731
        %3982 = vmatpush1.msra.mxu0 %v3730
        %3983 = vmatprep.subr.mxu0 0.0
        %3984 = vmatpush1.msra.mxu0 0.0
        %3985 = vmatprep.subr.mxu0 0.0
        %3986 = vmatpush1.msra.mxu0 0.0
        %3987 = vmatprep.subr.mxu0 0.0
        %3988 = vmatpush1.msra.mxu0 0.0
        %3989 = vmatprep.subr.mxu0 0.0
        %3990 = vmatpush1.msra.mxu0 0.0
        %3991 = vmatprep.subr.mxu0 0.0
        %3992 = vmatpush1.msra.mxu0 0.0
        %3993 = vmatprep.subr.mxu0 0.0
        %3994 = vmatpush1.msra.mxu0 0.0
        %3995 = vmatprep.subr.mxu0 0.0
        %3996 = vmatpush1.msra.mxu0 0.0
        %3997 = vmatprep.subr.mxu0 0.0
        %3998 = vmatpush1.msra.mxu0 0.0
        %3999 = vmatprep.subr.mxu0 0.0
        %4000 = vmatpush1.msra.mxu0 0.0
        %4001 = vmatprep.subr.mxu0 0.0
        %4002 = vmatpush1.msra.mxu0 0.0
        %4003 = vmatprep.subr.mxu0 0.0
        %4004 = vmatpush1.msra.mxu0 0.0
        %4005 = vmatprep.subr.mxu0 0.0
        %4006 = vmatpush1.msra.mxu0 0.0
        %4007 = vmatprep.subr.mxu0 0.0
        %4008 = vmatpush1.msra.mxu0 0.0
        %4009 = vmatprep.subr.mxu0 0.0
        %4010 = vmatpush1.msra.mxu0 0.0
        %4011 = vmatprep.subr.mxu0 0.0
        %4012 = vmatpush1.msra.mxu0 0.0
        %4013 = vmatprep.subr.mxu0 0.0
        %4014 = vmatpush1.msra.mxu0 0.0
        %4015 = vmatprep.subr.mxu0 0.0
        %4016 = vmatpush1.msra.mxu0 0.0
        %4017 = vmatprep.subr.mxu0 0.0
        %4018 = vmatpush1.msra.mxu0 0.0
        %4019 = vmatprep.subr.mxu0 0.0
        %4020 = vmatpush1.msra.mxu0 0.0
        %4021 = vmatprep.subr.mxu0 0.0
        %4022 = vmatpush1.msra.mxu0 0.0
        %4023 = vmatprep.subr.mxu0 0.0
        %4024 = vmatpush1.msra.mxu0 0.0
        %4025 = vmatprep.subr.mxu0 0.0
        %4026 = vmatpush1.msra.mxu0 0.0
        %4027 = vmatprep.subr.mxu0 0.0
        %4028 = vmatpush1.msra.mxu0 0.0
        %4029 = vmatprep.subr.mxu0 0.0
        %4030 = vmatpush1.msra.mxu0 0.0
        %4031 = vmatprep.subr.mxu0 0.0
        %4032 = vmatpush1.msra.mxu0 0.0
        %4033 = vmatprep.subr.mxu0 0.0
        %4034 = vmatpush1.msra.mxu0 0.0
        %4035 = vmatprep.subr.mxu0 0.0
        %4036 = vmatpush1.msra.mxu0 0.0
        %4037 = vmatprep.subr.mxu0 0.0
        %4038 = vmatpush1.msra.mxu0 0.0
        %4039 = vmatprep.subr.mxu0 0.0
        %4040 = vmatpush1.msra.mxu0 0.0
        %4041 = vmatprep.subr.mxu0 0.0
        %4042 = vmatpush1.msra.mxu0 0.0
        %4043 = vmatprep.subr.mxu0 0.0
        %4044 = vmatpush1.msra.mxu0 0.0
        %4045 = vmatprep.mubr.f32.mxu0 0.0
        %4046 = vmatmul.mubr.f32.gmra.mrb[0].mxu0 %v3979
        %v4047 = vpop.f32.mrb[0].mxu0
        %v4048 = vadd.f32 0.0, %v4047
        %v4049 = vpop.f32.mrb[0].mxu0
        %v4050 = vadd.f32 0.0, %v4049
        %4051 = vdwg.mxu0
        %v4052 = vmul.f32 %v3730, %v4048
        %v4053 = vmul.f32 %v3731, %v4050
        %v4054 = vrot.slane %v4052, 4
        %v4055 = vadd.f32 %v4052, %v4054
        %v4056 = vrot.slane %v4055, 2
        %v4057 = vadd.f32 %v4055, %v4056
        %v4058 = vrot.slane %v4057, 1
        %v4059 = vadd.f32 %v4057, %v4058
        %v4060 = vrot.slane %v4053, 4
        %v4061 = vadd.f32 %v4053, %v4060
        %v4062 = vrot.slane %v4061, 2
        %v4063 = vadd.f32 %v4061, %v4062
        %v4064 = vrot.slane %v4063, 1
        %v4065 = vadd.f32 %v4063, %v4064
        %v4066 = vmul.f32 %v3970, %v3970
        %v4067 = vmul.f32 %v3976, %v3976
        %v4068 = vsub.f32 %v4059, %v4066
        %v4069 = vsub.f32 %v4065, %v4067
        %v4070 = vmax.f32 %v4068, 0.0
        %v4071 = vmax.f32 %v4069, 0.0
        %v4072 = vld [vmem:[%s300 + $0xc] sm:$0x3]
        %v4073 = vadd.f32 %v4070, 1e-05
        %v4074 = vadd.f32 %v4071, 1e-05
        %v4075 = vrsqrt.pop %v4073
        %v4076 = vrsqrt.pop %v4074
        %v4079 = vcombine.low %v4075, %v4076
        %v4081 = vunpack.c.l.s4 1966171168
        %v4082 = vunpack.c.0.s8 %v4081
        %v4083 = vlaneseq
        %v4084 = vshrl.u32 %v4083, 7
        %v4085 = vsub.s32 %v4082, %v4084
        %v4086 = vrot.slane %v4079, %v4085
        %v4088 = vunpack.c.l.s4 1966171168
        %v4089 = vunpack.c.0.s8 %v4088
        %v4090 = vlaneseq
        %v4091 = vshrl.u32 %v4090, 7
        %v4092 = vsub.s32 %v4089, %v4091
        %v4093 = vrot.slane %v4086, %v4092
        %v4095 = vmul.f32 %v4072, %v4093
        %v4096 = vld [vmem:[%s305 + $0xc] sm:$0x3]
        %v4098 = vlaneseq
        %v4099 = vshrl.u32 %v4098, 7
        %v4100 = vsub.s32 0, %v4099
        %v4101 = vrot.slane %v4095, %v4100
        %v4102 = vlaneseq
        %v4103 = vshrl.u32 %v4102, 7
        %v4104 = vsub.s32 1, %v4103
        %v4105 = vrot.slane %v4095, %v4104
        %v4108 = vmul.f32 %v3970, %v4101
        %v4109 = vmul.f32 %v3976, %v4105
        %v4112 = vcombine.low %v4108, %v4109
        %v4114 = vunpack.c.l.s4 1966171168
        %v4115 = vunpack.c.0.s8 %v4114
        %v4116 = vlaneseq
        %v4117 = vshrl.u32 %v4116, 7
        %v4118 = vsub.s32 %v4115, %v4117
        %v4119 = vrot.slane %v4112, %v4118
        %v4121 = vunpack.c.l.s4 1966171168
        %v4122 = vunpack.c.0.s8 %v4121
        %v4123 = vlaneseq
        %v4124 = vshrl.u32 %v4123, 7
        %v4125 = vsub.s32 %v4122, %v4124
        %v4126 = vrot.slane %v4119, %v4125
        %v4128 = vsub.f32 %v4096, %v4126
        %v4129 = vmax.f32 %v3863, %v3869
        %v4130 = vmax.f32 %v4129, %v3875
        %v4131 = vmax.f32 %v4130, %v3881
        %v4132 = vmax.f32 %v4131, %v3887
        %v4133 = vmax.f32 %v4132, %v3893
        %v4134 = vmax.f32 %v4133, %v3899
        %v4135 = vmax.f32 %v4134, %v3905
        %v4136 = vrot.slane %v4135, 4
        %v4137 = vmax.f32 %v4135, %v4136
        %v4138 = vrot.slane %v4137, 2
        %v4139 = vmax.f32 %v4137, %v4138
        %v4140 = vrot.slane %v4139, 1
        %v4141 = vmax.f32 %v4139, %v4140
        %v4142 = vmax.f32 %v3865, %v3871
        %v4143 = vmax.f32 %v4142, %v3877
        %v4144 = vmax.f32 %v4143, %v3883
        %v4145 = vmax.f32 %v4144, %v3889
        %v4146 = vmax.f32 %v4145, %v3895
        %v4147 = vmax.f32 %v4146, %v3901
        %v4148 = vmax.f32 %v4147, %v3907
        %v4149 = vrot.slane %v4148, 4
        %v4150 = vmax.f32 %v4148, %v4149
        %v4151 = vrot.slane %v4150, 2
        %v4152 = vmax.f32 %v4150, %v4151
        %v4153 = vrot.slane %v4152, 1
        %v4154 = vmax.f32 %v4152, %v4153
        %v4155 = vmax.f32 %v3911, %v3917
        %v4156 = vmax.f32 %v4155, %v3923
        %v4157 = vmax.f32 %v4156, %v3929
        %v4158 = vmax.f32 %v4157, %v3935
        %v4159 = vmax.f32 %v4158, %v3941
        %v4160 = vmax.f32 %v4159, %v3947
        %v4161 = vmax.f32 %v4160, %v3953
        %v4162 = vrot.slane %v4161, 4
        %v4163 = vmax.f32 %v4161, %v4162
        %v4164 = vrot.slane %v4163, 2
        %v4165 = vmax.f32 %v4163, %v4164
        %v4166 = vrot.slane %v4165, 1
        %v4167 = vmax.f32 %v4165, %v4166
        %v4168 = vmax.f32 %v3913, %v3919
        %v4169 = vmax.f32 %v4168, %v3925
        %v4170 = vmax.f32 %v4169, %v3931
        %v4171 = vmax.f32 %v4170, %v3937
        %v4172 = vmax.f32 %v4171, %v3943
        %v4173 = vmax.f32 %v4172, %v3949
        %v4174 = vmax.f32 %v4173, %v3955
        %v4175 = vrot.slane %v4174, 4
        %v4176 = vmax.f32 %v4174, %v4175
        %v4177 = vrot.slane %v4176, 2
        %v4178 = vmax.f32 %v4176, %v4177
        %v4179 = vrot.slane %v4178, 1
        %v4180 = vmax.f32 %v4178, %v4179
        %v4181 = vmin.f32 %v3863, %v3869
        %v4182 = vmin.f32 %v4181, %v3875
        %v4183 = vmin.f32 %v4182, %v3881
        %v4184 = vmin.f32 %v4183, %v3887
        %v4185 = vmin.f32 %v4184, %v3893
        %v4186 = vmin.f32 %v4185, %v3899
        %v4187 = vmin.f32 %v4186, %v3905
        %v4188 = vrot.slane %v4187, 4
        %v4189 = vmin.f32 %v4187, %v4188
        %v4190 = vrot.slane %v4189, 2
        %v4191 = vmin.f32 %v4189, %v4190
        %v4192 = vrot.slane %v4191, 1
        %v4193 = vmin.f32 %v4191, %v4192
        %v4194 = vmin.f32 %v3865, %v3871
        %v4195 = vmin.f32 %v4194, %v3877
        %v4196 = vmin.f32 %v4195, %v3883
        %v4197 = vmin.f32 %v4196, %v3889
        %v4198 = vmin.f32 %v4197, %v3895
        %v4199 = vmin.f32 %v4198, %v3901
        %v4200 = vmin.f32 %v4199, %v3907
        %v4201 = vrot.slane %v4200, 4
        %v4202 = vmin.f32 %v4200, %v4201
        %v4203 = vrot.slane %v4202, 2
        %v4204 = vmin.f32 %v4202, %v4203
        %v4205 = vrot.slane %v4204, 1
        %v4206 = vmin.f32 %v4204, %v4205
        %v4207 = vmin.f32 %v3911, %v3917
        %v4208 = vmin.f32 %v4207, %v3923
        %v4209 = vmin.f32 %v4208, %v3929
        %v4210 = vmin.f32 %v4209, %v3935
        %v4211 = vmin.f32 %v4210, %v3941
        %v4212 = vmin.f32 %v4211, %v3947
        %v4213 = vmin.f32 %v4212, %v3953
        %v4214 = vrot.slane %v4213, 4
        %v4215 = vmin.f32 %v4213, %v4214
        %v4216 = vrot.slane %v4215, 2
        %v4217 = vmin.f32 %v4215, %v4216
        %v4218 = vrot.slane %v4217, 1
        %v4219 = vmin.f32 %v4217, %v4218
        %v4220 = vmin.f32 %v3913, %v3919
        %v4221 = vmin.f32 %v4220, %v3925
        %v4222 = vmin.f32 %v4221, %v3931
        %v4223 = vmin.f32 %v4222, %v3937
        %v4224 = vmin.f32 %v4223, %v3943
        %v4225 = vmin.f32 %v4224, %v3949
        %v4226 = vmin.f32 %v4225, %v3955
        %v4227 = vrot.slane %v4226, 4
        %v4228 = vmin.f32 %v4226, %v4227
        %v4229 = vrot.slane %v4228, 2
        %v4230 = vmin.f32 %v4228, %v4229
        %v4231 = vrot.slane %v4230, 1
        %v4232 = vmin.f32 %v4230, %v4231
        %vm4233 = vcmp.ge.f32.partialorder %v4095, 0.0
        %v4234 = vmul.f32 %v4141, %v4101
        %v4235 = vmul.f32 %v4154, %v4105
        %v4236 = vmul.f32 %v4167, %v4101
        %v4237 = vmul.f32 %v4180, %v4105
        %v4238 = vmul.f32 %v4193, %v4101
        %v4239 = vmul.f32 %v4206, %v4105
        %v4240 = vmul.f32 %v4219, %v4101
        %v4241 = vmul.f32 %v4232, %v4105
        %v4242 = vsel %vm4233, 1, 0
        %v4243 = vlaneseq
        %v4244 = vshrl.u32 %v4243, 7
        %v4245 = vsub.s32 0, %v4244
        %v4246 = vrot.slane %v4242, %v4245
        %v4247 = vlaneseq
        %v4248 = vshrl.u32 %v4247, 7
        %v4249 = vsub.s32 1, %v4248
        %v4250 = vrot.slane %v4242, %v4249
        %vm4251 = vcmp.eq.s32.totalorder %v4246, 1
        %vm4252 = vcmp.eq.s32.totalorder %v4250, 1
        %v4257 = vrot.slane %v4236, 7
        %v4258 = vsel %vm837, %v4257, %v4234
        %v4259 = vrot.slane %v4237, 7
        %v4260 = vsel %vm837, %v4259, %v4235
        %v4267 = vrot.slane %v4240, 7
        %v4268 = vsel %vm837, %v4267, %v4238
        %v4269 = vrot.slane %v4241, 7
        %v4270 = vsel %vm837, %v4269, %v4239
        %v4273 = vsel %vm4251, %v4258, %v4268
        %v4274 = vsel %vm4252, %v4260, %v4270
        %v4276 = vlaneseq
        %v4277 = vshrl.u32 %v4276, 7
        %v4278 = vsub.s32 0, %v4277
        %v4279 = vrot.slane %v4128, %v4278
        %v4280 = vlaneseq
        %v4281 = vshrl.u32 %v4280, 7
        %v4282 = vsub.s32 1, %v4281
        %v4283 = vrot.slane %v4128, %v4282
        %v4286 = vadd.f32 %v4273, %v4279
        %v4287 = vadd.f32 %v4274, %v4283
        %v4290 = vcombine.low %v4286, %v4287
        %v4292 = vunpack.c.l.s4 1983009808
        %v4293 = vunpack.c.0.s8 %v4292
        %v4294 = vlaneseq
        %v4295 = vshrl.u32 %v4294, 7
        %v4296 = vsub.s32 %v4293, %v4295
        %v4297 = vrot.slane %v4290, %v4296
        %4299 = vst [vmem:[%s295 + $0x18] sm:$0xf] %v4297
        %v4300 = vld [vmem:[%s259 + $0x70] sm:$0xff]
        %v4301 = vld [vmem:[%s259 + $0x78] sm:$0xff]
        %v4302 = vld [vmem:[%s0] sm:$0xff]
        %v4303 = vld [vmem:[%s0 + $0x8] sm:$0xff]
        %v4304 = vld [vmem:[%s0 + $0x10] sm:$0xff]
        %v4305 = vld [vmem:[%s0 + $0x18] sm:$0xff]
        %v4306 = vld [vmem:[%s0 + $0x20] sm:$0xff]
        %v4307 = vld [vmem:[%s0 + $0x28] sm:$0xff]
        %v4308 = vld [vmem:[%s0 + $0x30] sm:$0xff]
        %v4309 = vld [vmem:[%s0 + $0x38] sm:$0xff]
        %v4310 = vld [vmem:[%s0 + $0x40] sm:$0xff]
        %v4311 = vld [vmem:[%s0 + $0x48] sm:$0xff]
        %v4312 = vld [vmem:[%s0 + $0x50] sm:$0xff]
        %v4313 = vld [vmem:[%s0 + $0x58] sm:$0xff]
        %v4314 = vld [vmem:[%s0 + $0x60] sm:$0xff]
        %v4315 = vld [vmem:[%s0 + $0x68] sm:$0xff]
        %v4316 = vld [vmem:[%s0 + $0x70] sm:$0xff]
        %v4317 = vld [vmem:[%s0 + $0x78] sm:$0xff]
        %v4319 = vsel %vm326, %v4302, 0
        %v4322 = vsel %vm326, %v4303, 0
        %v4325 = vsel %vm326, %v4304, 0
        %v4328 = vsel %vm326, %v4305, 0
        %v4331 = vsel %vm326, %v4306, 0
        %v4334 = vsel %vm326, %v4307, 0
        %v4337 = vsel %vm326, %v4308, 0
        %v4340 = vsel %vm326, %v4309, 0
        %v4343 = vsel %vm326, %v4310, 0
        %v4346 = vsel %vm326, %v4311, 0
        %v4349 = vsel %vm326, %v4312, 0
        %v4352 = vsel %vm326, %v4313, 0
        %v4355 = vsel %vm326, %v4314, 0
        %v4358 = vsel %vm326, %v4315, 0
        %v4361 = vsel %vm326, %v4316, 0
        %v4364 = vsel %vm326, %v4317, 0
        %4366 = vmatprep.subr.mxu0 %v4301
        %4367 = vmatpush1.msra.mxu0 %v4300
        %4368 = vmatprep.subr.mxu0 0.0
        %4369 = vmatpush1.msra.mxu0 0.0
        %4370 = vmatprep.subr.mxu0 0.0
        %4371 = vmatpush1.msra.mxu0 0.0
        %4372 = vmatprep.subr.mxu0 0.0
        %4373 = vmatpush1.msra.mxu0 0.0
        %4374 = vmatprep.subr.mxu0 0.0
        %4375 = vmatpush1.msra.mxu0 0.0
        %4376 = vmatprep.subr.mxu0 0.0
        %4377 = vmatpush1.msra.mxu0 0.0
        %4378 = vmatprep.subr.mxu0 0.0
        %4379 = vmatpush1.msra.mxu0 0.0
        %4380 = vmatprep.subr.mxu0 0.0
        %4381 = vmatpush1.msra.mxu0 0.0
        %4382 = vmatprep.subr.mxu0 0.0
        %4383 = vmatpush1.msra.mxu0 0.0
        %4384 = vmatprep.subr.mxu0 0.0
        %4385 = vmatpush1.msra.mxu0 0.0
        %4386 = vmatprep.subr.mxu0 0.0
        %4387 = vmatpush1.msra.mxu0 0.0
        %4388 = vmatprep.subr.mxu0 0.0
        %4389 = vmatpush1.msra.mxu0 0.0
        %4390 = vmatprep.subr.mxu0 0.0
        %4391 = vmatpush1.msra.mxu0 0.0
        %4392 = vmatprep.subr.mxu0 0.0
        %4393 = vmatpush1.msra.mxu0 0.0
        %4394 = vmatprep.subr.mxu0 0.0
        %4395 = vmatpush1.msra.mxu0 0.0
        %4396 = vmatprep.subr.mxu0 0.0
        %4397 = vmatpush1.msra.mxu0 0.0
        %4398 = vmatprep.subr.mxu0 0.0
        %4399 = vmatpush1.msra.mxu0 0.0
        %4400 = vmatprep.subr.mxu0 0.0
        %4401 = vmatpush1.msra.mxu0 0.0
        %4402 = vmatprep.subr.mxu0 0.0
        %4403 = vmatpush1.msra.mxu0 0.0
        %4404 = vmatprep.subr.mxu0 0.0
        %4405 = vmatpush1.msra.mxu0 0.0
        %4406 = vmatprep.subr.mxu0 0.0
        %4407 = vmatpush1.msra.mxu0 0.0
        %4408 = vmatprep.subr.mxu0 0.0
        %4409 = vmatpush1.msra.mxu0 0.0
        %4410 = vmatprep.subr.mxu0 0.0
        %4411 = vmatpush1.msra.mxu0 0.0
        %4412 = vmatprep.subr.mxu0 0.0
        %4413 = vmatpush1.msra.mxu0 0.0
        %4414 = vmatprep.subr.mxu0 0.0
        %4415 = vmatpush1.msra.mxu0 0.0
        %4416 = vmatprep.subr.mxu0 0.0
        %4417 = vmatpush1.msra.mxu0 0.0
        %4418 = vmatprep.subr.mxu0 0.0
        %4419 = vmatpush1.msra.mxu0 0.0
        %4420 = vmatprep.subr.mxu0 0.0
        %4421 = vmatpush1.msra.mxu0 0.0
        %4422 = vmatprep.subr.mxu0 0.0
        %4423 = vmatpush1.msra.mxu0 0.0
        %4424 = vmatprep.subr.mxu0 0.0
        %4425 = vmatpush1.msra.mxu0 0.0
        %4426 = vmatprep.subr.mxu0 0.0
        %4427 = vmatpush1.msra.mxu0 0.0
        %4428 = vmatprep.subr.mxu0 0.0
        %4429 = vmatpush1.msra.mxu0 0.0
        %4430 = vmatprep.mubr.f32.mxu0 0.0
        %4431 = vmatmul.mubr.f32.gmra.mrb[0].mxu0 %v4319
        %v4432 = vpop.f32.mrb[0].mxu0
        %v4433 = vadd.f32 0.0, %v4432
        %v4434 = vpop.f32.mrb[0].mxu0
        %v4435 = vadd.f32 0.0, %v4434
        %4436 = vmatprep.mubr.f32.mxu0 0.0
        %4437 = vmatmul.mubr.f32.gmra.mrb[0].mxu0 %v4322
        %v4438 = vpop.f32.mrb[0].mxu0
        %v4439 = vadd.f32 0.0, %v4438
        %v4440 = vpop.f32.mrb[0].mxu0
        %v4441 = vadd.f32 0.0, %v4440
        %4442 = vmatprep.mubr.f32.mxu0 0.0
        %4443 = vmatmul.mubr.f32.gmra.mrb[0].mxu0 %v4325
        %v4444 = vpop.f32.mrb[0].mxu0
        %v4445 = vadd.f32 0.0, %v4444
        %v4446 = vpop.f32.mrb[0].mxu0
        %v4447 = vadd.f32 0.0, %v4446
        %4448 = vmatprep.mubr.f32.mxu0 0.0
        %4449 = vmatmul.mubr.f32.gmra.mrb[0].mxu0 %v4328
        %v4450 = vpop.f32.mrb[0].mxu0
        %v4451 = vadd.f32 0.0, %v4450
        %v4452 = vpop.f32.mrb[0].mxu0
        %v4453 = vadd.f32 0.0, %v4452
        %4454 = vmatprep.mubr.f32.mxu0 0.0
        %4455 = vmatmul.mubr.f32.gmra.mrb[0].mxu0 %v4331
        %v4456 = vpop.f32.mrb[0].mxu0
        %v4457 = vadd.f32 0.0, %v4456
        %v4458 = vpop.f32.mrb[0].mxu0
        %v4459 = vadd.f32 0.0, %v4458
        %4460 = vmatprep.mubr.f32.mxu0 0.0
        %4461 = vmatmul.mubr.f32.gmra.mrb[0].mxu0 %v4334
        %v4462 = vpop.f32.mrb[0].mxu0
        %v4463 = vadd.f32 0.0, %v4462
        %v4464 = vpop.f32.mrb[0].mxu0
        %v4465 = vadd.f32 0.0, %v4464
        %4466 = vmatprep.mubr.f32.mxu0 0.0
        %4467 = vmatmul.mubr.f32.gmra.mrb[0].mxu0 %v4337
        %v4468 = vpop.f32.mrb[0].mxu0
        %v4469 = vadd.f32 0.0, %v4468
        %v4470 = vpop.f32.mrb[0].mxu0
        %v4471 = vadd.f32 0.0, %v4470
        %4472 = vmatprep.mubr.f32.mxu0 0.0
        %4473 = vmatmul.mubr.f32.gmra.mrb[0].mxu0 %v4340
        %v4474 = vpop.f32.mrb[0].mxu0
        %v4475 = vadd.f32 0.0, %v4474
        %v4476 = vpop.f32.mrb[0].mxu0
        %v4477 = vadd.f32 0.0, %v4476
        %4478 = vmatprep.mubr.f32.mxu0 0.0
        %4479 = vmatmul.mubr.f32.gmra.mrb[0].mxu0 %v4343
        %v4480 = vpop.f32.mrb[0].mxu0
        %v4481 = vadd.f32 0.0, %v4480
        %v4482 = vpop.f32.mrb[0].mxu0
        %v4483 = vadd.f32 0.0, %v4482
        %4484 = vmatprep.mubr.f32.mxu0 0.0
        %4485 = vmatmul.mubr.f32.gmra.mrb[0].mxu0 %v4346
        %v4486 = vpop.f32.mrb[0].mxu0
        %v4487 = vadd.f32 0.0, %v4486
        %v4488 = vpop.f32.mrb[0].mxu0
        %v4489 = vadd.f32 0.0, %v4488
        %4490 = vmatprep.mubr.f32.mxu0 0.0
        %4491 = vmatmul.mubr.f32.gmra.mrb[0].mxu0 %v4349
        %v4492 = vpop.f32.mrb[0].mxu0
        %v4493 = vadd.f32 0.0, %v4492
        %v4494 = vpop.f32.mrb[0].mxu0
        %v4495 = vadd.f32 0.0, %v4494
        %4496 = vmatprep.mubr.f32.mxu0 0.0
        %4497 = vmatmul.mubr.f32.gmra.mrb[0].mxu0 %v4352
        %v4498 = vpop.f32.mrb[0].mxu0
        %v4499 = vadd.f32 0.0, %v4498
        %v4500 = vpop.f32.mrb[0].mxu0
        %v4501 = vadd.f32 0.0, %v4500
        %4502 = vmatprep.mubr.f32.mxu0 0.0
        %4503 = vmatmul.mubr.f32.gmra.mrb[0].mxu0 %v4355
        %v4504 = vpop.f32.mrb[0].mxu0
        %v4505 = vadd.f32 0.0, %v4504
        %v4506 = vpop.f32.mrb[0].mxu0
        %v4507 = vadd.f32 0.0, %v4506
        %4508 = vmatprep.mubr.f32.mxu0 0.0
        %4509 = vmatmul.mubr.f32.gmra.mrb[0].mxu0 %v4358
        %v4510 = vpop.f32.mrb[0].mxu0
        %v4511 = vadd.f32 0.0, %v4510
        %v4512 = vpop.f32.mrb[0].mxu0
        %v4513 = vadd.f32 0.0, %v4512
        %4514 = vmatprep.mubr.f32.mxu0 0.0
        %4515 = vmatmul.mubr.f32.gmra.mrb[0].mxu0 %v4361
        %v4516 = vpop.f32.mrb[0].mxu0
        %v4517 = vadd.f32 0.0, %v4516
        %v4518 = vpop.f32.mrb[0].mxu0
        %v4519 = vadd.f32 0.0, %v4518
        %4520 = vmatprep.mubr.f32.mxu0 0.0
        %4521 = vmatmul.mubr.f32.gmra.mrb[0].mxu0 %v4364
        %v4522 = vpop.f32.mrb[0].mxu0
        %v4523 = vadd.f32 0.0, %v4522
        %v4524 = vpop.f32.mrb[0].mxu0
        %v4525 = vadd.f32 0.0, %v4524
        %4526 = vdwg.mxu0
        %v4527 = vld [vmem:[%s2] sm:$0xff]
        %4529 = vset.pattern.permute.xlu0 0
        %4530 = vperm.xlu0 %4529, %v4527
        %v4531 = vpop.permute.xlu0 %4530
        %v4533 = vmul.f32 %v4531, %v4300
        %v4534 = vmul.f32 %v4531, %v4301
        %v4535 = vrot.slane %v4533, 4
        %v4536 = vadd.f32 %v4533, %v4535
        %v4537 = vrot.slane %v4536, 2
        %v4538 = vadd.f32 %v4536, %v4537
        %v4539 = vrot.slane %v4538, 1
        %v4540 = vadd.f32 %v4538, %v4539
        %v4541 = vrot.slane %v4534, 4
        %v4542 = vadd.f32 %v4534, %v4541
        %v4543 = vrot.slane %v4542, 2
        %v4544 = vadd.f32 %v4542, %v4543
        %v4545 = vrot.slane %v4544, 1
        %v4546 = vadd.f32 %v4544, %v4545
        %v4547 = vld [vmem:[%s3] sm:$0xff]
        %v4549 = vsel %vm326, %v4547, 0
        %4551 = vmatprep.subr.mxu0 %v4301
        %4552 = vmatpush1.msra.mxu0 %v4300
        %4553 = vmatprep.subr.mxu0 0.0
        %4554 = vmatpush1.msra.mxu0 0.0
        %4555 = vmatprep.subr.mxu0 0.0
        %4556 = vmatpush1.msra.mxu0 0.0
        %4557 = vmatprep.subr.mxu0 0.0
        %4558 = vmatpush1.msra.mxu0 0.0
        %4559 = vmatprep.subr.mxu0 0.0
        %4560 = vmatpush1.msra.mxu0 0.0
        %4561 = vmatprep.subr.mxu0 0.0
        %4562 = vmatpush1.msra.mxu0 0.0
        %4563 = vmatprep.subr.mxu0 0.0
        %4564 = vmatpush1.msra.mxu0 0.0
        %4565 = vmatprep.subr.mxu0 0.0
        %4566 = vmatpush1.msra.mxu0 0.0
        %4567 = vmatprep.subr.mxu0 0.0
        %4568 = vmatpush1.msra.mxu0 0.0
        %4569 = vmatprep.subr.mxu0 0.0
        %4570 = vmatpush1.msra.mxu0 0.0
        %4571 = vmatprep.subr.mxu0 0.0
        %4572 = vmatpush1.msra.mxu0 0.0
        %4573 = vmatprep.subr.mxu0 0.0
        %4574 = vmatpush1.msra.mxu0 0.0
        %4575 = vmatprep.subr.mxu0 0.0
        %4576 = vmatpush1.msra.mxu0 0.0
        %4577 = vmatprep.subr.mxu0 0.0
        %4578 = vmatpush1.msra.mxu0 0.0
        %4579 = vmatprep.subr.mxu0 0.0
        %4580 = vmatpush1.msra.mxu0 0.0
        %4581 = vmatprep.subr.mxu0 0.0
        %4582 = vmatpush1.msra.mxu0 0.0
        %4583 = vmatprep.subr.mxu0 0.0
        %4584 = vmatpush1.msra.mxu0 0.0
        %4585 = vmatprep.subr.mxu0 0.0
        %4586 = vmatpush1.msra.mxu0 0.0
        %4587 = vmatprep.subr.mxu0 0.0
        %4588 = vmatpush1.msra.mxu0 0.0
        %4589 = vmatprep.subr.mxu0 0.0
        %4590 = vmatpush1.msra.mxu0 0.0
        %4591 = vmatprep.subr.mxu0 0.0
        %4592 = vmatpush1.msra.mxu0 0.0
        %4593 = vmatprep.subr.mxu0 0.0
        %4594 = vmatpush1.msra.mxu0 0.0
        %4595 = vmatprep.subr.mxu0 0.0
        %4596 = vmatpush1.msra.mxu0 0.0
        %4597 = vmatprep.subr.mxu0 0.0
        %4598 = vmatpush1.msra.mxu0 0.0
        %4599 = vmatprep.subr.mxu0 0.0
        %4600 = vmatpush1.msra.mxu0 0.0
        %4601 = vmatprep.subr.mxu0 0.0
        %4602 = vmatpush1.msra.mxu0 0.0
        %4603 = vmatprep.subr.mxu0 0.0
        %4604 = vmatpush1.msra.mxu0 0.0
        %4605 = vmatprep.subr.mxu0 0.0
        %4606 = vmatpush1.msra.mxu0 0.0
        %4607 = vmatprep.subr.mxu0 0.0
        %4608 = vmatpush1.msra.mxu0 0.0
        %4609 = vmatprep.subr.mxu0 0.0
        %4610 = vmatpush1.msra.mxu0 0.0
        %4611 = vmatprep.subr.mxu0 0.0
        %4612 = vmatpush1.msra.mxu0 0.0
        %4613 = vmatprep.subr.mxu0 0.0
        %4614 = vmatpush1.msra.mxu0 0.0
        %4615 = vmatprep.mubr.f32.mxu0 0.0
        %4616 = vmatmul.mubr.f32.gmra.mrb[0].mxu0 %v4549
        %v4617 = vpop.f32.mrb[0].mxu0
        %v4618 = vadd.f32 0.0, %v4617
        %v4619 = vpop.f32.mrb[0].mxu0
        %v4620 = vadd.f32 0.0, %v4619
        %4621 = vdwg.mxu0
        %v4622 = vmul.f32 %v4300, %v4618
        %v4623 = vmul.f32 %v4301, %v4620
        %v4624 = vrot.slane %v4622, 4
        %v4625 = vadd.f32 %v4622, %v4624
        %v4626 = vrot.slane %v4625, 2
        %v4627 = vadd.f32 %v4625, %v4626
        %v4628 = vrot.slane %v4627, 1
        %v4629 = vadd.f32 %v4627, %v4628
        %v4630 = vrot.slane %v4623, 4
        %v4631 = vadd.f32 %v4623, %v4630
        %v4632 = vrot.slane %v4631, 2
        %v4633 = vadd.f32 %v4631, %v4632
        %v4634 = vrot.slane %v4633, 1
        %v4635 = vadd.f32 %v4633, %v4634
        %v4636 = vmul.f32 %v4540, %v4540
        %v4637 = vmul.f32 %v4546, %v4546
        %v4638 = vsub.f32 %v4629, %v4636
        %v4639 = vsub.f32 %v4635, %v4637
        %v4640 = vmax.f32 %v4638, 0.0
        %v4641 = vmax.f32 %v4639, 0.0
        %v4642 = vld [vmem:[%s300 + $0xe] sm:$0x3]
        %v4643 = vadd.f32 %v4640, 1e-05
        %v4644 = vadd.f32 %v4641, 1e-05
        %v4645 = vrsqrt.pop %v4643
        %v4646 = vrsqrt.pop %v4644
        %v4649 = vcombine.low %v4645, %v4646
        %v4651 = vunpack.c.l.s4 1966171168
        %v4652 = vunpack.c.0.s8 %v4651
        %v4653 = vlaneseq
        %v4654 = vshrl.u32 %v4653, 7
        %v4655 = vsub.s32 %v4652, %v4654
        %v4656 = vrot.slane %v4649, %v4655
        %v4658 = vunpack.c.l.s4 1966171168
        %v4659 = vunpack.c.0.s8 %v4658
        %v4660 = vlaneseq
        %v4661 = vshrl.u32 %v4660, 7
        %v4662 = vsub.s32 %v4659, %v4661
        %v4663 = vrot.slane %v4656, %v4662
        %v4665 = vmul.f32 %v4642, %v4663
        %v4666 = vld [vmem:[%s305 + $0xe] sm:$0x3]
        %v4668 = vlaneseq
        %v4669 = vshrl.u32 %v4668, 7
        %v4670 = vsub.s32 0, %v4669
        %v4671 = vrot.slane %v4665, %v4670
        %v4672 = vlaneseq
        %v4673 = vshrl.u32 %v4672, 7
        %v4674 = vsub.s32 1, %v4673
        %v4675 = vrot.slane %v4665, %v4674
        %v4678 = vmul.f32 %v4540, %v4671
        %v4679 = vmul.f32 %v4546, %v4675
        %v4682 = vcombine.low %v4678, %v4679
        %v4684 = vunpack.c.l.s4 1966171168
        %v4685 = vunpack.c.0.s8 %v4684
        %v4686 = vlaneseq
        %v4687 = vshrl.u32 %v4686, 7
        %v4688 = vsub.s32 %v4685, %v4687
        %v4689 = vrot.slane %v4682, %v4688
        %v4691 = vunpack.c.l.s4 1966171168
        %v4692 = vunpack.c.0.s8 %v4691
        %v4693 = vlaneseq
        %v4694 = vshrl.u32 %v4693, 7
        %v4695 = vsub.s32 %v4692, %v4694
        %v4696 = vrot.slane %v4689, %v4695
        %v4698 = vsub.f32 %v4666, %v4696
        %v4699 = vmax.f32 %v4433, %v4439
        %v4700 = vmax.f32 %v4699, %v4445
        %v4701 = vmax.f32 %v4700, %v4451
        %v4702 = vmax.f32 %v4701, %v4457
        %v4703 = vmax.f32 %v4702, %v4463
        %v4704 = vmax.f32 %v4703, %v4469
        %v4705 = vmax.f32 %v4704, %v4475
        %v4706 = vrot.slane %v4705, 4
        %v4707 = vmax.f32 %v4705, %v4706
        %v4708 = vrot.slane %v4707, 2
        %v4709 = vmax.f32 %v4707, %v4708
        %v4710 = vrot.slane %v4709, 1
        %v4711 = vmax.f32 %v4709, %v4710
        %v4712 = vmax.f32 %v4435, %v4441
        %v4713 = vmax.f32 %v4712, %v4447
        %v4714 = vmax.f32 %v4713, %v4453
        %v4715 = vmax.f32 %v4714, %v4459
        %v4716 = vmax.f32 %v4715, %v4465
        %v4717 = vmax.f32 %v4716, %v4471
        %v4718 = vmax.f32 %v4717, %v4477
        %v4719 = vrot.slane %v4718, 4
        %v4720 = vmax.f32 %v4718, %v4719
        %v4721 = vrot.slane %v4720, 2
        %v4722 = vmax.f32 %v4720, %v4721
        %v4723 = vrot.slane %v4722, 1
        %v4724 = vmax.f32 %v4722, %v4723
        %v4725 = vmax.f32 %v4481, %v4487
        %v4726 = vmax.f32 %v4725, %v4493
        %v4727 = vmax.f32 %v4726, %v4499
        %v4728 = vmax.f32 %v4727, %v4505
        %v4729 = vmax.f32 %v4728, %v4511
        %v4730 = vmax.f32 %v4729, %v4517
        %v4731 = vmax.f32 %v4730, %v4523
        %v4732 = vrot.slane %v4731, 4
        %v4733 = vmax.f32 %v4731, %v4732
        %v4734 = vrot.slane %v4733, 2
        %v4735 = vmax.f32 %v4733, %v4734
        %v4736 = vrot.slane %v4735, 1
        %v4737 = vmax.f32 %v4735, %v4736
        %v4738 = vmax.f32 %v4483, %v4489
        %v4739 = vmax.f32 %v4738, %v4495
        %v4740 = vmax.f32 %v4739, %v4501
        %v4741 = vmax.f32 %v4740, %v4507
        %v4742 = vmax.f32 %v4741, %v4513
        %v4743 = vmax.f32 %v4742, %v4519
        %v4744 = vmax.f32 %v4743, %v4525
        %v4745 = vrot.slane %v4744, 4
        %v4746 = vmax.f32 %v4744, %v4745
        %v4747 = vrot.slane %v4746, 2
        %v4748 = vmax.f32 %v4746, %v4747
        %v4749 = vrot.slane %v4748, 1
        %v4750 = vmax.f32 %v4748, %v4749
        %v4751 = vmin.f32 %v4433, %v4439
        %v4752 = vmin.f32 %v4751, %v4445
        %v4753 = vmin.f32 %v4752, %v4451
        %v4754 = vmin.f32 %v4753, %v4457
        %v4755 = vmin.f32 %v4754, %v4463
        %v4756 = vmin.f32 %v4755, %v4469
        %v4757 = vmin.f32 %v4756, %v4475
        %v4758 = vrot.slane %v4757, 4
        %v4759 = vmin.f32 %v4757, %v4758
        %v4760 = vrot.slane %v4759, 2
        %v4761 = vmin.f32 %v4759, %v4760
        %v4762 = vrot.slane %v4761, 1
        %v4763 = vmin.f32 %v4761, %v4762
        %v4764 = vmin.f32 %v4435, %v4441
        %v4765 = vmin.f32 %v4764, %v4447
        %v4766 = vmin.f32 %v4765, %v4453
        %v4767 = vmin.f32 %v4766, %v4459
        %v4768 = vmin.f32 %v4767, %v4465
        %v4769 = vmin.f32 %v4768, %v4471
        %v4770 = vmin.f32 %v4769, %v4477
        %v4771 = vrot.slane %v4770, 4
        %v4772 = vmin.f32 %v4770, %v4771
        %v4773 = vrot.slane %v4772, 2
        %v4774 = vmin.f32 %v4772, %v4773
        %v4775 = vrot.slane %v4774, 1
        %v4776 = vmin.f32 %v4774, %v4775
        %v4777 = vmin.f32 %v4481, %v4487
        %v4778 = vmin.f32 %v4777, %v4493
        %v4779 = vmin.f32 %v4778, %v4499
        %v4780 = vmin.f32 %v4779, %v4505
        %v4781 = vmin.f32 %v4780, %v4511
        %v4782 = vmin.f32 %v4781, %v4517
        %v4783 = vmin.f32 %v4782, %v4523
        %v4784 = vrot.slane %v4783, 4
        %v4785 = vmin.f32 %v4783, %v4784
        %v4786 = vrot.slane %v4785, 2
        %v4787 = vmin.f32 %v4785, %v4786
        %v4788 = vrot.slane %v4787, 1
        %v4789 = vmin.f32 %v4787, %v4788
        %v4790 = vmin.f32 %v4483, %v4489
        %v4791 = vmin.f32 %v4790, %v4495
        %v4792 = vmin.f32 %v4791, %v4501
        %v4793 = vmin.f32 %v4792, %v4507
        %v4794 = vmin.f32 %v4793, %v4513
        %v4795 = vmin.f32 %v4794, %v4519
        %v4796 = vmin.f32 %v4795, %v4525
        %v4797 = vrot.slane %v4796, 4
        %v4798 = vmin.f32 %v4796, %v4797
        %v4799 = vrot.slane %v4798, 2
        %v4800 = vmin.f32 %v4798, %v4799
        %v4801 = vrot.slane %v4800, 1
        %v4802 = vmin.f32 %v4800, %v4801
        %vm4803 = vcmp.ge.f32.partialorder %v4665, 0.0
        %v4804 = vmul.f32 %v4711, %v4671
        %v4805 = vmul.f32 %v4724, %v4675
        %v4806 = vmul.f32 %v4737, %v4671
        %v4807 = vmul.f32 %v4750, %v4675
        %v4808 = vmul.f32 %v4763, %v4671
        %v4809 = vmul.f32 %v4776, %v4675
        %v4810 = vmul.f32 %v4789, %v4671
        %v4811 = vmul.f32 %v4802, %v4675
        %v4812 = vsel %vm4803, 1, 0
        %v4813 = vlaneseq
        %v4814 = vshrl.u32 %v4813, 7
        %v4815 = vsub.s32 0, %v4814
        %v4816 = vrot.slane %v4812, %v4815
        %v4817 = vlaneseq
        %v4818 = vshrl.u32 %v4817, 7
        %v4819 = vsub.s32 1, %v4818
        %v4820 = vrot.slane %v4812, %v4819
        %vm4821 = vcmp.eq.s32.totalorder %v4816, 1
        %vm4822 = vcmp.eq.s32.totalorder %v4820, 1
        %v4827 = vrot.slane %v4806, 7
        %v4828 = vsel %vm837, %v4827, %v4804
        %v4829 = vrot.slane %v4807, 7
        %v4830 = vsel %vm837, %v4829, %v4805
        %v4837 = vrot.slane %v4810, 7
        %v4838 = vsel %vm837, %v4837, %v4808
        %v4839 = vrot.slane %v4811, 7
        %v4840 = vsel %vm837, %v4839, %v4809
        %v4843 = vsel %vm4821, %v4828, %v4838
        %v4844 = vsel %vm4822, %v4830, %v4840
        %v4846 = vlaneseq
        %v4847 = vshrl.u32 %v4846, 7
        %v4848 = vsub.s32 0, %v4847
        %v4849 = vrot.slane %v4698, %v4848
        %v4850 = vlaneseq
        %v4851 = vshrl.u32 %v4850, 7
        %v4852 = vsub.s32 1, %v4851
        %v4853 = vrot.slane %v4698, %v4852
        %v4856 = vadd.f32 %v4843, %v4849
        %v4857 = vadd.f32 %v4844, %v4853
        %v4860 = vcombine.low %v4856, %v4857
        %v4862 = vunpack.c.l.s4 1983009808
        %v4863 = vunpack.c.0.s8 %v4862
        %v4864 = vlaneseq
        %v4865 = vshrl.u32 %v4864, 7
        %v4866 = vsub.s32 %v4863, %v4865
        %v4867 = vrot.slane %v4860, %v4866
        %4869 = vst [vmem:[%s295 + $0x1c] sm:$0xf] %v4867
        %v4870 = vld [vmem:[%s259 + $0x80] sm:$0xff]
        %v4871 = vld [vmem:[%s259 + $0x88] sm:$0xff]
        %v4872 = vld [vmem:[%s0] sm:$0xff]
        %v4873 = vld [vmem:[%s0 + $0x8] sm:$0xff]
        %v4874 = vld [vmem:[%s0 + $0x10] sm:$0xff]
        %v4875 = vld [vmem:[%s0 + $0x18] sm:$0xff]
        %v4876 = vld [vmem:[%s0 + $0x20] sm:$0xff]
        %v4877 = vld [vmem:[%s0 + $0x28] sm:$0xff]
        %v4878 = vld [vmem:[%s0 + $0x30] sm:$0xff]
        %v4879 = vld [vmem:[%s0 + $0x38] sm:$0xff]
        %v4880 = vld [vmem:[%s0 + $0x40] sm:$0xff]
        %v4881 = vld [vmem:[%s0 + $0x48] sm:$0xff]
        %v4882 = vld [vmem:[%s0 + $0x50] sm:$0xff]
        %v4883 = vld [vmem:[%s0 + $0x58] sm:$0xff]
        %v4884 = vld [vmem:[%s0 + $0x60] sm:$0xff]
        %v4885 = vld [vmem:[%s0 + $0x68] sm:$0xff]
        %v4886 = vld [vmem:[%s0 + $0x70] sm:$0xff]
        %v4887 = vld [vmem:[%s0 + $0x78] sm:$0xff]
        %v4889 = vsel %vm326, %v4872, 0
        %v4892 = vsel %vm326, %v4873, 0
        %v4895 = vsel %vm326, %v4874, 0
        %v4898 = vsel %vm326, %v4875, 0
        %v4901 = vsel %vm326, %v4876, 0
        %v4904 = vsel %vm326, %v4877, 0
        %v4907 = vsel %vm326, %v4878, 0
        %v4910 = vsel %vm326, %v4879, 0
        %v4913 = vsel %vm326, %v4880, 0
        %v4916 = vsel %vm326, %v4881, 0
        %v4919 = vsel %vm326, %v4882, 0
        %v4922 = vsel %vm326, %v4883, 0
        %v4925 = vsel %vm326, %v4884, 0
        %v4928 = vsel %vm326, %v4885, 0
        %v4931 = vsel %vm326, %v4886, 0
        %v4934 = vsel %vm326, %v4887, 0
        %4936 = vmatprep.subr.mxu0 %v4871
        %4937 = vmatpush1.msra.mxu0 %v4870
        %4938 = vmatprep.subr.mxu0 0.0
        %4939 = vmatpush1.msra.mxu0 0.0
        %4940 = vmatprep.subr.mxu0 0.0
        %4941 = vmatpush1.msra.mxu0 0.0
        %4942 = vmatprep.subr.mxu0 0.0
        %4943 = vmatpush1.msra.mxu0 0.0
        %4944 = vmatprep.subr.mxu0 0.0
        %4945 = vmatpush1.msra.mxu0 0.0
        %4946 = vmatprep.subr.mxu0 0.0
        %4947 = vmatpush1.msra.mxu0 0.0
        %4948 = vmatprep.subr.mxu0 0.0
        %4949 = vmatpush1.msra.mxu0 0.0
        %4950 = vmatprep.subr.mxu0 0.0
        %4951 = vmatpush1.msra.mxu0 0.0
        %4952 = vmatprep.subr.mxu0 0.0
        %4953 = vmatpush1.msra.mxu0 0.0
        %4954 = vmatprep.subr.mxu0 0.0
        %4955 = vmatpush1.msra.mxu0 0.0
        %4956 = vmatprep.subr.mxu0 0.0
        %4957 = vmatpush1.msra.mxu0 0.0
        %4958 = vmatprep.subr.mxu0 0.0
        %4959 = vmatpush1.msra.mxu0 0.0
        %4960 = vmatprep.subr.mxu0 0.0
        %4961 = vmatpush1.msra.mxu0 0.0
        %4962 = vmatprep.subr.mxu0 0.0
        %4963 = vmatpush1.msra.mxu0 0.0
        %4964 = vmatprep.subr.mxu0 0.0
        %4965 = vmatpush1.msra.mxu0 0.0
        %4966 = vmatprep.subr.mxu0 0.0
        %4967 = vmatpush1.msra.mxu0 0.0
        %4968 = vmatprep.subr.mxu0 0.0
        %4969 = vmatpush1.msra.mxu0 0.0
        %4970 = vmatprep.subr.mxu0 0.0
        %4971 = vmatpush1.msra.mxu0 0.0
        %4972 = vmatprep.subr.mxu0 0.0
        %4973 = vmatpush1.msra.mxu0 0.0
        %4974 = vmatprep.subr.mxu0 0.0
        %4975 = vmatpush1.msra.mxu0 0.0
        %4976 = vmatprep.subr.mxu0 0.0
        %4977 = vmatpush1.msra.mxu0 0.0
        %4978 = vmatprep.subr.mxu0 0.0
        %4979 = vmatpush1.msra.mxu0 0.0
        %4980 = vmatprep.subr.mxu0 0.0
        %4981 = vmatpush1.msra.mxu0 0.0
        %4982 = vmatprep.subr.mxu0 0.0
        %4983 = vmatpush1.msra.mxu0 0.0
        %4984 = vmatprep.subr.mxu0 0.0
        %4985 = vmatpush1.msra.mxu0 0.0
        %4986 = vmatprep.subr.mxu0 0.0
        %4987 = vmatpush1.msra.mxu0 0.0
        %4988 = vmatprep.subr.mxu0 0.0
        %4989 = vmatpush1.msra.mxu0 0.0
        %4990 = vmatprep.subr.mxu0 0.0
        %4991 = vmatpush1.msra.mxu0 0.0
        %4992 = vmatprep.subr.mxu0 0.0
        %4993 = vmatpush1.msra.mxu0 0.0
        %4994 = vmatprep.subr.mxu0 0.0
        %4995 = vmatpush1.msra.mxu0 0.0
        %4996 = vmatprep.subr.mxu0 0.0
        %4997 = vmatpush1.msra.mxu0 0.0
        %4998 = vmatprep.subr.mxu0 0.0
        %4999 = vmatpush1.msra.mxu0 0.0
        %5000 = vmatprep.mubr.f32.mxu0 0.0
        %5001 = vmatmul.mubr.f32.gmra.mrb[0].mxu0 %v4889
        %v5002 = vpop.f32.mrb[0].mxu0
        %v5003 = vadd.f32 0.0, %v5002
        %v5004 = vpop.f32.mrb[0].mxu0
        %v5005 = vadd.f32 0.0, %v5004
        %5006 = vmatprep.mubr.f32.mxu0 0.0
        %5007 = vmatmul.mubr.f32.gmra.mrb[0].mxu0 %v4892
        %v5008 = vpop.f32.mrb[0].mxu0
        %v5009 = vadd.f32 0.0, %v5008
        %v5010 = vpop.f32.mrb[0].mxu0
        %v5011 = vadd.f32 0.0, %v5010
        %5012 = vmatprep.mubr.f32.mxu0 0.0
        %5013 = vmatmul.mubr.f32.gmra.mrb[0].mxu0 %v4895
        %v5014 = vpop.f32.mrb[0].mxu0
        %v5015 = vadd.f32 0.0, %v5014
        %v5016 = vpop.f32.mrb[0].mxu0
        %v5017 = vadd.f32 0.0, %v5016
        %5018 = vmatprep.mubr.f32.mxu0 0.0
        %5019 = vmatmul.mubr.f32.gmra.mrb[0].mxu0 %v4898
        %v5020 = vpop.f32.mrb[0].mxu0
        %v5021 = vadd.f32 0.0, %v5020
        %v5022 = vpop.f32.mrb[0].mxu0
        %v5023 = vadd.f32 0.0, %v5022
        %5024 = vmatprep.mubr.f32.mxu0 0.0
        %5025 = vmatmul.mubr.f32.gmra.mrb[0].mxu0 %v4901
        %v5026 = vpop.f32.mrb[0].mxu0
        %v5027 = vadd.f32 0.0, %v5026
        %v5028 = vpop.f32.mrb[0].mxu0
        %v5029 = vadd.f32 0.0, %v5028
        %5030 = vmatprep.mubr.f32.mxu0 0.0
        %5031 = vmatmul.mubr.f32.gmra.mrb[0].mxu0 %v4904
        %v5032 = vpop.f32.mrb[0].mxu0
        %v5033 = vadd.f32 0.0, %v5032
        %v5034 = vpop.f32.mrb[0].mxu0
        %v5035 = vadd.f32 0.0, %v5034
        %5036 = vmatprep.mubr.f32.mxu0 0.0
        %5037 = vmatmul.mubr.f32.gmra.mrb[0].mxu0 %v4907
        %v5038 = vpop.f32.mrb[0].mxu0
        %v5039 = vadd.f32 0.0, %v5038
        %v5040 = vpop.f32.mrb[0].mxu0
        %v5041 = vadd.f32 0.0, %v5040
        %5042 = vmatprep.mubr.f32.mxu0 0.0
        %5043 = vmatmul.mubr.f32.gmra.mrb[0].mxu0 %v4910
        %v5044 = vpop.f32.mrb[0].mxu0
        %v5045 = vadd.f32 0.0, %v5044
        %v5046 = vpop.f32.mrb[0].mxu0
        %v5047 = vadd.f32 0.0, %v5046
        %5048 = vmatprep.mubr.f32.mxu0 0.0
        %5049 = vmatmul.mubr.f32.gmra.mrb[0].mxu0 %v4913
        %v5050 = vpop.f32.mrb[0].mxu0
        %v5051 = vadd.f32 0.0, %v5050
        %v5052 = vpop.f32.mrb[0].mxu0
        %v5053 = vadd.f32 0.0, %v5052
        %5054 = vmatprep.mubr.f32.mxu0 0.0
        %5055 = vmatmul.mubr.f32.gmra.mrb[0].mxu0 %v4916
        %v5056 = vpop.f32.mrb[0].mxu0
        %v5057 = vadd.f32 0.0, %v5056
        %v5058 = vpop.f32.mrb[0].mxu0
        %v5059 = vadd.f32 0.0, %v5058
        %5060 = vmatprep.mubr.f32.mxu0 0.0
        %5061 = vmatmul.mubr.f32.gmra.mrb[0].mxu0 %v4919
        %v5062 = vpop.f32.mrb[0].mxu0
        %v5063 = vadd.f32 0.0, %v5062
        %v5064 = vpop.f32.mrb[0].mxu0
        %v5065 = vadd.f32 0.0, %v5064
        %5066 = vmatprep.mubr.f32.mxu0 0.0
        %5067 = vmatmul.mubr.f32.gmra.mrb[0].mxu0 %v4922
        %v5068 = vpop.f32.mrb[0].mxu0
        %v5069 = vadd.f32 0.0, %v5068
        %v5070 = vpop.f32.mrb[0].mxu0
        %v5071 = vadd.f32 0.0, %v5070
        %5072 = vmatprep.mubr.f32.mxu0 0.0
        %5073 = vmatmul.mubr.f32.gmra.mrb[0].mxu0 %v4925
        %v5074 = vpop.f32.mrb[0].mxu0
        %v5075 = vadd.f32 0.0, %v5074
        %v5076 = vpop.f32.mrb[0].mxu0
        %v5077 = vadd.f32 0.0, %v5076
        %5078 = vmatprep.mubr.f32.mxu0 0.0
        %5079 = vmatmul.mubr.f32.gmra.mrb[0].mxu0 %v4928
        %v5080 = vpop.f32.mrb[0].mxu0
        %v5081 = vadd.f32 0.0, %v5080
        %v5082 = vpop.f32.mrb[0].mxu0
        %v5083 = vadd.f32 0.0, %v5082
        %5084 = vmatprep.mubr.f32.mxu0 0.0
        %5085 = vmatmul.mubr.f32.gmra.mrb[0].mxu0 %v4931
        %v5086 = vpop.f32.mrb[0].mxu0
        %v5087 = vadd.f32 0.0, %v5086
        %v5088 = vpop.f32.mrb[0].mxu0
        %v5089 = vadd.f32 0.0, %v5088
        %5090 = vmatprep.mubr.f32.mxu0 0.0
        %5091 = vmatmul.mubr.f32.gmra.mrb[0].mxu0 %v4934
        %v5092 = vpop.f32.mrb[0].mxu0
        %v5093 = vadd.f32 0.0, %v5092
        %v5094 = vpop.f32.mrb[0].mxu0
        %v5095 = vadd.f32 0.0, %v5094
        %5096 = vdwg.mxu0
        %v5097 = vld [vmem:[%s2] sm:$0xff]
        %5099 = vset.pattern.permute.xlu0 0
        %5100 = vperm.xlu0 %5099, %v5097
        %v5101 = vpop.permute.xlu0 %5100
        %v5103 = vmul.f32 %v5101, %v4870
        %v5104 = vmul.f32 %v5101, %v4871
        %v5105 = vrot.slane %v5103, 4
        %v5106 = vadd.f32 %v5103, %v5105
        %v5107 = vrot.slane %v5106, 2
        %v5108 = vadd.f32 %v5106, %v5107
        %v5109 = vrot.slane %v5108, 1
        %v5110 = vadd.f32 %v5108, %v5109
        %v5111 = vrot.slane %v5104, 4
        %v5112 = vadd.f32 %v5104, %v5111
        %v5113 = vrot.slane %v5112, 2
        %v5114 = vadd.f32 %v5112, %v5113
        %v5115 = vrot.slane %v5114, 1
        %v5116 = vadd.f32 %v5114, %v5115
        %v5117 = vld [vmem:[%s3] sm:$0xff]
        %v5119 = vsel %vm326, %v5117, 0
        %5121 = vmatprep.subr.mxu0 %v4871
        %5122 = vmatpush1.msra.mxu0 %v4870
        %5123 = vmatprep.subr.mxu0 0.0
        %5124 = vmatpush1.msra.mxu0 0.0
        %5125 = vmatprep.subr.mxu0 0.0
        %5126 = vmatpush1.msra.mxu0 0.0
        %5127 = vmatprep.subr.mxu0 0.0
        %5128 = vmatpush1.msra.mxu0 0.0
        %5129 = vmatprep.subr.mxu0 0.0
        %5130 = vmatpush1.msra.mxu0 0.0
        %5131 = vmatprep.subr.mxu0 0.0
        %5132 = vmatpush1.msra.mxu0 0.0
        %5133 = vmatprep.subr.mxu0 0.0
        %5134 = vmatpush1.msra.mxu0 0.0
        %5135 = vmatprep.subr.mxu0 0.0
        %5136 = vmatpush1.msra.mxu0 0.0
        %5137 = vmatprep.subr.mxu0 0.0
        %5138 = vmatpush1.msra.mxu0 0.0
        %5139 = vmatprep.subr.mxu0 0.0
        %5140 = vmatpush1.msra.mxu0 0.0
        %5141 = vmatprep.subr.mxu0 0.0
        %5142 = vmatpush1.msra.mxu0 0.0
        %5143 = vmatprep.subr.mxu0 0.0
        %5144 = vmatpush1.msra.mxu0 0.0
        %5145 = vmatprep.subr.mxu0 0.0
        %5146 = vmatpush1.msra.mxu0 0.0
        %5147 = vmatprep.subr.mxu0 0.0
        %5148 = vmatpush1.msra.mxu0 0.0
        %5149 = vmatprep.subr.mxu0 0.0
        %5150 = vmatpush1.msra.mxu0 0.0
        %5151 = vmatprep.subr.mxu0 0.0
        %5152 = vmatpush1.msra.mxu0 0.0
        %5153 = vmatprep.subr.mxu0 0.0
        %5154 = vmatpush1.msra.mxu0 0.0
        %5155 = vmatprep.subr.mxu0 0.0
        %5156 = vmatpush1.msra.mxu0 0.0
        %5157 = vmatprep.subr.mxu0 0.0
        %5158 = vmatpush1.msra.mxu0 0.0
        %5159 = vmatprep.subr.mxu0 0.0
        %5160 = vmatpush1.msra.mxu0 0.0
        %5161 = vmatprep.subr.mxu0 0.0
        %5162 = vmatpush1.msra.mxu0 0.0
        %5163 = vmatprep.subr.mxu0 0.0
        %5164 = vmatpush1.msra.mxu0 0.0
        %5165 = vmatprep.subr.mxu0 0.0
        %5166 = vmatpush1.msra.mxu0 0.0
        %5167 = vmatprep.subr.mxu0 0.0
        %5168 = vmatpush1.msra.mxu0 0.0
        %5169 = vmatprep.subr.mxu0 0.0
        %5170 = vmatpush1.msra.mxu0 0.0
        %5171 = vmatprep.subr.mxu0 0.0
        %5172 = vmatpush1.msra.mxu0 0.0
        %5173 = vmatprep.subr.mxu0 0.0
        %5174 = vmatpush1.msra.mxu0 0.0
        %5175 = vmatprep.subr.mxu0 0.0
        %5176 = vmatpush1.msra.mxu0 0.0
        %5177 = vmatprep.subr.mxu0 0.0
        %5178 = vmatpush1.msra.mxu0 0.0
        %5179 = vmatprep.subr.mxu0 0.0
        %5180 = vmatpush1.msra.mxu0 0.0
        %5181 = vmatprep.subr.mxu0 0.0
        %5182 = vmatpush1.msra.mxu0 0.0
        %5183 = vmatprep.subr.mxu0 0.0
        %5184 = vmatpush1.msra.mxu0 0.0
        %5185 = vmatprep.mubr.f32.mxu0 0.0
        %5186 = vmatmul.mubr.f32.gmra.mrb[0].mxu0 %v5119
        %v5187 = vpop.f32.mrb[0].mxu0
        %v5188 = vadd.f32 0.0, %v5187
        %v5189 = vpop.f32.mrb[0].mxu0
        %v5190 = vadd.f32 0.0, %v5189
        %5191 = vdwg.mxu0
        %v5192 = vmul.f32 %v4870, %v5188
        %v5193 = vmul.f32 %v4871, %v5190
        %v5194 = vrot.slane %v5192, 4
        %v5195 = vadd.f32 %v5192, %v5194
        %v5196 = vrot.slane %v5195, 2
        %v5197 = vadd.f32 %v5195, %v5196
        %v5198 = vrot.slane %v5197, 1
        %v5199 = vadd.f32 %v5197, %v5198
        %v5200 = vrot.slane %v5193, 4
        %v5201 = vadd.f32 %v5193, %v5200
        %v5202 = vrot.slane %v5201, 2
        %v5203 = vadd.f32 %v5201, %v5202
        %v5204 = vrot.slane %v5203, 1
        %v5205 = vadd.f32 %v5203, %v5204
        %v5206 = vmul.f32 %v5110, %v5110
        %v5207 = vmul.f32 %v5116, %v5116
        %v5208 = vsub.f32 %v5199, %v5206
        %v5209 = vsub.f32 %v5205, %v5207
        %v5210 = vmax.f32 %v5208, 0.0
        %v5211 = vmax.f32 %v5209, 0.0
        %v5212 = vld [vmem:[%s300 + $0x10] sm:$0x3]
        %v5213 = vadd.f32 %v5210, 1e-05
        %v5214 = vadd.f32 %v5211, 1e-05
        %v5215 = vrsqrt.pop %v5213
        %v5216 = vrsqrt.pop %v5214
        %v5219 = vcombine.low %v5215, %v5216
        %v5221 = vunpack.c.l.s4 1966171168
        %v5222 = vunpack.c.0.s8 %v5221
        %v5223 = vlaneseq
        %v5224 = vshrl.u32 %v5223, 7
        %v5225 = vsub.s32 %v5222, %v5224
        %v5226 = vrot.slane %v5219, %v5225
        %v5228 = vunpack.c.l.s4 1966171168
        %v5229 = vunpack.c.0.s8 %v5228
        %v5230 = vlaneseq
        %v5231 = vshrl.u32 %v5230, 7
        %v5232 = vsub.s32 %v5229, %v5231
        %v5233 = vrot.slane %v5226, %v5232
        %v5235 = vmul.f32 %v5212, %v5233
        %v5236 = vld [vmem:[%s305 + $0x10] sm:$0x3]
        %v5238 = vlaneseq
        %v5239 = vshrl.u32 %v5238, 7
        %v5240 = vsub.s32 0, %v5239
        %v5241 = vrot.slane %v5235, %v5240
        %v5242 = vlaneseq
        %v5243 = vshrl.u32 %v5242, 7
        %v5244 = vsub.s32 1, %v5243
        %v5245 = vrot.slane %v5235, %v5244
        %v5248 = vmul.f32 %v5110, %v5241
        %v5249 = vmul.f32 %v5116, %v5245
        %v5252 = vcombine.low %v5248, %v5249
        %v5254 = vunpack.c.l.s4 1966171168
        %v5255 = vunpack.c.0.s8 %v5254
        %v5256 = vlaneseq
        %v5257 = vshrl.u32 %v5256, 7
        %v5258 = vsub.s32 %v5255, %v5257
        %v5259 = vrot.slane %v5252, %v5258
        %v5261 = vunpack.c.l.s4 1966171168
        %v5262 = vunpack.c.0.s8 %v5261
        %v5263 = vlaneseq
        %v5264 = vshrl.u32 %v5263, 7
        %v5265 = vsub.s32 %v5262, %v5264
        %v5266 = vrot.slane %v5259, %v5265
        %v5268 = vsub.f32 %v5236, %v5266
        %v5269 = vmax.f32 %v5003, %v5009
        %v5270 = vmax.f32 %v5269, %v5015
        %v5271 = vmax.f32 %v5270, %v5021
        %v5272 = vmax.f32 %v5271, %v5027
        %v5273 = vmax.f32 %v5272, %v5033
        %v5274 = vmax.f32 %v5273, %v5039
        %v5275 = vmax.f32 %v5274, %v5045
        %v5276 = vrot.slane %v5275, 4
        %v5277 = vmax.f32 %v5275, %v5276
        %v5278 = vrot.slane %v5277, 2
        %v5279 = vmax.f32 %v5277, %v5278
        %v5280 = vrot.slane %v5279, 1
        %v5281 = vmax.f32 %v5279, %v5280
        %v5282 = vmax.f32 %v5005, %v5011
        %v5283 = vmax.f32 %v5282, %v5017
        %v5284 = vmax.f32 %v5283, %v5023
        %v5285 = vmax.f32 %v5284, %v5029
        %v5286 = vmax.f32 %v5285, %v5035
        %v5287 = vmax.f32 %v5286, %v5041
        %v5288 = vmax.f32 %v5287, %v5047
        %v5289 = vrot.slane %v5288, 4
        %v5290 = vmax.f32 %v5288, %v5289
        %v5291 = vrot.slane %v5290, 2
        %v5292 = vmax.f32 %v5290, %v5291
        %v5293 = vrot.slane %v5292, 1
        %v5294 = vmax.f32 %v5292, %v5293
        %v5295 = vmax.f32 %v5051, %v5057
        %v5296 = vmax.f32 %v5295, %v5063
        %v5297 = vmax.f32 %v5296, %v5069
        %v5298 = vmax.f32 %v5297, %v5075
        %v5299 = vmax.f32 %v5298, %v5081
        %v5300 = vmax.f32 %v5299, %v5087
        %v5301 = vmax.f32 %v5300, %v5093
        %v5302 = vrot.slane %v5301, 4
        %v5303 = vmax.f32 %v5301, %v5302
        %v5304 = vrot.slane %v5303, 2
        %v5305 = vmax.f32 %v5303, %v5304
        %v5306 = vrot.slane %v5305, 1
        %v5307 = vmax.f32 %v5305, %v5306
        %v5308 = vmax.f32 %v5053, %v5059
        %v5309 = vmax.f32 %v5308, %v5065
        %v5310 = vmax.f32 %v5309, %v5071
        %v5311 = vmax.f32 %v5310, %v5077
        %v5312 = vmax.f32 %v5311, %v5083
        %v5313 = vmax.f32 %v5312, %v5089
        %v5314 = vmax.f32 %v5313, %v5095
        %v5315 = vrot.slane %v5314, 4
        %v5316 = vmax.f32 %v5314, %v5315
        %v5317 = vrot.slane %v5316, 2
        %v5318 = vmax.f32 %v5316, %v5317
        %v5319 = vrot.slane %v5318, 1
        %v5320 = vmax.f32 %v5318, %v5319
        %v5321 = vmin.f32 %v5003, %v5009
        %v5322 = vmin.f32 %v5321, %v5015
        %v5323 = vmin.f32 %v5322, %v5021
        %v5324 = vmin.f32 %v5323, %v5027
        %v5325 = vmin.f32 %v5324, %v5033
        %v5326 = vmin.f32 %v5325, %v5039
        %v5327 = vmin.f32 %v5326, %v5045
        %v5328 = vrot.slane %v5327, 4
        %v5329 = vmin.f32 %v5327, %v5328
        %v5330 = vrot.slane %v5329, 2
        %v5331 = vmin.f32 %v5329, %v5330
        %v5332 = vrot.slane %v5331, 1
        %v5333 = vmin.f32 %v5331, %v5332
        %v5334 = vmin.f32 %v5005, %v5011
        %v5335 = vmin.f32 %v5334, %v5017
        %v5336 = vmin.f32 %v5335, %v5023
        %v5337 = vmin.f32 %v5336, %v5029
        %v5338 = vmin.f32 %v5337, %v5035
        %v5339 = vmin.f32 %v5338, %v5041
        %v5340 = vmin.f32 %v5339, %v5047
        %v5341 = vrot.slane %v5340, 4
        %v5342 = vmin.f32 %v5340, %v5341
        %v5343 = vrot.slane %v5342, 2
        %v5344 = vmin.f32 %v5342, %v5343
        %v5345 = vrot.slane %v5344, 1
        %v5346 = vmin.f32 %v5344, %v5345
        %v5347 = vmin.f32 %v5051, %v5057
        %v5348 = vmin.f32 %v5347, %v5063
        %v5349 = vmin.f32 %v5348, %v5069
        %v5350 = vmin.f32 %v5349, %v5075
        %v5351 = vmin.f32 %v5350, %v5081
        %v5352 = vmin.f32 %v5351, %v5087
        %v5353 = vmin.f32 %v5352, %v5093
        %v5354 = vrot.slane %v5353, 4
        %v5355 = vmin.f32 %v5353, %v5354
        %v5356 = vrot.slane %v5355, 2
        %v5357 = vmin.f32 %v5355, %v5356
        %v5358 = vrot.slane %v5357, 1
        %v5359 = vmin.f32 %v5357, %v5358
        %v5360 = vmin.f32 %v5053, %v5059
        %v5361 = vmin.f32 %v5360, %v5065
        %v5362 = vmin.f32 %v5361, %v5071
        %v5363 = vmin.f32 %v5362, %v5077
        %v5364 = vmin.f32 %v5363, %v5083
        %v5365 = vmin.f32 %v5364, %v5089
        %v5366 = vmin.f32 %v5365, %v5095
        %v5367 = vrot.slane %v5366, 4
        %v5368 = vmin.f32 %v5366, %v5367
        %v5369 = vrot.slane %v5368, 2
        %v5370 = vmin.f32 %v5368, %v5369
        %v5371 = vrot.slane %v5370, 1
        %v5372 = vmin.f32 %v5370, %v5371
        %vm5373 = vcmp.ge.f32.partialorder %v5235, 0.0
        %v5374 = vmul.f32 %v5281, %v5241
        %v5375 = vmul.f32 %v5294, %v5245
        %v5376 = vmul.f32 %v5307, %v5241
        %v5377 = vmul.f32 %v5320, %v5245
        %v5378 = vmul.f32 %v5333, %v5241
        %v5379 = vmul.f32 %v5346, %v5245
        %v5380 = vmul.f32 %v5359, %v5241
        %v5381 = vmul.f32 %v5372, %v5245
        %v5382 = vsel %vm5373, 1, 0
        %v5383 = vlaneseq
        %v5384 = vshrl.u32 %v5383, 7
        %v5385 = vsub.s32 0, %v5384
        %v5386 = vrot.slane %v5382, %v5385
        %v5387 = vlaneseq
        %v5388 = vshrl.u32 %v5387, 7
        %v5389 = vsub.s32 1, %v5388
        %v5390 = vrot.slane %v5382, %v5389
        %vm5391 = vcmp.eq.s32.totalorder %v5386, 1
        %vm5392 = vcmp.eq.s32.totalorder %v5390, 1
        %v5397 = vrot.slane %v5376, 7
        %v5398 = vsel %vm837, %v5397, %v5374
        %v5399 = vrot.slane %v5377, 7
        %v5400 = vsel %vm837, %v5399, %v5375
        %v5407 = vrot.slane %v5380, 7
        %v5408 = vsel %vm837, %v5407, %v5378
        %v5409 = vrot.slane %v5381, 7
        %v5410 = vsel %vm837, %v5409, %v5379
        %v5413 = vsel %vm5391, %v5398, %v5408
        %v5414 = vsel %vm5392, %v5400, %v5410
        %v5416 = vlaneseq
        %v5417 = vshrl.u32 %v5416, 7
        %v5418 = vsub.s32 0, %v5417
        %v5419 = vrot.slane %v5268, %v5418
        %v5420 = vlaneseq
        %v5421 = vshrl.u32 %v5420, 7
        %v5422 = vsub.s32 1, %v5421
        %v5423 = vrot.slane %v5268, %v5422
        %v5426 = vadd.f32 %v5413, %v5419
        %v5427 = vadd.f32 %v5414, %v5423
        %v5430 = vcombine.low %v5426, %v5427
        %v5432 = vunpack.c.l.s4 1983009808
        %v5433 = vunpack.c.0.s8 %v5432
        %v5434 = vlaneseq
        %v5435 = vshrl.u32 %v5434, 7
        %v5436 = vsub.s32 %v5433, %v5435
        %v5437 = vrot.slane %v5430, %v5436
        %5439 = vst [vmem:[%s295 + $0x20] sm:$0xf] %v5437
        %v5440 = vld [vmem:[%s259 + $0x90] sm:$0xff]
        %v5441 = vld [vmem:[%s259 + $0x98] sm:$0xff]
        %v5442 = vld [vmem:[%s0] sm:$0xff]
        %v5443 = vld [vmem:[%s0 + $0x8] sm:$0xff]
        %v5444 = vld [vmem:[%s0 + $0x10] sm:$0xff]
        %v5445 = vld [vmem:[%s0 + $0x18] sm:$0xff]
        %v5446 = vld [vmem:[%s0 + $0x20] sm:$0xff]
        %v5447 = vld [vmem:[%s0 + $0x28] sm:$0xff]
        %v5448 = vld [vmem:[%s0 + $0x30] sm:$0xff]
        %v5449 = vld [vmem:[%s0 + $0x38] sm:$0xff]
        %v5450 = vld [vmem:[%s0 + $0x40] sm:$0xff]
        %v5451 = vld [vmem:[%s0 + $0x48] sm:$0xff]
        %v5452 = vld [vmem:[%s0 + $0x50] sm:$0xff]
        %v5453 = vld [vmem:[%s0 + $0x58] sm:$0xff]
        %v5454 = vld [vmem:[%s0 + $0x60] sm:$0xff]
        %v5455 = vld [vmem:[%s0 + $0x68] sm:$0xff]
        %v5456 = vld [vmem:[%s0 + $0x70] sm:$0xff]
        %v5457 = vld [vmem:[%s0 + $0x78] sm:$0xff]
        %v5459 = vsel %vm326, %v5442, 0
        %v5462 = vsel %vm326, %v5443, 0
        %v5465 = vsel %vm326, %v5444, 0
        %v5468 = vsel %vm326, %v5445, 0
        %v5471 = vsel %vm326, %v5446, 0
        %v5474 = vsel %vm326, %v5447, 0
        %v5477 = vsel %vm326, %v5448, 0
        %v5480 = vsel %vm326, %v5449, 0
        %v5483 = vsel %vm326, %v5450, 0
        %v5486 = vsel %vm326, %v5451, 0
        %v5489 = vsel %vm326, %v5452, 0
        %v5492 = vsel %vm326, %v5453, 0
        %v5495 = vsel %vm326, %v5454, 0
        %v5498 = vsel %vm326, %v5455, 0
        %v5501 = vsel %vm326, %v5456, 0
        %v5504 = vsel %vm326, %v5457, 0
        %5506 = vmatprep.subr.mxu0 %v5441
        %5507 = vmatpush1.msra.mxu0 %v5440
        %5508 = vmatprep.subr.mxu0 0.0
        %5509 = vmatpush1.msra.mxu0 0.0
        %5510 = vmatprep.subr.mxu0 0.0
        %5511 = vmatpush1.msra.mxu0 0.0
        %5512 = vmatprep.subr.mxu0 0.0
        %5513 = vmatpush1.msra.mxu0 0.0
        %5514 = vmatprep.subr.mxu0 0.0
        %5515 = vmatpush1.msra.mxu0 0.0
        %5516 = vmatprep.subr.mxu0 0.0
        %5517 = vmatpush1.msra.mxu0 0.0
        %5518 = vmatprep.subr.mxu0 0.0
        %5519 = vmatpush1.msra.mxu0 0.0
        %5520 = vmatprep.subr.mxu0 0.0
        %5521 = vmatpush1.msra.mxu0 0.0
        %5522 = vmatprep.subr.mxu0 0.0
        %5523 = vmatpush1.msra.mxu0 0.0
        %5524 = vmatprep.subr.mxu0 0.0
        %5525 = vmatpush1.msra.mxu0 0.0
        %5526 = vmatprep.subr.mxu0 0.0
        %5527 = vmatpush1.msra.mxu0 0.0
        %5528 = vmatprep.subr.mxu0 0.0
        %5529 = vmatpush1.msra.mxu0 0.0
        %5530 = vmatprep.subr.mxu0 0.0
        %5531 = vmatpush1.msra.mxu0 0.0
        %5532 = vmatprep.subr.mxu0 0.0
        %5533 = vmatpush1.msra.mxu0 0.0
        %5534 = vmatprep.subr.mxu0 0.0
        %5535 = vmatpush1.msra.mxu0 0.0
        %5536 = vmatprep.subr.mxu0 0.0
        %5537 = vmatpush1.msra.mxu0 0.0
        %5538 = vmatprep.subr.mxu0 0.0
        %5539 = vmatpush1.msra.mxu0 0.0
        %5540 = vmatprep.subr.mxu0 0.0
        %5541 = vmatpush1.msra.mxu0 0.0
        %5542 = vmatprep.subr.mxu0 0.0
        %5543 = vmatpush1.msra.mxu0 0.0
        %5544 = vmatprep.subr.mxu0 0.0
        %5545 = vmatpush1.msra.mxu0 0.0
        %5546 = vmatprep.subr.mxu0 0.0
        %5547 = vmatpush1.msra.mxu0 0.0
        %5548 = vmatprep.subr.mxu0 0.0
        %5549 = vmatpush1.msra.mxu0 0.0
        %5550 = vmatprep.subr.mxu0 0.0
        %5551 = vmatpush1.msra.mxu0 0.0
        %5552 = vmatprep.subr.mxu0 0.0
        %5553 = vmatpush1.msra.mxu0 0.0
        %5554 = vmatprep.subr.mxu0 0.0
        %5555 = vmatpush1.msra.mxu0 0.0
        %5556 = vmatprep.subr.mxu0 0.0
        %5557 = vmatpush1.msra.mxu0 0.0
        %5558 = vmatprep.subr.mxu0 0.0
        %5559 = vmatpush1.msra.mxu0 0.0
        %5560 = vmatprep.subr.mxu0 0.0
        %5561 = vmatpush1.msra.mxu0 0.0
        %5562 = vmatprep.subr.mxu0 0.0
        %5563 = vmatpush1.msra.mxu0 0.0
        %5564 = vmatprep.subr.mxu0 0.0
        %5565 = vmatpush1.msra.mxu0 0.0
        %5566 = vmatprep.subr.mxu0 0.0
        %5567 = vmatpush1.msra.mxu0 0.0
        %5568 = vmatprep.subr.mxu0 0.0
        %5569 = vmatpush1.msra.mxu0 0.0
        %5570 = vmatprep.mubr.f32.mxu0 0.0
        %5571 = vmatmul.mubr.f32.gmra.mrb[0].mxu0 %v5459
        %v5572 = vpop.f32.mrb[0].mxu0
        %v5573 = vadd.f32 0.0, %v5572
        %v5574 = vpop.f32.mrb[0].mxu0
        %v5575 = vadd.f32 0.0, %v5574
        %5576 = vmatprep.mubr.f32.mxu0 0.0
        %5577 = vmatmul.mubr.f32.gmra.mrb[0].mxu0 %v5462
        %v5578 = vpop.f32.mrb[0].mxu0
        %v5579 = vadd.f32 0.0, %v5578
        %v5580 = vpop.f32.mrb[0].mxu0
        %v5581 = vadd.f32 0.0, %v5580
        %5582 = vmatprep.mubr.f32.mxu0 0.0
        %5583 = vmatmul.mubr.f32.gmra.mrb[0].mxu0 %v5465
        %v5584 = vpop.f32.mrb[0].mxu0
        %v5585 = vadd.f32 0.0, %v5584
        %v5586 = vpop.f32.mrb[0].mxu0
        %v5587 = vadd.f32 0.0, %v5586
        %5588 = vmatprep.mubr.f32.mxu0 0.0
        %5589 = vmatmul.mubr.f32.gmra.mrb[0].mxu0 %v5468
        %v5590 = vpop.f32.mrb[0].mxu0
        %v5591 = vadd.f32 0.0, %v5590
        %v5592 = vpop.f32.mrb[0].mxu0
        %v5593 = vadd.f32 0.0, %v5592
        %5594 = vmatprep.mubr.f32.mxu0 0.0
        %5595 = vmatmul.mubr.f32.gmra.mrb[0].mxu0 %v5471
        %v5596 = vpop.f32.mrb[0].mxu0
        %v5597 = vadd.f32 0.0, %v5596
        %v5598 = vpop.f32.mrb[0].mxu0
        %v5599 = vadd.f32 0.0, %v5598
        %5600 = vmatprep.mubr.f32.mxu0 0.0
        %5601 = vmatmul.mubr.f32.gmra.mrb[0].mxu0 %v5474
        %v5602 = vpop.f32.mrb[0].mxu0
        %v5603 = vadd.f32 0.0, %v5602
        %v5604 = vpop.f32.mrb[0].mxu0
        %v5605 = vadd.f32 0.0, %v5604
        %5606 = vmatprep.mubr.f32.mxu0 0.0
        %5607 = vmatmul.mubr.f32.gmra.mrb[0].mxu0 %v5477
        %v5608 = vpop.f32.mrb[0].mxu0
        %v5609 = vadd.f32 0.0, %v5608
        %v5610 = vpop.f32.mrb[0].mxu0
        %v5611 = vadd.f32 0.0, %v5610
        %5612 = vmatprep.mubr.f32.mxu0 0.0
        %5613 = vmatmul.mubr.f32.gmra.mrb[0].mxu0 %v5480
        %v5614 = vpop.f32.mrb[0].mxu0
        %v5615 = vadd.f32 0.0, %v5614
        %v5616 = vpop.f32.mrb[0].mxu0
        %v5617 = vadd.f32 0.0, %v5616
        %5618 = vmatprep.mubr.f32.mxu0 0.0
        %5619 = vmatmul.mubr.f32.gmra.mrb[0].mxu0 %v5483
        %v5620 = vpop.f32.mrb[0].mxu0
        %v5621 = vadd.f32 0.0, %v5620
        %v5622 = vpop.f32.mrb[0].mxu0
        %v5623 = vadd.f32 0.0, %v5622
        %5624 = vmatprep.mubr.f32.mxu0 0.0
        %5625 = vmatmul.mubr.f32.gmra.mrb[0].mxu0 %v5486
        %v5626 = vpop.f32.mrb[0].mxu0
        %v5627 = vadd.f32 0.0, %v5626
        %v5628 = vpop.f32.mrb[0].mxu0
        %v5629 = vadd.f32 0.0, %v5628
        %5630 = vmatprep.mubr.f32.mxu0 0.0
        %5631 = vmatmul.mubr.f32.gmra.mrb[0].mxu0 %v5489
        %v5632 = vpop.f32.mrb[0].mxu0
        %v5633 = vadd.f32 0.0, %v5632
        %v5634 = vpop.f32.mrb[0].mxu0
        %v5635 = vadd.f32 0.0, %v5634
        %5636 = vmatprep.mubr.f32.mxu0 0.0
        %5637 = vmatmul.mubr.f32.gmra.mrb[0].mxu0 %v5492
        %v5638 = vpop.f32.mrb[0].mxu0
        %v5639 = vadd.f32 0.0, %v5638
        %v5640 = vpop.f32.mrb[0].mxu0
        %v5641 = vadd.f32 0.0, %v5640
        %5642 = vmatprep.mubr.f32.mxu0 0.0
        %5643 = vmatmul.mubr.f32.gmra.mrb[0].mxu0 %v5495
        %v5644 = vpop.f32.mrb[0].mxu0
        %v5645 = vadd.f32 0.0, %v5644
        %v5646 = vpop.f32.mrb[0].mxu0
        %v5647 = vadd.f32 0.0, %v5646
        %5648 = vmatprep.mubr.f32.mxu0 0.0
        %5649 = vmatmul.mubr.f32.gmra.mrb[0].mxu0 %v5498
        %v5650 = vpop.f32.mrb[0].mxu0
        %v5651 = vadd.f32 0.0, %v5650
        %v5652 = vpop.f32.mrb[0].mxu0
        %v5653 = vadd.f32 0.0, %v5652
        %5654 = vmatprep.mubr.f32.mxu0 0.0
        %5655 = vmatmul.mubr.f32.gmra.mrb[0].mxu0 %v5501
        %v5656 = vpop.f32.mrb[0].mxu0
        %v5657 = vadd.f32 0.0, %v5656
        %v5658 = vpop.f32.mrb[0].mxu0
        %v5659 = vadd.f32 0.0, %v5658
        %5660 = vmatprep.mubr.f32.mxu0 0.0
        %5661 = vmatmul.mubr.f32.gmra.mrb[0].mxu0 %v5504
        %v5662 = vpop.f32.mrb[0].mxu0
        %v5663 = vadd.f32 0.0, %v5662
        %v5664 = vpop.f32.mrb[0].mxu0
        %v5665 = vadd.f32 0.0, %v5664
        %5666 = vdwg.mxu0
        %v5667 = vld [vmem:[%s2] sm:$0xff]
        %5669 = vset.pattern.permute.xlu0 0
        %5670 = vperm.xlu0 %5669, %v5667
        %v5671 = vpop.permute.xlu0 %5670
        %v5673 = vmul.f32 %v5671, %v5440
        %v5674 = vmul.f32 %v5671, %v5441
        %v5675 = vrot.slane %v5673, 4
        %v5676 = vadd.f32 %v5673, %v5675
        %v5677 = vrot.slane %v5676, 2
        %v5678 = vadd.f32 %v5676, %v5677
        %v5679 = vrot.slane %v5678, 1
        %v5680 = vadd.f32 %v5678, %v5679
        %v5681 = vrot.slane %v5674, 4
        %v5682 = vadd.f32 %v5674, %v5681
        %v5683 = vrot.slane %v5682, 2
        %v5684 = vadd.f32 %v5682, %v5683
        %v5685 = vrot.slane %v5684, 1
        %v5686 = vadd.f32 %v5684, %v5685
        %v5687 = vld [vmem:[%s3] sm:$0xff]
        %v5689 = vsel %vm326, %v5687, 0
        %5691 = vmatprep.subr.mxu0 %v5441
        %5692 = vmatpush1.msra.mxu0 %v5440
        %5693 = vmatprep.subr.mxu0 0.0
        %5694 = vmatpush1.msra.mxu0 0.0
        %5695 = vmatprep.subr.mxu0 0.0
        %5696 = vmatpush1.msra.mxu0 0.0
        %5697 = vmatprep.subr.mxu0 0.0
        %5698 = vmatpush1.msra.mxu0 0.0
        %5699 = vmatprep.subr.mxu0 0.0
        %5700 = vmatpush1.msra.mxu0 0.0
        %5701 = vmatprep.subr.mxu0 0.0
        %5702 = vmatpush1.msra.mxu0 0.0
        %5703 = vmatprep.subr.mxu0 0.0
        %5704 = vmatpush1.msra.mxu0 0.0
        %5705 = vmatprep.subr.mxu0 0.0
        %5706 = vmatpush1.msra.mxu0 0.0
        %5707 = vmatprep.subr.mxu0 0.0
        %5708 = vmatpush1.msra.mxu0 0.0
        %5709 = vmatprep.subr.mxu0 0.0
        %5710 = vmatpush1.msra.mxu0 0.0
        %5711 = vmatprep.subr.mxu0 0.0
        %5712 = vmatpush1.msra.mxu0 0.0
        %5713 = vmatprep.subr.mxu0 0.0
        %5714 = vmatpush1.msra.mxu0 0.0
        %5715 = vmatprep.subr.mxu0 0.0
        %5716 = vmatpush1.msra.mxu0 0.0
        %5717 = vmatprep.subr.mxu0 0.0
        %5718 = vmatpush1.msra.mxu0 0.0
        %5719 = vmatprep.subr.mxu0 0.0
        %5720 = vmatpush1.msra.mxu0 0.0
        %5721 = vmatprep.subr.mxu0 0.0
        %5722 = vmatpush1.msra.mxu0 0.0
        %5723 = vmatprep.subr.mxu0 0.0
        %5724 = vmatpush1.msra.mxu0 0.0
        %5725 = vmatprep.subr.mxu0 0.0
        %5726 = vmatpush1.msra.mxu0 0.0
        %5727 = vmatprep.subr.mxu0 0.0
        %5728 = vmatpush1.msra.mxu0 0.0
        %5729 = vmatprep.subr.mxu0 0.0
        %5730 = vmatpush1.msra.mxu0 0.0
        %5731 = vmatprep.subr.mxu0 0.0
        %5732 = vmatpush1.msra.mxu0 0.0
        %5733 = vmatprep.subr.mxu0 0.0
        %5734 = vmatpush1.msra.mxu0 0.0
        %5735 = vmatprep.subr.mxu0 0.0
        %5736 = vmatpush1.msra.mxu0 0.0
        %5737 = vmatprep.subr.mxu0 0.0
        %5738 = vmatpush1.msra.mxu0 0.0
        %5739 = vmatprep.subr.mxu0 0.0
        %5740 = vmatpush1.msra.mxu0 0.0
        %5741 = vmatprep.subr.mxu0 0.0
        %5742 = vmatpush1.msra.mxu0 0.0
        %5743 = vmatprep.subr.mxu0 0.0
        %5744 = vmatpush1.msra.mxu0 0.0
        %5745 = vmatprep.subr.mxu0 0.0
        %5746 = vmatpush1.msra.mxu0 0.0
        %5747 = vmatprep.subr.mxu0 0.0
        %5748 = vmatpush1.msra.mxu0 0.0
        %5749 = vmatprep.subr.mxu0 0.0
        %5750 = vmatpush1.msra.mxu0 0.0
        %5751 = vmatprep.subr.mxu0 0.0
        %5752 = vmatpush1.msra.mxu0 0.0
        %5753 = vmatprep.subr.mxu0 0.0
        %5754 = vmatpush1.msra.mxu0 0.0
        %5755 = vmatprep.mubr.f32.mxu0 0.0
        %5756 = vmatmul.mubr.f32.gmra.mrb[0].mxu0 %v5689
        %v5757 = vpop.f32.mrb[0].mxu0
        %v5758 = vadd.f32 0.0, %v5757
        %v5759 = vpop.f32.mrb[0].mxu0
        %v5760 = vadd.f32 0.0, %v5759
        %5761 = vdwg.mxu0
        %v5762 = vmul.f32 %v5440, %v5758
        %v5763 = vmul.f32 %v5441, %v5760
        %v5764 = vrot.slane %v5762, 4
        %v5765 = vadd.f32 %v5762, %v5764
        %v5766 = vrot.slane %v5765, 2
        %v5767 = vadd.f32 %v5765, %v5766
        %v5768 = vrot.slane %v5767, 1
        %v5769 = vadd.f32 %v5767, %v5768
        %v5770 = vrot.slane %v5763, 4
        %v5771 = vadd.f32 %v5763, %v5770
        %v5772 = vrot.slane %v5771, 2
        %v5773 = vadd.f32 %v5771, %v5772
        %v5774 = vrot.slane %v5773, 1
        %v5775 = vadd.f32 %v5773, %v5774
        %v5776 = vmul.f32 %v5680, %v5680
        %v5777 = vmul.f32 %v5686, %v5686
        %v5778 = vsub.f32 %v5769, %v5776
        %v5779 = vsub.f32 %v5775, %v5777
        %v5780 = vmax.f32 %v5778, 0.0
        %v5781 = vmax.f32 %v5779, 0.0
        %v5782 = vld [vmem:[%s300 + $0x12] sm:$0x3]
        %v5783 = vadd.f32 %v5780, 1e-05
        %v5784 = vadd.f32 %v5781, 1e-05
        %v5785 = vrsqrt.pop %v5783
        %v5786 = vrsqrt.pop %v5784
        %v5789 = vcombine.low %v5785, %v5786
        %v5791 = vunpack.c.l.s4 1966171168
        %v5792 = vunpack.c.0.s8 %v5791
        %v5793 = vlaneseq
        %v5794 = vshrl.u32 %v5793, 7
        %v5795 = vsub.s32 %v5792, %v5794
        %v5796 = vrot.slane %v5789, %v5795
        %v5798 = vunpack.c.l.s4 1966171168
        %v5799 = vunpack.c.0.s8 %v5798
        %v5800 = vlaneseq
        %v5801 = vshrl.u32 %v5800, 7
        %v5802 = vsub.s32 %v5799, %v5801
        %v5803 = vrot.slane %v5796, %v5802
        %v5805 = vmul.f32 %v5782, %v5803
        %v5806 = vld [vmem:[%s305 + $0x12] sm:$0x3]
        %v5808 = vlaneseq
        %v5809 = vshrl.u32 %v5808, 7
        %v5810 = vsub.s32 0, %v5809
        %v5811 = vrot.slane %v5805, %v5810
        %v5812 = vlaneseq
        %v5813 = vshrl.u32 %v5812, 7
        %v5814 = vsub.s32 1, %v5813
        %v5815 = vrot.slane %v5805, %v5814
        %v5818 = vmul.f32 %v5680, %v5811
        %v5819 = vmul.f32 %v5686, %v5815
        %v5822 = vcombine.low %v5818, %v5819
        %v5824 = vunpack.c.l.s4 1966171168
        %v5825 = vunpack.c.0.s8 %v5824
        %v5826 = vlaneseq
        %v5827 = vshrl.u32 %v5826, 7
        %v5828 = vsub.s32 %v5825, %v5827
        %v5829 = vrot.slane %v5822, %v5828
        %v5831 = vunpack.c.l.s4 1966171168
        %v5832 = vunpack.c.0.s8 %v5831
        %v5833 = vlaneseq
        %v5834 = vshrl.u32 %v5833, 7
        %v5835 = vsub.s32 %v5832, %v5834
        %v5836 = vrot.slane %v5829, %v5835
        %v5838 = vsub.f32 %v5806, %v5836
        %v5839 = vmax.f32 %v5573, %v5579
        %v5840 = vmax.f32 %v5839, %v5585
        %v5841 = vmax.f32 %v5840, %v5591
        %v5842 = vmax.f32 %v5841, %v5597
        %v5843 = vmax.f32 %v5842, %v5603
        %v5844 = vmax.f32 %v5843, %v5609
        %v5845 = vmax.f32 %v5844, %v5615
        %v5846 = vrot.slane %v5845, 4
        %v5847 = vmax.f32 %v5845, %v5846
        %v5848 = vrot.slane %v5847, 2
        %v5849 = vmax.f32 %v5847, %v5848
        %v5850 = vrot.slane %v5849, 1
        %v5851 = vmax.f32 %v5849, %v5850
        %v5852 = vmax.f32 %v5575, %v5581
        %v5853 = vmax.f32 %v5852, %v5587
        %v5854 = vmax.f32 %v5853, %v5593
        %v5855 = vmax.f32 %v5854, %v5599
        %v5856 = vmax.f32 %v5855, %v5605
        %v5857 = vmax.f32 %v5856, %v5611
        %v5858 = vmax.f32 %v5857, %v5617
        %v5859 = vrot.slane %v5858, 4
        %v5860 = vmax.f32 %v5858, %v5859
        %v5861 = vrot.slane %v5860, 2
        %v5862 = vmax.f32 %v5860, %v5861
        %v5863 = vrot.slane %v5862, 1
        %v5864 = vmax.f32 %v5862, %v5863
        %v5865 = vmax.f32 %v5621, %v5627
        %v5866 = vmax.f32 %v5865, %v5633
        %v5867 = vmax.f32 %v5866, %v5639
        %v5868 = vmax.f32 %v5867, %v5645
        %v5869 = vmax.f32 %v5868, %v5651
        %v5870 = vmax.f32 %v5869, %v5657
        %v5871 = vmax.f32 %v5870, %v5663
        %v5872 = vrot.slane %v5871, 4
        %v5873 = vmax.f32 %v5871, %v5872
        %v5874 = vrot.slane %v5873, 2
        %v5875 = vmax.f32 %v5873, %v5874
        %v5876 = vrot.slane %v5875, 1
        %v5877 = vmax.f32 %v5875, %v5876
        %v5878 = vmax.f32 %v5623, %v5629
        %v5879 = vmax.f32 %v5878, %v5635
        %v5880 = vmax.f32 %v5879, %v5641
        %v5881 = vmax.f32 %v5880, %v5647
        %v5882 = vmax.f32 %v5881, %v5653
        %v5883 = vmax.f32 %v5882, %v5659
        %v5884 = vmax.f32 %v5883, %v5665
        %v5885 = vrot.slane %v5884, 4
        %v5886 = vmax.f32 %v5884, %v5885
        %v5887 = vrot.slane %v5886, 2
        %v5888 = vmax.f32 %v5886, %v5887
        %v5889 = vrot.slane %v5888, 1
        %v5890 = vmax.f32 %v5888, %v5889
        %v5891 = vmin.f32 %v5573, %v5579
        %v5892 = vmin.f32 %v5891, %v5585
        %v5893 = vmin.f32 %v5892, %v5591
        %v5894 = vmin.f32 %v5893, %v5597
        %v5895 = vmin.f32 %v5894, %v5603
        %v5896 = vmin.f32 %v5895, %v5609
        %v5897 = vmin.f32 %v5896, %v5615
        %v5898 = vrot.slane %v5897, 4
        %v5899 = vmin.f32 %v5897, %v5898
        %v5900 = vrot.slane %v5899, 2
        %v5901 = vmin.f32 %v5899, %v5900
        %v5902 = vrot.slane %v5901, 1
        %v5903 = vmin.f32 %v5901, %v5902
        %v5904 = vmin.f32 %v5575, %v5581
        %v5905 = vmin.f32 %v5904, %v5587
        %v5906 = vmin.f32 %v5905, %v5593
        %v5907 = vmin.f32 %v5906, %v5599
        %v5908 = vmin.f32 %v5907, %v5605
        %v5909 = vmin.f32 %v5908, %v5611
        %v5910 = vmin.f32 %v5909, %v5617
        %v5911 = vrot.slane %v5910, 4
        %v5912 = vmin.f32 %v5910, %v5911
        %v5913 = vrot.slane %v5912, 2
        %v5914 = vmin.f32 %v5912, %v5913
        %v5915 = vrot.slane %v5914, 1
        %v5916 = vmin.f32 %v5914, %v5915
        %v5917 = vmin.f32 %v5621, %v5627
        %v5918 = vmin.f32 %v5917, %v5633
        %v5919 = vmin.f32 %v5918, %v5639
        %v5920 = vmin.f32 %v5919, %v5645
        %v5921 = vmin.f32 %v5920, %v5651
        %v5922 = vmin.f32 %v5921, %v5657
        %v5923 = vmin.f32 %v5922, %v5663
        %v5924 = vrot.slane %v5923, 4
        %v5925 = vmin.f32 %v5923, %v5924
        %v5926 = vrot.slane %v5925, 2
        %v5927 = vmin.f32 %v5925, %v5926
        %v5928 = vrot.slane %v5927, 1
        %v5929 = vmin.f32 %v5927, %v5928
        %v5930 = vmin.f32 %v5623, %v5629
        %v5931 = vmin.f32 %v5930, %v5635
        %v5932 = vmin.f32 %v5931, %v5641
        %v5933 = vmin.f32 %v5932, %v5647
        %v5934 = vmin.f32 %v5933, %v5653
        %v5935 = vmin.f32 %v5934, %v5659
        %v5936 = vmin.f32 %v5935, %v5665
        %v5937 = vrot.slane %v5936, 4
        %v5938 = vmin.f32 %v5936, %v5937
        %v5939 = vrot.slane %v5938, 2
        %v5940 = vmin.f32 %v5938, %v5939
        %v5941 = vrot.slane %v5940, 1
        %v5942 = vmin.f32 %v5940, %v5941
        %vm5943 = vcmp.ge.f32.partialorder %v5805, 0.0
        %v5944 = vmul.f32 %v5851, %v5811
        %v5945 = vmul.f32 %v5864, %v5815
        %v5946 = vmul.f32 %v5877, %v5811
        %v5947 = vmul.f32 %v5890, %v5815
        %v5948 = vmul.f32 %v5903, %v5811
        %v5949 = vmul.f32 %v5916, %v5815
        %v5950 = vmul.f32 %v5929, %v5811
        %v5951 = vmul.f32 %v5942, %v5815
        %v5952 = vsel %vm5943, 1, 0
        %v5953 = vlaneseq
        %v5954 = vshrl.u32 %v5953, 7
        %v5955 = vsub.s32 0, %v5954
        %v5956 = vrot.slane %v5952, %v5955
        %v5957 = vlaneseq
        %v5958 = vshrl.u32 %v5957, 7
        %v5959 = vsub.s32 1, %v5958
        %v5960 = vrot.slane %v5952, %v5959
        %vm5961 = vcmp.eq.s32.totalorder %v5956, 1
        %vm5962 = vcmp.eq.s32.totalorder %v5960, 1
        %v5967 = vrot.slane %v5946, 7
        %v5968 = vsel %vm837, %v5967, %v5944
        %v5969 = vrot.slane %v5947, 7
        %v5970 = vsel %vm837, %v5969, %v5945
        %v5977 = vrot.slane %v5950, 7
        %v5978 = vsel %vm837, %v5977, %v5948
        %v5979 = vrot.slane %v5951, 7
        %v5980 = vsel %vm837, %v5979, %v5949
        %v5983 = vsel %vm5961, %v5968, %v5978
        %v5984 = vsel %vm5962, %v5970, %v5980
        %v5986 = vlaneseq
        %v5987 = vshrl.u32 %v5986, 7
        %v5988 = vsub.s32 0, %v5987
        %v5989 = vrot.slane %v5838, %v5988
        %v5990 = vlaneseq
        %v5991 = vshrl.u32 %v5990, 7
        %v5992 = vsub.s32 1, %v5991
        %v5993 = vrot.slane %v5838, %v5992
        %v5996 = vadd.f32 %v5983, %v5989
        %v5997 = vadd.f32 %v5984, %v5993
        %v6000 = vcombine.low %v5996, %v5997
        %v6002 = vunpack.c.l.s4 1983009808
        %v6003 = vunpack.c.0.s8 %v6002
        %v6004 = vlaneseq
        %v6005 = vshrl.u32 %v6004, 7
        %v6006 = vsub.s32 %v6003, %v6005
        %v6007 = vrot.slane %v6000, %v6006
        %6009 = vst [vmem:[%s295 + $0x24] sm:$0xf] %v6007
        %v6010 = vld [vmem:[%s259 + $0xa0] sm:$0xff]
        %v6011 = vld [vmem:[%s259 + $0xa8] sm:$0xff]
        %v6012 = vld [vmem:[%s0] sm:$0xff]
        %v6013 = vld [vmem:[%s0 + $0x8] sm:$0xff]
        %v6014 = vld [vmem:[%s0 + $0x10] sm:$0xff]
        %v6015 = vld [vmem:[%s0 + $0x18] sm:$0xff]
        %v6016 = vld [vmem:[%s0 + $0x20] sm:$0xff]
        %v6017 = vld [vmem:[%s0 + $0x28] sm:$0xff]
        %v6018 = vld [vmem:[%s0 + $0x30] sm:$0xff]
        %v6019 = vld [vmem:[%s0 + $0x38] sm:$0xff]
        %v6020 = vld [vmem:[%s0 + $0x40] sm:$0xff]
        %v6021 = vld [vmem:[%s0 + $0x48] sm:$0xff]
        %v6022 = vld [vmem:[%s0 + $0x50] sm:$0xff]
        %v6023 = vld [vmem:[%s0 + $0x58] sm:$0xff]
        %v6024 = vld [vmem:[%s0 + $0x60] sm:$0xff]
        %v6025 = vld [vmem:[%s0 + $0x68] sm:$0xff]
        %v6026 = vld [vmem:[%s0 + $0x70] sm:$0xff]
        %v6027 = vld [vmem:[%s0 + $0x78] sm:$0xff]
        %v6029 = vsel %vm326, %v6012, 0
        %v6032 = vsel %vm326, %v6013, 0
        %v6035 = vsel %vm326, %v6014, 0
        %v6038 = vsel %vm326, %v6015, 0
        %v6041 = vsel %vm326, %v6016, 0
        %v6044 = vsel %vm326, %v6017, 0
        %v6047 = vsel %vm326, %v6018, 0
        %v6050 = vsel %vm326, %v6019, 0
        %v6053 = vsel %vm326, %v6020, 0
        %v6056 = vsel %vm326, %v6021, 0
        %v6059 = vsel %vm326, %v6022, 0
        %v6062 = vsel %vm326, %v6023, 0
        %v6065 = vsel %vm326, %v6024, 0
        %v6068 = vsel %vm326, %v6025, 0
        %v6071 = vsel %vm326, %v6026, 0
        %v6074 = vsel %vm326, %v6027, 0
        %6076 = vmatprep.subr.mxu0 %v6011
        %6077 = vmatpush1.msra.mxu0 %v6010
        %6078 = vmatprep.subr.mxu0 0.0
        %6079 = vmatpush1.msra.mxu0 0.0
        %6080 = vmatprep.subr.mxu0 0.0
        %6081 = vmatpush1.msra.mxu0 0.0
        %6082 = vmatprep.subr.mxu0 0.0
        %6083 = vmatpush1.msra.mxu0 0.0
        %6084 = vmatprep.subr.mxu0 0.0
        %6085 = vmatpush1.msra.mxu0 0.0
        %6086 = vmatprep.subr.mxu0 0.0
        %6087 = vmatpush1.msra.mxu0 0.0
        %6088 = vmatprep.subr.mxu0 0.0
        %6089 = vmatpush1.msra.mxu0 0.0
        %6090 = vmatprep.subr.mxu0 0.0
        %6091 = vmatpush1.msra.mxu0 0.0
        %6092 = vmatprep.subr.mxu0 0.0
        %6093 = vmatpush1.msra.mxu0 0.0
        %6094 = vmatprep.subr.mxu0 0.0
        %6095 = vmatpush1.msra.mxu0 0.0
        %6096 = vmatprep.subr.mxu0 0.0
        %6097 = vmatpush1.msra.mxu0 0.0
        %6098 = vmatprep.subr.mxu0 0.0
        %6099 = vmatpush1.msra.mxu0 0.0
        %6100 = vmatprep.subr.mxu0 0.0
        %6101 = vmatpush1.msra.mxu0 0.0
        %6102 = vmatprep.subr.mxu0 0.0
        %6103 = vmatpush1.msra.mxu0 0.0
        %6104 = vmatprep.subr.mxu0 0.0
        %6105 = vmatpush1.msra.mxu0 0.0
        %6106 = vmatprep.subr.mxu0 0.0
        %6107 = vmatpush1.msra.mxu0 0.0
        %6108 = vmatprep.subr.mxu0 0.0
        %6109 = vmatpush1.msra.mxu0 0.0
        %6110 = vmatprep.subr.mxu0 0.0
        %6111 = vmatpush1.msra.mxu0 0.0
        %6112 = vmatprep.subr.mxu0 0.0
        %6113 = vmatpush1.msra.mxu0 0.0
        %6114 = vmatprep.subr.mxu0 0.0
        %6115 = vmatpush1.msra.mxu0 0.0
        %6116 = vmatprep.subr.mxu0 0.0
        %6117 = vmatpush1.msra.mxu0 0.0
        %6118 = vmatprep.subr.mxu0 0.0
        %6119 = vmatpush1.msra.mxu0 0.0
        %6120 = vmatprep.subr.mxu0 0.0
        %6121 = vmatpush1.msra.mxu0 0.0
        %6122 = vmatprep.subr.mxu0 0.0
        %6123 = vmatpush1.msra.mxu0 0.0
        %6124 = vmatprep.subr.mxu0 0.0
        %6125 = vmatpush1.msra.mxu0 0.0
        %6126 = vmatprep.subr.mxu0 0.0
        %6127 = vmatpush1.msra.mxu0 0.0
        %6128 = vmatprep.subr.mxu0 0.0
        %6129 = vmatpush1.msra.mxu0 0.0
        %6130 = vmatprep.subr.mxu0 0.0
        %6131 = vmatpush1.msra.mxu0 0.0
        %6132 = vmatprep.subr.mxu0 0.0
        %6133 = vmatpush1.msra.mxu0 0.0
        %6134 = vmatprep.subr.mxu0 0.0
        %6135 = vmatpush1.msra.mxu0 0.0
        %6136 = vmatprep.subr.mxu0 0.0
        %6137 = vmatpush1.msra.mxu0 0.0
        %6138 = vmatprep.subr.mxu0 0.0
        %6139 = vmatpush1.msra.mxu0 0.0
        %6140 = vmatprep.mubr.f32.mxu0 0.0
        %6141 = vmatmul.mubr.f32.gmra.mrb[0].mxu0 %v6029
        %v6142 = vpop.f32.mrb[0].mxu0
        %v6143 = vadd.f32 0.0, %v6142
        %v6144 = vpop.f32.mrb[0].mxu0
        %v6145 = vadd.f32 0.0, %v6144
        %6146 = vmatprep.mubr.f32.mxu0 0.0
        %6147 = vmatmul.mubr.f32.gmra.mrb[0].mxu0 %v6032
        %v6148 = vpop.f32.mrb[0].mxu0
        %v6149 = vadd.f32 0.0, %v6148
        %v6150 = vpop.f32.mrb[0].mxu0
        %v6151 = vadd.f32 0.0, %v6150
        %6152 = vmatprep.mubr.f32.mxu0 0.0
        %6153 = vmatmul.mubr.f32.gmra.mrb[0].mxu0 %v6035
        %v6154 = vpop.f32.mrb[0].mxu0
        %v6155 = vadd.f32 0.0, %v6154
        %v6156 = vpop.f32.mrb[0].mxu0
        %v6157 = vadd.f32 0.0, %v6156
        %6158 = vmatprep.mubr.f32.mxu0 0.0
        %6159 = vmatmul.mubr.f32.gmra.mrb[0].mxu0 %v6038
        %v6160 = vpop.f32.mrb[0].mxu0
        %v6161 = vadd.f32 0.0, %v6160
        %v6162 = vpop.f32.mrb[0].mxu0
        %v6163 = vadd.f32 0.0, %v6162
        %6164 = vmatprep.mubr.f32.mxu0 0.0
        %6165 = vmatmul.mubr.f32.gmra.mrb[0].mxu0 %v6041
        %v6166 = vpop.f32.mrb[0].mxu0
        %v6167 = vadd.f32 0.0, %v6166
        %v6168 = vpop.f32.mrb[0].mxu0
        %v6169 = vadd.f32 0.0, %v6168
        %6170 = vmatprep.mubr.f32.mxu0 0.0
        %6171 = vmatmul.mubr.f32.gmra.mrb[0].mxu0 %v6044
        %v6172 = vpop.f32.mrb[0].mxu0
        %v6173 = vadd.f32 0.0, %v6172
        %v6174 = vpop.f32.mrb[0].mxu0
        %v6175 = vadd.f32 0.0, %v6174
        %6176 = vmatprep.mubr.f32.mxu0 0.0
        %6177 = vmatmul.mubr.f32.gmra.mrb[0].mxu0 %v6047
        %v6178 = vpop.f32.mrb[0].mxu0
        %v6179 = vadd.f32 0.0, %v6178
        %v6180 = vpop.f32.mrb[0].mxu0
        %v6181 = vadd.f32 0.0, %v6180
        %6182 = vmatprep.mubr.f32.mxu0 0.0
        %6183 = vmatmul.mubr.f32.gmra.mrb[0].mxu0 %v6050
        %v6184 = vpop.f32.mrb[0].mxu0
        %v6185 = vadd.f32 0.0, %v6184
        %v6186 = vpop.f32.mrb[0].mxu0
        %v6187 = vadd.f32 0.0, %v6186
        %6188 = vmatprep.mubr.f32.mxu0 0.0
        %6189 = vmatmul.mubr.f32.gmra.mrb[0].mxu0 %v6053
        %v6190 = vpop.f32.mrb[0].mxu0
        %v6191 = vadd.f32 0.0, %v6190
        %v6192 = vpop.f32.mrb[0].mxu0
        %v6193 = vadd.f32 0.0, %v6192
        %6194 = vmatprep.mubr.f32.mxu0 0.0
        %6195 = vmatmul.mubr.f32.gmra.mrb[0].mxu0 %v6056
        %v6196 = vpop.f32.mrb[0].mxu0
        %v6197 = vadd.f32 0.0, %v6196
        %v6198 = vpop.f32.mrb[0].mxu0
        %v6199 = vadd.f32 0.0, %v6198
        %6200 = vmatprep.mubr.f32.mxu0 0.0
        %6201 = vmatmul.mubr.f32.gmra.mrb[0].mxu0 %v6059
        %v6202 = vpop.f32.mrb[0].mxu0
        %v6203 = vadd.f32 0.0, %v6202
        %v6204 = vpop.f32.mrb[0].mxu0
        %v6205 = vadd.f32 0.0, %v6204
        %6206 = vmatprep.mubr.f32.mxu0 0.0
        %6207 = vmatmul.mubr.f32.gmra.mrb[0].mxu0 %v6062
        %v6208 = vpop.f32.mrb[0].mxu0
        %v6209 = vadd.f32 0.0, %v6208
        %v6210 = vpop.f32.mrb[0].mxu0
        %v6211 = vadd.f32 0.0, %v6210
        %6212 = vmatprep.mubr.f32.mxu0 0.0
        %6213 = vmatmul.mubr.f32.gmra.mrb[0].mxu0 %v6065
        %v6214 = vpop.f32.mrb[0].mxu0
        %v6215 = vadd.f32 0.0, %v6214
        %v6216 = vpop.f32.mrb[0].mxu0
        %v6217 = vadd.f32 0.0, %v6216
        %6218 = vmatprep.mubr.f32.mxu0 0.0
        %6219 = vmatmul.mubr.f32.gmra.mrb[0].mxu0 %v6068
        %v6220 = vpop.f32.mrb[0].mxu0
        %v6221 = vadd.f32 0.0, %v6220
        %v6222 = vpop.f32.mrb[0].mxu0
        %v6223 = vadd.f32 0.0, %v6222
        %6224 = vmatprep.mubr.f32.mxu0 0.0
        %6225 = vmatmul.mubr.f32.gmra.mrb[0].mxu0 %v6071
        %v6226 = vpop.f32.mrb[0].mxu0
        %v6227 = vadd.f32 0.0, %v6226
        %v6228 = vpop.f32.mrb[0].mxu0
        %v6229 = vadd.f32 0.0, %v6228
        %6230 = vmatprep.mubr.f32.mxu0 0.0
        %6231 = vmatmul.mubr.f32.gmra.mrb[0].mxu0 %v6074
        %v6232 = vpop.f32.mrb[0].mxu0
        %v6233 = vadd.f32 0.0, %v6232
        %v6234 = vpop.f32.mrb[0].mxu0
        %v6235 = vadd.f32 0.0, %v6234
        %6236 = vdwg.mxu0
        %v6237 = vld [vmem:[%s2] sm:$0xff]
        %6239 = vset.pattern.permute.xlu0 0
        %6240 = vperm.xlu0 %6239, %v6237
        %v6241 = vpop.permute.xlu0 %6240
        %v6243 = vmul.f32 %v6241, %v6010
        %v6244 = vmul.f32 %v6241, %v6011
        %v6245 = vrot.slane %v6243, 4
        %v6246 = vadd.f32 %v6243, %v6245
        %v6247 = vrot.slane %v6246, 2
        %v6248 = vadd.f32 %v6246, %v6247
        %v6249 = vrot.slane %v6248, 1
        %v6250 = vadd.f32 %v6248, %v6249
        %v6251 = vrot.slane %v6244, 4
        %v6252 = vadd.f32 %v6244, %v6251
        %v6253 = vrot.slane %v6252, 2
        %v6254 = vadd.f32 %v6252, %v6253
        %v6255 = vrot.slane %v6254, 1
        %v6256 = vadd.f32 %v6254, %v6255
        %v6257 = vld [vmem:[%s3] sm:$0xff]
        %v6259 = vsel %vm326, %v6257, 0
        %6261 = vmatprep.subr.mxu0 %v6011
        %6262 = vmatpush1.msra.mxu0 %v6010
        %6263 = vmatprep.subr.mxu0 0.0
        %6264 = vmatpush1.msra.mxu0 0.0
        %6265 = vmatprep.subr.mxu0 0.0
        %6266 = vmatpush1.msra.mxu0 0.0
        %6267 = vmatprep.subr.mxu0 0.0
        %6268 = vmatpush1.msra.mxu0 0.0
        %6269 = vmatprep.subr.mxu0 0.0
        %6270 = vmatpush1.msra.mxu0 0.0
        %6271 = vmatprep.subr.mxu0 0.0
        %6272 = vmatpush1.msra.mxu0 0.0
        %6273 = vmatprep.subr.mxu0 0.0
        %6274 = vmatpush1.msra.mxu0 0.0
        %6275 = vmatprep.subr.mxu0 0.0
        %6276 = vmatpush1.msra.mxu0 0.0
        %6277 = vmatprep.subr.mxu0 0.0
        %6278 = vmatpush1.msra.mxu0 0.0
        %6279 = vmatprep.subr.mxu0 0.0
        %6280 = vmatpush1.msra.mxu0 0.0
        %6281 = vmatprep.subr.mxu0 0.0
        %6282 = vmatpush1.msra.mxu0 0.0
        %6283 = vmatprep.subr.mxu0 0.0
        %6284 = vmatpush1.msra.mxu0 0.0
        %6285 = vmatprep.subr.mxu0 0.0
        %6286 = vmatpush1.msra.mxu0 0.0
        %6287 = vmatprep.subr.mxu0 0.0
        %6288 = vmatpush1.msra.mxu0 0.0
        %6289 = vmatprep.subr.mxu0 0.0
        %6290 = vmatpush1.msra.mxu0 0.0
        %6291 = vmatprep.subr.mxu0 0.0
        %6292 = vmatpush1.msra.mxu0 0.0
        %6293 = vmatprep.subr.mxu0 0.0
        %6294 = vmatpush1.msra.mxu0 0.0
        %6295 = vmatprep.subr.mxu0 0.0
        %6296 = vmatpush1.msra.mxu0 0.0
        %6297 = vmatprep.subr.mxu0 0.0
        %6298 = vmatpush1.msra.mxu0 0.0
        %6299 = vmatprep.subr.mxu0 0.0
        %6300 = vmatpush1.msra.mxu0 0.0
        %6301 = vmatprep.subr.mxu0 0.0
        %6302 = vmatpush1.msra.mxu0 0.0
        %6303 = vmatprep.subr.mxu0 0.0
        %6304 = vmatpush1.msra.mxu0 0.0
        %6305 = vmatprep.subr.mxu0 0.0
        %6306 = vmatpush1.msra.mxu0 0.0
        %6307 = vmatprep.subr.mxu0 0.0
        %6308 = vmatpush1.msra.mxu0 0.0
        %6309 = vmatprep.subr.mxu0 0.0
        %6310 = vmatpush1.msra.mxu0 0.0
        %6311 = vmatprep.subr.mxu0 0.0
        %6312 = vmatpush1.msra.mxu0 0.0
        %6313 = vmatprep.subr.mxu0 0.0
        %6314 = vmatpush1.msra.mxu0 0.0
        %6315 = vmatprep.subr.mxu0 0.0
        %6316 = vmatpush1.msra.mxu0 0.0
        %6317 = vmatprep.subr.mxu0 0.0
        %6318 = vmatpush1.msra.mxu0 0.0
        %6319 = vmatprep.subr.mxu0 0.0
        %6320 = vmatpush1.msra.mxu0 0.0
        %6321 = vmatprep.subr.mxu0 0.0
        %6322 = vmatpush1.msra.mxu0 0.0
        %6323 = vmatprep.subr.mxu0 0.0
        %6324 = vmatpush1.msra.mxu0 0.0
        %6325 = vmatprep.mubr.f32.mxu0 0.0
        %6326 = vmatmul.mubr.f32.gmra.mrb[0].mxu0 %v6259
        %v6327 = vpop.f32.mrb[0].mxu0
        %v6328 = vadd.f32 0.0, %v6327
        %v6329 = vpop.f32.mrb[0].mxu0
        %v6330 = vadd.f32 0.0, %v6329
        %6331 = vdwg.mxu0
        %v6332 = vmul.f32 %v6010, %v6328
        %v6333 = vmul.f32 %v6011, %v6330
        %v6334 = vrot.slane %v6332, 4
        %v6335 = vadd.f32 %v6332, %v6334
        %v6336 = vrot.slane %v6335, 2
        %v6337 = vadd.f32 %v6335, %v6336
        %v6338 = vrot.slane %v6337, 1
        %v6339 = vadd.f32 %v6337, %v6338
        %v6340 = vrot.slane %v6333, 4
        %v6341 = vadd.f32 %v6333, %v6340
        %v6342 = vrot.slane %v6341, 2
        %v6343 = vadd.f32 %v6341, %v6342
        %v6344 = vrot.slane %v6343, 1
        %v6345 = vadd.f32 %v6343, %v6344
        %v6346 = vmul.f32 %v6250, %v6250
        %v6347 = vmul.f32 %v6256, %v6256
        %v6348 = vsub.f32 %v6339, %v6346
        %v6349 = vsub.f32 %v6345, %v6347
        %v6350 = vmax.f32 %v6348, 0.0
        %v6351 = vmax.f32 %v6349, 0.0
        %v6352 = vld [vmem:[%s300 + $0x14] sm:$0x3]
        %v6353 = vadd.f32 %v6350, 1e-05
        %v6354 = vadd.f32 %v6351, 1e-05
        %v6355 = vrsqrt.pop %v6353
        %v6356 = vrsqrt.pop %v6354
        %v6359 = vcombine.low %v6355, %v6356
        %v6361 = vunpack.c.l.s4 1966171168
        %v6362 = vunpack.c.0.s8 %v6361
        %v6363 = vlaneseq
        %v6364 = vshrl.u32 %v6363, 7
        %v6365 = vsub.s32 %v6362, %v6364
        %v6366 = vrot.slane %v6359, %v6365
        %v6368 = vunpack.c.l.s4 1966171168
        %v6369 = vunpack.c.0.s8 %v6368
        %v6370 = vlaneseq
        %v6371 = vshrl.u32 %v6370, 7
        %v6372 = vsub.s32 %v6369, %v6371
        %v6373 = vrot.slane %v6366, %v6372
        %v6375 = vmul.f32 %v6352, %v6373
        %v6376 = vld [vmem:[%s305 + $0x14] sm:$0x3]
        %v6378 = vlaneseq
        %v6379 = vshrl.u32 %v6378, 7
        %v6380 = vsub.s32 0, %v6379
        %v6381 = vrot.slane %v6375, %v6380
        %v6382 = vlaneseq
        %v6383 = vshrl.u32 %v6382, 7
        %v6384 = vsub.s32 1, %v6383
        %v6385 = vrot.slane %v6375, %v6384
        %v6388 = vmul.f32 %v6250, %v6381
        %v6389 = vmul.f32 %v6256, %v6385
        %v6392 = vcombine.low %v6388, %v6389
        %v6394 = vunpack.c.l.s4 1966171168
        %v6395 = vunpack.c.0.s8 %v6394
        %v6396 = vlaneseq
        %v6397 = vshrl.u32 %v6396, 7
        %v6398 = vsub.s32 %v6395, %v6397
        %v6399 = vrot.slane %v6392, %v6398
        %v6401 = vunpack.c.l.s4 1966171168
        %v6402 = vunpack.c.0.s8 %v6401
        %v6403 = vlaneseq
        %v6404 = vshrl.u32 %v6403, 7
        %v6405 = vsub.s32 %v6402, %v6404
        %v6406 = vrot.slane %v6399, %v6405
        %v6408 = vsub.f32 %v6376, %v6406
        %v6409 = vmax.f32 %v6143, %v6149
        %v6410 = vmax.f32 %v6409, %v6155
        %v6411 = vmax.f32 %v6410, %v6161
        %v6412 = vmax.f32 %v6411, %v6167
        %v6413 = vmax.f32 %v6412, %v6173
        %v6414 = vmax.f32 %v6413, %v6179
        %v6415 = vmax.f32 %v6414, %v6185
        %v6416 = vrot.slane %v6415, 4
        %v6417 = vmax.f32 %v6415, %v6416
        %v6418 = vrot.slane %v6417, 2
        %v6419 = vmax.f32 %v6417, %v6418
        %v6420 = vrot.slane %v6419, 1
        %v6421 = vmax.f32 %v6419, %v6420
        %v6422 = vmax.f32 %v6145, %v6151
        %v6423 = vmax.f32 %v6422, %v6157
        %v6424 = vmax.f32 %v6423, %v6163
        %v6425 = vmax.f32 %v6424, %v6169
        %v6426 = vmax.f32 %v6425, %v6175
        %v6427 = vmax.f32 %v6426, %v6181
        %v6428 = vmax.f32 %v6427, %v6187
        %v6429 = vrot.slane %v6428, 4
        %v6430 = vmax.f32 %v6428, %v6429
        %v6431 = vrot.slane %v6430, 2
        %v6432 = vmax.f32 %v6430, %v6431
        %v6433 = vrot.slane %v6432, 1
        %v6434 = vmax.f32 %v6432, %v6433
        %v6435 = vmax.f32 %v6191, %v6197
        %v6436 = vmax.f32 %v6435, %v6203
        %v6437 = vmax.f32 %v6436, %v6209
        %v6438 = vmax.f32 %v6437, %v6215
        %v6439 = vmax.f32 %v6438, %v6221
        %v6440 = vmax.f32 %v6439, %v6227
        %v6441 = vmax.f32 %v6440, %v6233
        %v6442 = vrot.slane %v6441, 4
        %v6443 = vmax.f32 %v6441, %v6442
        %v6444 = vrot.slane %v6443, 2
        %v6445 = vmax.f32 %v6443, %v6444
        %v6446 = vrot.slane %v6445, 1
        %v6447 = vmax.f32 %v6445, %v6446
        %v6448 = vmax.f32 %v6193, %v6199
        %v6449 = vmax.f32 %v6448, %v6205
        %v6450 = vmax.f32 %v6449, %v6211
        %v6451 = vmax.f32 %v6450, %v6217
        %v6452 = vmax.f32 %v6451, %v6223
        %v6453 = vmax.f32 %v6452, %v6229
        %v6454 = vmax.f32 %v6453, %v6235
        %v6455 = vrot.slane %v6454, 4
        %v6456 = vmax.f32 %v6454, %v6455
        %v6457 = vrot.slane %v6456, 2
        %v6458 = vmax.f32 %v6456, %v6457
        %v6459 = vrot.slane %v6458, 1
        %v6460 = vmax.f32 %v6458, %v6459
        %v6461 = vmin.f32 %v6143, %v6149
        %v6462 = vmin.f32 %v6461, %v6155
        %v6463 = vmin.f32 %v6462, %v6161
        %v6464 = vmin.f32 %v6463, %v6167
        %v6465 = vmin.f32 %v6464, %v6173
        %v6466 = vmin.f32 %v6465, %v6179
        %v6467 = vmin.f32 %v6466, %v6185
        %v6468 = vrot.slane %v6467, 4
        %v6469 = vmin.f32 %v6467, %v6468
        %v6470 = vrot.slane %v6469, 2
        %v6471 = vmin.f32 %v6469, %v6470
        %v6472 = vrot.slane %v6471, 1
        %v6473 = vmin.f32 %v6471, %v6472
        %v6474 = vmin.f32 %v6145, %v6151
        %v6475 = vmin.f32 %v6474, %v6157
        %v6476 = vmin.f32 %v6475, %v6163
        %v6477 = vmin.f32 %v6476, %v6169
        %v6478 = vmin.f32 %v6477, %v6175
        %v6479 = vmin.f32 %v6478, %v6181
        %v6480 = vmin.f32 %v6479, %v6187
        %v6481 = vrot.slane %v6480, 4
        %v6482 = vmin.f32 %v6480, %v6481
        %v6483 = vrot.slane %v6482, 2
        %v6484 = vmin.f32 %v6482, %v6483
        %v6485 = vrot.slane %v6484, 1
        %v6486 = vmin.f32 %v6484, %v6485
        %v6487 = vmin.f32 %v6191, %v6197
        %v6488 = vmin.f32 %v6487, %v6203
        %v6489 = vmin.f32 %v6488, %v6209
        %v6490 = vmin.f32 %v6489, %v6215
        %v6491 = vmin.f32 %v6490, %v6221
        %v6492 = vmin.f32 %v6491, %v6227
        %v6493 = vmin.f32 %v6492, %v6233
        %v6494 = vrot.slane %v6493, 4
        %v6495 = vmin.f32 %v6493, %v6494
        %v6496 = vrot.slane %v6495, 2
        %v6497 = vmin.f32 %v6495, %v6496
        %v6498 = vrot.slane %v6497, 1
        %v6499 = vmin.f32 %v6497, %v6498
        %v6500 = vmin.f32 %v6193, %v6199
        %v6501 = vmin.f32 %v6500, %v6205
        %v6502 = vmin.f32 %v6501, %v6211
        %v6503 = vmin.f32 %v6502, %v6217
        %v6504 = vmin.f32 %v6503, %v6223
        %v6505 = vmin.f32 %v6504, %v6229
        %v6506 = vmin.f32 %v6505, %v6235
        %v6507 = vrot.slane %v6506, 4
        %v6508 = vmin.f32 %v6506, %v6507
        %v6509 = vrot.slane %v6508, 2
        %v6510 = vmin.f32 %v6508, %v6509
        %v6511 = vrot.slane %v6510, 1
        %v6512 = vmin.f32 %v6510, %v6511
        %vm6513 = vcmp.ge.f32.partialorder %v6375, 0.0
        %v6514 = vmul.f32 %v6421, %v6381
        %v6515 = vmul.f32 %v6434, %v6385
        %v6516 = vmul.f32 %v6447, %v6381
        %v6517 = vmul.f32 %v6460, %v6385
        %v6518 = vmul.f32 %v6473, %v6381
        %v6519 = vmul.f32 %v6486, %v6385
        %v6520 = vmul.f32 %v6499, %v6381
        %v6521 = vmul.f32 %v6512, %v6385
        %v6522 = vsel %vm6513, 1, 0
        %v6523 = vlaneseq
        %v6524 = vshrl.u32 %v6523, 7
        %v6525 = vsub.s32 0, %v6524
        %v6526 = vrot.slane %v6522, %v6525
        %v6527 = vlaneseq
        %v6528 = vshrl.u32 %v6527, 7
        %v6529 = vsub.s32 1, %v6528
        %v6530 = vrot.slane %v6522, %v6529
        %vm6531 = vcmp.eq.s32.totalorder %v6526, 1
        %vm6532 = vcmp.eq.s32.totalorder %v6530, 1
        %v6537 = vrot.slane %v6516, 7
        %v6538 = vsel %vm837, %v6537, %v6514
        %v6539 = vrot.slane %v6517, 7
        %v6540 = vsel %vm837, %v6539, %v6515
        %v6547 = vrot.slane %v6520, 7
        %v6548 = vsel %vm837, %v6547, %v6518
        %v6549 = vrot.slane %v6521, 7
        %v6550 = vsel %vm837, %v6549, %v6519
        %v6553 = vsel %vm6531, %v6538, %v6548
        %v6554 = vsel %vm6532, %v6540, %v6550
        %v6556 = vlaneseq
        %v6557 = vshrl.u32 %v6556, 7
        %v6558 = vsub.s32 0, %v6557
        %v6559 = vrot.slane %v6408, %v6558
        %v6560 = vlaneseq
        %v6561 = vshrl.u32 %v6560, 7
        %v6562 = vsub.s32 1, %v6561
        %v6563 = vrot.slane %v6408, %v6562
        %v6566 = vadd.f32 %v6553, %v6559
        %v6567 = vadd.f32 %v6554, %v6563
        %v6570 = vcombine.low %v6566, %v6567
        %v6572 = vunpack.c.l.s4 1983009808
        %v6573 = vunpack.c.0.s8 %v6572
        %v6574 = vlaneseq
        %v6575 = vshrl.u32 %v6574, 7
        %v6576 = vsub.s32 %v6573, %v6575
        %v6577 = vrot.slane %v6570, %v6576
        %6579 = vst [vmem:[%s295 + $0x28] sm:$0xf] %v6577
        %v6580 = vld [vmem:[%s259 + $0xb0] sm:$0xff]
        %v6581 = vld [vmem:[%s259 + $0xb8] sm:$0xff]
        %v6582 = vld [vmem:[%s0] sm:$0xff]
        %v6583 = vld [vmem:[%s0 + $0x8] sm:$0xff]
        %v6584 = vld [vmem:[%s0 + $0x10] sm:$0xff]
        %v6585 = vld [vmem:[%s0 + $0x18] sm:$0xff]
        %v6586 = vld [vmem:[%s0 + $0x20] sm:$0xff]
        %v6587 = vld [vmem:[%s0 + $0x28] sm:$0xff]
        %v6588 = vld [vmem:[%s0 + $0x30] sm:$0xff]
        %v6589 = vld [vmem:[%s0 + $0x38] sm:$0xff]
        %v6590 = vld [vmem:[%s0 + $0x40] sm:$0xff]
        %v6591 = vld [vmem:[%s0 + $0x48] sm:$0xff]
        %v6592 = vld [vmem:[%s0 + $0x50] sm:$0xff]
        %v6593 = vld [vmem:[%s0 + $0x58] sm:$0xff]
        %v6594 = vld [vmem:[%s0 + $0x60] sm:$0xff]
        %v6595 = vld [vmem:[%s0 + $0x68] sm:$0xff]
        %v6596 = vld [vmem:[%s0 + $0x70] sm:$0xff]
        %v6597 = vld [vmem:[%s0 + $0x78] sm:$0xff]
        %v6599 = vsel %vm326, %v6582, 0
        %v6602 = vsel %vm326, %v6583, 0
        %v6605 = vsel %vm326, %v6584, 0
        %v6608 = vsel %vm326, %v6585, 0
        %v6611 = vsel %vm326, %v6586, 0
        %v6614 = vsel %vm326, %v6587, 0
        %v6617 = vsel %vm326, %v6588, 0
        %v6620 = vsel %vm326, %v6589, 0
        %v6623 = vsel %vm326, %v6590, 0
        %v6626 = vsel %vm326, %v6591, 0
        %v6629 = vsel %vm326, %v6592, 0
        %v6632 = vsel %vm326, %v6593, 0
        %v6635 = vsel %vm326, %v6594, 0
        %v6638 = vsel %vm326, %v6595, 0
        %v6641 = vsel %vm326, %v6596, 0
        %v6644 = vsel %vm326, %v6597, 0
        %6646 = vmatprep.subr.mxu0 %v6581
        %6647 = vmatpush1.msra.mxu0 %v6580
        %6648 = vmatprep.subr.mxu0 0.0
        %6649 = vmatpush1.msra.mxu0 0.0
        %6650 = vmatprep.subr.mxu0 0.0
        %6651 = vmatpush1.msra.mxu0 0.0
        %6652 = vmatprep.subr.mxu0 0.0
        %6653 = vmatpush1.msra.mxu0 0.0
        %6654 = vmatprep.subr.mxu0 0.0
        %6655 = vmatpush1.msra.mxu0 0.0
        %6656 = vmatprep.subr.mxu0 0.0
        %6657 = vmatpush1.msra.mxu0 0.0
        %6658 = vmatprep.subr.mxu0 0.0
        %6659 = vmatpush1.msra.mxu0 0.0
        %6660 = vmatprep.subr.mxu0 0.0
        %6661 = vmatpush1.msra.mxu0 0.0
        %6662 = vmatprep.subr.mxu0 0.0
        %6663 = vmatpush1.msra.mxu0 0.0
        %6664 = vmatprep.subr.mxu0 0.0
        %6665 = vmatpush1.msra.mxu0 0.0
        %6666 = vmatprep.subr.mxu0 0.0
        %6667 = vmatpush1.msra.mxu0 0.0
        %6668 = vmatprep.subr.mxu0 0.0
        %6669 = vmatpush1.msra.mxu0 0.0
        %6670 = vmatprep.subr.mxu0 0.0
        %6671 = vmatpush1.msra.mxu0 0.0
        %6672 = vmatprep.subr.mxu0 0.0
        %6673 = vmatpush1.msra.mxu0 0.0
        %6674 = vmatprep.subr.mxu0 0.0
        %6675 = vmatpush1.msra.mxu0 0.0
        %6676 = vmatprep.subr.mxu0 0.0
        %6677 = vmatpush1.msra.mxu0 0.0
        %6678 = vmatprep.subr.mxu0 0.0
        %6679 = vmatpush1.msra.mxu0 0.0
        %6680 = vmatprep.subr.mxu0 0.0
        %6681 = vmatpush1.msra.mxu0 0.0
        %6682 = vmatprep.subr.mxu0 0.0
        %6683 = vmatpush1.msra.mxu0 0.0
        %6684 = vmatprep.subr.mxu0 0.0
        %6685 = vmatpush1.msra.mxu0 0.0
        %6686 = vmatprep.subr.mxu0 0.0
        %6687 = vmatpush1.msra.mxu0 0.0
        %6688 = vmatprep.subr.mxu0 0.0
        %6689 = vmatpush1.msra.mxu0 0.0
        %6690 = vmatprep.subr.mxu0 0.0
        %6691 = vmatpush1.msra.mxu0 0.0
        %6692 = vmatprep.subr.mxu0 0.0
        %6693 = vmatpush1.msra.mxu0 0.0
        %6694 = vmatprep.subr.mxu0 0.0
        %6695 = vmatpush1.msra.mxu0 0.0
        %6696 = vmatprep.subr.mxu0 0.0
        %6697 = vmatpush1.msra.mxu0 0.0
        %6698 = vmatprep.subr.mxu0 0.0
        %6699 = vmatpush1.msra.mxu0 0.0
        %6700 = vmatprep.subr.mxu0 0.0
        %6701 = vmatpush1.msra.mxu0 0.0
        %6702 = vmatprep.subr.mxu0 0.0
        %6703 = vmatpush1.msra.mxu0 0.0
        %6704 = vmatprep.subr.mxu0 0.0
        %6705 = vmatpush1.msra.mxu0 0.0
        %6706 = vmatprep.subr.mxu0 0.0
        %6707 = vmatpush1.msra.mxu0 0.0
        %6708 = vmatprep.subr.mxu0 0.0
        %6709 = vmatpush1.msra.mxu0 0.0
        %6710 = vmatprep.mubr.f32.mxu0 0.0
        %6711 = vmatmul.mubr.f32.gmra.mrb[0].mxu0 %v6599
        %v6712 = vpop.f32.mrb[0].mxu0
        %v6713 = vadd.f32 0.0, %v6712
        %v6714 = vpop.f32.mrb[0].mxu0
        %v6715 = vadd.f32 0.0, %v6714
        %6716 = vmatprep.mubr.f32.mxu0 0.0
        %6717 = vmatmul.mubr.f32.gmra.mrb[0].mxu0 %v6602
        %v6718 = vpop.f32.mrb[0].mxu0
        %v6719 = vadd.f32 0.0, %v6718
        %v6720 = vpop.f32.mrb[0].mxu0
        %v6721 = vadd.f32 0.0, %v6720
        %6722 = vmatprep.mubr.f32.mxu0 0.0
        %6723 = vmatmul.mubr.f32.gmra.mrb[0].mxu0 %v6605
        %v6724 = vpop.f32.mrb[0].mxu0
        %v6725 = vadd.f32 0.0, %v6724
        %v6726 = vpop.f32.mrb[0].mxu0
        %v6727 = vadd.f32 0.0, %v6726
        %6728 = vmatprep.mubr.f32.mxu0 0.0
        %6729 = vmatmul.mubr.f32.gmra.mrb[0].mxu0 %v6608
        %v6730 = vpop.f32.mrb[0].mxu0
        %v6731 = vadd.f32 0.0, %v6730
        %v6732 = vpop.f32.mrb[0].mxu0
        %v6733 = vadd.f32 0.0, %v6732
        %6734 = vmatprep.mubr.f32.mxu0 0.0
        %6735 = vmatmul.mubr.f32.gmra.mrb[0].mxu0 %v6611
        %v6736 = vpop.f32.mrb[0].mxu0
        %v6737 = vadd.f32 0.0, %v6736
        %v6738 = vpop.f32.mrb[0].mxu0
        %v6739 = vadd.f32 0.0, %v6738
        %6740 = vmatprep.mubr.f32.mxu0 0.0
        %6741 = vmatmul.mubr.f32.gmra.mrb[0].mxu0 %v6614
        %v6742 = vpop.f32.mrb[0].mxu0
        %v6743 = vadd.f32 0.0, %v6742
        %v6744 = vpop.f32.mrb[0].mxu0
        %v6745 = vadd.f32 0.0, %v6744
        %6746 = vmatprep.mubr.f32.mxu0 0.0
        %6747 = vmatmul.mubr.f32.gmra.mrb[0].mxu0 %v6617
        %v6748 = vpop.f32.mrb[0].mxu0
        %v6749 = vadd.f32 0.0, %v6748
        %v6750 = vpop.f32.mrb[0].mxu0
        %v6751 = vadd.f32 0.0, %v6750
        %6752 = vmatprep.mubr.f32.mxu0 0.0
        %6753 = vmatmul.mubr.f32.gmra.mrb[0].mxu0 %v6620
        %v6754 = vpop.f32.mrb[0].mxu0
        %v6755 = vadd.f32 0.0, %v6754
        %v6756 = vpop.f32.mrb[0].mxu0
        %v6757 = vadd.f32 0.0, %v6756
        %6758 = vmatprep.mubr.f32.mxu0 0.0
        %6759 = vmatmul.mubr.f32.gmra.mrb[0].mxu0 %v6623
        %v6760 = vpop.f32.mrb[0].mxu0
        %v6761 = vadd.f32 0.0, %v6760
        %v6762 = vpop.f32.mrb[0].mxu0
        %v6763 = vadd.f32 0.0, %v6762
        %6764 = vmatprep.mubr.f32.mxu0 0.0
        %6765 = vmatmul.mubr.f32.gmra.mrb[0].mxu0 %v6626
        %v6766 = vpop.f32.mrb[0].mxu0
        %v6767 = vadd.f32 0.0, %v6766
        %v6768 = vpop.f32.mrb[0].mxu0
        %v6769 = vadd.f32 0.0, %v6768
        %6770 = vmatprep.mubr.f32.mxu0 0.0
        %6771 = vmatmul.mubr.f32.gmra.mrb[0].mxu0 %v6629
        %v6772 = vpop.f32.mrb[0].mxu0
        %v6773 = vadd.f32 0.0, %v6772
        %v6774 = vpop.f32.mrb[0].mxu0
        %v6775 = vadd.f32 0.0, %v6774
        %6776 = vmatprep.mubr.f32.mxu0 0.0
        %6777 = vmatmul.mubr.f32.gmra.mrb[0].mxu0 %v6632
        %v6778 = vpop.f32.mrb[0].mxu0
        %v6779 = vadd.f32 0.0, %v6778
        %v6780 = vpop.f32.mrb[0].mxu0
        %v6781 = vadd.f32 0.0, %v6780
        %6782 = vmatprep.mubr.f32.mxu0 0.0
        %6783 = vmatmul.mubr.f32.gmra.mrb[0].mxu0 %v6635
        %v6784 = vpop.f32.mrb[0].mxu0
        %v6785 = vadd.f32 0.0, %v6784
        %v6786 = vpop.f32.mrb[0].mxu0
        %v6787 = vadd.f32 0.0, %v6786
        %6788 = vmatprep.mubr.f32.mxu0 0.0
        %6789 = vmatmul.mubr.f32.gmra.mrb[0].mxu0 %v6638
        %v6790 = vpop.f32.mrb[0].mxu0
        %v6791 = vadd.f32 0.0, %v6790
        %v6792 = vpop.f32.mrb[0].mxu0
        %v6793 = vadd.f32 0.0, %v6792
        %6794 = vmatprep.mubr.f32.mxu0 0.0
        %6795 = vmatmul.mubr.f32.gmra.mrb[0].mxu0 %v6641
        %v6796 = vpop.f32.mrb[0].mxu0
        %v6797 = vadd.f32 0.0, %v6796
        %v6798 = vpop.f32.mrb[0].mxu0
        %v6799 = vadd.f32 0.0, %v6798
        %6800 = vmatprep.mubr.f32.mxu0 0.0
        %6801 = vmatmul.mubr.f32.gmra.mrb[0].mxu0 %v6644
        %v6802 = vpop.f32.mrb[0].mxu0
        %v6803 = vadd.f32 0.0, %v6802
        %v6804 = vpop.f32.mrb[0].mxu0
        %v6805 = vadd.f32 0.0, %v6804
        %6806 = vdwg.mxu0
        %v6807 = vld [vmem:[%s2] sm:$0xff]
        %6809 = vset.pattern.permute.xlu0 0
        %6810 = vperm.xlu0 %6809, %v6807
        %v6811 = vpop.permute.xlu0 %6810
        %v6813 = vmul.f32 %v6811, %v6580
        %v6814 = vmul.f32 %v6811, %v6581
        %v6815 = vrot.slane %v6813, 4
        %v6816 = vadd.f32 %v6813, %v6815
        %v6817 = vrot.slane %v6816, 2
        %v6818 = vadd.f32 %v6816, %v6817
        %v6819 = vrot.slane %v6818, 1
        %v6820 = vadd.f32 %v6818, %v6819
        %v6821 = vrot.slane %v6814, 4
        %v6822 = vadd.f32 %v6814, %v6821
        %v6823 = vrot.slane %v6822, 2
        %v6824 = vadd.f32 %v6822, %v6823
        %v6825 = vrot.slane %v6824, 1
        %v6826 = vadd.f32 %v6824, %v6825
        %v6827 = vld [vmem:[%s3] sm:$0xff]
        %v6829 = vsel %vm326, %v6827, 0
        %6831 = vmatprep.subr.mxu0 %v6581
        %6832 = vmatpush1.msra.mxu0 %v6580
        %6833 = vmatprep.subr.mxu0 0.0
        %6834 = vmatpush1.msra.mxu0 0.0
        %6835 = vmatprep.subr.mxu0 0.0
        %6836 = vmatpush1.msra.mxu0 0.0
        %6837 = vmatprep.subr.mxu0 0.0
        %6838 = vmatpush1.msra.mxu0 0.0
        %6839 = vmatprep.subr.mxu0 0.0
        %6840 = vmatpush1.msra.mxu0 0.0
        %6841 = vmatprep.subr.mxu0 0.0
        %6842 = vmatpush1.msra.mxu0 0.0
        %6843 = vmatprep.subr.mxu0 0.0
        %6844 = vmatpush1.msra.mxu0 0.0
        %6845 = vmatprep.subr.mxu0 0.0
        %6846 = vmatpush1.msra.mxu0 0.0
        %6847 = vmatprep.subr.mxu0 0.0
        %6848 = vmatpush1.msra.mxu0 0.0
        %6849 = vmatprep.subr.mxu0 0.0
        %6850 = vmatpush1.msra.mxu0 0.0
        %6851 = vmatprep.subr.mxu0 0.0
        %6852 = vmatpush1.msra.mxu0 0.0
        %6853 = vmatprep.subr.mxu0 0.0
        %6854 = vmatpush1.msra.mxu0 0.0
        %6855 = vmatprep.subr.mxu0 0.0
        %6856 = vmatpush1.msra.mxu0 0.0
        %6857 = vmatprep.subr.mxu0 0.0
        %6858 = vmatpush1.msra.mxu0 0.0
        %6859 = vmatprep.subr.mxu0 0.0
        %6860 = vmatpush1.msra.mxu0 0.0
        %6861 = vmatprep.subr.mxu0 0.0
        %6862 = vmatpush1.msra.mxu0 0.0
        %6863 = vmatprep.subr.mxu0 0.0
        %6864 = vmatpush1.msra.mxu0 0.0
        %6865 = vmatprep.subr.mxu0 0.0
        %6866 = vmatpush1.msra.mxu0 0.0
        %6867 = vmatprep.subr.mxu0 0.0
        %6868 = vmatpush1.msra.mxu0 0.0
        %6869 = vmatprep.subr.mxu0 0.0
        %6870 = vmatpush1.msra.mxu0 0.0
        %6871 = vmatprep.subr.mxu0 0.0
        %6872 = vmatpush1.msra.mxu0 0.0
        %6873 = vmatprep.subr.mxu0 0.0
        %6874 = vmatpush1.msra.mxu0 0.0
        %6875 = vmatprep.subr.mxu0 0.0
        %6876 = vmatpush1.msra.mxu0 0.0
        %6877 = vmatprep.subr.mxu0 0.0
        %6878 = vmatpush1.msra.mxu0 0.0
        %6879 = vmatprep.subr.mxu0 0.0
        %6880 = vmatpush1.msra.mxu0 0.0
        %6881 = vmatprep.subr.mxu0 0.0
        %6882 = vmatpush1.msra.mxu0 0.0
        %6883 = vmatprep.subr.mxu0 0.0
        %6884 = vmatpush1.msra.mxu0 0.0
        %6885 = vmatprep.subr.mxu0 0.0
        %6886 = vmatpush1.msra.mxu0 0.0
        %6887 = vmatprep.subr.mxu0 0.0
        %6888 = vmatpush1.msra.mxu0 0.0
        %6889 = vmatprep.subr.mxu0 0.0
        %6890 = vmatpush1.msra.mxu0 0.0
        %6891 = vmatprep.subr.mxu0 0.0
        %6892 = vmatpush1.msra.mxu0 0.0
        %6893 = vmatprep.subr.mxu0 0.0
        %6894 = vmatpush1.msra.mxu0 0.0
        %6895 = vmatprep.mubr.f32.mxu0 0.0
        %6896 = vmatmul.mubr.f32.gmra.mrb[0].mxu0 %v6829
        %v6897 = vpop.f32.mrb[0].mxu0
        %v6898 = vadd.f32 0.0, %v6897
        %v6899 = vpop.f32.mrb[0].mxu0
        %v6900 = vadd.f32 0.0, %v6899
        %6901 = vdwg.mxu0
        %v6902 = vmul.f32 %v6580, %v6898
        %v6903 = vmul.f32 %v6581, %v6900
        %v6904 = vrot.slane %v6902, 4
        %v6905 = vadd.f32 %v6902, %v6904
        %v6906 = vrot.slane %v6905, 2
        %v6907 = vadd.f32 %v6905, %v6906
        %v6908 = vrot.slane %v6907, 1
        %v6909 = vadd.f32 %v6907, %v6908
        %v6910 = vrot.slane %v6903, 4
        %v6911 = vadd.f32 %v6903, %v6910
        %v6912 = vrot.slane %v6911, 2
        %v6913 = vadd.f32 %v6911, %v6912
        %v6914 = vrot.slane %v6913, 1
        %v6915 = vadd.f32 %v6913, %v6914
        %v6916 = vmul.f32 %v6820, %v6820
        %v6917 = vmul.f32 %v6826, %v6826
        %v6918 = vsub.f32 %v6909, %v6916
        %v6919 = vsub.f32 %v6915, %v6917
        %v6920 = vmax.f32 %v6918, 0.0
        %v6921 = vmax.f32 %v6919, 0.0
        %v6922 = vld [vmem:[%s300 + $0x16] sm:$0x3]
        %v6923 = vadd.f32 %v6920, 1e-05
        %v6924 = vadd.f32 %v6921, 1e-05
        %v6925 = vrsqrt.pop %v6923
        %v6926 = vrsqrt.pop %v6924
        %v6929 = vcombine.low %v6925, %v6926
        %v6931 = vunpack.c.l.s4 1966171168
        %v6932 = vunpack.c.0.s8 %v6931
        %v6933 = vlaneseq
        %v6934 = vshrl.u32 %v6933, 7
        %v6935 = vsub.s32 %v6932, %v6934
        %v6936 = vrot.slane %v6929, %v6935
        %v6938 = vunpack.c.l.s4 1966171168
        %v6939 = vunpack.c.0.s8 %v6938
        %v6940 = vlaneseq
        %v6941 = vshrl.u32 %v6940, 7
        %v6942 = vsub.s32 %v6939, %v6941
        %v6943 = vrot.slane %v6936, %v6942
        %v6945 = vmul.f32 %v6922, %v6943
        %v6946 = vld [vmem:[%s305 + $0x16] sm:$0x3]
        %v6948 = vlaneseq
        %v6949 = vshrl.u32 %v6948, 7
        %v6950 = vsub.s32 0, %v6949
        %v6951 = vrot.slane %v6945, %v6950
        %v6952 = vlaneseq
        %v6953 = vshrl.u32 %v6952, 7
        %v6954 = vsub.s32 1, %v6953
        %v6955 = vrot.slane %v6945, %v6954
        %v6958 = vmul.f32 %v6820, %v6951
        %v6959 = vmul.f32 %v6826, %v6955
        %v6962 = vcombine.low %v6958, %v6959
        %v6964 = vunpack.c.l.s4 1966171168
        %v6965 = vunpack.c.0.s8 %v6964
        %v6966 = vlaneseq
        %v6967 = vshrl.u32 %v6966, 7
        %v6968 = vsub.s32 %v6965, %v6967
        %v6969 = vrot.slane %v6962, %v6968
        %v6971 = vunpack.c.l.s4 1966171168
        %v6972 = vunpack.c.0.s8 %v6971
        %v6973 = vlaneseq
        %v6974 = vshrl.u32 %v6973, 7
        %v6975 = vsub.s32 %v6972, %v6974
        %v6976 = vrot.slane %v6969, %v6975
        %v6978 = vsub.f32 %v6946, %v6976
        %v6979 = vmax.f32 %v6713, %v6719
        %v6980 = vmax.f32 %v6979, %v6725
        %v6981 = vmax.f32 %v6980, %v6731
        %v6982 = vmax.f32 %v6981, %v6737
        %v6983 = vmax.f32 %v6982, %v6743
        %v6984 = vmax.f32 %v6983, %v6749
        %v6985 = vmax.f32 %v6984, %v6755
        %v6986 = vrot.slane %v6985, 4
        %v6987 = vmax.f32 %v6985, %v6986
        %v6988 = vrot.slane %v6987, 2
        %v6989 = vmax.f32 %v6987, %v6988
        %v6990 = vrot.slane %v6989, 1
        %v6991 = vmax.f32 %v6989, %v6990
        %v6992 = vmax.f32 %v6715, %v6721
        %v6993 = vmax.f32 %v6992, %v6727
        %v6994 = vmax.f32 %v6993, %v6733
        %v6995 = vmax.f32 %v6994, %v6739
        %v6996 = vmax.f32 %v6995, %v6745
        %v6997 = vmax.f32 %v6996, %v6751
        %v6998 = vmax.f32 %v6997, %v6757
        %v6999 = vrot.slane %v6998, 4
        %v7000 = vmax.f32 %v6998, %v6999
        %v7001 = vrot.slane %v7000, 2
        %v7002 = vmax.f32 %v7000, %v7001
        %v7003 = vrot.slane %v7002, 1
        %v7004 = vmax.f32 %v7002, %v7003
        %v7005 = vmax.f32 %v6761, %v6767
        %v7006 = vmax.f32 %v7005, %v6773
        %v7007 = vmax.f32 %v7006, %v6779
        %v7008 = vmax.f32 %v7007, %v6785
        %v7009 = vmax.f32 %v7008, %v6791
        %v7010 = vmax.f32 %v7009, %v6797
        %v7011 = vmax.f32 %v7010, %v6803
        %v7012 = vrot.slane %v7011, 4
        %v7013 = vmax.f32 %v7011, %v7012
        %v7014 = vrot.slane %v7013, 2
        %v7015 = vmax.f32 %v7013, %v7014
        %v7016 = vrot.slane %v7015, 1
        %v7017 = vmax.f32 %v7015, %v7016
        %v7018 = vmax.f32 %v6763, %v6769
        %v7019 = vmax.f32 %v7018, %v6775
        %v7020 = vmax.f32 %v7019, %v6781
        %v7021 = vmax.f32 %v7020, %v6787
        %v7022 = vmax.f32 %v7021, %v6793
        %v7023 = vmax.f32 %v7022, %v6799
        %v7024 = vmax.f32 %v7023, %v6805
        %v7025 = vrot.slane %v7024, 4
        %v7026 = vmax.f32 %v7024, %v7025
        %v7027 = vrot.slane %v7026, 2
        %v7028 = vmax.f32 %v7026, %v7027
        %v7029 = vrot.slane %v7028, 1
        %v7030 = vmax.f32 %v7028, %v7029
        %v7031 = vmin.f32 %v6713, %v6719
        %v7032 = vmin.f32 %v7031, %v6725
        %v7033 = vmin.f32 %v7032, %v6731
        %v7034 = vmin.f32 %v7033, %v6737
        %v7035 = vmin.f32 %v7034, %v6743
        %v7036 = vmin.f32 %v7035, %v6749
        %v7037 = vmin.f32 %v7036, %v6755
        %v7038 = vrot.slane %v7037, 4
        %v7039 = vmin.f32 %v7037, %v7038
        %v7040 = vrot.slane %v7039, 2
        %v7041 = vmin.f32 %v7039, %v7040
        %v7042 = vrot.slane %v7041, 1
        %v7043 = vmin.f32 %v7041, %v7042
        %v7044 = vmin.f32 %v6715, %v6721
        %v7045 = vmin.f32 %v7044, %v6727
        %v7046 = vmin.f32 %v7045, %v6733
        %v7047 = vmin.f32 %v7046, %v6739
        %v7048 = vmin.f32 %v7047, %v6745
        %v7049 = vmin.f32 %v7048, %v6751
        %v7050 = vmin.f32 %v7049, %v6757
        %v7051 = vrot.slane %v7050, 4
        %v7052 = vmin.f32 %v7050, %v7051
        %v7053 = vrot.slane %v7052, 2
        %v7054 = vmin.f32 %v7052, %v7053
        %v7055 = vrot.slane %v7054, 1
        %v7056 = vmin.f32 %v7054, %v7055
        %v7057 = vmin.f32 %v6761, %v6767
        %v7058 = vmin.f32 %v7057, %v6773
        %v7059 = vmin.f32 %v7058, %v6779
        %v7060 = vmin.f32 %v7059, %v6785
        %v7061 = vmin.f32 %v7060, %v6791
        %v7062 = vmin.f32 %v7061, %v6797
        %v7063 = vmin.f32 %v7062, %v6803
        %v7064 = vrot.slane %v7063, 4
        %v7065 = vmin.f32 %v7063, %v7064
        %v7066 = vrot.slane %v7065, 2
        %v7067 = vmin.f32 %v7065, %v7066
        %v7068 = vrot.slane %v7067, 1
        %v7069 = vmin.f32 %v7067, %v7068
        %v7070 = vmin.f32 %v6763, %v6769
        %v7071 = vmin.f32 %v7070, %v6775
        %v7072 = vmin.f32 %v7071, %v6781
        %v7073 = vmin.f32 %v7072, %v6787
        %v7074 = vmin.f32 %v7073, %v6793
        %v7075 = vmin.f32 %v7074, %v6799
        %v7076 = vmin.f32 %v7075, %v6805
        %v7077 = vrot.slane %v7076, 4
        %v7078 = vmin.f32 %v7076, %v7077
        %v7079 = vrot.slane %v7078, 2
        %v7080 = vmin.f32 %v7078, %v7079
        %v7081 = vrot.slane %v7080, 1
        %v7082 = vmin.f32 %v7080, %v7081
        %vm7083 = vcmp.ge.f32.partialorder %v6945, 0.0
        %v7084 = vmul.f32 %v6991, %v6951
        %v7085 = vmul.f32 %v7004, %v6955
        %v7086 = vmul.f32 %v7017, %v6951
        %v7087 = vmul.f32 %v7030, %v6955
        %v7088 = vmul.f32 %v7043, %v6951
        %v7089 = vmul.f32 %v7056, %v6955
        %v7090 = vmul.f32 %v7069, %v6951
        %v7091 = vmul.f32 %v7082, %v6955
        %v7092 = vsel %vm7083, 1, 0
        %v7093 = vlaneseq
        %v7094 = vshrl.u32 %v7093, 7
        %v7095 = vsub.s32 0, %v7094
        %v7096 = vrot.slane %v7092, %v7095
        %v7097 = vlaneseq
        %v7098 = vshrl.u32 %v7097, 7
        %v7099 = vsub.s32 1, %v7098
        %v7100 = vrot.slane %v7092, %v7099
        %vm7101 = vcmp.eq.s32.totalorder %v7096, 1
        %vm7102 = vcmp.eq.s32.totalorder %v7100, 1
        %v7107 = vrot.slane %v7086, 7
        %v7108 = vsel %vm837, %v7107, %v7084
        %v7109 = vrot.slane %v7087, 7
        %v7110 = vsel %vm837, %v7109, %v7085
        %v7117 = vrot.slane %v7090, 7
        %v7118 = vsel %vm837, %v7117, %v7088
        %v7119 = vrot.slane %v7091, 7
        %v7120 = vsel %vm837, %v7119, %v7089
        %v7123 = vsel %vm7101, %v7108, %v7118
        %v7124 = vsel %vm7102, %v7110, %v7120
        %v7126 = vlaneseq
        %v7127 = vshrl.u32 %v7126, 7
        %v7128 = vsub.s32 0, %v7127
        %v7129 = vrot.slane %v6978, %v7128
        %v7130 = vlaneseq
        %v7131 = vshrl.u32 %v7130, 7
        %v7132 = vsub.s32 1, %v7131
        %v7133 = vrot.slane %v6978, %v7132
        %v7136 = vadd.f32 %v7123, %v7129
        %v7137 = vadd.f32 %v7124, %v7133
        %v7140 = vcombine.low %v7136, %v7137
        %v7142 = vunpack.c.l.s4 1983009808
        %v7143 = vunpack.c.0.s8 %v7142
        %v7144 = vlaneseq
        %v7145 = vshrl.u32 %v7144, 7
        %v7146 = vsub.s32 %v7143, %v7145
        %v7147 = vrot.slane %v7140, %v7146
        %7149 = vst [vmem:[%s295 + $0x2c] sm:$0xf] %v7147
        %v7150 = vld [vmem:[%s259 + $0xc0] sm:$0xff]
        %v7151 = vld [vmem:[%s259 + $0xc8] sm:$0xff]
        %v7152 = vld [vmem:[%s0] sm:$0xff]
        %v7153 = vld [vmem:[%s0 + $0x8] sm:$0xff]
        %v7154 = vld [vmem:[%s0 + $0x10] sm:$0xff]
        %v7155 = vld [vmem:[%s0 + $0x18] sm:$0xff]
        %v7156 = vld [vmem:[%s0 + $0x20] sm:$0xff]
        %v7157 = vld [vmem:[%s0 + $0x28] sm:$0xff]
        %v7158 = vld [vmem:[%s0 + $0x30] sm:$0xff]
        %v7159 = vld [vmem:[%s0 + $0x38] sm:$0xff]
        %v7160 = vld [vmem:[%s0 + $0x40] sm:$0xff]
        %v7161 = vld [vmem:[%s0 + $0x48] sm:$0xff]
        %v7162 = vld [vmem:[%s0 + $0x50] sm:$0xff]
        %v7163 = vld [vmem:[%s0 + $0x58] sm:$0xff]
        %v7164 = vld [vmem:[%s0 + $0x60] sm:$0xff]
        %v7165 = vld [vmem:[%s0 + $0x68] sm:$0xff]
        %v7166 = vld [vmem:[%s0 + $0x70] sm:$0xff]
        %v7167 = vld [vmem:[%s0 + $0x78] sm:$0xff]
        %v7169 = vsel %vm326, %v7152, 0
        %v7172 = vsel %vm326, %v7153, 0
        %v7175 = vsel %vm326, %v7154, 0
        %v7178 = vsel %vm326, %v7155, 0
        %v7181 = vsel %vm326, %v7156, 0
        %v7184 = vsel %vm326, %v7157, 0
        %v7187 = vsel %vm326, %v7158, 0
        %v7190 = vsel %vm326, %v7159, 0
        %v7193 = vsel %vm326, %v7160, 0
        %v7196 = vsel %vm326, %v7161, 0
        %v7199 = vsel %vm326, %v7162, 0
        %v7202 = vsel %vm326, %v7163, 0
        %v7205 = vsel %vm326, %v7164, 0
        %v7208 = vsel %vm326, %v7165, 0
        %v7211 = vsel %vm326, %v7166, 0
        %v7214 = vsel %vm326, %v7167, 0
        %7216 = vmatprep.subr.mxu0 %v7151
        %7217 = vmatpush1.msra.mxu0 %v7150
        %7218 = vmatprep.subr.mxu0 0.0
        %7219 = vmatpush1.msra.mxu0 0.0
        %7220 = vmatprep.subr.mxu0 0.0
        %7221 = vmatpush1.msra.mxu0 0.0
        %7222 = vmatprep.subr.mxu0 0.0
        %7223 = vmatpush1.msra.mxu0 0.0
        %7224 = vmatprep.subr.mxu0 0.0
        %7225 = vmatpush1.msra.mxu0 0.0
        %7226 = vmatprep.subr.mxu0 0.0
        %7227 = vmatpush1.msra.mxu0 0.0
        %7228 = vmatprep.subr.mxu0 0.0
        %7229 = vmatpush1.msra.mxu0 0.0
        %7230 = vmatprep.subr.mxu0 0.0
        %7231 = vmatpush1.msra.mxu0 0.0
        %7232 = vmatprep.subr.mxu0 0.0
        %7233 = vmatpush1.msra.mxu0 0.0
        %7234 = vmatprep.subr.mxu0 0.0
        %7235 = vmatpush1.msra.mxu0 0.0
        %7236 = vmatprep.subr.mxu0 0.0
        %7237 = vmatpush1.msra.mxu0 0.0
        %7238 = vmatprep.subr.mxu0 0.0
        %7239 = vmatpush1.msra.mxu0 0.0
        %7240 = vmatprep.subr.mxu0 0.0
        %7241 = vmatpush1.msra.mxu0 0.0
        %7242 = vmatprep.subr.mxu0 0.0
        %7243 = vmatpush1.msra.mxu0 0.0
        %7244 = vmatprep.subr.mxu0 0.0
        %7245 = vmatpush1.msra.mxu0 0.0
        %7246 = vmatprep.subr.mxu0 0.0
        %7247 = vmatpush1.msra.mxu0 0.0
        %7248 = vmatprep.subr.mxu0 0.0
        %7249 = vmatpush1.msra.mxu0 0.0
        %7250 = vmatprep.subr.mxu0 0.0
        %7251 = vmatpush1.msra.mxu0 0.0
        %7252 = vmatprep.subr.mxu0 0.0
        %7253 = vmatpush1.msra.mxu0 0.0
        %7254 = vmatprep.subr.mxu0 0.0
        %7255 = vmatpush1.msra.mxu0 0.0
        %7256 = vmatprep.subr.mxu0 0.0
        %7257 = vmatpush1.msra.mxu0 0.0
        %7258 = vmatprep.subr.mxu0 0.0
        %7259 = vmatpush1.msra.mxu0 0.0
        %7260 = vmatprep.subr.mxu0 0.0
        %7261 = vmatpush1.msra.mxu0 0.0
        %7262 = vmatprep.subr.mxu0 0.0
        %7263 = vmatpush1.msra.mxu0 0.0
        %7264 = vmatprep.subr.mxu0 0.0
        %7265 = vmatpush1.msra.mxu0 0.0
        %7266 = vmatprep.subr.mxu0 0.0
        %7267 = vmatpush1.msra.mxu0 0.0
        %7268 = vmatprep.subr.mxu0 0.0
        %7269 = vmatpush1.msra.mxu0 0.0
        %7270 = vmatprep.subr.mxu0 0.0
        %7271 = vmatpush1.msra.mxu0 0.0
        %7272 = vmatprep.subr.mxu0 0.0
        %7273 = vmatpush1.msra.mxu0 0.0
        %7274 = vmatprep.subr.mxu0 0.0
        %7275 = vmatpush1.msra.mxu0 0.0
        %7276 = vmatprep.subr.mxu0 0.0
        %7277 = vmatpush1.msra.mxu0 0.0
        %7278 = vmatprep.subr.mxu0 0.0
        %7279 = vmatpush1.msra.mxu0 0.0
        %7280 = vmatprep.mubr.f32.mxu0 0.0
        %7281 = vmatmul.mubr.f32.gmra.mrb[0].mxu0 %v7169
        %v7282 = vpop.f32.mrb[0].mxu0
        %v7283 = vadd.f32 0.0, %v7282
        %v7284 = vpop.f32.mrb[0].mxu0
        %v7285 = vadd.f32 0.0, %v7284
        %7286 = vmatprep.mubr.f32.mxu0 0.0
        %7287 = vmatmul.mubr.f32.gmra.mrb[0].mxu0 %v7172
        %v7288 = vpop.f32.mrb[0].mxu0
        %v7289 = vadd.f32 0.0, %v7288
        %v7290 = vpop.f32.mrb[0].mxu0
        %v7291 = vadd.f32 0.0, %v7290
        %7292 = vmatprep.mubr.f32.mxu0 0.0
        %7293 = vmatmul.mubr.f32.gmra.mrb[0].mxu0 %v7175
        %v7294 = vpop.f32.mrb[0].mxu0
        %v7295 = vadd.f32 0.0, %v7294
        %v7296 = vpop.f32.mrb[0].mxu0
        %v7297 = vadd.f32 0.0, %v7296
        %7298 = vmatprep.mubr.f32.mxu0 0.0
        %7299 = vmatmul.mubr.f32.gmra.mrb[0].mxu0 %v7178
        %v7300 = vpop.f32.mrb[0].mxu0
        %v7301 = vadd.f32 0.0, %v7300
        %v7302 = vpop.f32.mrb[0].mxu0
        %v7303 = vadd.f32 0.0, %v7302
        %7304 = vmatprep.mubr.f32.mxu0 0.0
        %7305 = vmatmul.mubr.f32.gmra.mrb[0].mxu0 %v7181
        %v7306 = vpop.f32.mrb[0].mxu0
        %v7307 = vadd.f32 0.0, %v7306
        %v7308 = vpop.f32.mrb[0].mxu0
        %v7309 = vadd.f32 0.0, %v7308
        %7310 = vmatprep.mubr.f32.mxu0 0.0
        %7311 = vmatmul.mubr.f32.gmra.mrb[0].mxu0 %v7184
        %v7312 = vpop.f32.mrb[0].mxu0
        %v7313 = vadd.f32 0.0, %v7312
        %v7314 = vpop.f32.mrb[0].mxu0
        %v7315 = vadd.f32 0.0, %v7314
        %7316 = vmatprep.mubr.f32.mxu0 0.0
        %7317 = vmatmul.mubr.f32.gmra.mrb[0].mxu0 %v7187
        %v7318 = vpop.f32.mrb[0].mxu0
        %v7319 = vadd.f32 0.0, %v7318
        %v7320 = vpop.f32.mrb[0].mxu0
        %v7321 = vadd.f32 0.0, %v7320
        %7322 = vmatprep.mubr.f32.mxu0 0.0
        %7323 = vmatmul.mubr.f32.gmra.mrb[0].mxu0 %v7190
        %v7324 = vpop.f32.mrb[0].mxu0
        %v7325 = vadd.f32 0.0, %v7324
        %v7326 = vpop.f32.mrb[0].mxu0
        %v7327 = vadd.f32 0.0, %v7326
        %7328 = vmatprep.mubr.f32.mxu0 0.0
        %7329 = vmatmul.mubr.f32.gmra.mrb[0].mxu0 %v7193
        %v7330 = vpop.f32.mrb[0].mxu0
        %v7331 = vadd.f32 0.0, %v7330
        %v7332 = vpop.f32.mrb[0].mxu0
        %v7333 = vadd.f32 0.0, %v7332
        %7334 = vmatprep.mubr.f32.mxu0 0.0
        %7335 = vmatmul.mubr.f32.gmra.mrb[0].mxu0 %v7196
        %v7336 = vpop.f32.mrb[0].mxu0
        %v7337 = vadd.f32 0.0, %v7336
        %v7338 = vpop.f32.mrb[0].mxu0
        %v7339 = vadd.f32 0.0, %v7338
        %7340 = vmatprep.mubr.f32.mxu0 0.0
        %7341 = vmatmul.mubr.f32.gmra.mrb[0].mxu0 %v7199
        %v7342 = vpop.f32.mrb[0].mxu0
        %v7343 = vadd.f32 0.0, %v7342
        %v7344 = vpop.f32.mrb[0].mxu0
        %v7345 = vadd.f32 0.0, %v7344
        %7346 = vmatprep.mubr.f32.mxu0 0.0
        %7347 = vmatmul.mubr.f32.gmra.mrb[0].mxu0 %v7202
        %v7348 = vpop.f32.mrb[0].mxu0
        %v7349 = vadd.f32 0.0, %v7348
        %v7350 = vpop.f32.mrb[0].mxu0
        %v7351 = vadd.f32 0.0, %v7350
        %7352 = vmatprep.mubr.f32.mxu0 0.0
        %7353 = vmatmul.mubr.f32.gmra.mrb[0].mxu0 %v7205
        %v7354 = vpop.f32.mrb[0].mxu0
        %v7355 = vadd.f32 0.0, %v7354
        %v7356 = vpop.f32.mrb[0].mxu0
        %v7357 = vadd.f32 0.0, %v7356
        %7358 = vmatprep.mubr.f32.mxu0 0.0
        %7359 = vmatmul.mubr.f32.gmra.mrb[0].mxu0 %v7208
        %v7360 = vpop.f32.mrb[0].mxu0
        %v7361 = vadd.f32 0.0, %v7360
        %v7362 = vpop.f32.mrb[0].mxu0
        %v7363 = vadd.f32 0.0, %v7362
        %7364 = vmatprep.mubr.f32.mxu0 0.0
        %7365 = vmatmul.mubr.f32.gmra.mrb[0].mxu0 %v7211
        %v7366 = vpop.f32.mrb[0].mxu0
        %v7367 = vadd.f32 0.0, %v7366
        %v7368 = vpop.f32.mrb[0].mxu0
        %v7369 = vadd.f32 0.0, %v7368
        %7370 = vmatprep.mubr.f32.mxu0 0.0
        %7371 = vmatmul.mubr.f32.gmra.mrb[0].mxu0 %v7214
        %v7372 = vpop.f32.mrb[0].mxu0
        %v7373 = vadd.f32 0.0, %v7372
        %v7374 = vpop.f32.mrb[0].mxu0
        %v7375 = vadd.f32 0.0, %v7374
        %7376 = vdwg.mxu0
        %v7377 = vld [vmem:[%s2] sm:$0xff]
        %7379 = vset.pattern.permute.xlu0 0
        %7380 = vperm.xlu0 %7379, %v7377
        %v7381 = vpop.permute.xlu0 %7380
        %v7383 = vmul.f32 %v7381, %v7150
        %v7384 = vmul.f32 %v7381, %v7151
        %v7385 = vrot.slane %v7383, 4
        %v7386 = vadd.f32 %v7383, %v7385
        %v7387 = vrot.slane %v7386, 2
        %v7388 = vadd.f32 %v7386, %v7387
        %v7389 = vrot.slane %v7388, 1
        %v7390 = vadd.f32 %v7388, %v7389
        %v7391 = vrot.slane %v7384, 4
        %v7392 = vadd.f32 %v7384, %v7391
        %v7393 = vrot.slane %v7392, 2
        %v7394 = vadd.f32 %v7392, %v7393
        %v7395 = vrot.slane %v7394, 1
        %v7396 = vadd.f32 %v7394, %v7395
        %v7397 = vld [vmem:[%s3] sm:$0xff]
        %v7399 = vsel %vm326, %v7397, 0
        %7401 = vmatprep.subr.mxu0 %v7151
        %7402 = vmatpush1.msra.mxu0 %v7150
        %7403 = vmatprep.subr.mxu0 0.0
        %7404 = vmatpush1.msra.mxu0 0.0
        %7405 = vmatprep.subr.mxu0 0.0
        %7406 = vmatpush1.msra.mxu0 0.0
        %7407 = vmatprep.subr.mxu0 0.0
        %7408 = vmatpush1.msra.mxu0 0.0
        %7409 = vmatprep.subr.mxu0 0.0
        %7410 = vmatpush1.msra.mxu0 0.0
        %7411 = vmatprep.subr.mxu0 0.0
        %7412 = vmatpush1.msra.mxu0 0.0
        %7413 = vmatprep.subr.mxu0 0.0
        %7414 = vmatpush1.msra.mxu0 0.0
        %7415 = vmatprep.subr.mxu0 0.0
        %7416 = vmatpush1.msra.mxu0 0.0
        %7417 = vmatprep.subr.mxu0 0.0
        %7418 = vmatpush1.msra.mxu0 0.0
        %7419 = vmatprep.subr.mxu0 0.0
        %7420 = vmatpush1.msra.mxu0 0.0
        %7421 = vmatprep.subr.mxu0 0.0
        %7422 = vmatpush1.msra.mxu0 0.0
        %7423 = vmatprep.subr.mxu0 0.0
        %7424 = vmatpush1.msra.mxu0 0.0
        %7425 = vmatprep.subr.mxu0 0.0
        %7426 = vmatpush1.msra.mxu0 0.0
        %7427 = vmatprep.subr.mxu0 0.0
        %7428 = vmatpush1.msra.mxu0 0.0
        %7429 = vmatprep.subr.mxu0 0.0
        %7430 = vmatpush1.msra.mxu0 0.0
        %7431 = vmatprep.subr.mxu0 0.0
        %7432 = vmatpush1.msra.mxu0 0.0
        %7433 = vmatprep.subr.mxu0 0.0
        %7434 = vmatpush1.msra.mxu0 0.0
        %7435 = vmatprep.subr.mxu0 0.0
        %7436 = vmatpush1.msra.mxu0 0.0
        %7437 = vmatprep.subr.mxu0 0.0
        %7438 = vmatpush1.msra.mxu0 0.0
        %7439 = vmatprep.subr.mxu0 0.0
        %7440 = vmatpush1.msra.mxu0 0.0
        %7441 = vmatprep.subr.mxu0 0.0
        %7442 = vmatpush1.msra.mxu0 0.0
        %7443 = vmatprep.subr.mxu0 0.0
        %7444 = vmatpush1.msra.mxu0 0.0
        %7445 = vmatprep.subr.mxu0 0.0
        %7446 = vmatpush1.msra.mxu0 0.0
        %7447 = vmatprep.subr.mxu0 0.0
        %7448 = vmatpush1.msra.mxu0 0.0
        %7449 = vmatprep.subr.mxu0 0.0
        %7450 = vmatpush1.msra.mxu0 0.0
        %7451 = vmatprep.subr.mxu0 0.0
        %7452 = vmatpush1.msra.mxu0 0.0
        %7453 = vmatprep.subr.mxu0 0.0
        %7454 = vmatpush1.msra.mxu0 0.0
        %7455 = vmatprep.subr.mxu0 0.0
        %7456 = vmatpush1.msra.mxu0 0.0
        %7457 = vmatprep.subr.mxu0 0.0
        %7458 = vmatpush1.msra.mxu0 0.0
        %7459 = vmatprep.subr.mxu0 0.0
        %7460 = vmatpush1.msra.mxu0 0.0
        %7461 = vmatprep.subr.mxu0 0.0
        %7462 = vmatpush1.msra.mxu0 0.0
        %7463 = vmatprep.subr.mxu0 0.0
        %7464 = vmatpush1.msra.mxu0 0.0
        %7465 = vmatprep.mubr.f32.mxu0 0.0
        %7466 = vmatmul.mubr.f32.gmra.mrb[0].mxu0 %v7399
        %v7467 = vpop.f32.mrb[0].mxu0
        %v7468 = vadd.f32 0.0, %v7467
        %v7469 = vpop.f32.mrb[0].mxu0
        %v7470 = vadd.f32 0.0, %v7469
        %7471 = vdwg.mxu0
        %v7472 = vmul.f32 %v7150, %v7468
        %v7473 = vmul.f32 %v7151, %v7470
        %v7474 = vrot.slane %v7472, 4
        %v7475 = vadd.f32 %v7472, %v7474
        %v7476 = vrot.slane %v7475, 2
        %v7477 = vadd.f32 %v7475, %v7476
        %v7478 = vrot.slane %v7477, 1
        %v7479 = vadd.f32 %v7477, %v7478
        %v7480 = vrot.slane %v7473, 4
        %v7481 = vadd.f32 %v7473, %v7480
        %v7482 = vrot.slane %v7481, 2
        %v7483 = vadd.f32 %v7481, %v7482
        %v7484 = vrot.slane %v7483, 1
        %v7485 = vadd.f32 %v7483, %v7484
        %v7486 = vmul.f32 %v7390, %v7390
        %v7487 = vmul.f32 %v7396, %v7396
        %v7488 = vsub.f32 %v7479, %v7486
        %v7489 = vsub.f32 %v7485, %v7487
        %v7490 = vmax.f32 %v7488, 0.0
        %v7491 = vmax.f32 %v7489, 0.0
        %v7492 = vld [vmem:[%s300 + $0x18] sm:$0x3]
        %v7493 = vadd.f32 %v7490, 1e-05
        %v7494 = vadd.f32 %v7491, 1e-05
        %v7495 = vrsqrt.pop %v7493
        %v7496 = vrsqrt.pop %v7494
        %v7499 = vcombine.low %v7495, %v7496
        %v7501 = vunpack.c.l.s4 1966171168
        %v7502 = vunpack.c.0.s8 %v7501
        %v7503 = vlaneseq
        %v7504 = vshrl.u32 %v7503, 7
        %v7505 = vsub.s32 %v7502, %v7504
        %v7506 = vrot.slane %v7499, %v7505
        %v7508 = vunpack.c.l.s4 1966171168
        %v7509 = vunpack.c.0.s8 %v7508
        %v7510 = vlaneseq
        %v7511 = vshrl.u32 %v7510, 7
        %v7512 = vsub.s32 %v7509, %v7511
        %v7513 = vrot.slane %v7506, %v7512
        %v7515 = vmul.f32 %v7492, %v7513
        %v7516 = vld [vmem:[%s305 + $0x18] sm:$0x3]
        %v7518 = vlaneseq
        %v7519 = vshrl.u32 %v7518, 7
        %v7520 = vsub.s32 0, %v7519
        %v7521 = vrot.slane %v7515, %v7520
        %v7522 = vlaneseq
        %v7523 = vshrl.u32 %v7522, 7
        %v7524 = vsub.s32 1, %v7523
        %v7525 = vrot.slane %v7515, %v7524
        %v7528 = vmul.f32 %v7390, %v7521
        %v7529 = vmul.f32 %v7396, %v7525
        %v7532 = vcombine.low %v7528, %v7529
        %v7534 = vunpack.c.l.s4 1966171168
        %v7535 = vunpack.c.0.s8 %v7534
        %v7536 = vlaneseq
        %v7537 = vshrl.u32 %v7536, 7
        %v7538 = vsub.s32 %v7535, %v7537
        %v7539 = vrot.slane %v7532, %v7538
        %v7541 = vunpack.c.l.s4 1966171168
        %v7542 = vunpack.c.0.s8 %v7541
        %v7543 = vlaneseq
        %v7544 = vshrl.u32 %v7543, 7
        %v7545 = vsub.s32 %v7542, %v7544
        %v7546 = vrot.slane %v7539, %v7545
        %v7548 = vsub.f32 %v7516, %v7546
        %v7549 = vmax.f32 %v7283, %v7289
        %v7550 = vmax.f32 %v7549, %v7295
        %v7551 = vmax.f32 %v7550, %v7301
        %v7552 = vmax.f32 %v7551, %v7307
        %v7553 = vmax.f32 %v7552, %v7313
        %v7554 = vmax.f32 %v7553, %v7319
        %v7555 = vmax.f32 %v7554, %v7325
        %v7556 = vrot.slane %v7555, 4
        %v7557 = vmax.f32 %v7555, %v7556
        %v7558 = vrot.slane %v7557, 2
        %v7559 = vmax.f32 %v7557, %v7558
        %v7560 = vrot.slane %v7559, 1
        %v7561 = vmax.f32 %v7559, %v7560
        %v7562 = vmax.f32 %v7285, %v7291
        %v7563 = vmax.f32 %v7562, %v7297
        %v7564 = vmax.f32 %v7563, %v7303
        %v7565 = vmax.f32 %v7564, %v7309
        %v7566 = vmax.f32 %v7565, %v7315
        %v7567 = vmax.f32 %v7566, %v7321
        %v7568 = vmax.f32 %v7567, %v7327
        %v7569 = vrot.slane %v7568, 4
        %v7570 = vmax.f32 %v7568, %v7569
        %v7571 = vrot.slane %v7570, 2
        %v7572 = vmax.f32 %v7570, %v7571
        %v7573 = vrot.slane %v7572, 1
        %v7574 = vmax.f32 %v7572, %v7573
        %v7575 = vmax.f32 %v7331, %v7337
        %v7576 = vmax.f32 %v7575, %v7343
        %v7577 = vmax.f32 %v7576, %v7349
        %v7578 = vmax.f32 %v7577, %v7355
        %v7579 = vmax.f32 %v7578, %v7361
        %v7580 = vmax.f32 %v7579, %v7367
        %v7581 = vmax.f32 %v7580, %v7373
        %v7582 = vrot.slane %v7581, 4
        %v7583 = vmax.f32 %v7581, %v7582
        %v7584 = vrot.slane %v7583, 2
        %v7585 = vmax.f32 %v7583, %v7584
        %v7586 = vrot.slane %v7585, 1
        %v7587 = vmax.f32 %v7585, %v7586
        %v7588 = vmax.f32 %v7333, %v7339
        %v7589 = vmax.f32 %v7588, %v7345
        %v7590 = vmax.f32 %v7589, %v7351
        %v7591 = vmax.f32 %v7590, %v7357
        %v7592 = vmax.f32 %v7591, %v7363
        %v7593 = vmax.f32 %v7592, %v7369
        %v7594 = vmax.f32 %v7593, %v7375
        %v7595 = vrot.slane %v7594, 4
        %v7596 = vmax.f32 %v7594, %v7595
        %v7597 = vrot.slane %v7596, 2
        %v7598 = vmax.f32 %v7596, %v7597
        %v7599 = vrot.slane %v7598, 1
        %v7600 = vmax.f32 %v7598, %v7599
        %v7601 = vmin.f32 %v7283, %v7289
        %v7602 = vmin.f32 %v7601, %v7295
        %v7603 = vmin.f32 %v7602, %v7301
        %v7604 = vmin.f32 %v7603, %v7307
        %v7605 = vmin.f32 %v7604, %v7313
        %v7606 = vmin.f32 %v7605, %v7319
        %v7607 = vmin.f32 %v7606, %v7325
        %v7608 = vrot.slane %v7607, 4
        %v7609 = vmin.f32 %v7607, %v7608
        %v7610 = vrot.slane %v7609, 2
        %v7611 = vmin.f32 %v7609, %v7610
        %v7612 = vrot.slane %v7611, 1
        %v7613 = vmin.f32 %v7611, %v7612
        %v7614 = vmin.f32 %v7285, %v7291
        %v7615 = vmin.f32 %v7614, %v7297
        %v7616 = vmin.f32 %v7615, %v7303
        %v7617 = vmin.f32 %v7616, %v7309
        %v7618 = vmin.f32 %v7617, %v7315
        %v7619 = vmin.f32 %v7618, %v7321
        %v7620 = vmin.f32 %v7619, %v7327
        %v7621 = vrot.slane %v7620, 4
        %v7622 = vmin.f32 %v7620, %v7621
        %v7623 = vrot.slane %v7622, 2
        %v7624 = vmin.f32 %v7622, %v7623
        %v7625 = vrot.slane %v7624, 1
        %v7626 = vmin.f32 %v7624, %v7625
        %v7627 = vmin.f32 %v7331, %v7337
        %v7628 = vmin.f32 %v7627, %v7343
        %v7629 = vmin.f32 %v7628, %v7349
        %v7630 = vmin.f32 %v7629, %v7355
        %v7631 = vmin.f32 %v7630, %v7361
        %v7632 = vmin.f32 %v7631, %v7367
        %v7633 = vmin.f32 %v7632, %v7373
        %v7634 = vrot.slane %v7633, 4
        %v7635 = vmin.f32 %v7633, %v7634
        %v7636 = vrot.slane %v7635, 2
        %v7637 = vmin.f32 %v7635, %v7636
        %v7638 = vrot.slane %v7637, 1
        %v7639 = vmin.f32 %v7637, %v7638
        %v7640 = vmin.f32 %v7333, %v7339
        %v7641 = vmin.f32 %v7640, %v7345
        %v7642 = vmin.f32 %v7641, %v7351
        %v7643 = vmin.f32 %v7642, %v7357
        %v7644 = vmin.f32 %v7643, %v7363
        %v7645 = vmin.f32 %v7644, %v7369
        %v7646 = vmin.f32 %v7645, %v7375
        %v7647 = vrot.slane %v7646, 4
        %v7648 = vmin.f32 %v7646, %v7647
        %v7649 = vrot.slane %v7648, 2
        %v7650 = vmin.f32 %v7648, %v7649
        %v7651 = vrot.slane %v7650, 1
        %v7652 = vmin.f32 %v7650, %v7651
        %vm7653 = vcmp.ge.f32.partialorder %v7515, 0.0
        %v7654 = vmul.f32 %v7561, %v7521
        %v7655 = vmul.f32 %v7574, %v7525
        %v7656 = vmul.f32 %v7587, %v7521
        %v7657 = vmul.f32 %v7600, %v7525
        %v7658 = vmul.f32 %v7613, %v7521
        %v7659 = vmul.f32 %v7626, %v7525
        %v7660 = vmul.f32 %v7639, %v7521
        %v7661 = vmul.f32 %v7652, %v7525
        %v7662 = vsel %vm7653, 1, 0
        %v7663 = vlaneseq
        %v7664 = vshrl.u32 %v7663, 7
        %v7665 = vsub.s32 0, %v7664
        %v7666 = vrot.slane %v7662, %v7665
        %v7667 = vlaneseq
        %v7668 = vshrl.u32 %v7667, 7
        %v7669 = vsub.s32 1, %v7668
        %v7670 = vrot.slane %v7662, %v7669
        %vm7671 = vcmp.eq.s32.totalorder %v7666, 1
        %vm7672 = vcmp.eq.s32.totalorder %v7670, 1
        %v7677 = vrot.slane %v7656, 7
        %v7678 = vsel %vm837, %v7677, %v7654
        %v7679 = vrot.slane %v7657, 7
        %v7680 = vsel %vm837, %v7679, %v7655
        %v7687 = vrot.slane %v7660, 7
        %v7688 = vsel %vm837, %v7687, %v7658
        %v7689 = vrot.slane %v7661, 7
        %v7690 = vsel %vm837, %v7689, %v7659
        %v7693 = vsel %vm7671, %v7678, %v7688
        %v7694 = vsel %vm7672, %v7680, %v7690
        %v7696 = vlaneseq
        %v7697 = vshrl.u32 %v7696, 7
        %v7698 = vsub.s32 0, %v7697
        %v7699 = vrot.slane %v7548, %v7698
        %v7700 = vlaneseq
        %v7701 = vshrl.u32 %v7700, 7
        %v7702 = vsub.s32 1, %v7701
        %v7703 = vrot.slane %v7548, %v7702
        %v7706 = vadd.f32 %v7693, %v7699
        %v7707 = vadd.f32 %v7694, %v7703
        %v7710 = vcombine.low %v7706, %v7707
        %v7712 = vunpack.c.l.s4 1983009808
        %v7713 = vunpack.c.0.s8 %v7712
        %v7714 = vlaneseq
        %v7715 = vshrl.u32 %v7714, 7
        %v7716 = vsub.s32 %v7713, %v7715
        %v7717 = vrot.slane %v7710, %v7716
        %7719 = vst [vmem:[%s295 + $0x30] sm:$0xf] %v7717
        %v7720 = vld [vmem:[%s259 + $0xd0] sm:$0xff]
        %v7721 = vld [vmem:[%s259 + $0xd8] sm:$0xff]
        %v7722 = vld [vmem:[%s0] sm:$0xff]
        %v7723 = vld [vmem:[%s0 + $0x8] sm:$0xff]
        %v7724 = vld [vmem:[%s0 + $0x10] sm:$0xff]
        %v7725 = vld [vmem:[%s0 + $0x18] sm:$0xff]
        %v7726 = vld [vmem:[%s0 + $0x20] sm:$0xff]
        %v7727 = vld [vmem:[%s0 + $0x28] sm:$0xff]
        %v7728 = vld [vmem:[%s0 + $0x30] sm:$0xff]
        %v7729 = vld [vmem:[%s0 + $0x38] sm:$0xff]
        %v7730 = vld [vmem:[%s0 + $0x40] sm:$0xff]
        %v7731 = vld [vmem:[%s0 + $0x48] sm:$0xff]
        %v7732 = vld [vmem:[%s0 + $0x50] sm:$0xff]
        %v7733 = vld [vmem:[%s0 + $0x58] sm:$0xff]
        %v7734 = vld [vmem:[%s0 + $0x60] sm:$0xff]
        %v7735 = vld [vmem:[%s0 + $0x68] sm:$0xff]
        %v7736 = vld [vmem:[%s0 + $0x70] sm:$0xff]
        %v7737 = vld [vmem:[%s0 + $0x78] sm:$0xff]
        %v7739 = vsel %vm326, %v7722, 0
        %v7742 = vsel %vm326, %v7723, 0
        %v7745 = vsel %vm326, %v7724, 0
        %v7748 = vsel %vm326, %v7725, 0
        %v7751 = vsel %vm326, %v7726, 0
        %v7754 = vsel %vm326, %v7727, 0
        %v7757 = vsel %vm326, %v7728, 0
        %v7760 = vsel %vm326, %v7729, 0
        %v7763 = vsel %vm326, %v7730, 0
        %v7766 = vsel %vm326, %v7731, 0
        %v7769 = vsel %vm326, %v7732, 0
        %v7772 = vsel %vm326, %v7733, 0
        %v7775 = vsel %vm326, %v7734, 0
        %v7778 = vsel %vm326, %v7735, 0
        %v7781 = vsel %vm326, %v7736, 0
        %v7784 = vsel %vm326, %v7737, 0
        %7786 = vmatprep.subr.mxu0 %v7721
        %7787 = vmatpush1.msra.mxu0 %v7720
        %7788 = vmatprep.subr.mxu0 0.0
        %7789 = vmatpush1.msra.mxu0 0.0
        %7790 = vmatprep.subr.mxu0 0.0
        %7791 = vmatpush1.msra.mxu0 0.0
        %7792 = vmatprep.subr.mxu0 0.0
        %7793 = vmatpush1.msra.mxu0 0.0
        %7794 = vmatprep.subr.mxu0 0.0
        %7795 = vmatpush1.msra.mxu0 0.0
        %7796 = vmatprep.subr.mxu0 0.0
        %7797 = vmatpush1.msra.mxu0 0.0
        %7798 = vmatprep.subr.mxu0 0.0
        %7799 = vmatpush1.msra.mxu0 0.0
        %7800 = vmatprep.subr.mxu0 0.0
        %7801 = vmatpush1.msra.mxu0 0.0
        %7802 = vmatprep.subr.mxu0 0.0
        %7803 = vmatpush1.msra.mxu0 0.0
        %7804 = vmatprep.subr.mxu0 0.0
        %7805 = vmatpush1.msra.mxu0 0.0
        %7806 = vmatprep.subr.mxu0 0.0
        %7807 = vmatpush1.msra.mxu0 0.0
        %7808 = vmatprep.subr.mxu0 0.0
        %7809 = vmatpush1.msra.mxu0 0.0
        %7810 = vmatprep.subr.mxu0 0.0
        %7811 = vmatpush1.msra.mxu0 0.0
        %7812 = vmatprep.subr.mxu0 0.0
        %7813 = vmatpush1.msra.mxu0 0.0
        %7814 = vmatprep.subr.mxu0 0.0
        %7815 = vmatpush1.msra.mxu0 0.0
        %7816 = vmatprep.subr.mxu0 0.0
        %7817 = vmatpush1.msra.mxu0 0.0
        %7818 = vmatprep.subr.mxu0 0.0
        %7819 = vmatpush1.msra.mxu0 0.0
        %7820 = vmatprep.subr.mxu0 0.0
        %7821 = vmatpush1.msra.mxu0 0.0
        %7822 = vmatprep.subr.mxu0 0.0
        %7823 = vmatpush1.msra.mxu0 0.0
        %7824 = vmatprep.subr.mxu0 0.0
        %7825 = vmatpush1.msra.mxu0 0.0
        %7826 = vmatprep.subr.mxu0 0.0
        %7827 = vmatpush1.msra.mxu0 0.0
        %7828 = vmatprep.subr.mxu0 0.0
        %7829 = vmatpush1.msra.mxu0 0.0
        %7830 = vmatprep.subr.mxu0 0.0
        %7831 = vmatpush1.msra.mxu0 0.0
        %7832 = vmatprep.subr.mxu0 0.0
        %7833 = vmatpush1.msra.mxu0 0.0
        %7834 = vmatprep.subr.mxu0 0.0
        %7835 = vmatpush1.msra.mxu0 0.0
        %7836 = vmatprep.subr.mxu0 0.0
        %7837 = vmatpush1.msra.mxu0 0.0
        %7838 = vmatprep.subr.mxu0 0.0
        %7839 = vmatpush1.msra.mxu0 0.0
        %7840 = vmatprep.subr.mxu0 0.0
        %7841 = vmatpush1.msra.mxu0 0.0
        %7842 = vmatprep.subr.mxu0 0.0
        %7843 = vmatpush1.msra.mxu0 0.0
        %7844 = vmatprep.subr.mxu0 0.0
        %7845 = vmatpush1.msra.mxu0 0.0
        %7846 = vmatprep.subr.mxu0 0.0
        %7847 = vmatpush1.msra.mxu0 0.0
        %7848 = vmatprep.subr.mxu0 0.0
        %7849 = vmatpush1.msra.mxu0 0.0
        %7850 = vmatprep.mubr.f32.mxu0 0.0
        %7851 = vmatmul.mubr.f32.gmra.mrb[0].mxu0 %v7739
        %v7852 = vpop.f32.mrb[0].mxu0
        %v7853 = vadd.f32 0.0, %v7852
        %v7854 = vpop.f32.mrb[0].mxu0
        %v7855 = vadd.f32 0.0, %v7854
        %7856 = vmatprep.mubr.f32.mxu0 0.0
        %7857 = vmatmul.mubr.f32.gmra.mrb[0].mxu0 %v7742
        %v7858 = vpop.f32.mrb[0].mxu0
        %v7859 = vadd.f32 0.0, %v7858
        %v7860 = vpop.f32.mrb[0].mxu0
        %v7861 = vadd.f32 0.0, %v7860
        %7862 = vmatprep.mubr.f32.mxu0 0.0
        %7863 = vmatmul.mubr.f32.gmra.mrb[0].mxu0 %v7745
        %v7864 = vpop.f32.mrb[0].mxu0
        %v7865 = vadd.f32 0.0, %v7864
        %v7866 = vpop.f32.mrb[0].mxu0
        %v7867 = vadd.f32 0.0, %v7866
        %7868 = vmatprep.mubr.f32.mxu0 0.0
        %7869 = vmatmul.mubr.f32.gmra.mrb[0].mxu0 %v7748
        %v7870 = vpop.f32.mrb[0].mxu0
        %v7871 = vadd.f32 0.0, %v7870
        %v7872 = vpop.f32.mrb[0].mxu0
        %v7873 = vadd.f32 0.0, %v7872
        %7874 = vmatprep.mubr.f32.mxu0 0.0
        %7875 = vmatmul.mubr.f32.gmra.mrb[0].mxu0 %v7751
        %v7876 = vpop.f32.mrb[0].mxu0
        %v7877 = vadd.f32 0.0, %v7876
        %v7878 = vpop.f32.mrb[0].mxu0
        %v7879 = vadd.f32 0.0, %v7878
        %7880 = vmatprep.mubr.f32.mxu0 0.0
        %7881 = vmatmul.mubr.f32.gmra.mrb[0].mxu0 %v7754
        %v7882 = vpop.f32.mrb[0].mxu0
        %v7883 = vadd.f32 0.0, %v7882
        %v7884 = vpop.f32.mrb[0].mxu0
        %v7885 = vadd.f32 0.0, %v7884
        %7886 = vmatprep.mubr.f32.mxu0 0.0
        %7887 = vmatmul.mubr.f32.gmra.mrb[0].mxu0 %v7757
        %v7888 = vpop.f32.mrb[0].mxu0
        %v7889 = vadd.f32 0.0, %v7888
        %v7890 = vpop.f32.mrb[0].mxu0
        %v7891 = vadd.f32 0.0, %v7890
        %7892 = vmatprep.mubr.f32.mxu0 0.0
        %7893 = vmatmul.mubr.f32.gmra.mrb[0].mxu0 %v7760
        %v7894 = vpop.f32.mrb[0].mxu0
        %v7895 = vadd.f32 0.0, %v7894
        %v7896 = vpop.f32.mrb[0].mxu0
        %v7897 = vadd.f32 0.0, %v7896
        %7898 = vmatprep.mubr.f32.mxu0 0.0
        %7899 = vmatmul.mubr.f32.gmra.mrb[0].mxu0 %v7763
        %v7900 = vpop.f32.mrb[0].mxu0
        %v7901 = vadd.f32 0.0, %v7900
        %v7902 = vpop.f32.mrb[0].mxu0
        %v7903 = vadd.f32 0.0, %v7902
        %7904 = vmatprep.mubr.f32.mxu0 0.0
        %7905 = vmatmul.mubr.f32.gmra.mrb[0].mxu0 %v7766
        %v7906 = vpop.f32.mrb[0].mxu0
        %v7907 = vadd.f32 0.0, %v7906
        %v7908 = vpop.f32.mrb[0].mxu0
        %v7909 = vadd.f32 0.0, %v7908
        %7910 = vmatprep.mubr.f32.mxu0 0.0
        %7911 = vmatmul.mubr.f32.gmra.mrb[0].mxu0 %v7769
        %v7912 = vpop.f32.mrb[0].mxu0
        %v7913 = vadd.f32 0.0, %v7912
        %v7914 = vpop.f32.mrb[0].mxu0
        %v7915 = vadd.f32 0.0, %v7914
        %7916 = vmatprep.mubr.f32.mxu0 0.0
        %7917 = vmatmul.mubr.f32.gmra.mrb[0].mxu0 %v7772
        %v7918 = vpop.f32.mrb[0].mxu0
        %v7919 = vadd.f32 0.0, %v7918
        %v7920 = vpop.f32.mrb[0].mxu0
        %v7921 = vadd.f32 0.0, %v7920
        %7922 = vmatprep.mubr.f32.mxu0 0.0
        %7923 = vmatmul.mubr.f32.gmra.mrb[0].mxu0 %v7775
        %v7924 = vpop.f32.mrb[0].mxu0
        %v7925 = vadd.f32 0.0, %v7924
        %v7926 = vpop.f32.mrb[0].mxu0
        %v7927 = vadd.f32 0.0, %v7926
        %7928 = vmatprep.mubr.f32.mxu0 0.0
        %7929 = vmatmul.mubr.f32.gmra.mrb[0].mxu0 %v7778
        %v7930 = vpop.f32.mrb[0].mxu0
        %v7931 = vadd.f32 0.0, %v7930
        %v7932 = vpop.f32.mrb[0].mxu0
        %v7933 = vadd.f32 0.0, %v7932
        %7934 = vmatprep.mubr.f32.mxu0 0.0
        %7935 = vmatmul.mubr.f32.gmra.mrb[0].mxu0 %v7781
        %v7936 = vpop.f32.mrb[0].mxu0
        %v7937 = vadd.f32 0.0, %v7936
        %v7938 = vpop.f32.mrb[0].mxu0
        %v7939 = vadd.f32 0.0, %v7938
        %7940 = vmatprep.mubr.f32.mxu0 0.0
        %7941 = vmatmul.mubr.f32.gmra.mrb[0].mxu0 %v7784
        %v7942 = vpop.f32.mrb[0].mxu0
        %v7943 = vadd.f32 0.0, %v7942
        %v7944 = vpop.f32.mrb[0].mxu0
        %v7945 = vadd.f32 0.0, %v7944
        %7946 = vdwg.mxu0
        %v7947 = vld [vmem:[%s2] sm:$0xff]
        %7949 = vset.pattern.permute.xlu0 0
        %7950 = vperm.xlu0 %7949, %v7947
        %v7951 = vpop.permute.xlu0 %7950
        %v7953 = vmul.f32 %v7951, %v7720
        %v7954 = vmul.f32 %v7951, %v7721
        %v7955 = vrot.slane %v7953, 4
        %v7956 = vadd.f32 %v7953, %v7955
        %v7957 = vrot.slane %v7956, 2
        %v7958 = vadd.f32 %v7956, %v7957
        %v7959 = vrot.slane %v7958, 1
        %v7960 = vadd.f32 %v7958, %v7959
        %v7961 = vrot.slane %v7954, 4
        %v7962 = vadd.f32 %v7954, %v7961
        %v7963 = vrot.slane %v7962, 2
        %v7964 = vadd.f32 %v7962, %v7963
        %v7965 = vrot.slane %v7964, 1
        %v7966 = vadd.f32 %v7964, %v7965
        %v7967 = vld [vmem:[%s3] sm:$0xff]
        %v7969 = vsel %vm326, %v7967, 0
        %7971 = vmatprep.subr.mxu0 %v7721
        %7972 = vmatpush1.msra.mxu0 %v7720
        %7973 = vmatprep.subr.mxu0 0.0
        %7974 = vmatpush1.msra.mxu0 0.0
        %7975 = vmatprep.subr.mxu0 0.0
        %7976 = vmatpush1.msra.mxu0 0.0
        %7977 = vmatprep.subr.mxu0 0.0
        %7978 = vmatpush1.msra.mxu0 0.0
        %7979 = vmatprep.subr.mxu0 0.0
        %7980 = vmatpush1.msra.mxu0 0.0
        %7981 = vmatprep.subr.mxu0 0.0
        %7982 = vmatpush1.msra.mxu0 0.0
        %7983 = vmatprep.subr.mxu0 0.0
        %7984 = vmatpush1.msra.mxu0 0.0
        %7985 = vmatprep.subr.mxu0 0.0
        %7986 = vmatpush1.msra.mxu0 0.0
        %7987 = vmatprep.subr.mxu0 0.0
        %7988 = vmatpush1.msra.mxu0 0.0
        %7989 = vmatprep.subr.mxu0 0.0
        %7990 = vmatpush1.msra.mxu0 0.0
        %7991 = vmatprep.subr.mxu0 0.0
        %7992 = vmatpush1.msra.mxu0 0.0
        %7993 = vmatprep.subr.mxu0 0.0
        %7994 = vmatpush1.msra.mxu0 0.0
        %7995 = vmatprep.subr.mxu0 0.0
        %7996 = vmatpush1.msra.mxu0 0.0
        %7997 = vmatprep.subr.mxu0 0.0
        %7998 = vmatpush1.msra.mxu0 0.0
        %7999 = vmatprep.subr.mxu0 0.0
        %8000 = vmatpush1.msra.mxu0 0.0
        %8001 = vmatprep.subr.mxu0 0.0
        %8002 = vmatpush1.msra.mxu0 0.0
        %8003 = vmatprep.subr.mxu0 0.0
        %8004 = vmatpush1.msra.mxu0 0.0
        %8005 = vmatprep.subr.mxu0 0.0
        %8006 = vmatpush1.msra.mxu0 0.0
        %8007 = vmatprep.subr.mxu0 0.0
        %8008 = vmatpush1.msra.mxu0 0.0
        %8009 = vmatprep.subr.mxu0 0.0
        %8010 = vmatpush1.msra.mxu0 0.0
        %8011 = vmatprep.subr.mxu0 0.0
        %8012 = vmatpush1.msra.mxu0 0.0
        %8013 = vmatprep.subr.mxu0 0.0
        %8014 = vmatpush1.msra.mxu0 0.0
        %8015 = vmatprep.subr.mxu0 0.0
        %8016 = vmatpush1.msra.mxu0 0.0
        %8017 = vmatprep.subr.mxu0 0.0
        %8018 = vmatpush1.msra.mxu0 0.0
        %8019 = vmatprep.subr.mxu0 0.0
        %8020 = vmatpush1.msra.mxu0 0.0
        %8021 = vmatprep.subr.mxu0 0.0
        %8022 = vmatpush1.msra.mxu0 0.0
        %8023 = vmatprep.subr.mxu0 0.0
        %8024 = vmatpush1.msra.mxu0 0.0
        %8025 = vmatprep.subr.mxu0 0.0
        %8026 = vmatpush1.msra.mxu0 0.0
        %8027 = vmatprep.subr.mxu0 0.0
        %8028 = vmatpush1.msra.mxu0 0.0
        %8029 = vmatprep.subr.mxu0 0.0
        %8030 = vmatpush1.msra.mxu0 0.0
        %8031 = vmatprep.subr.mxu0 0.0
        %8032 = vmatpush1.msra.mxu0 0.0
        %8033 = vmatprep.subr.mxu0 0.0
        %8034 = vmatpush1.msra.mxu0 0.0
        %8035 = vmatprep.mubr.f32.mxu0 0.0
        %8036 = vmatmul.mubr.f32.gmra.mrb[0].mxu0 %v7969
        %v8037 = vpop.f32.mrb[0].mxu0
        %v8038 = vadd.f32 0.0, %v8037
        %v8039 = vpop.f32.mrb[0].mxu0
        %v8040 = vadd.f32 0.0, %v8039
        %8041 = vdwg.mxu0
        %v8042 = vmul.f32 %v7720, %v8038
        %v8043 = vmul.f32 %v7721, %v8040
        %v8044 = vrot.slane %v8042, 4
        %v8045 = vadd.f32 %v8042, %v8044
        %v8046 = vrot.slane %v8045, 2
        %v8047 = vadd.f32 %v8045, %v8046
        %v8048 = vrot.slane %v8047, 1
        %v8049 = vadd.f32 %v8047, %v8048
        %v8050 = vrot.slane %v8043, 4
        %v8051 = vadd.f32 %v8043, %v8050
        %v8052 = vrot.slane %v8051, 2
        %v8053 = vadd.f32 %v8051, %v8052
        %v8054 = vrot.slane %v8053, 1
        %v8055 = vadd.f32 %v8053, %v8054
        %v8056 = vmul.f32 %v7960, %v7960
        %v8057 = vmul.f32 %v7966, %v7966
        %v8058 = vsub.f32 %v8049, %v8056
        %v8059 = vsub.f32 %v8055, %v8057
        %v8060 = vmax.f32 %v8058, 0.0
        %v8061 = vmax.f32 %v8059, 0.0
        %v8062 = vld [vmem:[%s300 + $0x1a] sm:$0x3]
        %v8063 = vadd.f32 %v8060, 1e-05
        %v8064 = vadd.f32 %v8061, 1e-05
        %v8065 = vrsqrt.pop %v8063
        %v8066 = vrsqrt.pop %v8064
        %v8069 = vcombine.low %v8065, %v8066
        %v8071 = vunpack.c.l.s4 1966171168
        %v8072 = vunpack.c.0.s8 %v8071
        %v8073 = vlaneseq
        %v8074 = vshrl.u32 %v8073, 7
        %v8075 = vsub.s32 %v8072, %v8074
        %v8076 = vrot.slane %v8069, %v8075
        %v8078 = vunpack.c.l.s4 1966171168
        %v8079 = vunpack.c.0.s8 %v8078
        %v8080 = vlaneseq
        %v8081 = vshrl.u32 %v8080, 7
        %v8082 = vsub.s32 %v8079, %v8081
        %v8083 = vrot.slane %v8076, %v8082
        %v8085 = vmul.f32 %v8062, %v8083
        %v8086 = vld [vmem:[%s305 + $0x1a] sm:$0x3]
        %v8088 = vlaneseq
        %v8089 = vshrl.u32 %v8088, 7
        %v8090 = vsub.s32 0, %v8089
        %v8091 = vrot.slane %v8085, %v8090
        %v8092 = vlaneseq
        %v8093 = vshrl.u32 %v8092, 7
        %v8094 = vsub.s32 1, %v8093
        %v8095 = vrot.slane %v8085, %v8094
        %v8098 = vmul.f32 %v7960, %v8091
        %v8099 = vmul.f32 %v7966, %v8095
        %v8102 = vcombine.low %v8098, %v8099
        %v8104 = vunpack.c.l.s4 1966171168
        %v8105 = vunpack.c.0.s8 %v8104
        %v8106 = vlaneseq
        %v8107 = vshrl.u32 %v8106, 7
        %v8108 = vsub.s32 %v8105, %v8107
        %v8109 = vrot.slane %v8102, %v8108
        %v8111 = vunpack.c.l.s4 1966171168
        %v8112 = vunpack.c.0.s8 %v8111
        %v8113 = vlaneseq
        %v8114 = vshrl.u32 %v8113, 7
        %v8115 = vsub.s32 %v8112, %v8114
        %v8116 = vrot.slane %v8109, %v8115
        %v8118 = vsub.f32 %v8086, %v8116
        %v8119 = vmax.f32 %v7853, %v7859
        %v8120 = vmax.f32 %v8119, %v7865
        %v8121 = vmax.f32 %v8120, %v7871
        %v8122 = vmax.f32 %v8121, %v7877
        %v8123 = vmax.f32 %v8122, %v7883
        %v8124 = vmax.f32 %v8123, %v7889
        %v8125 = vmax.f32 %v8124, %v7895
        %v8126 = vrot.slane %v8125, 4
        %v8127 = vmax.f32 %v8125, %v8126
        %v8128 = vrot.slane %v8127, 2
        %v8129 = vmax.f32 %v8127, %v8128
        %v8130 = vrot.slane %v8129, 1
        %v8131 = vmax.f32 %v8129, %v8130
        %v8132 = vmax.f32 %v7855, %v7861
        %v8133 = vmax.f32 %v8132, %v7867
        %v8134 = vmax.f32 %v8133, %v7873
        %v8135 = vmax.f32 %v8134, %v7879
        %v8136 = vmax.f32 %v8135, %v7885
        %v8137 = vmax.f32 %v8136, %v7891
        %v8138 = vmax.f32 %v8137, %v7897
        %v8139 = vrot.slane %v8138, 4
        %v8140 = vmax.f32 %v8138, %v8139
        %v8141 = vrot.slane %v8140, 2
        %v8142 = vmax.f32 %v8140, %v8141
        %v8143 = vrot.slane %v8142, 1
        %v8144 = vmax.f32 %v8142, %v8143
        %v8145 = vmax.f32 %v7901, %v7907
        %v8146 = vmax.f32 %v8145, %v7913
        %v8147 = vmax.f32 %v8146, %v7919
        %v8148 = vmax.f32 %v8147, %v7925
        %v8149 = vmax.f32 %v8148, %v7931
        %v8150 = vmax.f32 %v8149, %v7937
        %v8151 = vmax.f32 %v8150, %v7943
        %v8152 = vrot.slane %v8151, 4
        %v8153 = vmax.f32 %v8151, %v8152
        %v8154 = vrot.slane %v8153, 2
        %v8155 = vmax.f32 %v8153, %v8154
        %v8156 = vrot.slane %v8155, 1
        %v8157 = vmax.f32 %v8155, %v8156
        %v8158 = vmax.f32 %v7903, %v7909
        %v8159 = vmax.f32 %v8158, %v7915
        %v8160 = vmax.f32 %v8159, %v7921
        %v8161 = vmax.f32 %v8160, %v7927
        %v8162 = vmax.f32 %v8161, %v7933
        %v8163 = vmax.f32 %v8162, %v7939
        %v8164 = vmax.f32 %v8163, %v7945
        %v8165 = vrot.slane %v8164, 4
        %v8166 = vmax.f32 %v8164, %v8165
        %v8167 = vrot.slane %v8166, 2
        %v8168 = vmax.f32 %v8166, %v8167
        %v8169 = vrot.slane %v8168, 1
        %v8170 = vmax.f32 %v8168, %v8169
        %v8171 = vmin.f32 %v7853, %v7859
        %v8172 = vmin.f32 %v8171, %v7865
        %v8173 = vmin.f32 %v8172, %v7871
        %v8174 = vmin.f32 %v8173, %v7877
        %v8175 = vmin.f32 %v8174, %v7883
        %v8176 = vmin.f32 %v8175, %v7889
        %v8177 = vmin.f32 %v8176, %v7895
        %v8178 = vrot.slane %v8177, 4
        %v8179 = vmin.f32 %v8177, %v8178
        %v8180 = vrot.slane %v8179, 2
        %v8181 = vmin.f32 %v8179, %v8180
        %v8182 = vrot.slane %v8181, 1
        %v8183 = vmin.f32 %v8181, %v8182
        %v8184 = vmin.f32 %v7855, %v7861
        %v8185 = vmin.f32 %v8184, %v7867
        %v8186 = vmin.f32 %v8185, %v7873
        %v8187 = vmin.f32 %v8186, %v7879
        %v8188 = vmin.f32 %v8187, %v7885
        %v8189 = vmin.f32 %v8188, %v7891
        %v8190 = vmin.f32 %v8189, %v7897
        %v8191 = vrot.slane %v8190, 4
        %v8192 = vmin.f32 %v8190, %v8191
        %v8193 = vrot.slane %v8192, 2
        %v8194 = vmin.f32 %v8192, %v8193
        %v8195 = vrot.slane %v8194, 1
        %v8196 = vmin.f32 %v8194, %v8195
        %v8197 = vmin.f32 %v7901, %v7907
        %v8198 = vmin.f32 %v8197, %v7913
        %v8199 = vmin.f32 %v8198, %v7919
        %v8200 = vmin.f32 %v8199, %v7925
        %v8201 = vmin.f32 %v8200, %v7931
        %v8202 = vmin.f32 %v8201, %v7937
        %v8203 = vmin.f32 %v8202, %v7943
        %v8204 = vrot.slane %v8203, 4
        %v8205 = vmin.f32 %v8203, %v8204
        %v8206 = vrot.slane %v8205, 2
        %v8207 = vmin.f32 %v8205, %v8206
        %v8208 = vrot.slane %v8207, 1
        %v8209 = vmin.f32 %v8207, %v8208
        %v8210 = vmin.f32 %v7903, %v7909
        %v8211 = vmin.f32 %v8210, %v7915
        %v8212 = vmin.f32 %v8211, %v7921
        %v8213 = vmin.f32 %v8212, %v7927
        %v8214 = vmin.f32 %v8213, %v7933
        %v8215 = vmin.f32 %v8214, %v7939
        %v8216 = vmin.f32 %v8215, %v7945
        %v8217 = vrot.slane %v8216, 4
        %v8218 = vmin.f32 %v8216, %v8217
        %v8219 = vrot.slane %v8218, 2
        %v8220 = vmin.f32 %v8218, %v8219
        %v8221 = vrot.slane %v8220, 1
        %v8222 = vmin.f32 %v8220, %v8221
        %vm8223 = vcmp.ge.f32.partialorder %v8085, 0.0
        %v8224 = vmul.f32 %v8131, %v8091
        %v8225 = vmul.f32 %v8144, %v8095
        %v8226 = vmul.f32 %v8157, %v8091
        %v8227 = vmul.f32 %v8170, %v8095
        %v8228 = vmul.f32 %v8183, %v8091
        %v8229 = vmul.f32 %v8196, %v8095
        %v8230 = vmul.f32 %v8209, %v8091
        %v8231 = vmul.f32 %v8222, %v8095
        %v8232 = vsel %vm8223, 1, 0
        %v8233 = vlaneseq
        %v8234 = vshrl.u32 %v8233, 7
        %v8235 = vsub.s32 0, %v8234
        %v8236 = vrot.slane %v8232, %v8235
        %v8237 = vlaneseq
        %v8238 = vshrl.u32 %v8237, 7
        %v8239 = vsub.s32 1, %v8238
        %v8240 = vrot.slane %v8232, %v8239
        %vm8241 = vcmp.eq.s32.totalorder %v8236, 1
        %vm8242 = vcmp.eq.s32.totalorder %v8240, 1
        %v8247 = vrot.slane %v8226, 7
        %v8248 = vsel %vm837, %v8247, %v8224
        %v8249 = vrot.slane %v8227, 7
        %v8250 = vsel %vm837, %v8249, %v8225
        %v8257 = vrot.slane %v8230, 7
        %v8258 = vsel %vm837, %v8257, %v8228
        %v8259 = vrot.slane %v8231, 7
        %v8260 = vsel %vm837, %v8259, %v8229
        %v8263 = vsel %vm8241, %v8248, %v8258
        %v8264 = vsel %vm8242, %v8250, %v8260
        %v8266 = vlaneseq
        %v8267 = vshrl.u32 %v8266, 7
        %v8268 = vsub.s32 0, %v8267
        %v8269 = vrot.slane %v8118, %v8268
        %v8270 = vlaneseq
        %v8271 = vshrl.u32 %v8270, 7
        %v8272 = vsub.s32 1, %v8271
        %v8273 = vrot.slane %v8118, %v8272
        %v8276 = vadd.f32 %v8263, %v8269
        %v8277 = vadd.f32 %v8264, %v8273
        %v8280 = vcombine.low %v8276, %v8277
        %v8282 = vunpack.c.l.s4 1983009808
        %v8283 = vunpack.c.0.s8 %v8282
        %v8284 = vlaneseq
        %v8285 = vshrl.u32 %v8284, 7
        %v8286 = vsub.s32 %v8283, %v8285
        %v8287 = vrot.slane %v8280, %v8286
        %8289 = vst [vmem:[%s295 + $0x34] sm:$0xf] %v8287
        %v8290 = vld [vmem:[%s259 + $0xe0] sm:$0xff]
        %v8291 = vld [vmem:[%s259 + $0xe8] sm:$0xff]
        %v8292 = vld [vmem:[%s0] sm:$0xff]
        %v8293 = vld [vmem:[%s0 + $0x8] sm:$0xff]
        %v8294 = vld [vmem:[%s0 + $0x10] sm:$0xff]
        %v8295 = vld [vmem:[%s0 + $0x18] sm:$0xff]
        %v8296 = vld [vmem:[%s0 + $0x20] sm:$0xff]
        %v8297 = vld [vmem:[%s0 + $0x28] sm:$0xff]
        %v8298 = vld [vmem:[%s0 + $0x30] sm:$0xff]
        %v8299 = vld [vmem:[%s0 + $0x38] sm:$0xff]
        %v8300 = vld [vmem:[%s0 + $0x40] sm:$0xff]
        %v8301 = vld [vmem:[%s0 + $0x48] sm:$0xff]
        %v8302 = vld [vmem:[%s0 + $0x50] sm:$0xff]
        %v8303 = vld [vmem:[%s0 + $0x58] sm:$0xff]
        %v8304 = vld [vmem:[%s0 + $0x60] sm:$0xff]
        %v8305 = vld [vmem:[%s0 + $0x68] sm:$0xff]
        %v8306 = vld [vmem:[%s0 + $0x70] sm:$0xff]
        %v8307 = vld [vmem:[%s0 + $0x78] sm:$0xff]
        %v8309 = vsel %vm326, %v8292, 0
        %v8312 = vsel %vm326, %v8293, 0
        %v8315 = vsel %vm326, %v8294, 0
        %v8318 = vsel %vm326, %v8295, 0
        %v8321 = vsel %vm326, %v8296, 0
        %v8324 = vsel %vm326, %v8297, 0
        %v8327 = vsel %vm326, %v8298, 0
        %v8330 = vsel %vm326, %v8299, 0
        %v8333 = vsel %vm326, %v8300, 0
        %v8336 = vsel %vm326, %v8301, 0
        %v8339 = vsel %vm326, %v8302, 0
        %v8342 = vsel %vm326, %v8303, 0
        %v8345 = vsel %vm326, %v8304, 0
        %v8348 = vsel %vm326, %v8305, 0
        %v8351 = vsel %vm326, %v8306, 0
        %v8354 = vsel %vm326, %v8307, 0
        %8356 = vmatprep.subr.mxu0 %v8291
        %8357 = vmatpush1.msra.mxu0 %v8290
        %8358 = vmatprep.subr.mxu0 0.0
        %8359 = vmatpush1.msra.mxu0 0.0
        %8360 = vmatprep.subr.mxu0 0.0
        %8361 = vmatpush1.msra.mxu0 0.0
        %8362 = vmatprep.subr.mxu0 0.0
        %8363 = vmatpush1.msra.mxu0 0.0
        %8364 = vmatprep.subr.mxu0 0.0
        %8365 = vmatpush1.msra.mxu0 0.0
        %8366 = vmatprep.subr.mxu0 0.0
        %8367 = vmatpush1.msra.mxu0 0.0
        %8368 = vmatprep.subr.mxu0 0.0
        %8369 = vmatpush1.msra.mxu0 0.0
        %8370 = vmatprep.subr.mxu0 0.0
        %8371 = vmatpush1.msra.mxu0 0.0
        %8372 = vmatprep.subr.mxu0 0.0
        %8373 = vmatpush1.msra.mxu0 0.0
        %8374 = vmatprep.subr.mxu0 0.0
        %8375 = vmatpush1.msra.mxu0 0.0
        %8376 = vmatprep.subr.mxu0 0.0
        %8377 = vmatpush1.msra.mxu0 0.0
        %8378 = vmatprep.subr.mxu0 0.0
        %8379 = vmatpush1.msra.mxu0 0.0
        %8380 = vmatprep.subr.mxu0 0.0
        %8381 = vmatpush1.msra.mxu0 0.0
        %8382 = vmatprep.subr.mxu0 0.0
        %8383 = vmatpush1.msra.mxu0 0.0
        %8384 = vmatprep.subr.mxu0 0.0
        %8385 = vmatpush1.msra.mxu0 0.0
        %8386 = vmatprep.subr.mxu0 0.0
        %8387 = vmatpush1.msra.mxu0 0.0
        %8388 = vmatprep.subr.mxu0 0.0
        %8389 = vmatpush1.msra.mxu0 0.0
        %8390 = vmatprep.subr.mxu0 0.0
        %8391 = vmatpush1.msra.mxu0 0.0
        %8392 = vmatprep.subr.mxu0 0.0
        %8393 = vmatpush1.msra.mxu0 0.0
        %8394 = vmatprep.subr.mxu0 0.0
        %8395 = vmatpush1.msra.mxu0 0.0
        %8396 = vmatprep.subr.mxu0 0.0
        %8397 = vmatpush1.msra.mxu0 0.0
        %8398 = vmatprep.subr.mxu0 0.0
        %8399 = vmatpush1.msra.mxu0 0.0
        %8400 = vmatprep.subr.mxu0 0.0
        %8401 = vmatpush1.msra.mxu0 0.0
        %8402 = vmatprep.subr.mxu0 0.0
        %8403 = vmatpush1.msra.mxu0 0.0
        %8404 = vmatprep.subr.mxu0 0.0
        %8405 = vmatpush1.msra.mxu0 0.0
        %8406 = vmatprep.subr.mxu0 0.0
        %8407 = vmatpush1.msra.mxu0 0.0
        %8408 = vmatprep.subr.mxu0 0.0
        %8409 = vmatpush1.msra.mxu0 0.0
        %8410 = vmatprep.subr.mxu0 0.0
        %8411 = vmatpush1.msra.mxu0 0.0
        %8412 = vmatprep.subr.mxu0 0.0
        %8413 = vmatpush1.msra.mxu0 0.0
        %8414 = vmatprep.subr.mxu0 0.0
        %8415 = vmatpush1.msra.mxu0 0.0
        %8416 = vmatprep.subr.mxu0 0.0
        %8417 = vmatpush1.msra.mxu0 0.0
        %8418 = vmatprep.subr.mxu0 0.0
        %8419 = vmatpush1.msra.mxu0 0.0
        %8420 = vmatprep.mubr.f32.mxu0 0.0
        %8421 = vmatmul.mubr.f32.gmra.mrb[0].mxu0 %v8309
        %v8422 = vpop.f32.mrb[0].mxu0
        %v8423 = vadd.f32 0.0, %v8422
        %v8424 = vpop.f32.mrb[0].mxu0
        %v8425 = vadd.f32 0.0, %v8424
        %8426 = vmatprep.mubr.f32.mxu0 0.0
        %8427 = vmatmul.mubr.f32.gmra.mrb[0].mxu0 %v8312
        %v8428 = vpop.f32.mrb[0].mxu0
        %v8429 = vadd.f32 0.0, %v8428
        %v8430 = vpop.f32.mrb[0].mxu0
        %v8431 = vadd.f32 0.0, %v8430
        %8432 = vmatprep.mubr.f32.mxu0 0.0
        %8433 = vmatmul.mubr.f32.gmra.mrb[0].mxu0 %v8315
        %v8434 = vpop.f32.mrb[0].mxu0
        %v8435 = vadd.f32 0.0, %v8434
        %v8436 = vpop.f32.mrb[0].mxu0
        %v8437 = vadd.f32 0.0, %v8436
        %8438 = vmatprep.mubr.f32.mxu0 0.0
        %8439 = vmatmul.mubr.f32.gmra.mrb[0].mxu0 %v8318
        %v8440 = vpop.f32.mrb[0].mxu0
        %v8441 = vadd.f32 0.0, %v8440
        %v8442 = vpop.f32.mrb[0].mxu0
        %v8443 = vadd.f32 0.0, %v8442
        %8444 = vmatprep.mubr.f32.mxu0 0.0
        %8445 = vmatmul.mubr.f32.gmra.mrb[0].mxu0 %v8321
        %v8446 = vpop.f32.mrb[0].mxu0
        %v8447 = vadd.f32 0.0, %v8446
        %v8448 = vpop.f32.mrb[0].mxu0
        %v8449 = vadd.f32 0.0, %v8448
        %8450 = vmatprep.mubr.f32.mxu0 0.0
        %8451 = vmatmul.mubr.f32.gmra.mrb[0].mxu0 %v8324
        %v8452 = vpop.f32.mrb[0].mxu0
        %v8453 = vadd.f32 0.0, %v8452
        %v8454 = vpop.f32.mrb[0].mxu0
        %v8455 = vadd.f32 0.0, %v8454
        %8456 = vmatprep.mubr.f32.mxu0 0.0
        %8457 = vmatmul.mubr.f32.gmra.mrb[0].mxu0 %v8327
        %v8458 = vpop.f32.mrb[0].mxu0
        %v8459 = vadd.f32 0.0, %v8458
        %v8460 = vpop.f32.mrb[0].mxu0
        %v8461 = vadd.f32 0.0, %v8460
        %8462 = vmatprep.mubr.f32.mxu0 0.0
        %8463 = vmatmul.mubr.f32.gmra.mrb[0].mxu0 %v8330
        %v8464 = vpop.f32.mrb[0].mxu0
        %v8465 = vadd.f32 0.0, %v8464
        %v8466 = vpop.f32.mrb[0].mxu0
        %v8467 = vadd.f32 0.0, %v8466
        %8468 = vmatprep.mubr.f32.mxu0 0.0
        %8469 = vmatmul.mubr.f32.gmra.mrb[0].mxu0 %v8333
        %v8470 = vpop.f32.mrb[0].mxu0
        %v8471 = vadd.f32 0.0, %v8470
        %v8472 = vpop.f32.mrb[0].mxu0
        %v8473 = vadd.f32 0.0, %v8472
        %8474 = vmatprep.mubr.f32.mxu0 0.0
        %8475 = vmatmul.mubr.f32.gmra.mrb[0].mxu0 %v8336
        %v8476 = vpop.f32.mrb[0].mxu0
        %v8477 = vadd.f32 0.0, %v8476
        %v8478 = vpop.f32.mrb[0].mxu0
        %v8479 = vadd.f32 0.0, %v8478
        %8480 = vmatprep.mubr.f32.mxu0 0.0
        %8481 = vmatmul.mubr.f32.gmra.mrb[0].mxu0 %v8339
        %v8482 = vpop.f32.mrb[0].mxu0
        %v8483 = vadd.f32 0.0, %v8482
        %v8484 = vpop.f32.mrb[0].mxu0
        %v8485 = vadd.f32 0.0, %v8484
        %8486 = vmatprep.mubr.f32.mxu0 0.0
        %8487 = vmatmul.mubr.f32.gmra.mrb[0].mxu0 %v8342
        %v8488 = vpop.f32.mrb[0].mxu0
        %v8489 = vadd.f32 0.0, %v8488
        %v8490 = vpop.f32.mrb[0].mxu0
        %v8491 = vadd.f32 0.0, %v8490
        %8492 = vmatprep.mubr.f32.mxu0 0.0
        %8493 = vmatmul.mubr.f32.gmra.mrb[0].mxu0 %v8345
        %v8494 = vpop.f32.mrb[0].mxu0
        %v8495 = vadd.f32 0.0, %v8494
        %v8496 = vpop.f32.mrb[0].mxu0
        %v8497 = vadd.f32 0.0, %v8496
        %8498 = vmatprep.mubr.f32.mxu0 0.0
        %8499 = vmatmul.mubr.f32.gmra.mrb[0].mxu0 %v8348
        %v8500 = vpop.f32.mrb[0].mxu0
        %v8501 = vadd.f32 0.0, %v8500
        %v8502 = vpop.f32.mrb[0].mxu0
        %v8503 = vadd.f32 0.0, %v8502
        %8504 = vmatprep.mubr.f32.mxu0 0.0
        %8505 = vmatmul.mubr.f32.gmra.mrb[0].mxu0 %v8351
        %v8506 = vpop.f32.mrb[0].mxu0
        %v8507 = vadd.f32 0.0, %v8506
        %v8508 = vpop.f32.mrb[0].mxu0
        %v8509 = vadd.f32 0.0, %v8508
        %8510 = vmatprep.mubr.f32.mxu0 0.0
        %8511 = vmatmul.mubr.f32.gmra.mrb[0].mxu0 %v8354
        %v8512 = vpop.f32.mrb[0].mxu0
        %v8513 = vadd.f32 0.0, %v8512
        %v8514 = vpop.f32.mrb[0].mxu0
        %v8515 = vadd.f32 0.0, %v8514
        %8516 = vdwg.mxu0
        %v8517 = vld [vmem:[%s2] sm:$0xff]
        %8519 = vset.pattern.permute.xlu0 0
        %8520 = vperm.xlu0 %8519, %v8517
        %v8521 = vpop.permute.xlu0 %8520
        %v8523 = vmul.f32 %v8521, %v8290
        %v8524 = vmul.f32 %v8521, %v8291
        %v8525 = vrot.slane %v8523, 4
        %v8526 = vadd.f32 %v8523, %v8525
        %v8527 = vrot.slane %v8526, 2
        %v8528 = vadd.f32 %v8526, %v8527
        %v8529 = vrot.slane %v8528, 1
        %v8530 = vadd.f32 %v8528, %v8529
        %v8531 = vrot.slane %v8524, 4
        %v8532 = vadd.f32 %v8524, %v8531
        %v8533 = vrot.slane %v8532, 2
        %v8534 = vadd.f32 %v8532, %v8533
        %v8535 = vrot.slane %v8534, 1
        %v8536 = vadd.f32 %v8534, %v8535
        %v8537 = vld [vmem:[%s3] sm:$0xff]
        %v8539 = vsel %vm326, %v8537, 0
        %8541 = vmatprep.subr.mxu0 %v8291
        %8542 = vmatpush1.msra.mxu0 %v8290
        %8543 = vmatprep.subr.mxu0 0.0
        %8544 = vmatpush1.msra.mxu0 0.0
        %8545 = vmatprep.subr.mxu0 0.0
        %8546 = vmatpush1.msra.mxu0 0.0
        %8547 = vmatprep.subr.mxu0 0.0
        %8548 = vmatpush1.msra.mxu0 0.0
        %8549 = vmatprep.subr.mxu0 0.0
        %8550 = vmatpush1.msra.mxu0 0.0
        %8551 = vmatprep.subr.mxu0 0.0
        %8552 = vmatpush1.msra.mxu0 0.0
        %8553 = vmatprep.subr.mxu0 0.0
        %8554 = vmatpush1.msra.mxu0 0.0
        %8555 = vmatprep.subr.mxu0 0.0
        %8556 = vmatpush1.msra.mxu0 0.0
        %8557 = vmatprep.subr.mxu0 0.0
        %8558 = vmatpush1.msra.mxu0 0.0
        %8559 = vmatprep.subr.mxu0 0.0
        %8560 = vmatpush1.msra.mxu0 0.0
        %8561 = vmatprep.subr.mxu0 0.0
        %8562 = vmatpush1.msra.mxu0 0.0
        %8563 = vmatprep.subr.mxu0 0.0
        %8564 = vmatpush1.msra.mxu0 0.0
        %8565 = vmatprep.subr.mxu0 0.0
        %8566 = vmatpush1.msra.mxu0 0.0
        %8567 = vmatprep.subr.mxu0 0.0
        %8568 = vmatpush1.msra.mxu0 0.0
        %8569 = vmatprep.subr.mxu0 0.0
        %8570 = vmatpush1.msra.mxu0 0.0
        %8571 = vmatprep.subr.mxu0 0.0
        %8572 = vmatpush1.msra.mxu0 0.0
        %8573 = vmatprep.subr.mxu0 0.0
        %8574 = vmatpush1.msra.mxu0 0.0
        %8575 = vmatprep.subr.mxu0 0.0
        %8576 = vmatpush1.msra.mxu0 0.0
        %8577 = vmatprep.subr.mxu0 0.0
        %8578 = vmatpush1.msra.mxu0 0.0
        %8579 = vmatprep.subr.mxu0 0.0
        %8580 = vmatpush1.msra.mxu0 0.0
        %8581 = vmatprep.subr.mxu0 0.0
        %8582 = vmatpush1.msra.mxu0 0.0
        %8583 = vmatprep.subr.mxu0 0.0
        %8584 = vmatpush1.msra.mxu0 0.0
        %8585 = vmatprep.subr.mxu0 0.0
        %8586 = vmatpush1.msra.mxu0 0.0
        %8587 = vmatprep.subr.mxu0 0.0
        %8588 = vmatpush1.msra.mxu0 0.0
        %8589 = vmatprep.subr.mxu0 0.0
        %8590 = vmatpush1.msra.mxu0 0.0
        %8591 = vmatprep.subr.mxu0 0.0
        %8592 = vmatpush1.msra.mxu0 0.0
        %8593 = vmatprep.subr.mxu0 0.0
        %8594 = vmatpush1.msra.mxu0 0.0
        %8595 = vmatprep.subr.mxu0 0.0
        %8596 = vmatpush1.msra.mxu0 0.0
        %8597 = vmatprep.subr.mxu0 0.0
        %8598 = vmatpush1.msra.mxu0 0.0
        %8599 = vmatprep.subr.mxu0 0.0
        %8600 = vmatpush1.msra.mxu0 0.0
        %8601 = vmatprep.subr.mxu0 0.0
        %8602 = vmatpush1.msra.mxu0 0.0
        %8603 = vmatprep.subr.mxu0 0.0
        %8604 = vmatpush1.msra.mxu0 0.0
        %8605 = vmatprep.mubr.f32.mxu0 0.0
        %8606 = vmatmul.mubr.f32.gmra.mrb[0].mxu0 %v8539
        %v8607 = vpop.f32.mrb[0].mxu0
        %v8608 = vadd.f32 0.0, %v8607
        %v8609 = vpop.f32.mrb[0].mxu0
        %v8610 = vadd.f32 0.0, %v8609
        %8611 = vdwg.mxu0
        %v8612 = vmul.f32 %v8290, %v8608
        %v8613 = vmul.f32 %v8291, %v8610
        %v8614 = vrot.slane %v8612, 4
        %v8615 = vadd.f32 %v8612, %v8614
        %v8616 = vrot.slane %v8615, 2
        %v8617 = vadd.f32 %v8615, %v8616
        %v8618 = vrot.slane %v8617, 1
        %v8619 = vadd.f32 %v8617, %v8618
        %v8620 = vrot.slane %v8613, 4
        %v8621 = vadd.f32 %v8613, %v8620
        %v8622 = vrot.slane %v8621, 2
        %v8623 = vadd.f32 %v8621, %v8622
        %v8624 = vrot.slane %v8623, 1
        %v8625 = vadd.f32 %v8623, %v8624
        %v8626 = vmul.f32 %v8530, %v8530
        %v8627 = vmul.f32 %v8536, %v8536
        %v8628 = vsub.f32 %v8619, %v8626
        %v8629 = vsub.f32 %v8625, %v8627
        %v8630 = vmax.f32 %v8628, 0.0
        %v8631 = vmax.f32 %v8629, 0.0
        %v8632 = vld [vmem:[%s300 + $0x1c] sm:$0x3]
        %v8633 = vadd.f32 %v8630, 1e-05
        %v8634 = vadd.f32 %v8631, 1e-05
        %v8635 = vrsqrt.pop %v8633
        %v8636 = vrsqrt.pop %v8634
        %v8639 = vcombine.low %v8635, %v8636
        %v8641 = vunpack.c.l.s4 1966171168
        %v8642 = vunpack.c.0.s8 %v8641
        %v8643 = vlaneseq
        %v8644 = vshrl.u32 %v8643, 7
        %v8645 = vsub.s32 %v8642, %v8644
        %v8646 = vrot.slane %v8639, %v8645
        %v8648 = vunpack.c.l.s4 1966171168
        %v8649 = vunpack.c.0.s8 %v8648
        %v8650 = vlaneseq
        %v8651 = vshrl.u32 %v8650, 7
        %v8652 = vsub.s32 %v8649, %v8651
        %v8653 = vrot.slane %v8646, %v8652
        %v8655 = vmul.f32 %v8632, %v8653
        %v8656 = vld [vmem:[%s305 + $0x1c] sm:$0x3]
        %v8658 = vlaneseq
        %v8659 = vshrl.u32 %v8658, 7
        %v8660 = vsub.s32 0, %v8659
        %v8661 = vrot.slane %v8655, %v8660
        %v8662 = vlaneseq
        %v8663 = vshrl.u32 %v8662, 7
        %v8664 = vsub.s32 1, %v8663
        %v8665 = vrot.slane %v8655, %v8664
        %v8668 = vmul.f32 %v8530, %v8661
        %v8669 = vmul.f32 %v8536, %v8665
        %v8672 = vcombine.low %v8668, %v8669
        %v8674 = vunpack.c.l.s4 1966171168
        %v8675 = vunpack.c.0.s8 %v8674
        %v8676 = vlaneseq
        %v8677 = vshrl.u32 %v8676, 7
        %v8678 = vsub.s32 %v8675, %v8677
        %v8679 = vrot.slane %v8672, %v8678
        %v8681 = vunpack.c.l.s4 1966171168
        %v8682 = vunpack.c.0.s8 %v8681
        %v8683 = vlaneseq
        %v8684 = vshrl.u32 %v8683, 7
        %v8685 = vsub.s32 %v8682, %v8684
        %v8686 = vrot.slane %v8679, %v8685
        %v8688 = vsub.f32 %v8656, %v8686
        %v8689 = vmax.f32 %v8423, %v8429
        %v8690 = vmax.f32 %v8689, %v8435
        %v8691 = vmax.f32 %v8690, %v8441
        %v8692 = vmax.f32 %v8691, %v8447
        %v8693 = vmax.f32 %v8692, %v8453
        %v8694 = vmax.f32 %v8693, %v8459
        %v8695 = vmax.f32 %v8694, %v8465
        %v8696 = vrot.slane %v8695, 4
        %v8697 = vmax.f32 %v8695, %v8696
        %v8698 = vrot.slane %v8697, 2
        %v8699 = vmax.f32 %v8697, %v8698
        %v8700 = vrot.slane %v8699, 1
        %v8701 = vmax.f32 %v8699, %v8700
        %v8702 = vmax.f32 %v8425, %v8431
        %v8703 = vmax.f32 %v8702, %v8437
        %v8704 = vmax.f32 %v8703, %v8443
        %v8705 = vmax.f32 %v8704, %v8449
        %v8706 = vmax.f32 %v8705, %v8455
        %v8707 = vmax.f32 %v8706, %v8461
        %v8708 = vmax.f32 %v8707, %v8467
        %v8709 = vrot.slane %v8708, 4
        %v8710 = vmax.f32 %v8708, %v8709
        %v8711 = vrot.slane %v8710, 2
        %v8712 = vmax.f32 %v8710, %v8711
        %v8713 = vrot.slane %v8712, 1
        %v8714 = vmax.f32 %v8712, %v8713
        %v8715 = vmax.f32 %v8471, %v8477
        %v8716 = vmax.f32 %v8715, %v8483
        %v8717 = vmax.f32 %v8716, %v8489
        %v8718 = vmax.f32 %v8717, %v8495
        %v8719 = vmax.f32 %v8718, %v8501
        %v8720 = vmax.f32 %v8719, %v8507
        %v8721 = vmax.f32 %v8720, %v8513
        %v8722 = vrot.slane %v8721, 4
        %v8723 = vmax.f32 %v8721, %v8722
        %v8724 = vrot.slane %v8723, 2
        %v8725 = vmax.f32 %v8723, %v8724
        %v8726 = vrot.slane %v8725, 1
        %v8727 = vmax.f32 %v8725, %v8726
        %v8728 = vmax.f32 %v8473, %v8479
        %v8729 = vmax.f32 %v8728, %v8485
        %v8730 = vmax.f32 %v8729, %v8491
        %v8731 = vmax.f32 %v8730, %v8497
        %v8732 = vmax.f32 %v8731, %v8503
        %v8733 = vmax.f32 %v8732, %v8509
        %v8734 = vmax.f32 %v8733, %v8515
        %v8735 = vrot.slane %v8734, 4
        %v8736 = vmax.f32 %v8734, %v8735
        %v8737 = vrot.slane %v8736, 2
        %v8738 = vmax.f32 %v8736, %v8737
        %v8739 = vrot.slane %v8738, 1
        %v8740 = vmax.f32 %v8738, %v8739
        %v8741 = vmin.f32 %v8423, %v8429
        %v8742 = vmin.f32 %v8741, %v8435
        %v8743 = vmin.f32 %v8742, %v8441
        %v8744 = vmin.f32 %v8743, %v8447
        %v8745 = vmin.f32 %v8744, %v8453
        %v8746 = vmin.f32 %v8745, %v8459
        %v8747 = vmin.f32 %v8746, %v8465
        %v8748 = vrot.slane %v8747, 4
        %v8749 = vmin.f32 %v8747, %v8748
        %v8750 = vrot.slane %v8749, 2
        %v8751 = vmin.f32 %v8749, %v8750
        %v8752 = vrot.slane %v8751, 1
        %v8753 = vmin.f32 %v8751, %v8752
        %v8754 = vmin.f32 %v8425, %v8431
        %v8755 = vmin.f32 %v8754, %v8437
        %v8756 = vmin.f32 %v8755, %v8443
        %v8757 = vmin.f32 %v8756, %v8449
        %v8758 = vmin.f32 %v8757, %v8455
        %v8759 = vmin.f32 %v8758, %v8461
        %v8760 = vmin.f32 %v8759, %v8467
        %v8761 = vrot.slane %v8760, 4
        %v8762 = vmin.f32 %v8760, %v8761
        %v8763 = vrot.slane %v8762, 2
        %v8764 = vmin.f32 %v8762, %v8763
        %v8765 = vrot.slane %v8764, 1
        %v8766 = vmin.f32 %v8764, %v8765
        %v8767 = vmin.f32 %v8471, %v8477
        %v8768 = vmin.f32 %v8767, %v8483
        %v8769 = vmin.f32 %v8768, %v8489
        %v8770 = vmin.f32 %v8769, %v8495
        %v8771 = vmin.f32 %v8770, %v8501
        %v8772 = vmin.f32 %v8771, %v8507
        %v8773 = vmin.f32 %v8772, %v8513
        %v8774 = vrot.slane %v8773, 4
        %v8775 = vmin.f32 %v8773, %v8774
        %v8776 = vrot.slane %v8775, 2
        %v8777 = vmin.f32 %v8775, %v8776
        %v8778 = vrot.slane %v8777, 1
        %v8779 = vmin.f32 %v8777, %v8778
        %v8780 = vmin.f32 %v8473, %v8479
        %v8781 = vmin.f32 %v8780, %v8485
        %v8782 = vmin.f32 %v8781, %v8491
        %v8783 = vmin.f32 %v8782, %v8497
        %v8784 = vmin.f32 %v8783, %v8503
        %v8785 = vmin.f32 %v8784, %v8509
        %v8786 = vmin.f32 %v8785, %v8515
        %v8787 = vrot.slane %v8786, 4
        %v8788 = vmin.f32 %v8786, %v8787
        %v8789 = vrot.slane %v8788, 2
        %v8790 = vmin.f32 %v8788, %v8789
        %v8791 = vrot.slane %v8790, 1
        %v8792 = vmin.f32 %v8790, %v8791
        %vm8793 = vcmp.ge.f32.partialorder %v8655, 0.0
        %v8794 = vmul.f32 %v8701, %v8661
        %v8795 = vmul.f32 %v8714, %v8665
        %v8796 = vmul.f32 %v8727, %v8661
        %v8797 = vmul.f32 %v8740, %v8665
        %v8798 = vmul.f32 %v8753, %v8661
        %v8799 = vmul.f32 %v8766, %v8665
        %v8800 = vmul.f32 %v8779, %v8661
        %v8801 = vmul.f32 %v8792, %v8665
        %v8802 = vsel %vm8793, 1, 0
        %v8803 = vlaneseq
        %v8804 = vshrl.u32 %v8803, 7
        %v8805 = vsub.s32 0, %v8804
        %v8806 = vrot.slane %v8802, %v8805
        %v8807 = vlaneseq
        %v8808 = vshrl.u32 %v8807, 7
        %v8809 = vsub.s32 1, %v8808
        %v8810 = vrot.slane %v8802, %v8809
        %vm8811 = vcmp.eq.s32.totalorder %v8806, 1
        %vm8812 = vcmp.eq.s32.totalorder %v8810, 1
        %v8817 = vrot.slane %v8796, 7
        %v8818 = vsel %vm837, %v8817, %v8794
        %v8819 = vrot.slane %v8797, 7
        %v8820 = vsel %vm837, %v8819, %v8795
        %v8827 = vrot.slane %v8800, 7
        %v8828 = vsel %vm837, %v8827, %v8798
        %v8829 = vrot.slane %v8801, 7
        %v8830 = vsel %vm837, %v8829, %v8799
        %v8833 = vsel %vm8811, %v8818, %v8828
        %v8834 = vsel %vm8812, %v8820, %v8830
        %v8836 = vlaneseq
        %v8837 = vshrl.u32 %v8836, 7
        %v8838 = vsub.s32 0, %v8837
        %v8839 = vrot.slane %v8688, %v8838
        %v8840 = vlaneseq
        %v8841 = vshrl.u32 %v8840, 7
        %v8842 = vsub.s32 1, %v8841
        %v8843 = vrot.slane %v8688, %v8842
        %v8846 = vadd.f32 %v8833, %v8839
        %v8847 = vadd.f32 %v8834, %v8843
        %v8850 = vcombine.low %v8846, %v8847
        %v8852 = vunpack.c.l.s4 1983009808
        %v8853 = vunpack.c.0.s8 %v8852
        %v8854 = vlaneseq
        %v8855 = vshrl.u32 %v8854, 7
        %v8856 = vsub.s32 %v8853, %v8855
        %v8857 = vrot.slane %v8850, %v8856
        %8859 = vst [vmem:[%s295 + $0x38] sm:$0xf] %v8857
        %v8860 = vld [vmem:[%s259 + $0xf0] sm:$0xff]
        %v8861 = vld [vmem:[%s259 + $0xf8] sm:$0xff]
        %v8862 = vld [vmem:[%s0] sm:$0xff]
        %v8863 = vld [vmem:[%s0 + $0x8] sm:$0xff]
        %v8864 = vld [vmem:[%s0 + $0x10] sm:$0xff]
        %v8865 = vld [vmem:[%s0 + $0x18] sm:$0xff]
        %v8866 = vld [vmem:[%s0 + $0x20] sm:$0xff]
        %v8867 = vld [vmem:[%s0 + $0x28] sm:$0xff]
        %v8868 = vld [vmem:[%s0 + $0x30] sm:$0xff]
        %v8869 = vld [vmem:[%s0 + $0x38] sm:$0xff]
        %v8870 = vld [vmem:[%s0 + $0x40] sm:$0xff]
        %v8871 = vld [vmem:[%s0 + $0x48] sm:$0xff]
        %v8872 = vld [vmem:[%s0 + $0x50] sm:$0xff]
        %v8873 = vld [vmem:[%s0 + $0x58] sm:$0xff]
        %v8874 = vld [vmem:[%s0 + $0x60] sm:$0xff]
        %v8875 = vld [vmem:[%s0 + $0x68] sm:$0xff]
        %v8876 = vld [vmem:[%s0 + $0x70] sm:$0xff]
        %v8877 = vld [vmem:[%s0 + $0x78] sm:$0xff]
        %v8879 = vsel %vm326, %v8862, 0
        %v8882 = vsel %vm326, %v8863, 0
        %v8885 = vsel %vm326, %v8864, 0
        %v8888 = vsel %vm326, %v8865, 0
        %v8891 = vsel %vm326, %v8866, 0
        %v8894 = vsel %vm326, %v8867, 0
        %v8897 = vsel %vm326, %v8868, 0
        %v8900 = vsel %vm326, %v8869, 0
        %v8903 = vsel %vm326, %v8870, 0
        %v8906 = vsel %vm326, %v8871, 0
        %v8909 = vsel %vm326, %v8872, 0
        %v8912 = vsel %vm326, %v8873, 0
        %v8915 = vsel %vm326, %v8874, 0
        %v8918 = vsel %vm326, %v8875, 0
        %v8921 = vsel %vm326, %v8876, 0
        %v8924 = vsel %vm326, %v8877, 0
        %8926 = vmatprep.subr.mxu0 %v8861
        %8927 = vmatpush1.msra.mxu0 %v8860
        %8928 = vmatprep.subr.mxu0 0.0
        %8929 = vmatpush1.msra.mxu0 0.0
        %8930 = vmatprep.subr.mxu0 0.0
        %8931 = vmatpush1.msra.mxu0 0.0
        %8932 = vmatprep.subr.mxu0 0.0
        %8933 = vmatpush1.msra.mxu0 0.0
        %8934 = vmatprep.subr.mxu0 0.0
        %8935 = vmatpush1.msra.mxu0 0.0
        %8936 = vmatprep.subr.mxu0 0.0
        %8937 = vmatpush1.msra.mxu0 0.0
        %8938 = vmatprep.subr.mxu0 0.0
        %8939 = vmatpush1.msra.mxu0 0.0
        %8940 = vmatprep.subr.mxu0 0.0
        %8941 = vmatpush1.msra.mxu0 0.0
        %8942 = vmatprep.subr.mxu0 0.0
        %8943 = vmatpush1.msra.mxu0 0.0
        %8944 = vmatprep.subr.mxu0 0.0
        %8945 = vmatpush1.msra.mxu0 0.0
        %8946 = vmatprep.subr.mxu0 0.0
        %8947 = vmatpush1.msra.mxu0 0.0
        %8948 = vmatprep.subr.mxu0 0.0
        %8949 = vmatpush1.msra.mxu0 0.0
        %8950 = vmatprep.subr.mxu0 0.0
        %8951 = vmatpush1.msra.mxu0 0.0
        %8952 = vmatprep.subr.mxu0 0.0
        %8953 = vmatpush1.msra.mxu0 0.0
        %8954 = vmatprep.subr.mxu0 0.0
        %8955 = vmatpush1.msra.mxu0 0.0
        %8956 = vmatprep.subr.mxu0 0.0
        %8957 = vmatpush1.msra.mxu0 0.0
        %8958 = vmatprep.subr.mxu0 0.0
        %8959 = vmatpush1.msra.mxu0 0.0
        %8960 = vmatprep.subr.mxu0 0.0
        %8961 = vmatpush1.msra.mxu0 0.0
        %8962 = vmatprep.subr.mxu0 0.0
        %8963 = vmatpush1.msra.mxu0 0.0
        %8964 = vmatprep.subr.mxu0 0.0
        %8965 = vmatpush1.msra.mxu0 0.0
        %8966 = vmatprep.subr.mxu0 0.0
        %8967 = vmatpush1.msra.mxu0 0.0
        %8968 = vmatprep.subr.mxu0 0.0
        %8969 = vmatpush1.msra.mxu0 0.0
        %8970 = vmatprep.subr.mxu0 0.0
        %8971 = vmatpush1.msra.mxu0 0.0
        %8972 = vmatprep.subr.mxu0 0.0
        %8973 = vmatpush1.msra.mxu0 0.0
        %8974 = vmatprep.subr.mxu0 0.0
        %8975 = vmatpush1.msra.mxu0 0.0
        %8976 = vmatprep.subr.mxu0 0.0
        %8977 = vmatpush1.msra.mxu0 0.0
        %8978 = vmatprep.subr.mxu0 0.0
        %8979 = vmatpush1.msra.mxu0 0.0
        %8980 = vmatprep.subr.mxu0 0.0
        %8981 = vmatpush1.msra.mxu0 0.0
        %8982 = vmatprep.subr.mxu0 0.0
        %8983 = vmatpush1.msra.mxu0 0.0
        %8984 = vmatprep.subr.mxu0 0.0
        %8985 = vmatpush1.msra.mxu0 0.0
        %8986 = vmatprep.subr.mxu0 0.0
        %8987 = vmatpush1.msra.mxu0 0.0
        %8988 = vmatprep.subr.mxu0 0.0
        %8989 = vmatpush1.msra.mxu0 0.0
        %8990 = vmatprep.mubr.f32.mxu0 0.0
        %8991 = vmatmul.mubr.f32.gmra.mrb[0].mxu0 %v8879
        %v8992 = vpop.f32.mrb[0].mxu0
        %v8993 = vadd.f32 0.0, %v8992
        %v8994 = vpop.f32.mrb[0].mxu0
        %v8995 = vadd.f32 0.0, %v8994
        %8996 = vmatprep.mubr.f32.mxu0 0.0
        %8997 = vmatmul.mubr.f32.gmra.mrb[0].mxu0 %v8882
        %v8998 = vpop.f32.mrb[0].mxu0
        %v8999 = vadd.f32 0.0, %v8998
        %v9000 = vpop.f32.mrb[0].mxu0
        %v9001 = vadd.f32 0.0, %v9000
        %9002 = vmatprep.mubr.f32.mxu0 0.0
        %9003 = vmatmul.mubr.f32.gmra.mrb[0].mxu0 %v8885
        %v9004 = vpop.f32.mrb[0].mxu0
        %v9005 = vadd.f32 0.0, %v9004
        %v9006 = vpop.f32.mrb[0].mxu0
        %v9007 = vadd.f32 0.0, %v9006
        %9008 = vmatprep.mubr.f32.mxu0 0.0
        %9009 = vmatmul.mubr.f32.gmra.mrb[0].mxu0 %v8888
        %v9010 = vpop.f32.mrb[0].mxu0
        %v9011 = vadd.f32 0.0, %v9010
        %v9012 = vpop.f32.mrb[0].mxu0
        %v9013 = vadd.f32 0.0, %v9012
        %9014 = vmatprep.mubr.f32.mxu0 0.0
        %9015 = vmatmul.mubr.f32.gmra.mrb[0].mxu0 %v8891
        %v9016 = vpop.f32.mrb[0].mxu0
        %v9017 = vadd.f32 0.0, %v9016
        %v9018 = vpop.f32.mrb[0].mxu0
        %v9019 = vadd.f32 0.0, %v9018
        %9020 = vmatprep.mubr.f32.mxu0 0.0
        %9021 = vmatmul.mubr.f32.gmra.mrb[0].mxu0 %v8894
        %v9022 = vpop.f32.mrb[0].mxu0
        %v9023 = vadd.f32 0.0, %v9022
        %v9024 = vpop.f32.mrb[0].mxu0
        %v9025 = vadd.f32 0.0, %v9024
        %9026 = vmatprep.mubr.f32.mxu0 0.0
        %9027 = vmatmul.mubr.f32.gmra.mrb[0].mxu0 %v8897
        %v9028 = vpop.f32.mrb[0].mxu0
        %v9029 = vadd.f32 0.0, %v9028
        %v9030 = vpop.f32.mrb[0].mxu0
        %v9031 = vadd.f32 0.0, %v9030
        %9032 = vmatprep.mubr.f32.mxu0 0.0
        %9033 = vmatmul.mubr.f32.gmra.mrb[0].mxu0 %v8900
        %v9034 = vpop.f32.mrb[0].mxu0
        %v9035 = vadd.f32 0.0, %v9034
        %v9036 = vpop.f32.mrb[0].mxu0
        %v9037 = vadd.f32 0.0, %v9036
        %9038 = vmatprep.mubr.f32.mxu0 0.0
        %9039 = vmatmul.mubr.f32.gmra.mrb[0].mxu0 %v8903
        %v9040 = vpop.f32.mrb[0].mxu0
        %v9041 = vadd.f32 0.0, %v9040
        %v9042 = vpop.f32.mrb[0].mxu0
        %v9043 = vadd.f32 0.0, %v9042
        %9044 = vmatprep.mubr.f32.mxu0 0.0
        %9045 = vmatmul.mubr.f32.gmra.mrb[0].mxu0 %v8906
        %v9046 = vpop.f32.mrb[0].mxu0
        %v9047 = vadd.f32 0.0, %v9046
        %v9048 = vpop.f32.mrb[0].mxu0
        %v9049 = vadd.f32 0.0, %v9048
        %9050 = vmatprep.mubr.f32.mxu0 0.0
        %9051 = vmatmul.mubr.f32.gmra.mrb[0].mxu0 %v8909
        %v9052 = vpop.f32.mrb[0].mxu0
        %v9053 = vadd.f32 0.0, %v9052
        %v9054 = vpop.f32.mrb[0].mxu0
        %v9055 = vadd.f32 0.0, %v9054
        %9056 = vmatprep.mubr.f32.mxu0 0.0
        %9057 = vmatmul.mubr.f32.gmra.mrb[0].mxu0 %v8912
        %v9058 = vpop.f32.mrb[0].mxu0
        %v9059 = vadd.f32 0.0, %v9058
        %v9060 = vpop.f32.mrb[0].mxu0
        %v9061 = vadd.f32 0.0, %v9060
        %9062 = vmatprep.mubr.f32.mxu0 0.0
        %9063 = vmatmul.mubr.f32.gmra.mrb[0].mxu0 %v8915
        %v9064 = vpop.f32.mrb[0].mxu0
        %v9065 = vadd.f32 0.0, %v9064
        %v9066 = vpop.f32.mrb[0].mxu0
        %v9067 = vadd.f32 0.0, %v9066
        %9068 = vmatprep.mubr.f32.mxu0 0.0
        %9069 = vmatmul.mubr.f32.gmra.mrb[0].mxu0 %v8918
        %v9070 = vpop.f32.mrb[0].mxu0
        %v9071 = vadd.f32 0.0, %v9070
        %v9072 = vpop.f32.mrb[0].mxu0
        %v9073 = vadd.f32 0.0, %v9072
        %9074 = vmatprep.mubr.f32.mxu0 0.0
        %9075 = vmatmul.mubr.f32.gmra.mrb[0].mxu0 %v8921
        %v9076 = vpop.f32.mrb[0].mxu0
        %v9077 = vadd.f32 0.0, %v9076
        %v9078 = vpop.f32.mrb[0].mxu0
        %v9079 = vadd.f32 0.0, %v9078
        %9080 = vmatprep.mubr.f32.mxu0 0.0
        %9081 = vmatmul.mubr.f32.gmra.mrb[0].mxu0 %v8924
        %v9082 = vpop.f32.mrb[0].mxu0
        %v9083 = vadd.f32 0.0, %v9082
        %v9084 = vpop.f32.mrb[0].mxu0
        %v9085 = vadd.f32 0.0, %v9084
        %9086 = vdwg.mxu0
        %v9087 = vld [vmem:[%s2] sm:$0xff]
        %9089 = vset.pattern.permute.xlu0 0
        %9090 = vperm.xlu0 %9089, %v9087
        %v9091 = vpop.permute.xlu0 %9090
        %v9093 = vmul.f32 %v9091, %v8860
        %v9094 = vmul.f32 %v9091, %v8861
        %v9095 = vrot.slane %v9093, 4
        %v9096 = vadd.f32 %v9093, %v9095
        %v9097 = vrot.slane %v9096, 2
        %v9098 = vadd.f32 %v9096, %v9097
        %v9099 = vrot.slane %v9098, 1
        %v9100 = vadd.f32 %v9098, %v9099
        %v9101 = vrot.slane %v9094, 4
        %v9102 = vadd.f32 %v9094, %v9101
        %v9103 = vrot.slane %v9102, 2
        %v9104 = vadd.f32 %v9102, %v9103
        %v9105 = vrot.slane %v9104, 1
        %v9106 = vadd.f32 %v9104, %v9105
        %v9107 = vld [vmem:[%s3] sm:$0xff]
        %v9109 = vsel %vm326, %v9107, 0
        %9111 = vmatprep.subr.mxu0 %v8861
        %9112 = vmatpush1.msra.mxu0 %v8860
        %9113 = vmatprep.subr.mxu0 0.0
        %9114 = vmatpush1.msra.mxu0 0.0
        %9115 = vmatprep.subr.mxu0 0.0
        %9116 = vmatpush1.msra.mxu0 0.0
        %9117 = vmatprep.subr.mxu0 0.0
        %9118 = vmatpush1.msra.mxu0 0.0
        %9119 = vmatprep.subr.mxu0 0.0
        %9120 = vmatpush1.msra.mxu0 0.0
        %9121 = vmatprep.subr.mxu0 0.0
        %9122 = vmatpush1.msra.mxu0 0.0
        %9123 = vmatprep.subr.mxu0 0.0
        %9124 = vmatpush1.msra.mxu0 0.0
        %9125 = vmatprep.subr.mxu0 0.0
        %9126 = vmatpush1.msra.mxu0 0.0
        %9127 = vmatprep.subr.mxu0 0.0
        %9128 = vmatpush1.msra.mxu0 0.0
        %9129 = vmatprep.subr.mxu0 0.0
        %9130 = vmatpush1.msra.mxu0 0.0
        %9131 = vmatprep.subr.mxu0 0.0
        %9132 = vmatpush1.msra.mxu0 0.0
        %9133 = vmatprep.subr.mxu0 0.0
        %9134 = vmatpush1.msra.mxu0 0.0
        %9135 = vmatprep.subr.mxu0 0.0
        %9136 = vmatpush1.msra.mxu0 0.0
        %9137 = vmatprep.subr.mxu0 0.0
        %9138 = vmatpush1.msra.mxu0 0.0
        %9139 = vmatprep.subr.mxu0 0.0
        %9140 = vmatpush1.msra.mxu0 0.0
        %9141 = vmatprep.subr.mxu0 0.0
        %9142 = vmatpush1.msra.mxu0 0.0
        %9143 = vmatprep.subr.mxu0 0.0
        %9144 = vmatpush1.msra.mxu0 0.0
        %9145 = vmatprep.subr.mxu0 0.0
        %9146 = vmatpush1.msra.mxu0 0.0
        %9147 = vmatprep.subr.mxu0 0.0
        %9148 = vmatpush1.msra.mxu0 0.0
        %9149 = vmatprep.subr.mxu0 0.0
        %9150 = vmatpush1.msra.mxu0 0.0
        %9151 = vmatprep.subr.mxu0 0.0
        %9152 = vmatpush1.msra.mxu0 0.0
        %9153 = vmatprep.subr.mxu0 0.0
        %9154 = vmatpush1.msra.mxu0 0.0
        %9155 = vmatprep.subr.mxu0 0.0
        %9156 = vmatpush1.msra.mxu0 0.0
        %9157 = vmatprep.subr.mxu0 0.0
        %9158 = vmatpush1.msra.mxu0 0.0
        %9159 = vmatprep.subr.mxu0 0.0
        %9160 = vmatpush1.msra.mxu0 0.0
        %9161 = vmatprep.subr.mxu0 0.0
        %9162 = vmatpush1.msra.mxu0 0.0
        %9163 = vmatprep.subr.mxu0 0.0
        %9164 = vmatpush1.msra.mxu0 0.0
        %9165 = vmatprep.subr.mxu0 0.0
        %9166 = vmatpush1.msra.mxu0 0.0
        %9167 = vmatprep.subr.mxu0 0.0
        %9168 = vmatpush1.msra.mxu0 0.0
        %9169 = vmatprep.subr.mxu0 0.0
        %9170 = vmatpush1.msra.mxu0 0.0
        %9171 = vmatprep.subr.mxu0 0.0
        %9172 = vmatpush1.msra.mxu0 0.0
        %9173 = vmatprep.subr.mxu0 0.0
        %9174 = vmatpush1.msra.mxu0 0.0
        %9175 = vmatprep.mubr.f32.mxu0 0.0
        %9176 = vmatmul.mubr.f32.gmra.mrb[0].mxu0 %v9109
        %v9177 = vpop.f32.mrb[0].mxu0
        %v9178 = vadd.f32 0.0, %v9177
        %v9179 = vpop.f32.mrb[0].mxu0
        %v9180 = vadd.f32 0.0, %v9179
        %9181 = vdwg.mxu0
        %v9182 = vmul.f32 %v8860, %v9178
        %v9183 = vmul.f32 %v8861, %v9180
        %v9184 = vrot.slane %v9182, 4
        %v9185 = vadd.f32 %v9182, %v9184
        %v9186 = vrot.slane %v9185, 2
        %v9187 = vadd.f32 %v9185, %v9186
        %v9188 = vrot.slane %v9187, 1
        %v9189 = vadd.f32 %v9187, %v9188
        %v9190 = vrot.slane %v9183, 4
        %v9191 = vadd.f32 %v9183, %v9190
        %v9192 = vrot.slane %v9191, 2
        %v9193 = vadd.f32 %v9191, %v9192
        %v9194 = vrot.slane %v9193, 1
        %v9195 = vadd.f32 %v9193, %v9194
        %v9196 = vmul.f32 %v9100, %v9100
        %v9197 = vmul.f32 %v9106, %v9106
        %v9198 = vsub.f32 %v9189, %v9196
        %v9199 = vsub.f32 %v9195, %v9197
        %v9200 = vmax.f32 %v9198, 0.0
        %v9201 = vmax.f32 %v9199, 0.0
        %v9202 = vld [vmem:[%s300 + $0x1e] sm:$0x3]
        %v9203 = vadd.f32 %v9200, 1e-05
        %v9204 = vadd.f32 %v9201, 1e-05
        %v9205 = vrsqrt.pop %v9203
        %v9206 = vrsqrt.pop %v9204
        %v9209 = vcombine.low %v9205, %v9206
        %v9211 = vunpack.c.l.s4 1966171168
        %v9212 = vunpack.c.0.s8 %v9211
        %v9213 = vlaneseq
        %v9214 = vshrl.u32 %v9213, 7
        %v9215 = vsub.s32 %v9212, %v9214
        %v9216 = vrot.slane %v9209, %v9215
        %v9218 = vunpack.c.l.s4 1966171168
        %v9219 = vunpack.c.0.s8 %v9218
        %v9220 = vlaneseq
        %v9221 = vshrl.u32 %v9220, 7
        %v9222 = vsub.s32 %v9219, %v9221
        %v9223 = vrot.slane %v9216, %v9222
        %v9225 = vmul.f32 %v9202, %v9223
        %v9226 = vld [vmem:[%s305 + $0x1e] sm:$0x3]
        %v9228 = vlaneseq
        %v9229 = vshrl.u32 %v9228, 7
        %v9230 = vsub.s32 0, %v9229
        %v9231 = vrot.slane %v9225, %v9230
        %v9232 = vlaneseq
        %v9233 = vshrl.u32 %v9232, 7
        %v9234 = vsub.s32 1, %v9233
        %v9235 = vrot.slane %v9225, %v9234
        %v9238 = vmul.f32 %v9100, %v9231
        %v9239 = vmul.f32 %v9106, %v9235
        %v9242 = vcombine.low %v9238, %v9239
        %v9244 = vunpack.c.l.s4 1966171168
        %v9245 = vunpack.c.0.s8 %v9244
        %v9246 = vlaneseq
        %v9247 = vshrl.u32 %v9246, 7
        %v9248 = vsub.s32 %v9245, %v9247
        %v9249 = vrot.slane %v9242, %v9248
        %v9251 = vunpack.c.l.s4 1966171168
        %v9252 = vunpack.c.0.s8 %v9251
        %v9253 = vlaneseq
        %v9254 = vshrl.u32 %v9253, 7
        %v9255 = vsub.s32 %v9252, %v9254
        %v9256 = vrot.slane %v9249, %v9255
        %v9258 = vsub.f32 %v9226, %v9256
        %v9259 = vmax.f32 %v8993, %v8999
        %v9260 = vmax.f32 %v9259, %v9005
        %v9261 = vmax.f32 %v9260, %v9011
        %v9262 = vmax.f32 %v9261, %v9017
        %v9263 = vmax.f32 %v9262, %v9023
        %v9264 = vmax.f32 %v9263, %v9029
        %v9265 = vmax.f32 %v9264, %v9035
        %v9266 = vrot.slane %v9265, 4
        %v9267 = vmax.f32 %v9265, %v9266
        %v9268 = vrot.slane %v9267, 2
        %v9269 = vmax.f32 %v9267, %v9268
        %v9270 = vrot.slane %v9269, 1
        %v9271 = vmax.f32 %v9269, %v9270
        %v9272 = vmax.f32 %v8995, %v9001
        %v9273 = vmax.f32 %v9272, %v9007
        %v9274 = vmax.f32 %v9273, %v9013
        %v9275 = vmax.f32 %v9274, %v9019
        %v9276 = vmax.f32 %v9275, %v9025
        %v9277 = vmax.f32 %v9276, %v9031
        %v9278 = vmax.f32 %v9277, %v9037
        %v9279 = vrot.slane %v9278, 4
        %v9280 = vmax.f32 %v9278, %v9279
        %v9281 = vrot.slane %v9280, 2
        %v9282 = vmax.f32 %v9280, %v9281
        %v9283 = vrot.slane %v9282, 1
        %v9284 = vmax.f32 %v9282, %v9283
        %v9285 = vmax.f32 %v9041, %v9047
        %v9286 = vmax.f32 %v9285, %v9053
        %v9287 = vmax.f32 %v9286, %v9059
        %v9288 = vmax.f32 %v9287, %v9065
        %v9289 = vmax.f32 %v9288, %v9071
        %v9290 = vmax.f32 %v9289, %v9077
        %v9291 = vmax.f32 %v9290, %v9083
        %v9292 = vrot.slane %v9291, 4
        %v9293 = vmax.f32 %v9291, %v9292
        %v9294 = vrot.slane %v9293, 2
        %v9295 = vmax.f32 %v9293, %v9294
        %v9296 = vrot.slane %v9295, 1
        %v9297 = vmax.f32 %v9295, %v9296
        %v9298 = vmax.f32 %v9043, %v9049
        %v9299 = vmax.f32 %v9298, %v9055
        %v9300 = vmax.f32 %v9299, %v9061
        %v9301 = vmax.f32 %v9300, %v9067
        %v9302 = vmax.f32 %v9301, %v9073
        %v9303 = vmax.f32 %v9302, %v9079
        %v9304 = vmax.f32 %v9303, %v9085
        %v9305 = vrot.slane %v9304, 4
        %v9306 = vmax.f32 %v9304, %v9305
        %v9307 = vrot.slane %v9306, 2
        %v9308 = vmax.f32 %v9306, %v9307
        %v9309 = vrot.slane %v9308, 1
        %v9310 = vmax.f32 %v9308, %v9309
        %v9311 = vmin.f32 %v8993, %v8999
        %v9312 = vmin.f32 %v9311, %v9005
        %v9313 = vmin.f32 %v9312, %v9011
        %v9314 = vmin.f32 %v9313, %v9017
        %v9315 = vmin.f32 %v9314, %v9023
        %v9316 = vmin.f32 %v9315, %v9029
        %v9317 = vmin.f32 %v9316, %v9035
        %v9318 = vrot.slane %v9317, 4
        %v9319 = vmin.f32 %v9317, %v9318
        %v9320 = vrot.slane %v9319, 2
        %v9321 = vmin.f32 %v9319, %v9320
        %v9322 = vrot.slane %v9321, 1
        %v9323 = vmin.f32 %v9321, %v9322
        %v9324 = vmin.f32 %v8995, %v9001
        %v9325 = vmin.f32 %v9324, %v9007
        %v9326 = vmin.f32 %v9325, %v9013
        %v9327 = vmin.f32 %v9326, %v9019
        %v9328 = vmin.f32 %v9327, %v9025
        %v9329 = vmin.f32 %v9328, %v9031
        %v9330 = vmin.f32 %v9329, %v9037
        %v9331 = vrot.slane %v9330, 4
        %v9332 = vmin.f32 %v9330, %v9331
        %v9333 = vrot.slane %v9332, 2
        %v9334 = vmin.f32 %v9332, %v9333
        %v9335 = vrot.slane %v9334, 1
        %v9336 = vmin.f32 %v9334, %v9335
        %v9337 = vmin.f32 %v9041, %v9047
        %v9338 = vmin.f32 %v9337, %v9053
        %v9339 = vmin.f32 %v9338, %v9059
        %v9340 = vmin.f32 %v9339, %v9065
        %v9341 = vmin.f32 %v9340, %v9071
        %v9342 = vmin.f32 %v9341, %v9077
        %v9343 = vmin.f32 %v9342, %v9083
        %v9344 = vrot.slane %v9343, 4
        %v9345 = vmin.f32 %v9343, %v9344
        %v9346 = vrot.slane %v9345, 2
        %v9347 = vmin.f32 %v9345, %v9346
        %v9348 = vrot.slane %v9347, 1
        %v9349 = vmin.f32 %v9347, %v9348
        %v9350 = vmin.f32 %v9043, %v9049
        %v9351 = vmin.f32 %v9350, %v9055
        %v9352 = vmin.f32 %v9351, %v9061
        %v9353 = vmin.f32 %v9352, %v9067
        %v9354 = vmin.f32 %v9353, %v9073
        %v9355 = vmin.f32 %v9354, %v9079
        %v9356 = vmin.f32 %v9355, %v9085
        %v9357 = vrot.slane %v9356, 4
        %v9358 = vmin.f32 %v9356, %v9357
        %v9359 = vrot.slane %v9358, 2
        %v9360 = vmin.f32 %v9358, %v9359
        %v9361 = vrot.slane %v9360, 1
        %v9362 = vmin.f32 %v9360, %v9361
        %vm9363 = vcmp.ge.f32.partialorder %v9225, 0.0
        %v9364 = vmul.f32 %v9271, %v9231
        %v9365 = vmul.f32 %v9284, %v9235
        %v9366 = vmul.f32 %v9297, %v9231
        %v9367 = vmul.f32 %v9310, %v9235
        %v9368 = vmul.f32 %v9323, %v9231
        %v9369 = vmul.f32 %v9336, %v9235
        %v9370 = vmul.f32 %v9349, %v9231
        %v9371 = vmul.f32 %v9362, %v9235
        %v9372 = vsel %vm9363, 1, 0
        %v9373 = vlaneseq
        %v9374 = vshrl.u32 %v9373, 7
        %v9375 = vsub.s32 0, %v9374
        %v9376 = vrot.slane %v9372, %v9375
        %v9377 = vlaneseq
        %v9378 = vshrl.u32 %v9377, 7
        %v9379 = vsub.s32 1, %v9378
        %v9380 = vrot.slane %v9372, %v9379
        %vm9381 = vcmp.eq.s32.totalorder %v9376, 1
        %vm9382 = vcmp.eq.s32.totalorder %v9380, 1
        %v9387 = vrot.slane %v9366, 7
        %v9388 = vsel %vm837, %v9387, %v9364
        %v9389 = vrot.slane %v9367, 7
        %v9390 = vsel %vm837, %v9389, %v9365
        %v9397 = vrot.slane %v9370, 7
        %v9398 = vsel %vm837, %v9397, %v9368
        %v9399 = vrot.slane %v9371, 7
        %v9400 = vsel %vm837, %v9399, %v9369
        %v9403 = vsel %vm9381, %v9388, %v9398
        %v9404 = vsel %vm9382, %v9390, %v9400
        %v9406 = vlaneseq
        %v9407 = vshrl.u32 %v9406, 7
        %v9408 = vsub.s32 0, %v9407
        %v9409 = vrot.slane %v9258, %v9408
        %v9410 = vlaneseq
        %v9411 = vshrl.u32 %v9410, 7
        %v9412 = vsub.s32 1, %v9411
        %v9413 = vrot.slane %v9258, %v9412
        %v9416 = vadd.f32 %v9403, %v9409
        %v9417 = vadd.f32 %v9404, %v9413
        %v9420 = vcombine.low %v9416, %v9417
        %v9422 = vunpack.c.l.s4 1983009808
        %v9423 = vunpack.c.0.s8 %v9422
        %v9424 = vlaneseq
        %v9425 = vshrl.u32 %v9424, 7
        %v9426 = vsub.s32 %v9423, %v9425
        %v9427 = vrot.slane %v9420, %v9426
        %9429 = vst [vmem:[%s295 + $0x3c] sm:$0xf] %v9427
        %s9430 = sand.u32 %s172, 1
        %s9431 = scalar_lea.sflag [#allocation4], %s9430
        %s9432 = sand.u32 %s172, 1
        %s9433 = smul.addr %s9432, 64
        %s9434 = scalar_lea.vmem [#allocation5], %s9433
        // Predicated region
        $region49: #{tpu_custom_call.1} parent=43 // pred_check
          %p9435 = pneg %p182
        $region50: #{tpu_custom_call.1} parent=43 // pred_check_branch
          %9437 = sbr.rel (%p9435) target = $region52
        $region51: #{tpu_custom_call.1} parent=43 // pred_region
          %s9438 = smul.u32 32, %s23
          %s9440 = ssub.s32 1024, 1024
          %9441 = vsyncadd %s9431, %s9440
          %s9442 = smul.addr %s9438, 32
          %s9443 = scalar_lea.hbm %s6, %s9442
          %s9445 = sshll.u32 %s9434, 4
          %s9446 = int_to_ptr.vmem [resolvable:$true] %s9445
          %9448 = dma.vmem_to_hbm [thread:$0]  %s9446, 1024, %s9443, %s9431
        $region52: #{tpu_custom_call.1} parent=43 // pred_fallthru
          _
      $region44: #{tpu_custom_call.1} parent=5 // pred_fallthru
        _
      %p9449 = scmp.le.s32.totalorder 2, %s18
      // Predicated region
      $region53: #{tpu_custom_call.1} parent=5 // pred_check
        %p9450 = pneg %p9449
      $region54: #{tpu_custom_call.1} parent=5 // pred_check_branch
        %9452 = sbr.rel (%p9450) target = $region56
      $region55: #{tpu_custom_call.1} parent=5 // pred_region
        %s9453 = ssub.s32 %s18, 2
        // Predicated region
        $region57: #{tpu_custom_call.1} parent=55 // pred_check
          %p9454 = pneg %p188
        $region58: #{tpu_custom_call.1} parent=55 // pred_check_branch
          %9456 = sbr.rel (%p9454) target = $region60
        $region59: #{tpu_custom_call.1} parent=55 // pred_region
          %s9457 = sand.u32 %s173, 1
          %s9458 = scalar_lea.sflag [#allocation4], %s9457
          %s9459 = sand.u32 %s173, 1
          %s9460 = smul.addr %s9459, 64
          %s9461 = scalar_lea.vmem [#allocation5], %s9460
          %9462 = dma.done %s9458, 1024
        $region60: #{tpu_custom_call.1} parent=55 // pred_fallthru
          _
      $region56: #{tpu_custom_call.1} parent=5 // pred_fallthru
        _
    $region6: #{tpu_custom_call.1} parent=1 // loop_footer
      %s22 = sadd.s32 1, %s18
    $region7: #{tpu_custom_call.1} parent=1 // loop_footer_branch
      %17 = sbr.rel target = $region3
    $region8: #{tpu_custom_call.1} parent=1 // loop_exit
      _
    %9463 = vsyncpa [#allocation3], 1
    %s9464 = scalar_lea.sflag [#allocation3], 1
    %9465 = vsyncpa %s9464, 1
    %9466 = vsyncpa [#allocation4], 1
    %s9467 = scalar_lea.sflag [#allocation4], 1
    %9468 = vsyncpa %s9467, 1

</llo_original>
